<compile_context>
chip_gen: v7x
topology: tpu7x:2x2x1
jax: 0.10.0
libtpu: 0.0.40
codegen_flags: <defaults>
</compile_context>

<pallas_src>
import functools

import jax
import jax.numpy as jnp
from jax import lax
from jax.experimental import pallas as pl
from jax.experimental.pallas import tpu as pltpu

C_HID = 25                     # conv1/conv2/conv3 out_channels
K1, K2, K3, K4 = 25, 15, 15, 5  # conv kernel sizes
HALO = 128                     # lane-aligned halo (>= max "same" pad of 12)


def _leaky(h):
    return jnp.where(h > 0, h, 0.01 * h)


def _round_up(n, m):
    return (n + m - 1) // m * m


def _pick_bt(batch, target=4):
    """Largest divisor of `batch` <= target, preferring >= 2 grid steps (v7x dual-TC)."""
    divs = [d for d in range(1, batch + 1) if batch % d == 0 and d <= target]
    multi = [d for d in divs if batch // d >= 2]
    return max(multi) if multi else max(divs)


def _prep_conv_w(w):
    """(Cout, Cin, K) -> (Cout, K*Cin) bf16, tap-major to match the im2col row order."""
    cout, cin, k = w.shape
    return jnp.transpose(w, (0, 2, 1)).reshape(cout, k * cin).astype(jnp.bfloat16)


# ----------------------------------------------------------------------------- conv
def conv_stack_kernel(x_ref, w1_ref, b1_ref, w2_ref, b2_ref, w3_ref, b3_ref,
                      w4_ref, b4_ref, o_ref, act_ref, *, L, Lp, Bt):
    """One batch block of 4 'same' Conv1d + LeakyReLU layers via im2col matmuls.

    x_ref:   (Bt, 1, Lp)            bf16  input (zero padded to Lp)
    w*_ref:  (Cout, K*Cin)          bf16  reshaped conv weights
    b*_ref:  (Cout, 1)              f32   conv biases
    o_ref:   (Bt, 1, Lp)            bf16  leaky(conv4(...))
    act_ref: (Bt, C_HID, Lp+2*HALO) bf16  activation scratch with zero halos
    """
    bf16 = jnp.bfloat16

    # Halos must read as zero ("same" conv padding); the interior is always overwritten.
    halo = jnp.zeros((Bt, C_HID, HALO), bf16)
    act_ref[:, :, :HALO] = halo
    act_ref[:, :, HALO + Lp:] = halo

    # Positions >= L (the pad-to-128 tail) must stay zero between layers.
    if Lp > L:
        in_range = lax.broadcasted_iota(jnp.int32, (1, Lp), 1) < L
        mask = lambda h: jnp.where(in_range, h, 0.0)
    else:
        mask = lambda h: h

    # Stage the single-channel input into channel row 0 of the scratch interior.
    act_ref[:, 0:1, HALO:HALO + Lp] = x_ref[...]

    w1, w2, w3, w4 = w1_ref[...], w2_ref[...], w3_ref[...], w4_ref[...]
    b1, b2, b3, b4 = b1_ref[...], b2_ref[...], b3_ref[...], b4_ref[...]

    def conv_layer(b, cin, w2d, bias, ksize):
        """'same' conv for batch row b: (Cout, K*cin) @ (K*cin, Lp) + bias."""
        pad = (ksize - 1) // 2
        base = HALO - pad
        taps = [act_ref[b, :cin, base + k: base + k + Lp] for k in range(ksize)]
        stacked = jnp.concatenate(taps, axis=0)                       # (K*cin, Lp) bf16
        acc = jnp.dot(w2d, stacked, preferred_element_type=jnp.float32)
        return acc + bias                                             # (Cout, Lp) f32

    for b in range(Bt):  # statically unrolled over the batch block
        h = mask(_leaky(conv_layer(b, 1, w1, b1, K1)))                # (25, Lp)
        act_ref[b:b + 1, :, HALO:HALO + Lp] = h.reshape(1, C_HID, Lp).astype(bf16)
        h = mask(_leaky(conv_layer(b, C_HID, w2, b2, K2)))            # (25, Lp)
        act_ref[b:b + 1, :, HALO:HALO + Lp] = h.reshape(1, C_HID, Lp).astype(bf16)
        h = mask(_leaky(conv_layer(b, C_HID, w3, b3, K3)))            # (25, Lp)
        act_ref[b:b + 1, :, HALO:HALO + Lp] = h.reshape(1, C_HID, Lp).astype(bf16)
        h = mask(_leaky(conv_layer(b, C_HID, w4, b4, K4)))            # (1, Lp)
        o_ref[b:b + 1, :, :] = h.reshape(1, 1, Lp).astype(o_ref.dtype)


def conv_stack(x, conv_params, *, bt_target=4):
    """x: (B, 1, L) f32 -> (B, Lp) bf16 with Lp = round_up(L, 128); tail lanes are zero.

    VMEM note: per grid step the footprint is ~(Bt*25*(Lp+256)*2 B scratch +
    Bt*Lp*2 B in/out blocks + a (375, Lp) bf16 im2col temporary), i.e. only a few MiB
    at Bt=4 even for Lp=4096 -> fits the default scoped VMEM on v5e/v6e/v7x.
    """
    (w1, b1), (w2, b2), (w3, b3), (w4, b4) = conv_params
    B, cin, L = x.shape
    assert cin == 1
    Lp = _round_up(L, 128)
    bt = _pick_bt(B, bt_target)

    x3 = x.astype(jnp.bfloat16)
    if Lp > L:
        x3 = jnp.pad(x3, ((0, 0), (0, 0), (0, Lp - L)))

    ws = [_prep_conv_w(w) for w in (w1, w2, w3, w4)]
    bs = [b.reshape(-1, 1).astype(jnp.float32) for b in (b1, b2, b3, b4)]

    def full(a):  # whole-array block (weights / biases), constant across the grid
        return pl.BlockSpec(a.shape, lambda i, _nd=a.ndim: (0,) * _nd)

    kernel = functools.partial(conv_stack_kernel, L=L, Lp=Lp, Bt=bt)
    out = pl.pallas_call(
        kernel,
        out_shape=jax.ShapeDtypeStruct((B, 1, Lp), jnp.bfloat16),
        grid_spec=pltpu.PrefetchScalarGridSpec(
            num_scalar_prefetch=0,
            grid=(B // bt,),
            in_specs=[
                pl.BlockSpec((bt, 1, Lp), lambda i: (i, 0, 0)),
                full(ws[0]), full(bs[0]),
                full(ws[1]), full(bs[1]),
                full(ws[2]), full(bs[2]),
                full(ws[3]), full(bs[3]),
            ],
            out_specs=pl.BlockSpec((bt, 1, Lp), lambda i: (i, 0, 0)),
            scratch_shapes=[pltpu.VMEM((bt, C_HID, Lp + 2 * HALO), jnp.bfloat16)],
        ),
        compiler_params=pltpu.CompilerParams(dimension_semantics=("parallel",)),
    )(x3, ws[0], bs[0], ws[1], bs[1], ws[2], bs[2], ws[3], bs[3])
    return out.reshape(B, Lp)


# ------------------------------------------------------------------------------ fc1
def fc_softplus_kernel(y_ref, wt_ref, b_ref, o_ref, acc_ref):
    @pl.when(pl.program_id(1) == 0)
    def _():
        acc_ref[...] = jnp.zeros_like(acc_ref)

    acc_ref[...] += jnp.dot(y_ref[...], wt_ref[...],
                            preferred_element_type=jnp.float32)

    @pl.when(pl.program_id(1) == pl.num_programs(1) - 1)
    def _():
        z = acc_ref[...] + b_ref[...]
        # numerically stable softplus == torch.nn.Softplus() (beta=1)
        sp = jnp.maximum(z, 0.0) + jnp.log(1.0 + jnp.exp(-jnp.abs(z)))
        o_ref[...] = sp.astype(o_ref.dtype)


def fc_softplus(y, fw, fb, L, Lp):
    """y: (B, Lp) bf16 (tail zeros) -> softplus(y[:, :L] @ fw.T + fb), shape (B, Lp) f32."""
    B = y.shape[0]
    wt = jnp.pad(fw.T.astype(jnp.bfloat16), ((0, Lp - L), (0, Lp - L)))  # (Lp, Lp)
    bp = jnp.pad(fb.astype(jnp.float32), (0, Lp - L)).reshape(1, Lp)

    tn = 256 if (Lp % 256 == 0 and Lp >= 512) else 128
    tk = 256 if Lp % 256 == 0 else 128

    return pl.pallas_call(
        fc_softplus_kernel,
        out_shape=jax.ShapeDtypeStruct((B, Lp), jnp.float32),
        grid_spec=pltpu.PrefetchScalarGridSpec(
            num_scalar_prefetch=0,
            grid=(Lp // tn, Lp // tk),            # reduction axis last
            in_specs=[
                pl.BlockSpec((B, tk), lambda j, k: (0, k)),
                pl.BlockSpec((tk, tn), lambda j, k: (k, j)),
                pl.BlockSpec((1, tn), lambda j, k: (0, j)),
            ],
            out_specs=pl.BlockSpec((B, tn), lambda j, k: (0, j)),
            scratch_shapes=[pltpu.VMEM((B, tn), jnp.float32)],
        ),
        compiler_params=pltpu.CompilerParams(
            dimension_semantics=("parallel", "arbitrary")),
    )(y, wt, bp)


# -------------------------------------------------------------------------- forward
def simple_cnn4_forward(x, params):
    """x: (B, 1, L) f32 -> (B, L) f32, matching SimpleCNN4Layer_D35_sp.forward (eval)."""
    w1, b1, w2, b2, w3, b3, w4, b4, fw, fb = params
    B, _, L = x.shape
    Lp = _round_up(L, 128)
    conv_out = conv_stack(x, ((w1, b1), (w2, b2), (w3, b3), (w4, b4)))  # (B, Lp) bf16
    # x.view(B, L); conv4dropout is an eval-mode identity.
    out = fc_softplus(conv_out, fw, fb, L, Lp)                          # (B, Lp) f32
    return out[:, :L]


# --------------------------------------------------------------------------- params
def init_params(key, L):
    """PyTorch-default init (Conv1d/Linear: U(-s, s), s = 1/sqrt(fan_in)).

    NOTE: the real module hard-codes fc1 to 4000 features; here fc1 is (L, L) so
    the self-test can run at a small stand-in sequence length.
    """
    def conv_init(k, cout, cin, ksize):
        kw, kb = jax.random.split(k)
        bound = 1.0 / (cin * ksize) ** 0.5
        w = jax.random.uniform(kw, (cout, cin, ksize), jnp.float32, -bound, bound)
        b = jax.random.uniform(kb, (cout,), jnp.float32, -bound, bound)
        return w, b

    k1, k2, k3, k4, k5 = jax.random.split(key, 5)
    w1, b1 = conv_init(k1, C_HID, 1, K1)
    w2, b2 = conv_init(k2, C_HID, C_HID, K2)
    w3, b3 = conv_init(k3, C_HID, C_HID, K3)
    w4, b4 = conv_init(k4, 1, C_HID, K4)
    kfw, kfb = jax.random.split(k5)
    fbound = 1.0 / L ** 0.5
    fw = jax.random.uniform(kfw, (L, L), jnp.float32, -fbound, fbound)
    fb = jax.random.uniform(kfb, (L,), jnp.float32, -fbound, fbound)
    return w1, b1, w2, b2, w3, b3, w4, b4, fw, fb


def reference_forward(x, params):
    """Pure-JAX f32 reference (lax conv + dense) for the correctness check."""
    w1, b1, w2, b2, w3, b3, w4, b4, fw, fb = params
    dn = ("NCH", "OIH", "NCH")

    def conv(h, w, b):
        pad = (w.shape[-1] - 1) // 2
        y = lax.conv_general_dilated(h, w, (1,), [(pad, pad)], dimension_numbers=dn)
        return y + b[None, :, None]

    h = _leaky(conv(x, w1, b1))
    h = _leaky(conv(h, w2, b2))
    h = _leaky(conv(h, w3, b3))
    h = _leaky(conv(h, w4, b4))
    y = h.reshape(x.shape[0], x.shape[-1])
    z = y @ fw.T + fb
    return jnp.maximum(z, 0.0) + jnp.log1p(jnp.exp(-jnp.abs(z)))


if __name__ == "__main__":
    key = jax.random.PRNGKey(0)
    k_param, k_x = jax.random.split(key)

    # Small stand-in for the nominal (B, 1, 4000) input.  L is deliberately NOT a
    # multiple of 128 so the pad-to-128 tail handling (4000 -> 4096 path) is exercised.
    B, Cin, L = 4, 1, 200
    params = init_params(k_param, L)
    x = jax.random.normal(k_x, (B, Cin, L), jnp.float32)

    fwd = jax.jit(simple_cnn4_forward)
    out = jax.block_until_ready(fwd(x, params))
    ref = jax.block_until_ready(reference_forward(x, params))

    assert out.shape == (B, L), out.shape
    err = float(jnp.max(jnp.abs(out - ref)))
    # bf16 MXU inputs with f32 accumulation -> looser tolerance than pure f32.
    assert jnp.allclose(out, ref, atol=2e-2, rtol=2e-2), err
    print("KERNEL_OK")
</pallas_src>

<mosaic_0001>
module attributes {stable_mosaic.version = 11 : i64} {
  func.func @conv_stack_kernel(%arg0: i32, %arg1: memref<2x1x256xbf16, #tpu.memory_space<vmem>>, %arg2: memref<25x25xbf16, #tpu.memory_space<vmem>>, %arg3: memref<25x1xf32, #tpu.memory_space<vmem>>, %arg4: memref<25x375xbf16, #tpu.memory_space<vmem>>, %arg5: memref<25x1xf32, #tpu.memory_space<vmem>>, %arg6: memref<25x375xbf16, #tpu.memory_space<vmem>>, %arg7: memref<25x1xf32, #tpu.memory_space<vmem>>, %arg8: memref<1x125xbf16, #tpu.memory_space<vmem>>, %arg9: memref<1x1xf32, #tpu.memory_space<vmem>>, %arg10: memref<2x1x256xbf16, #tpu.memory_space<vmem>>, %arg11: memref<2x25x512xbf16, #tpu.memory_space<vmem>>) attributes {dimension_semantics = [#tpu.dimension_semantics<parallel>], iteration_bounds = array<i64: 2>, scalar_prefetch = 0 : i64, scratch_operands = 1 : i64, tpu.core_type = #tpu.core_type<tc>, window_params = [{transform_indices = @transform_0, window_bounds = array<i64: 2, 1, 256>}, {pipeline_mode = #tpu.pipeline_mode<synchronous>, transform_indices = @transform_1, window_bounds = array<i64: 25, 25>}, {pipeline_mode = #tpu.pipeline_mode<synchronous>, transform_indices = @transform_2, window_bounds = array<i64: 25, 1>}, {pipeline_mode = #tpu.pipeline_mode<synchronous>, transform_indices = @transform_3, window_bounds = array<i64: 25, 375>}, {pipeline_mode = #tpu.pipeline_mode<synchronous>, transform_indices = @transform_4, window_bounds = array<i64: 25, 1>}, {pipeline_mode = #tpu.pipeline_mode<synchronous>, transform_indices = @transform_5, window_bounds = array<i64: 25, 375>}, {pipeline_mode = #tpu.pipeline_mode<synchronous>, transform_indices = @transform_6, window_bounds = array<i64: 25, 1>}, {pipeline_mode = #tpu.pipeline_mode<synchronous>, transform_indices = @transform_7, window_bounds = array<i64: 1, 125>}, {pipeline_mode = #tpu.pipeline_mode<synchronous>, transform_indices = @transform_8, window_bounds = array<i64: 1, 1>}, {transform_indices = @transform_9, window_bounds = array<i64: 2, 1, 256>}]} {
    %cst = arith.constant 0.000000e+00 : bf16
    %0 = vector.broadcast %cst : bf16 to vector<2x25x128xbf16>
    %c0 = arith.constant 0 : index
    %c0_0 = arith.constant 0 : index
    %c0_1 = arith.constant 0 : index
    %1 = vector.load %arg11[%c0, %c0_0, %c0_1] : memref<2x25x512xbf16, #tpu.memory_space<vmem>>, vector<2x25x128xbf16>
    tpu.vector_store %arg11[%c0, %c0_0, %c0_1], %0 {strides = array<i32>} : memref<2x25x512xbf16, #tpu.memory_space<vmem>>, vector<2x25x128xbf16>,
    %c0_2 = arith.constant 0 : index
    %c0_3 = arith.constant 0 : index
    %c384 = arith.constant 384 : index
    %2 = vector.load %arg11[%c0_2, %c0_3, %c384] : memref<2x25x512xbf16, #tpu.memory_space<vmem>>, vector<2x25x128xbf16>
    tpu.vector_store %arg11[%c0_2, %c0_3, %c384], %0 {strides = array<i32>} : memref<2x25x512xbf16, #tpu.memory_space<vmem>>, vector<2x25x128xbf16>,
    %3 = tpu.iota {dimensions = array<i32: 1>} : vector<1x256xi32>
    %c200_i32 = arith.constant 200 : i32
    %4 = vector.broadcast %c200_i32 : i32 to vector<1x256xi32>
    %5 = arith.cmpi slt, %3, %4 : vector<1x256xi32>
    %c0_4 = arith.constant 0 : index
    %c0_5 = arith.constant 0 : index
    %c0_6 = arith.constant 0 : index
    %6 = vector.load %arg1[%c0_4, %c0_5, %c0_6] : memref<2x1x256xbf16, #tpu.memory_space<vmem>>, vector<2x1x256xbf16>
    %c0_7 = arith.constant 0 : index
    %c0_8 = arith.constant 0 : index
    %c128 = arith.constant 128 : index
    %7 = vector.load %arg11[%c0_7, %c0_8, %c128] : memref<2x25x512xbf16, #tpu.memory_space<vmem>>, vector<2x1x256xbf16>
    tpu.vector_store %arg11[%c0_7, %c0_8, %c128], %6 {strides = array<i32>} : memref<2x25x512xbf16, #tpu.memory_space<vmem>>, vector<2x1x256xbf16>,
    %c0_9 = arith.constant 0 : index
    %c0_10 = arith.constant 0 : index
    %8 = vector.load %arg2[%c0_9, %c0_10] : memref<25x25xbf16, #tpu.memory_space<vmem>>, vector<25x25xbf16>
    %c0_11 = arith.constant 0 : index
    %c0_12 = arith.constant 0 : index
    %9 = vector.load %arg4[%c0_11, %c0_12] : memref<25x375xbf16, #tpu.memory_space<vmem>>, vector<25x375xbf16>
    %c0_13 = arith.constant 0 : index
    %c0_14 = arith.constant 0 : index
    %10 = vector.load %arg6[%c0_13, %c0_14] : memref<25x375xbf16, #tpu.memory_space<vmem>>, vector<25x375xbf16>
    %c0_15 = arith.constant 0 : index
    %c0_16 = arith.constant 0 : index
    %11 = vector.load %arg8[%c0_15, %c0_16] : memref<1x125xbf16, #tpu.memory_space<vmem>>, vector<1x125xbf16>
    %c0_17 = arith.constant 0 : index
    %c0_18 = arith.constant 0 : index
    %12 = vector.load %arg3[%c0_17, %c0_18] : memref<25x1xf32, #tpu.memory_space<vmem>>, vector<25x1xf32>
    %c0_19 = arith.constant 0 : index
    %c0_20 = arith.constant 0 : index
    %13 = vector.load %arg5[%c0_19, %c0_20] : memref<25x1xf32, #tpu.memory_space<vmem>>, vector<25x1xf32>
    %c0_21 = arith.constant 0 : index
    %c0_22 = arith.constant 0 : index
    %14 = vector.load %arg7[%c0_21, %c0_22] : memref<25x1xf32, #tpu.memory_space<vmem>>, vector<25x1xf32>
    %c0_23 = arith.constant 0 : index
    %c0_24 = arith.constant 0 : index
    %15 = vector.load %arg9[%c0_23, %c0_24] : memref<1x1xf32, #tpu.memory_space<vmem>>, vector<1x1xf32>
    %c0_25 = arith.constant 0 : index
    %c0_26 = arith.constant 0 : index
    %c116 = arith.constant 116 : index
    %16 = vector.load %arg11[%c0_25, %c0_26, %c116] : memref<2x25x512xbf16, #tpu.memory_space<vmem>>, vector<1x1x256xbf16>
    %17 = vector.shape_cast %16 : vector<1x1x256xbf16> to vector<1x256xbf16>
    %c0_27 = arith.constant 0 : index
    %c0_28 = arith.constant 0 : index
    %c117 = arith.constant 117 : index
    %18 = vector.load %arg11[%c0_27, %c0_28, %c117] : memref<2x25x512xbf16, #tpu.memory_space<vmem>>, vector<1x1x256xbf16>
    %19 = vector.shape_cast %18 : vector<1x1x256xbf16> to vector<1x256xbf16>
    %c0_29 = arith.constant 0 : index
    %c0_30 = arith.constant 0 : index
    %c118 = arith.constant 118 : index
    %20 = vector.load %arg11[%c0_29, %c0_30, %c118] : memref<2x25x512xbf16, #tpu.memory_space<vmem>>, vector<1x1x256xbf16>
    %21 = vector.shape_cast %20 : vector<1x1x256xbf16> to vector<1x256xbf16>
    %c0_31 = arith.constant 0 : index
    %c0_32 = arith.constant 0 : index
    %c119 = arith.constant 119 : index
    %22 = vector.load %arg11[%c0_31, %c0_32, %c119] : memref<2x25x512xbf16, #tpu.memory_space<vmem>>, vector<1x1x256xbf16>
    %23 = vector.shape_cast %22 : vector<1x1x256xbf16> to vector<1x256xbf16>
    %c0_33 = arith.constant 0 : index
    %c0_34 = arith.constant 0 : index
    %c120 = arith.constant 120 : index
    %24 = vector.load %arg11[%c0_33, %c0_34, %c120] : memref<2x25x512xbf16, #tpu.memory_space<vmem>>, vector<1x1x256xbf16>
    %25 = vector.shape_cast %24 : vector<1x1x256xbf16> to vector<1x256xbf16>
    %c0_35 = arith.constant 0 : index
    %c0_36 = arith.constant 0 : index
    %c121 = arith.constant 121 : index
    %26 = vector.load %arg11[%c0_35, %c0_36, %c121] : memref<2x25x512xbf16, #tpu.memory_space<vmem>>, vector<1x1x256xbf16>
    %27 = vector.shape_cast %26 : vector<1x1x256xbf16> to vector<1x256xbf16>
    %c0_37 = arith.constant 0 : index
    %c0_38 = arith.constant 0 : index
    %c122 = arith.constant 122 : index
    %28 = vector.load %arg11[%c0_37, %c0_38, %c122] : memref<2x25x512xbf16, #tpu.memory_space<vmem>>, vector<1x1x256xbf16>
    %29 = vector.shape_cast %28 : vector<1x1x256xbf16> to vector<1x256xbf16>
    %c0_39 = arith.constant 0 : index
    %c0_40 = arith.constant 0 : index
    %c123 = arith.constant 123 : index
    %30 = vector.load %arg11[%c0_39, %c0_40, %c123] : memref<2x25x512xbf16, #tpu.memory_space<vmem>>, vector<1x1x256xbf16>
    %31 = vector.shape_cast %30 : vector<1x1x256xbf16> to vector<1x256xbf16>
    %c0_41 = arith.constant 0 : index
    %c0_42 = arith.constant 0 : index
    %c124 = arith.constant 124 : index
    %32 = vector.load %arg11[%c0_41, %c0_42, %c124] : memref<2x25x512xbf16, #tpu.memory_space<vmem>>, vector<1x1x256xbf16>
    %33 = vector.shape_cast %32 : vector<1x1x256xbf16> to vector<1x256xbf16>
    %c0_43 = arith.constant 0 : index
    %c0_44 = arith.constant 0 : index
    %c125 = arith.constant 125 : index
    %34 = vector.load %arg11[%c0_43, %c0_44, %c125] : memref<2x25x512xbf16, #tpu.memory_space<vmem>>, vector<1x1x256xbf16>
    %35 = vector.shape_cast %34 : vector<1x1x256xbf16> to vector<1x256xbf16>
    %c0_45 = arith.constant 0 : index
    %c0_46 = arith.constant 0 : index
    %c126 = arith.constant 126 : index
    %36 = vector.load %arg11[%c0_45, %c0_46, %c126] : memref<2x25x512xbf16, #tpu.memory_space<vmem>>, vector<1x1x256xbf16>
    %37 = vector.shape_cast %36 : vector<1x1x256xbf16> to vector<1x256xbf16>
    %c0_47 = arith.constant 0 : index
    %c0_48 = arith.constant 0 : index
    %c127 = arith.constant 127 : index
    %38 = vector.load %arg11[%c0_47, %c0_48, %c127] : memref<2x25x512xbf16, #tpu.memory_space<vmem>>, vector<1x1x256xbf16>
    %39 = vector.shape_cast %38 : vector<1x1x256xbf16> to vector<1x256xbf16>
    %c0_49 = arith.constant 0 : index
    %c0_50 = arith.constant 0 : index
    %c128_51 = arith.constant 128 : index
    %40 = vector.load %arg11[%c0_49, %c0_50, %c128_51] : memref<2x25x512xbf16, #tpu.memory_space<vmem>>, vector<1x1x256xbf16>
    %41 = vector.shape_cast %40 : vector<1x1x256xbf16> to vector<1x256xbf16>
    %c0_52 = arith.constant 0 : index
    %c0_53 = arith.constant 0 : index
    %c129 = arith.constant 129 : index
    %42 = vector.load %arg11[%c0_52, %c0_53, %c129] : memref<2x25x512xbf16, #tpu.memory_space<vmem>>, vector<1x1x256xbf16>
    %43 = vector.shape_cast %42 : vector<1x1x256xbf16> to vector<1x256xbf16>
    %c0_54 = arith.constant 0 : index
    %c0_55 = arith.constant 0 : index
    %c130 = arith.constant 130 : index
    %44 = vector.load %arg11[%c0_54, %c0_55, %c130] : memref<2x25x512xbf16, #tpu.memory_space<vmem>>, vector<1x1x256xbf16>
    %45 = vector.shape_cast %44 : vector<1x1x256xbf16> to vector<1x256xbf16>
    %c0_56 = arith.constant 0 : index
    %c0_57 = arith.constant 0 : index
    %c131 = arith.constant 131 : index
    %46 = vector.load %arg11[%c0_56, %c0_57, %c131] : memref<2x25x512xbf16, #tpu.memory_space<vmem>>, vector<1x1x256xbf16>
    %47 = vector.shape_cast %46 : vector<1x1x256xbf16> to vector<1x256xbf16>
    %c0_58 = arith.constant 0 : index
    %c0_59 = arith.constant 0 : index
    %c132 = arith.constant 132 : index
    %48 = vector.load %arg11[%c0_58, %c0_59, %c132] : memref<2x25x512xbf16, #tpu.memory_space<vmem>>, vector<1x1x256xbf16>
    %49 = vector.shape_cast %48 : vector<1x1x256xbf16> to vector<1x256xbf16>
    %c0_60 = arith.constant 0 : index
    %c0_61 = arith.constant 0 : index
    %c133 = arith.constant 133 : index
    %50 = vector.load %arg11[%c0_60, %c0_61, %c133] : memref<2x25x512xbf16, #tpu.memory_space<vmem>>, vector<1x1x256xbf16>
    %51 = vector.shape_cast %50 : vector<1x1x256xbf16> to vector<1x256xbf16>
    %c0_62 = arith.constant 0 : index
    %c0_63 = arith.constant 0 : index
    %c134 = arith.constant 134 : index
    %52 = vector.load %arg11[%c0_62, %c0_63, %c134] : memref<2x25x512xbf16, #tpu.memory_space<vmem>>, vector<1x1x256xbf16>
    %53 = vector.shape_cast %52 : vector<1x1x256xbf16> to vector<1x256xbf16>
    %c0_64 = arith.constant 0 : index
    %c0_65 = arith.constant 0 : index
    %c135 = arith.constant 135 : index
    %54 = vector.load %arg11[%c0_64, %c0_65, %c135] : memref<2x25x512xbf16, #tpu.memory_space<vmem>>, vector<1x1x256xbf16>
    %55 = vector.shape_cast %54 : vector<1x1x256xbf16> to vector<1x256xbf16>
    %c0_66 = arith.constant 0 : index
    %c0_67 = arith.constant 0 : index
    %c136 = arith.constant 136 : index
    %56 = vector.load %arg11[%c0_66, %c0_67, %c136] : memref<2x25x512xbf16, #tpu.memory_space<vmem>>, vector<1x1x256xbf16>
    %57 = vector.shape_cast %56 : vector<1x1x256xbf16> to vector<1x256xbf16>
    %c0_68 = arith.constant 0 : index
    %c0_69 = arith.constant 0 : index
    %c137 = arith.constant 137 : index
    %58 = vector.load %arg11[%c0_68, %c0_69, %c137] : memref<2x25x512xbf16, #tpu.memory_space<vmem>>, vector<1x1x256xbf16>
    %59 = vector.shape_cast %58 : vector<1x1x256xbf16> to vector<1x256xbf16>
    %c0_70 = arith.constant 0 : index
    %c0_71 = arith.constant 0 : index
    %c138 = arith.constant 138 : index
    %60 = vector.load %arg11[%c0_70, %c0_71, %c138] : memref<2x25x512xbf16, #tpu.memory_space<vmem>>, vector<1x1x256xbf16>
    %61 = vector.shape_cast %60 : vector<1x1x256xbf16> to vector<1x256xbf16>
    %c0_72 = arith.constant 0 : index
    %c0_73 = arith.constant 0 : index
    %c139 = arith.constant 139 : index
    %62 = vector.load %arg11[%c0_72, %c0_73, %c139] : memref<2x25x512xbf16, #tpu.memory_space<vmem>>, vector<1x1x256xbf16>
    %63 = vector.shape_cast %62 : vector<1x1x256xbf16> to vector<1x256xbf16>
    %c0_74 = arith.constant 0 : index
    %c0_75 = arith.constant 0 : index
    %c140 = arith.constant 140 : index
    %64 = vector.load %arg11[%c0_74, %c0_75, %c140] : memref<2x25x512xbf16, #tpu.memory_space<vmem>>, vector<1x1x256xbf16>
    %65 = vector.shape_cast %64 : vector<1x1x256xbf16> to vector<1x256xbf16>
    %66 = tpu.concatenate %17, %19, %21, %23, %25, %27, %29, %31, %33, %35, %37, %39, %41, %43, %45, %47 in 0 : vector<1x256xbf16>, vector<1x256xbf16>, vector<1x256xbf16>, vector<1x256xbf16>, vector<1x256xbf16>, vector<1x256xbf16>, vector<1x256xbf16>, vector<1x256xbf16>, vector<1x256xbf16>, vector<1x256xbf16>, vector<1x256xbf16>, vector<1x256xbf16>, vector<1x256xbf16>, vector<1x256xbf16>, vector<1x256xbf16>, vector<1x256xbf16> -> vector<16x256xbf16>
    %67 = tpu.concatenate %49, %51, %53, %55, %57, %59, %61, %63, %65 in 0 : vector<1x256xbf16>, vector<1x256xbf16>, vector<1x256xbf16>, vector<1x256xbf16>, vector<1x256xbf16>, vector<1x256xbf16>, vector<1x256xbf16>, vector<1x256xbf16>, vector<1x256xbf16> -> vector<9x256xbf16>
    %68 = tpu.concatenate %66, %67 in 0 : vector<16x256xbf16>, vector<9x256xbf16> -> vector<25x256xbf16>
    %cst_76 = arith.constant dense<0.000000e+00> : vector<25x256xf32>
    %69 = tpu.matmul %8, %68, %cst_76 {dimension_numbers = #tpu.dot_dimension_numbers<[1], [0], [0], [1], [0, 0, 1, 1], [], []>} : vector<25x25xbf16>, vector<25x256xbf16>, vector<25x256xf32> -> vector<25x256xf32>
    %70 = vector.broadcast %12 : vector<25x1xf32> to vector<25x256xf32>
    %71 = arith.addf %69, %70 : vector<25x256xf32>
    %cst_77 = arith.constant 0.000000e+00 : f32
    %72 = vector.broadcast %cst_77 : f32 to vector<25x256xf32>
    %73 = arith.cmpf ogt, %71, %72 : vector<25x256xf32>
    %cst_78 = arith.constant 0.00999999977 : f32
    %74 = vector.broadcast %cst_78 : f32 to vector<25x256xf32>
    %75 = arith.mulf %74, %71 : vector<25x256xf32>
    %76 = arith.select %73, %71, %75 : vector<25x256xi1>, vector<25x256xf32>
    %cst_79 = arith.constant 0.000000e+00 : f32
    %77 = vector.shape_cast %5 : vector<1x256xi1> to vector<1x256xi1>
    %78 = vector.broadcast %77 : vector<1x256xi1> to vector<25x256xi1>
    %79 = vector.broadcast %cst_79 : f32 to vector<25x256xf32>
    %80 = arith.select %78, %76, %79 : vector<25x256xi1>, vector<25x256xf32>
    %81 = vector.shape_cast %80 : vector<25x256xf32> to vector<1x25x256xf32>
    %82 = arith.truncf %81 : vector<1x25x256xf32> to vector<1x25x256xbf16>
    %c0_80 = arith.constant 0 : index
    %c0_81 = arith.constant 0 : index
    %c128_82 = arith.constant 128 : index
    %83 = vector.load %arg11[%c0_80, %c0_81, %c128_82] : memref<2x25x512xbf16, #tpu.memory_space<vmem>>, vector<1x25x256xbf16>
    tpu.vector_store %arg11[%c0_80, %c0_81, %c128_82], %82 {strides = array<i32>} : memref<2x25x512xbf16, #tpu.memory_space<vmem>>, vector<1x25x256xbf16>,
    %c0_83 = arith.constant 0 : index
    %c0_84 = arith.constant 0 : index
    %c121_85 = arith.constant 121 : index
    %84 = vector.load %arg11[%c0_83, %c0_84, %c121_85] : memref<2x25x512xbf16, #tpu.memory_space<vmem>>, vector<1x25x256xbf16>
    %85 = vector.shape_cast %84 : vector<1x25x256xbf16> to vector<25x256xbf16>
    %c0_86 = arith.constant 0 : index
    %c0_87 = arith.constant 0 : index
    %c122_88 = arith.constant 122 : index
    %86 = vector.load %arg11[%c0_86, %c0_87, %c122_88] : memref<2x25x512xbf16, #tpu.memory_space<vmem>>, vector<1x25x256xbf16>
    %87 = vector.shape_cast %86 : vector<1x25x256xbf16> to vector<25x256xbf16>
    %c0_89 = arith.constant 0 : index
    %c0_90 = arith.constant 0 : index
    %c123_91 = arith.constant 123 : index
    %88 = vector.load %arg11[%c0_89, %c0_90, %c123_91] : memref<2x25x512xbf16, #tpu.memory_space<vmem>>, vector<1x25x256xbf16>
    %89 = vector.shape_cast %88 : vector<1x25x256xbf16> to vector<25x256xbf16>
    %c0_92 = arith.constant 0 : index
    %c0_93 = arith.constant 0 : index
    %c124_94 = arith.constant 124 : index
    %90 = vector.load %arg11[%c0_92, %c0_93, %c124_94] : memref<2x25x512xbf16, #tpu.memory_space<vmem>>, vector<1x25x256xbf16>
    %91 = vector.shape_cast %90 : vector<1x25x256xbf16> to vector<25x256xbf16>
    %c0_95 = arith.constant 0 : index
    %c0_96 = arith.constant 0 : index
    %c125_97 = arith.constant 125 : index
    %92 = vector.load %arg11[%c0_95, %c0_96, %c125_97] : memref<2x25x512xbf16, #tpu.memory_space<vmem>>, vector<1x25x256xbf16>
    %93 = vector.shape_cast %92 : vector<1x25x256xbf16> to vector<25x256xbf16>
    %c0_98 = arith.constant 0 : index
    %c0_99 = arith.constant 0 : index
    %c126_100 = arith.constant 126 : index
    %94 = vector.load %arg11[%c0_98, %c0_99, %c126_100] : memref<2x25x512xbf16, #tpu.memory_space<vmem>>, vector<1x25x256xbf16>
    %95 = vector.shape_cast %94 : vector<1x25x256xbf16> to vector<25x256xbf16>
    %c0_101 = arith.constant 0 : index
    %c0_102 = arith.constant 0 : index
    %c127_103 = arith.constant 127 : index
    %96 = vector.load %arg11[%c0_101, %c0_102, %c127_103] : memref<2x25x512xbf16, #tpu.memory_space<vmem>>, vector<1x25x256xbf16>
    %97 = vector.shape_cast %96 : vector<1x25x256xbf16> to vector<25x256xbf16>
    %c0_104 = arith.constant 0 : index
    %c0_105 = arith.constant 0 : index
    %c128_106 = arith.constant 128 : index
    %98 = vector.load %arg11[%c0_104, %c0_105, %c128_106] : memref<2x25x512xbf16, #tpu.memory_space<vmem>>, vector<1x25x256xbf16>
    %99 = vector.shape_cast %98 : vector<1x25x256xbf16> to vector<25x256xbf16>
    %c0_107 = arith.constant 0 : index
    %c0_108 = arith.constant 0 : index
    %c129_109 = arith.constant 129 : index
    %100 = vector.load %arg11[%c0_107, %c0_108, %c129_109] : memref<2x25x512xbf16, #tpu.memory_space<vmem>>, vector<1x25x256xbf16>
    %101 = vector.shape_cast %100 : vector<1x25x256xbf16> to vector<25x256xbf16>
    %c0_110 = arith.constant 0 : index
    %c0_111 = arith.constant 0 : index
    %c130_112 = arith.constant 130 : index
    %102 = vector.load %arg11[%c0_110, %c0_111, %c130_112] : memref<2x25x512xbf16, #tpu.memory_space<vmem>>, vector<1x25x256xbf16>
    %103 = vector.shape_cast %102 : vector<1x25x256xbf16> to vector<25x256xbf16>
    %c0_113 = arith.constant 0 : index
    %c0_114 = arith.constant 0 : index
    %c131_115 = arith.constant 131 : index
    %104 = vector.load %arg11[%c0_113, %c0_114, %c131_115] : memref<2x25x512xbf16, #tpu.memory_space<vmem>>, vector<1x25x256xbf16>
    %105 = vector.shape_cast %104 : vector<1x25x256xbf16> to vector<25x256xbf16>
    %c0_116 = arith.constant 0 : index
    %c0_117 = arith.constant 0 : index
    %c132_118 = arith.constant 132 : index
    %106 = vector.load %arg11[%c0_116, %c0_117, %c132_118] : memref<2x25x512xbf16, #tpu.memory_space<vmem>>, vector<1x25x256xbf16>
    %107 = vector.shape_cast %106 : vector<1x25x256xbf16> to vector<25x256xbf16>
    %c0_119 = arith.constant 0 : index
    %c0_120 = arith.constant 0 : index
    %c133_121 = arith.constant 133 : index
    %108 = vector.load %arg11[%c0_119, %c0_120, %c133_121] : memref<2x25x512xbf16, #tpu.memory_space<vmem>>, vector<1x25x256xbf16>
    %109 = vector.shape_cast %108 : vector<1x25x256xbf16> to vector<25x256xbf16>
    %c0_122 = arith.constant 0 : index
    %c0_123 = arith.constant 0 : index
    %c134_124 = arith.constant 134 : index
    %110 = vector.load %arg11[%c0_122, %c0_123, %c134_124] : memref<2x25x512xbf16, #tpu.memory_space<vmem>>, vector<1x25x256xbf16>
    %111 = vector.shape_cast %110 : vector<1x25x256xbf16> to vector<25x256xbf16>
    %c0_125 = arith.constant 0 : index
    %c0_126 = arith.constant 0 : index
    %c135_127 = arith.constant 135 : index
    %112 = vector.load %arg11[%c0_125, %c0_126, %c135_127] : memref<2x25x512xbf16, #tpu.memory_space<vmem>>, vector<1x25x256xbf16>
    %113 = vector.shape_cast %112 : vector<1x25x256xbf16> to vector<25x256xbf16>
    %114 = tpu.concatenate %85, %87, %89, %91, %93, %95, %97, %99, %101, %103, %105, %107, %109, %111, %113 in 0 : vector<25x256xbf16>, vector<25x256xbf16>, vector<25x256xbf16>, vector<25x256xbf16>, vector<25x256xbf16>, vector<25x256xbf16>, vector<25x256xbf16>, vector<25x256xbf16>, vector<25x256xbf16>, vector<25x256xbf16>, vector<25x256xbf16>, vector<25x256xbf16>, vector<25x256xbf16>, vector<25x256xbf16>, vector<25x256xbf16> -> vector<375x256xbf16>
    %cst_128 = arith.constant dense<0.000000e+00> : vector<25x256xf32>
    %115 = tpu.matmul %9, %114, %cst_128 {dimension_numbers = #tpu.dot_dimension_numbers<[1], [0], [0], [1], [0, 0, 1, 1], [], []>} : vector<25x375xbf16>, vector<375x256xbf16>, vector<25x256xf32> -> vector<25x256xf32>
    %116 = vector.broadcast %13 : vector<25x1xf32> to vector<25x256xf32>
    %117 = arith.addf %115, %116 : vector<25x256xf32>
    %cst_129 = arith.constant 0.000000e+00 : f32
    %118 = vector.broadcast %cst_129 : f32 to vector<25x256xf32>
    %119 = arith.cmpf ogt, %117, %118 : vector<25x256xf32>
    %cst_130 = arith.constant 0.00999999977 : f32
    %120 = vector.broadcast %cst_130 : f32 to vector<25x256xf32>
    %121 = arith.mulf %120, %117 : vector<25x256xf32>
    %122 = arith.select %119, %117, %121 : vector<25x256xi1>, vector<25x256xf32>
    %cst_131 = arith.constant 0.000000e+00 : f32
    %123 = vector.shape_cast %5 : vector<1x256xi1> to vector<1x256xi1>
    %124 = vector.broadcast %123 : vector<1x256xi1> to vector<25x256xi1>
    %125 = vector.broadcast %cst_131 : f32 to vector<25x256xf32>
    %126 = arith.select %124, %122, %125 : vector<25x256xi1>, vector<25x256xf32>
    %127 = vector.shape_cast %126 : vector<25x256xf32> to vector<1x25x256xf32>
    %128 = arith.truncf %127 : vector<1x25x256xf32> to vector<1x25x256xbf16>
    %c0_132 = arith.constant 0 : index
    %c0_133 = arith.constant 0 : index
    %c128_134 = arith.constant 128 : index
    %129 = vector.load %arg11[%c0_132, %c0_133, %c128_134] : memref<2x25x512xbf16, #tpu.memory_space<vmem>>, vector<1x25x256xbf16>
    tpu.vector_store %arg11[%c0_132, %c0_133, %c128_134], %128 {strides = array<i32>} : memref<2x25x512xbf16, #tpu.memory_space<vmem>>, vector<1x25x256xbf16>,
    %c0_135 = arith.constant 0 : index
    %c0_136 = arith.constant 0 : index
    %c121_137 = arith.constant 121 : index
    %130 = vector.load %arg11[%c0_135, %c0_136, %c121_137] : memref<2x25x512xbf16, #tpu.memory_space<vmem>>, vector<1x25x256xbf16>
    %131 = vector.shape_cast %130 : vector<1x25x256xbf16> to vector<25x256xbf16>
    %c0_138 = arith.constant 0 : index
    %c0_139 = arith.constant 0 : index
    %c122_140 = arith.constant 122 : index
    %132 = vector.load %arg11[%c0_138, %c0_139, %c122_140] : memref<2x25x512xbf16, #tpu.memory_space<vmem>>, vector<1x25x256xbf16>
    %133 = vector.shape_cast %132 : vector<1x25x256xbf16> to vector<25x256xbf16>
    %c0_141 = arith.constant 0 : index
    %c0_142 = arith.constant 0 : index
    %c123_143 = arith.constant 123 : index
    %134 = vector.load %arg11[%c0_141, %c0_142, %c123_143] : memref<2x25x512xbf16, #tpu.memory_space<vmem>>, vector<1x25x256xbf16>
    %135 = vector.shape_cast %134 : vector<1x25x256xbf16> to vector<25x256xbf16>
    %c0_144 = arith.constant 0 : index
    %c0_145 = arith.constant 0 : index
    %c124_146 = arith.constant 124 : index
    %136 = vector.load %arg11[%c0_144, %c0_145, %c124_146] : memref<2x25x512xbf16, #tpu.memory_space<vmem>>, vector<1x25x256xbf16>
    %137 = vector.shape_cast %136 : vector<1x25x256xbf16> to vector<25x256xbf16>
    %c0_147 = arith.constant 0 : index
    %c0_148 = arith.constant 0 : index
    %c125_149 = arith.constant 125 : index
    %138 = vector.load %arg11[%c0_147, %c0_148, %c125_149] : memref<2x25x512xbf16, #tpu.memory_space<vmem>>, vector<1x25x256xbf16>
    %139 = vector.shape_cast %138 : vector<1x25x256xbf16> to vector<25x256xbf16>
    %c0_150 = arith.constant 0 : index
    %c0_151 = arith.constant 0 : index
    %c126_152 = arith.constant 126 : index
    %140 = vector.load %arg11[%c0_150, %c0_151, %c126_152] : memref<2x25x512xbf16, #tpu.memory_space<vmem>>, vector<1x25x256xbf16>
    %141 = vector.shape_cast %140 : vector<1x25x256xbf16> to vector<25x256xbf16>
    %c0_153 = arith.constant 0 : index
    %c0_154 = arith.constant 0 : index
    %c127_155 = arith.constant 127 : index
    %142 = vector.load %arg11[%c0_153, %c0_154, %c127_155] : memref<2x25x512xbf16, #tpu.memory_space<vmem>>, vector<1x25x256xbf16>
    %143 = vector.shape_cast %142 : vector<1x25x256xbf16> to vector<25x256xbf16>
    %c0_156 = arith.constant 0 : index
    %c0_157 = arith.constant 0 : index
    %c128_158 = arith.constant 128 : index
    %144 = vector.load %arg11[%c0_156, %c0_157, %c128_158] : memref<2x25x512xbf16, #tpu.memory_space<vmem>>, vector<1x25x256xbf16>
    %145 = vector.shape_cast %144 : vector<1x25x256xbf16> to vector<25x256xbf16>
    %c0_159 = arith.constant 0 : index
    %c0_160 = arith.constant 0 : index
    %c129_161 = arith.constant 129 : index
    %146 = vector.load %arg11[%c0_159, %c0_160, %c129_161] : memref<2x25x512xbf16, #tpu.memory_space<vmem>>, vector<1x25x256xbf16>
    %147 = vector.shape_cast %146 : vector<1x25x256xbf16> to vector<25x256xbf16>
    %c0_162 = arith.constant 0 : index
    %c0_163 = arith.constant 0 : index
    %c130_164 = arith.constant 130 : index
    %148 = vector.load %arg11[%c0_162, %c0_163, %c130_164] : memref<2x25x512xbf16, #tpu.memory_space<vmem>>, vector<1x25x256xbf16>
    %149 = vector.shape_cast %148 : vector<1x25x256xbf16> to vector<25x256xbf16>
    %c0_165 = arith.constant 0 : index
    %c0_166 = arith.constant 0 : index
    %c131_167 = arith.constant 131 : index
    %150 = vector.load %arg11[%c0_165, %c0_166, %c131_167] : memref<2x25x512xbf16, #tpu.memory_space<vmem>>, vector<1x25x256xbf16>
    %151 = vector.shape_cast %150 : vector<1x25x256xbf16> to vector<25x256xbf16>
    %c0_168 = arith.constant 0 : index
    %c0_169 = arith.constant 0 : index
    %c132_170 = arith.constant 132 : index
    %152 = vector.load %arg11[%c0_168, %c0_169, %c132_170] : memref<2x25x512xbf16, #tpu.memory_space<vmem>>, vector<1x25x256xbf16>
    %153 = vector.shape_cast %152 : vector<1x25x256xbf16> to vector<25x256xbf16>
    %c0_171 = arith.constant 0 : index
    %c0_172 = arith.constant 0 : index
    %c133_173 = arith.constant 133 : index
    %154 = vector.load %arg11[%c0_171, %c0_172, %c133_173] : memref<2x25x512xbf16, #tpu.memory_space<vmem>>, vector<1x25x256xbf16>
    %155 = vector.shape_cast %154 : vector<1x25x256xbf16> to vector<25x256xbf16>
    %c0_174 = arith.constant 0 : index
    %c0_175 = arith.constant 0 : index
    %c134_176 = arith.constant 134 : index
    %156 = vector.load %arg11[%c0_174, %c0_175, %c134_176] : memref<2x25x512xbf16, #tpu.memory_space<vmem>>, vector<1x25x256xbf16>
    %157 = vector.shape_cast %156 : vector<1x25x256xbf16> to vector<25x256xbf16>
    %c0_177 = arith.constant 0 : index
    %c0_178 = arith.constant 0 : index
    %c135_179 = arith.constant 135 : index
    %158 = vector.load %arg11[%c0_177, %c0_178, %c135_179] : memref<2x25x512xbf16, #tpu.memory_space<vmem>>, vector<1x25x256xbf16>
    %159 = vector.shape_cast %158 : vector<1x25x256xbf16> to vector<25x256xbf16>
    %160 = tpu.concatenate %131, %133, %135, %137, %139, %141, %143, %145, %147, %149, %151, %153, %155, %157, %159 in 0 : vector<25x256xbf16>, vector<25x256xbf16>, vector<25x256xbf16>, vector<25x256xbf16>, vector<25x256xbf16>, vector<25x256xbf16>, vector<25x256xbf16>, vector<25x256xbf16>, vector<25x256xbf16>, vector<25x256xbf16>, vector<25x256xbf16>, vector<25x256xbf16>, vector<25x256xbf16>, vector<25x256xbf16>, vector<25x256xbf16> -> vector<375x256xbf16>
    %cst_180 = arith.constant dense<0.000000e+00> : vector<25x256xf32>
    %161 = tpu.matmul %10, %160, %cst_180 {dimension_numbers = #tpu.dot_dimension_numbers<[1], [0], [0], [1], [0, 0, 1, 1], [], []>} : vector<25x375xbf16>, vector<375x256xbf16>, vector<25x256xf32> -> vector<25x256xf32>
    %162 = vector.broadcast %14 : vector<25x1xf32> to vector<25x256xf32>
    %163 = arith.addf %161, %162 : vector<25x256xf32>
    %cst_181 = arith.constant 0.000000e+00 : f32
    %164 = vector.broadcast %cst_181 : f32 to vector<25x256xf32>
    %165 = arith.cmpf ogt, %163, %164 : vector<25x256xf32>
    %cst_182 = arith.constant 0.00999999977 : f32
    %166 = vector.broadcast %cst_182 : f32 to vector<25x256xf32>
    %167 = arith.mulf %166, %163 : vector<25x256xf32>
    %168 = arith.select %165, %163, %167 : vector<25x256xi1>, vector<25x256xf32>
    %cst_183 = arith.constant 0.000000e+00 : f32
    %169 = vector.shape_cast %5 : vector<1x256xi1> to vector<1x256xi1>
    %170 = vector.broadcast %169 : vector<1x256xi1> to vector<25x256xi1>
    %171 = vector.broadcast %cst_183 : f32 to vector<25x256xf32>
    %172 = arith.select %170, %168, %171 : vector<25x256xi1>, vector<25x256xf32>
    %173 = vector.shape_cast %172 : vector<25x256xf32> to vector<1x25x256xf32>
    %174 = arith.truncf %173 : vector<1x25x256xf32> to vector<1x25x256xbf16>
    %c0_184 = arith.constant 0 : index
    %c0_185 = arith.constant 0 : index
    %c128_186 = arith.constant 128 : index
    %175 = vector.load %arg11[%c0_184, %c0_185, %c128_186] : memref<2x25x512xbf16, #tpu.memory_space<vmem>>, vector<1x25x256xbf16>
    tpu.vector_store %arg11[%c0_184, %c0_185, %c128_186], %174 {strides = array<i32>} : memref<2x25x512xbf16, #tpu.memory_space<vmem>>, vector<1x25x256xbf16>,
    %c0_187 = arith.constant 0 : index
    %c0_188 = arith.constant 0 : index
    %c126_189 = arith.constant 126 : index
    %176 = vector.load %arg11[%c0_187, %c0_188, %c126_189] : memref<2x25x512xbf16, #tpu.memory_space<vmem>>, vector<1x25x256xbf16>
    %177 = vector.shape_cast %176 : vector<1x25x256xbf16> to vector<25x256xbf16>
    %c0_190 = arith.constant 0 : index
    %c0_191 = arith.constant 0 : index
    %c127_192 = arith.constant 127 : index
    %178 = vector.load %arg11[%c0_190, %c0_191, %c127_192] : memref<2x25x512xbf16, #tpu.memory_space<vmem>>, vector<1x25x256xbf16>
    %179 = vector.shape_cast %178 : vector<1x25x256xbf16> to vector<25x256xbf16>
    %c0_193 = arith.constant 0 : index
    %c0_194 = arith.constant 0 : index
    %c128_195 = arith.constant 128 : index
    %180 = vector.load %arg11[%c0_193, %c0_194, %c128_195] : memref<2x25x512xbf16, #tpu.memory_space<vmem>>, vector<1x25x256xbf16>
    %181 = vector.shape_cast %180 : vector<1x25x256xbf16> to vector<25x256xbf16>
    %c0_196 = arith.constant 0 : index
    %c0_197 = arith.constant 0 : index
    %c129_198 = arith.constant 129 : index
    %182 = vector.load %arg11[%c0_196, %c0_197, %c129_198] : memref<2x25x512xbf16, #tpu.memory_space<vmem>>, vector<1x25x256xbf16>
    %183 = vector.shape_cast %182 : vector<1x25x256xbf16> to vector<25x256xbf16>
    %c0_199 = arith.constant 0 : index
    %c0_200 = arith.constant 0 : index
    %c130_201 = arith.constant 130 : index
    %184 = vector.load %arg11[%c0_199, %c0_200, %c130_201] : memref<2x25x512xbf16, #tpu.memory_space<vmem>>, vector<1x25x256xbf16>
    %185 = vector.shape_cast %184 : vector<1x25x256xbf16> to vector<25x256xbf16>
    %186 = tpu.concatenate %177, %179, %181, %183, %185 in 0 : vector<25x256xbf16>, vector<25x256xbf16>, vector<25x256xbf16>, vector<25x256xbf16>, vector<25x256xbf16> -> vector<125x256xbf16>
    %cst_202 = arith.constant dense<0.000000e+00> : vector<1x256xf32>
    %187 = tpu.matmul %11, %186, %cst_202 {dimension_numbers = #tpu.dot_dimension_numbers<[1], [0], [0], [1], [0, 0, 1, 1], [], []>} : vector<1x125xbf16>, vector<125x256xbf16>, vector<1x256xf32> -> vector<1x256xf32>
    %188 = vector.broadcast %15 : vector<1x1xf32> to vector<1x256xf32>
    %189 = arith.addf %187, %188 : vector<1x256xf32>
    %cst_203 = arith.constant 0.000000e+00 : f32
    %190 = vector.broadcast %cst_203 : f32 to vector<1x256xf32>
    %191 = arith.cmpf ogt, %189, %190 : vector<1x256xf32>
    %cst_204 = arith.constant 0.00999999977 : f32
    %192 = vector.broadcast %cst_204 : f32 to vector<1x256xf32>
    %193 = arith.mulf %192, %189 : vector<1x256xf32>
    %194 = arith.select %191, %189, %193 : vector<1x256xi1>, vector<1x256xf32>
    %cst_205 = arith.constant 0.000000e+00 : f32
    %195 = vector.broadcast %cst_205 : f32 to vector<1x256xf32>
    %196 = arith.select %5, %194, %195 : vector<1x256xi1>, vector<1x256xf32>
    %197 = vector.shape_cast %196 : vector<1x256xf32> to vector<1x1x256xf32>
    %198 = arith.truncf %197 : vector<1x1x256xf32> to vector<1x1x256xbf16>
    %c0_206 = arith.constant 0 : index
    %c0_207 = arith.constant 0 : index
    %c0_208 = arith.constant 0 : index
    %199 = vector.load %arg10[%c0_206, %c0_207, %c0_208] : memref<2x1x256xbf16, #tpu.memory_space<vmem>>, vector<1x1x256xbf16>
    tpu.vector_store %arg10[%c0_206, %c0_207, %c0_208], %198 {strides = array<i32>} : memref<2x1x256xbf16, #tpu.memory_space<vmem>>, vector<1x1x256xbf16>,
    %c1 = arith.constant 1 : index
    %c0_209 = arith.constant 0 : index
    %c116_210 = arith.constant 116 : index
    %200 = vector.load %arg11[%c1, %c0_209, %c116_210] : memref<2x25x512xbf16, #tpu.memory_space<vmem>>, vector<1x1x256xbf16>
    %201 = vector.shape_cast %200 : vector<1x1x256xbf16> to vector<1x256xbf16>
    %c1_211 = arith.constant 1 : index
    %c0_212 = arith.constant 0 : index
    %c117_213 = arith.constant 117 : index
    %202 = vector.load %arg11[%c1_211, %c0_212, %c117_213] : memref<2x25x512xbf16, #tpu.memory_space<vmem>>, vector<1x1x256xbf16>
    %203 = vector.shape_cast %202 : vector<1x1x256xbf16> to vector<1x256xbf16>
    %c1_214 = arith.constant 1 : index
    %c0_215 = arith.constant 0 : index
    %c118_216 = arith.constant 118 : index
    %204 = vector.load %arg11[%c1_214, %c0_215, %c118_216] : memref<2x25x512xbf16, #tpu.memory_space<vmem>>, vector<1x1x256xbf16>
    %205 = vector.shape_cast %204 : vector<1x1x256xbf16> to vector<1x256xbf16>
    %c1_217 = arith.constant 1 : index
    %c0_218 = arith.constant 0 : index
    %c119_219 = arith.constant 119 : index
    %206 = vector.load %arg11[%c1_217, %c0_218, %c119_219] : memref<2x25x512xbf16, #tpu.memory_space<vmem>>, vector<1x1x256xbf16>
    %207 = vector.shape_cast %206 : vector<1x1x256xbf16> to vector<1x256xbf16>
    %c1_220 = arith.constant 1 : index
    %c0_221 = arith.constant 0 : index
    %c120_222 = arith.constant 120 : index
    %208 = vector.load %arg11[%c1_220, %c0_221, %c120_222] : memref<2x25x512xbf16, #tpu.memory_space<vmem>>, vector<1x1x256xbf16>
    %209 = vector.shape_cast %208 : vector<1x1x256xbf16> to vector<1x256xbf16>
    %c1_223 = arith.constant 1 : index
    %c0_224 = arith.constant 0 : index
    %c121_225 = arith.constant 121 : index
    %210 = vector.load %arg11[%c1_223, %c0_224, %c121_225] : memref<2x25x512xbf16, #tpu.memory_space<vmem>>, vector<1x1x256xbf16>
    %211 = vector.shape_cast %210 : vector<1x1x256xbf16> to vector<1x256xbf16>
    %c1_226 = arith.constant 1 : index
    %c0_227 = arith.constant 0 : index
    %c122_228 = arith.constant 122 : index
    %212 = vector.load %arg11[%c1_226, %c0_227, %c122_228] : memref<2x25x512xbf16, #tpu.memory_space<vmem>>, vector<1x1x256xbf16>
    %213 = vector.shape_cast %212 : vector<1x1x256xbf16> to vector<1x256xbf16>
    %c1_229 = arith.constant 1 : index
    %c0_230 = arith.constant 0 : index
    %c123_231 = arith.constant 123 : index
    %214 = vector.load %arg11[%c1_229, %c0_230, %c123_231] : memref<2x25x512xbf16, #tpu.memory_space<vmem>>, vector<1x1x256xbf16>
    %215 = vector.shape_cast %214 : vector<1x1x256xbf16> to vector<1x256xbf16>
    %c1_232 = arith.constant 1 : index
    %c0_233 = arith.constant 0 : index
    %c124_234 = arith.constant 124 : index
    %216 = vector.load %arg11[%c1_232, %c0_233, %c124_234] : memref<2x25x512xbf16, #tpu.memory_space<vmem>>, vector<1x1x256xbf16>
    %217 = vector.shape_cast %216 : vector<1x1x256xbf16> to vector<1x256xbf16>
    %c1_235 = arith.constant 1 : index
    %c0_236 = arith.constant 0 : index
    %c125_237 = arith.constant 125 : index
    %218 = vector.load %arg11[%c1_235, %c0_236, %c125_237] : memref<2x25x512xbf16, #tpu.memory_space<vmem>>, vector<1x1x256xbf16>
    %219 = vector.shape_cast %218 : vector<1x1x256xbf16> to vector<1x256xbf16>
    %c1_238 = arith.constant 1 : index
    %c0_239 = arith.constant 0 : index
    %c126_240 = arith.constant 126 : index
    %220 = vector.load %arg11[%c1_238, %c0_239, %c126_240] : memref<2x25x512xbf16, #tpu.memory_space<vmem>>, vector<1x1x256xbf16>
    %221 = vector.shape_cast %220 : vector<1x1x256xbf16> to vector<1x256xbf16>
    %c1_241 = arith.constant 1 : index
    %c0_242 = arith.constant 0 : index
    %c127_243 = arith.constant 127 : index
    %222 = vector.load %arg11[%c1_241, %c0_242, %c127_243] : memref<2x25x512xbf16, #tpu.memory_space<vmem>>, vector<1x1x256xbf16>
    %223 = vector.shape_cast %222 : vector<1x1x256xbf16> to vector<1x256xbf16>
    %c1_244 = arith.constant 1 : index
    %c0_245 = arith.constant 0 : index
    %c128_246 = arith.constant 128 : index
    %224 = vector.load %arg11[%c1_244, %c0_245, %c128_246] : memref<2x25x512xbf16, #tpu.memory_space<vmem>>, vector<1x1x256xbf16>
    %225 = vector.shape_cast %224 : vector<1x1x256xbf16> to vector<1x256xbf16>
    %c1_247 = arith.constant 1 : index
    %c0_248 = arith.constant 0 : index
    %c129_249 = arith.constant 129 : index
    %226 = vector.load %arg11[%c1_247, %c0_248, %c129_249] : memref<2x25x512xbf16, #tpu.memory_space<vmem>>, vector<1x1x256xbf16>
    %227 = vector.shape_cast %226 : vector<1x1x256xbf16> to vector<1x256xbf16>
    %c1_250 = arith.constant 1 : index
    %c0_251 = arith.constant 0 : index
    %c130_252 = arith.constant 130 : index
    %228 = vector.load %arg11[%c1_250, %c0_251, %c130_252] : memref<2x25x512xbf16, #tpu.memory_space<vmem>>, vector<1x1x256xbf16>
    %229 = vector.shape_cast %228 : vector<1x1x256xbf16> to vector<1x256xbf16>
    %c1_253 = arith.constant 1 : index
    %c0_254 = arith.constant 0 : index
    %c131_255 = arith.constant 131 : index
    %230 = vector.load %arg11[%c1_253, %c0_254, %c131_255] : memref<2x25x512xbf16, #tpu.memory_space<vmem>>, vector<1x1x256xbf16>
    %231 = vector.shape_cast %230 : vector<1x1x256xbf16> to vector<1x256xbf16>
    %c1_256 = arith.constant 1 : index
    %c0_257 = arith.constant 0 : index
    %c132_258 = arith.constant 132 : index
    %232 = vector.load %arg11[%c1_256, %c0_257, %c132_258] : memref<2x25x512xbf16, #tpu.memory_space<vmem>>, vector<1x1x256xbf16>
    %233 = vector.shape_cast %232 : vector<1x1x256xbf16> to vector<1x256xbf16>
    %c1_259 = arith.constant 1 : index
    %c0_260 = arith.constant 0 : index
    %c133_261 = arith.constant 133 : index
    %234 = vector.load %arg11[%c1_259, %c0_260, %c133_261] : memref<2x25x512xbf16, #tpu.memory_space<vmem>>, vector<1x1x256xbf16>
    %235 = vector.shape_cast %234 : vector<1x1x256xbf16> to vector<1x256xbf16>
    %c1_262 = arith.constant 1 : index
    %c0_263 = arith.constant 0 : index
    %c134_264 = arith.constant 134 : index
    %236 = vector.load %arg11[%c1_262, %c0_263, %c134_264] : memref<2x25x512xbf16, #tpu.memory_space<vmem>>, vector<1x1x256xbf16>
    %237 = vector.shape_cast %236 : vector<1x1x256xbf16> to vector<1x256xbf16>
    %c1_265 = arith.constant 1 : index
    %c0_266 = arith.constant 0 : index
    %c135_267 = arith.constant 135 : index
    %238 = vector.load %arg11[%c1_265, %c0_266, %c135_267] : memref<2x25x512xbf16, #tpu.memory_space<vmem>>, vector<1x1x256xbf16>
    %239 = vector.shape_cast %238 : vector<1x1x256xbf16> to vector<1x256xbf16>
    %c1_268 = arith.constant 1 : index
    %c0_269 = arith.constant 0 : index
    %c136_270 = arith.constant 136 : index
    %240 = vector.load %arg11[%c1_268, %c0_269, %c136_270] : memref<2x25x512xbf16, #tpu.memory_space<vmem>>, vector<1x1x256xbf16>
    %241 = vector.shape_cast %240 : vector<1x1x256xbf16> to vector<1x256xbf16>
    %c1_271 = arith.constant 1 : index
    %c0_272 = arith.constant 0 : index
    %c137_273 = arith.constant 137 : index
    %242 = vector.load %arg11[%c1_271, %c0_272, %c137_273] : memref<2x25x512xbf16, #tpu.memory_space<vmem>>, vector<1x1x256xbf16>
    %243 = vector.shape_cast %242 : vector<1x1x256xbf16> to vector<1x256xbf16>
    %c1_274 = arith.constant 1 : index
    %c0_275 = arith.constant 0 : index
    %c138_276 = arith.constant 138 : index
    %244 = vector.load %arg11[%c1_274, %c0_275, %c138_276] : memref<2x25x512xbf16, #tpu.memory_space<vmem>>, vector<1x1x256xbf16>
    %245 = vector.shape_cast %244 : vector<1x1x256xbf16> to vector<1x256xbf16>
    %c1_277 = arith.constant 1 : index
    %c0_278 = arith.constant 0 : index
    %c139_279 = arith.constant 139 : index
    %246 = vector.load %arg11[%c1_277, %c0_278, %c139_279] : memref<2x25x512xbf16, #tpu.memory_space<vmem>>, vector<1x1x256xbf16>
    %247 = vector.shape_cast %246 : vector<1x1x256xbf16> to vector<1x256xbf16>
    %c1_280 = arith.constant 1 : index
    %c0_281 = arith.constant 0 : index
    %c140_282 = arith.constant 140 : index
    %248 = vector.load %arg11[%c1_280, %c0_281, %c140_282] : memref<2x25x512xbf16, #tpu.memory_space<vmem>>, vector<1x1x256xbf16>
    %249 = vector.shape_cast %248 : vector<1x1x256xbf16> to vector<1x256xbf16>
    %250 = tpu.concatenate %201, %203, %205, %207, %209, %211, %213, %215, %217, %219, %221, %223, %225, %227, %229, %231 in 0 : vector<1x256xbf16>, vector<1x256xbf16>, vector<1x256xbf16>, vector<1x256xbf16>, vector<1x256xbf16>, vector<1x256xbf16>, vector<1x256xbf16>, vector<1x256xbf16>, vector<1x256xbf16>, vector<1x256xbf16>, vector<1x256xbf16>, vector<1x256xbf16>, vector<1x256xbf16>, vector<1x256xbf16>, vector<1x256xbf16>, vector<1x256xbf16> -> vector<16x256xbf16>
    %251 = tpu.concatenate %233, %235, %237, %239, %241, %243, %245, %247, %249 in 0 : vector<1x256xbf16>, vector<1x256xbf16>, vector<1x256xbf16>, vector<1x256xbf16>, vector<1x256xbf16>, vector<1x256xbf16>, vector<1x256xbf16>, vector<1x256xbf16>, vector<1x256xbf16> -> vector<9x256xbf16>
    %252 = tpu.concatenate %250, %251 in 0 : vector<16x256xbf16>, vector<9x256xbf16> -> vector<25x256xbf16>
    %cst_283 = arith.constant dense<0.000000e+00> : vector<25x256xf32>
    %253 = tpu.matmul %8, %252, %cst_283 {dimension_numbers = #tpu.dot_dimension_numbers<[1], [0], [0], [1], [0, 0, 1, 1], [], []>} : vector<25x25xbf16>, vector<25x256xbf16>, vector<25x256xf32> -> vector<25x256xf32>
    %254 = vector.broadcast %12 : vector<25x1xf32> to vector<25x256xf32>
    %255 = arith.addf %253, %254 : vector<25x256xf32>
    %cst_284 = arith.constant 0.000000e+00 : f32
    %256 = vector.broadcast %cst_284 : f32 to vector<25x256xf32>
    %257 = arith.cmpf ogt, %255, %256 : vector<25x256xf32>
    %cst_285 = arith.constant 0.00999999977 : f32
    %258 = vector.broadcast %cst_285 : f32 to vector<25x256xf32>
    %259 = arith.mulf %258, %255 : vector<25x256xf32>
    %260 = arith.select %257, %255, %259 : vector<25x256xi1>, vector<25x256xf32>
    %cst_286 = arith.constant 0.000000e+00 : f32
    %261 = vector.shape_cast %5 : vector<1x256xi1> to vector<1x256xi1>
    %262 = vector.broadcast %261 : vector<1x256xi1> to vector<25x256xi1>
    %263 = vector.broadcast %cst_286 : f32 to vector<25x256xf32>
    %264 = arith.select %262, %260, %263 : vector<25x256xi1>, vector<25x256xf32>
    %265 = vector.shape_cast %264 : vector<25x256xf32> to vector<1x25x256xf32>
    %266 = arith.truncf %265 : vector<1x25x256xf32> to vector<1x25x256xbf16>
    %c1_287 = arith.constant 1 : index
    %c0_288 = arith.constant 0 : index
    %c128_289 = arith.constant 128 : index
    %267 = vector.load %arg11[%c1_287, %c0_288, %c128_289] : memref<2x25x512xbf16, #tpu.memory_space<vmem>>, vector<1x25x256xbf16>
    tpu.vector_store %arg11[%c1_287, %c0_288, %c128_289], %266 {strides = array<i32>} : memref<2x25x512xbf16, #tpu.memory_space<vmem>>, vector<1x25x256xbf16>,
    %c1_290 = arith.constant 1 : index
    %c0_291 = arith.constant 0 : index
    %c121_292 = arith.constant 121 : index
    %268 = vector.load %arg11[%c1_290, %c0_291, %c121_292] : memref<2x25x512xbf16, #tpu.memory_space<vmem>>, vector<1x25x256xbf16>
    %269 = vector.shape_cast %268 : vector<1x25x256xbf16> to vector<25x256xbf16>
    %c1_293 = arith.constant 1 : index
    %c0_294 = arith.constant 0 : index
    %c122_295 = arith.constant 122 : index
    %270 = vector.load %arg11[%c1_293, %c0_294, %c122_295] : memref<2x25x512xbf16, #tpu.memory_space<vmem>>, vector<1x25x256xbf16>
    %271 = vector.shape_cast %270 : vector<1x25x256xbf16> to vector<25x256xbf16>
    %c1_296 = arith.constant 1 : index
    %c0_297 = arith.constant 0 : index
    %c123_298 = arith.constant 123 : index
    %272 = vector.load %arg11[%c1_296, %c0_297, %c123_298] : memref<2x25x512xbf16, #tpu.memory_space<vmem>>, vector<1x25x256xbf16>
    %273 = vector.shape_cast %272 : vector<1x25x256xbf16> to vector<25x256xbf16>
    %c1_299 = arith.constant 1 : index
    %c0_300 = arith.constant 0 : index
    %c124_301 = arith.constant 124 : index
    %274 = vector.load %arg11[%c1_299, %c0_300, %c124_301] : memref<2x25x512xbf16, #tpu.memory_space<vmem>>, vector<1x25x256xbf16>
    %275 = vector.shape_cast %274 : vector<1x25x256xbf16> to vector<25x256xbf16>
    %c1_302 = arith.constant 1 : index
    %c0_303 = arith.constant 0 : index
    %c125_304 = arith.constant 125 : index
    %276 = vector.load %arg11[%c1_302, %c0_303, %c125_304] : memref<2x25x512xbf16, #tpu.memory_space<vmem>>, vector<1x25x256xbf16>
    %277 = vector.shape_cast %276 : vector<1x25x256xbf16> to vector<25x256xbf16>
    %c1_305 = arith.constant 1 : index
    %c0_306 = arith.constant 0 : index
    %c126_307 = arith.constant 126 : index
    %278 = vector.load %arg11[%c1_305, %c0_306, %c126_307] : memref<2x25x512xbf16, #tpu.memory_space<vmem>>, vector<1x25x256xbf16>
    %279 = vector.shape_cast %278 : vector<1x25x256xbf16> to vector<25x256xbf16>
    %c1_308 = arith.constant 1 : index
    %c0_309 = arith.constant 0 : index
    %c127_310 = arith.constant 127 : index
    %280 = vector.load %arg11[%c1_308, %c0_309, %c127_310] : memref<2x25x512xbf16, #tpu.memory_space<vmem>>, vector<1x25x256xbf16>
    %281 = vector.shape_cast %280 : vector<1x25x256xbf16> to vector<25x256xbf16>
    %c1_311 = arith.constant 1 : index
    %c0_312 = arith.constant 0 : index
    %c128_313 = arith.constant 128 : index
    %282 = vector.load %arg11[%c1_311, %c0_312, %c128_313] : memref<2x25x512xbf16, #tpu.memory_space<vmem>>, vector<1x25x256xbf16>
    %283 = vector.shape_cast %282 : vector<1x25x256xbf16> to vector<25x256xbf16>
    %c1_314 = arith.constant 1 : index
    %c0_315 = arith.constant 0 : index
    %c129_316 = arith.constant 129 : index
    %284 = vector.load %arg11[%c1_314, %c0_315, %c129_316] : memref<2x25x512xbf16, #tpu.memory_space<vmem>>, vector<1x25x256xbf16>
    %285 = vector.shape_cast %284 : vector<1x25x256xbf16> to vector<25x256xbf16>
    %c1_317 = arith.constant 1 : index
    %c0_318 = arith.constant 0 : index
    %c130_319 = arith.constant 130 : index
    %286 = vector.load %arg11[%c1_317, %c0_318, %c130_319] : memref<2x25x512xbf16, #tpu.memory_space<vmem>>, vector<1x25x256xbf16>
    %287 = vector.shape_cast %286 : vector<1x25x256xbf16> to vector<25x256xbf16>
    %c1_320 = arith.constant 1 : index
    %c0_321 = arith.constant 0 : index
    %c131_322 = arith.constant 131 : index
    %288 = vector.load %arg11[%c1_320, %c0_321, %c131_322] : memref<2x25x512xbf16, #tpu.memory_space<vmem>>, vector<1x25x256xbf16>
    %289 = vector.shape_cast %288 : vector<1x25x256xbf16> to vector<25x256xbf16>
    %c1_323 = arith.constant 1 : index
    %c0_324 = arith.constant 0 : index
    %c132_325 = arith.constant 132 : index
    %290 = vector.load %arg11[%c1_323, %c0_324, %c132_325] : memref<2x25x512xbf16, #tpu.memory_space<vmem>>, vector<1x25x256xbf16>
    %291 = vector.shape_cast %290 : vector<1x25x256xbf16> to vector<25x256xbf16>
    %c1_326 = arith.constant 1 : index
    %c0_327 = arith.constant 0 : index
    %c133_328 = arith.constant 133 : index
    %292 = vector.load %arg11[%c1_326, %c0_327, %c133_328] : memref<2x25x512xbf16, #tpu.memory_space<vmem>>, vector<1x25x256xbf16>
    %293 = vector.shape_cast %292 : vector<1x25x256xbf16> to vector<25x256xbf16>
    %c1_329 = arith.constant 1 : index
    %c0_330 = arith.constant 0 : index
    %c134_331 = arith.constant 134 : index
    %294 = vector.load %arg11[%c1_329, %c0_330, %c134_331] : memref<2x25x512xbf16, #tpu.memory_space<vmem>>, vector<1x25x256xbf16>
    %295 = vector.shape_cast %294 : vector<1x25x256xbf16> to vector<25x256xbf16>
    %c1_332 = arith.constant 1 : index
    %c0_333 = arith.constant 0 : index
    %c135_334 = arith.constant 135 : index
    %296 = vector.load %arg11[%c1_332, %c0_333, %c135_334] : memref<2x25x512xbf16, #tpu.memory_space<vmem>>, vector<1x25x256xbf16>
    %297 = vector.shape_cast %296 : vector<1x25x256xbf16> to vector<25x256xbf16>
    %298 = tpu.concatenate %269, %271, %273, %275, %277, %279, %281, %283, %285, %287, %289, %291, %293, %295, %297 in 0 : vector<25x256xbf16>, vector<25x256xbf16>, vector<25x256xbf16>, vector<25x256xbf16>, vector<25x256xbf16>, vector<25x256xbf16>, vector<25x256xbf16>, vector<25x256xbf16>, vector<25x256xbf16>, vector<25x256xbf16>, vector<25x256xbf16>, vector<25x256xbf16>, vector<25x256xbf16>, vector<25x256xbf16>, vector<25x256xbf16> -> vector<375x256xbf16>
    %cst_335 = arith.constant dense<0.000000e+00> : vector<25x256xf32>
    %299 = tpu.matmul %9, %298, %cst_335 {dimension_numbers = #tpu.dot_dimension_numbers<[1], [0], [0], [1], [0, 0, 1, 1], [], []>} : vector<25x375xbf16>, vector<375x256xbf16>, vector<25x256xf32> -> vector<25x256xf32>
    %300 = vector.broadcast %13 : vector<25x1xf32> to vector<25x256xf32>
    %301 = arith.addf %299, %300 : vector<25x256xf32>
    %cst_336 = arith.constant 0.000000e+00 : f32
    %302 = vector.broadcast %cst_336 : f32 to vector<25x256xf32>
    %303 = arith.cmpf ogt, %301, %302 : vector<25x256xf32>
    %cst_337 = arith.constant 0.00999999977 : f32
    %304 = vector.broadcast %cst_337 : f32 to vector<25x256xf32>
    %305 = arith.mulf %304, %301 : vector<25x256xf32>
    %306 = arith.select %303, %301, %305 : vector<25x256xi1>, vector<25x256xf32>
    %cst_338 = arith.constant 0.000000e+00 : f32
    %307 = vector.shape_cast %5 : vector<1x256xi1> to vector<1x256xi1>
    %308 = vector.broadcast %307 : vector<1x256xi1> to vector<25x256xi1>
    %309 = vector.broadcast %cst_338 : f32 to vector<25x256xf32>
    %310 = arith.select %308, %306, %309 : vector<25x256xi1>, vector<25x256xf32>
    %311 = vector.shape_cast %310 : vector<25x256xf32> to vector<1x25x256xf32>
    %312 = arith.truncf %311 : vector<1x25x256xf32> to vector<1x25x256xbf16>
    %c1_339 = arith.constant 1 : index
    %c0_340 = arith.constant 0 : index
    %c128_341 = arith.constant 128 : index
    %313 = vector.load %arg11[%c1_339, %c0_340, %c128_341] : memref<2x25x512xbf16, #tpu.memory_space<vmem>>, vector<1x25x256xbf16>
    tpu.vector_store %arg11[%c1_339, %c0_340, %c128_341], %312 {strides = array<i32>} : memref<2x25x512xbf16, #tpu.memory_space<vmem>>, vector<1x25x256xbf16>,
    %c1_342 = arith.constant 1 : index
    %c0_343 = arith.constant 0 : index
    %c121_344 = arith.constant 121 : index
    %314 = vector.load %arg11[%c1_342, %c0_343, %c121_344] : memref<2x25x512xbf16, #tpu.memory_space<vmem>>, vector<1x25x256xbf16>
    %315 = vector.shape_cast %314 : vector<1x25x256xbf16> to vector<25x256xbf16>
    %c1_345 = arith.constant 1 : index
    %c0_346 = arith.constant 0 : index
    %c122_347 = arith.constant 122 : index
    %316 = vector.load %arg11[%c1_345, %c0_346, %c122_347] : memref<2x25x512xbf16, #tpu.memory_space<vmem>>, vector<1x25x256xbf16>
    %317 = vector.shape_cast %316 : vector<1x25x256xbf16> to vector<25x256xbf16>
    %c1_348 = arith.constant 1 : index
    %c0_349 = arith.constant 0 : index
    %c123_350 = arith.constant 123 : index
    %318 = vector.load %arg11[%c1_348, %c0_349, %c123_350] : memref<2x25x512xbf16, #tpu.memory_space<vmem>>, vector<1x25x256xbf16>
    %319 = vector.shape_cast %318 : vector<1x25x256xbf16> to vector<25x256xbf16>
    %c1_351 = arith.constant 1 : index
    %c0_352 = arith.constant 0 : index
    %c124_353 = arith.constant 124 : index
    %320 = vector.load %arg11[%c1_351, %c0_352, %c124_353] : memref<2x25x512xbf16, #tpu.memory_space<vmem>>, vector<1x25x256xbf16>
    %321 = vector.shape_cast %320 : vector<1x25x256xbf16> to vector<25x256xbf16>
    %c1_354 = arith.constant 1 : index
    %c0_355 = arith.constant 0 : index
    %c125_356 = arith.constant 125 : index
    %322 = vector.load %arg11[%c1_354, %c0_355, %c125_356] : memref<2x25x512xbf16, #tpu.memory_space<vmem>>, vector<1x25x256xbf16>
    %323 = vector.shape_cast %322 : vector<1x25x256xbf16> to vector<25x256xbf16>
    %c1_357 = arith.constant 1 : index
    %c0_358 = arith.constant 0 : index
    %c126_359 = arith.constant 126 : index
    %324 = vector.load %arg11[%c1_357, %c0_358, %c126_359] : memref<2x25x512xbf16, #tpu.memory_space<vmem>>, vector<1x25x256xbf16>
    %325 = vector.shape_cast %324 : vector<1x25x256xbf16> to vector<25x256xbf16>
    %c1_360 = arith.constant 1 : index
    %c0_361 = arith.constant 0 : index
    %c127_362 = arith.constant 127 : index
    %326 = vector.load %arg11[%c1_360, %c0_361, %c127_362] : memref<2x25x512xbf16, #tpu.memory_space<vmem>>, vector<1x25x256xbf16>
    %327 = vector.shape_cast %326 : vector<1x25x256xbf16> to vector<25x256xbf16>
    %c1_363 = arith.constant 1 : index
    %c0_364 = arith.constant 0 : index
    %c128_365 = arith.constant 128 : index
    %328 = vector.load %arg11[%c1_363, %c0_364, %c128_365] : memref<2x25x512xbf16, #tpu.memory_space<vmem>>, vector<1x25x256xbf16>
    %329 = vector.shape_cast %328 : vector<1x25x256xbf16> to vector<25x256xbf16>
    %c1_366 = arith.constant 1 : index
    %c0_367 = arith.constant 0 : index
    %c129_368 = arith.constant 129 : index
    %330 = vector.load %arg11[%c1_366, %c0_367, %c129_368] : memref<2x25x512xbf16, #tpu.memory_space<vmem>>, vector<1x25x256xbf16>
    %331 = vector.shape_cast %330 : vector<1x25x256xbf16> to vector<25x256xbf16>
    %c1_369 = arith.constant 1 : index
    %c0_370 = arith.constant 0 : index
    %c130_371 = arith.constant 130 : index
    %332 = vector.load %arg11[%c1_369, %c0_370, %c130_371] : memref<2x25x512xbf16, #tpu.memory_space<vmem>>, vector<1x25x256xbf16>
    %333 = vector.shape_cast %332 : vector<1x25x256xbf16> to vector<25x256xbf16>
    %c1_372 = arith.constant 1 : index
    %c0_373 = arith.constant 0 : index
    %c131_374 = arith.constant 131 : index
    %334 = vector.load %arg11[%c1_372, %c0_373, %c131_374] : memref<2x25x512xbf16, #tpu.memory_space<vmem>>, vector<1x25x256xbf16>
    %335 = vector.shape_cast %334 : vector<1x25x256xbf16> to vector<25x256xbf16>
    %c1_375 = arith.constant 1 : index
    %c0_376 = arith.constant 0 : index
    %c132_377 = arith.constant 132 : index
    %336 = vector.load %arg11[%c1_375, %c0_376, %c132_377] : memref<2x25x512xbf16, #tpu.memory_space<vmem>>, vector<1x25x256xbf16>
    %337 = vector.shape_cast %336 : vector<1x25x256xbf16> to vector<25x256xbf16>
    %c1_378 = arith.constant 1 : index
    %c0_379 = arith.constant 0 : index
    %c133_380 = arith.constant 133 : index
    %338 = vector.load %arg11[%c1_378, %c0_379, %c133_380] : memref<2x25x512xbf16, #tpu.memory_space<vmem>>, vector<1x25x256xbf16>
    %339 = vector.shape_cast %338 : vector<1x25x256xbf16> to vector<25x256xbf16>
    %c1_381 = arith.constant 1 : index
    %c0_382 = arith.constant 0 : index
    %c134_383 = arith.constant 134 : index
    %340 = vector.load %arg11[%c1_381, %c0_382, %c134_383] : memref<2x25x512xbf16, #tpu.memory_space<vmem>>, vector<1x25x256xbf16>
    %341 = vector.shape_cast %340 : vector<1x25x256xbf16> to vector<25x256xbf16>
    %c1_384 = arith.constant 1 : index
    %c0_385 = arith.constant 0 : index
    %c135_386 = arith.constant 135 : index
    %342 = vector.load %arg11[%c1_384, %c0_385, %c135_386] : memref<2x25x512xbf16, #tpu.memory_space<vmem>>, vector<1x25x256xbf16>
    %343 = vector.shape_cast %342 : vector<1x25x256xbf16> to vector<25x256xbf16>
    %344 = tpu.concatenate %315, %317, %319, %321, %323, %325, %327, %329, %331, %333, %335, %337, %339, %341, %343 in 0 : vector<25x256xbf16>, vector<25x256xbf16>, vector<25x256xbf16>, vector<25x256xbf16>, vector<25x256xbf16>, vector<25x256xbf16>, vector<25x256xbf16>, vector<25x256xbf16>, vector<25x256xbf16>, vector<25x256xbf16>, vector<25x256xbf16>, vector<25x256xbf16>, vector<25x256xbf16>, vector<25x256xbf16>, vector<25x256xbf16> -> vector<375x256xbf16>
    %cst_387 = arith.constant dense<0.000000e+00> : vector<25x256xf32>
    %345 = tpu.matmul %10, %344, %cst_387 {dimension_numbers = #tpu.dot_dimension_numbers<[1], [0], [0], [1], [0, 0, 1, 1], [], []>} : vector<25x375xbf16>, vector<375x256xbf16>, vector<25x256xf32> -> vector<25x256xf32>
    %346 = vector.broadcast %14 : vector<25x1xf32> to vector<25x256xf32>
    %347 = arith.addf %345, %346 : vector<25x256xf32>
    %cst_388 = arith.constant 0.000000e+00 : f32
    %348 = vector.broadcast %cst_388 : f32 to vector<25x256xf32>
    %349 = arith.cmpf ogt, %347, %348 : vector<25x256xf32>
    %cst_389 = arith.constant 0.00999999977 : f32
    %350 = vector.broadcast %cst_389 : f32 to vector<25x256xf32>
    %351 = arith.mulf %350, %347 : vector<25x256xf32>
    %352 = arith.select %349, %347, %351 : vector<25x256xi1>, vector<25x256xf32>
    %cst_390 = arith.constant 0.000000e+00 : f32
    %353 = vector.shape_cast %5 : vector<1x256xi1> to vector<1x256xi1>
    %354 = vector.broadcast %353 : vector<1x256xi1> to vector<25x256xi1>
    %355 = vector.broadcast %cst_390 : f32 to vector<25x256xf32>
    %356 = arith.select %354, %352, %355 : vector<25x256xi1>, vector<25x256xf32>
    %357 = vector.shape_cast %356 : vector<25x256xf32> to vector<1x25x256xf32>
    %358 = arith.truncf %357 : vector<1x25x256xf32> to vector<1x25x256xbf16>
    %c1_391 = arith.constant 1 : index
    %c0_392 = arith.constant 0 : index
    %c128_393 = arith.constant 128 : index
    %359 = vector.load %arg11[%c1_391, %c0_392, %c128_393] : memref<2x25x512xbf16, #tpu.memory_space<vmem>>, vector<1x25x256xbf16>
    tpu.vector_store %arg11[%c1_391, %c0_392, %c128_393], %358 {strides = array<i32>} : memref<2x25x512xbf16, #tpu.memory_space<vmem>>, vector<1x25x256xbf16>,
    %c1_394 = arith.constant 1 : index
    %c0_395 = arith.constant 0 : index
    %c126_396 = arith.constant 126 : index
    %360 = vector.load %arg11[%c1_394, %c0_395, %c126_396] : memref<2x25x512xbf16, #tpu.memory_space<vmem>>, vector<1x25x256xbf16>
    %361 = vector.shape_cast %360 : vector<1x25x256xbf16> to vector<25x256xbf16>
    %c1_397 = arith.constant 1 : index
    %c0_398 = arith.constant 0 : index
    %c127_399 = arith.constant 127 : index
    %362 = vector.load %arg11[%c1_397, %c0_398, %c127_399] : memref<2x25x512xbf16, #tpu.memory_space<vmem>>, vector<1x25x256xbf16>
    %363 = vector.shape_cast %362 : vector<1x25x256xbf16> to vector<25x256xbf16>
    %c1_400 = arith.constant 1 : index
    %c0_401 = arith.constant 0 : index
    %c128_402 = arith.constant 128 : index
    %364 = vector.load %arg11[%c1_400, %c0_401, %c128_402] : memref<2x25x512xbf16, #tpu.memory_space<vmem>>, vector<1x25x256xbf16>
    %365 = vector.shape_cast %364 : vector<1x25x256xbf16> to vector<25x256xbf16>
    %c1_403 = arith.constant 1 : index
    %c0_404 = arith.constant 0 : index
    %c129_405 = arith.constant 129 : index
    %366 = vector.load %arg11[%c1_403, %c0_404, %c129_405] : memref<2x25x512xbf16, #tpu.memory_space<vmem>>, vector<1x25x256xbf16>
    %367 = vector.shape_cast %366 : vector<1x25x256xbf16> to vector<25x256xbf16>
    %c1_406 = arith.constant 1 : index
    %c0_407 = arith.constant 0 : index
    %c130_408 = arith.constant 130 : index
    %368 = vector.load %arg11[%c1_406, %c0_407, %c130_408] : memref<2x25x512xbf16, #tpu.memory_space<vmem>>, vector<1x25x256xbf16>
    %369 = vector.shape_cast %368 : vector<1x25x256xbf16> to vector<25x256xbf16>
    %370 = tpu.concatenate %361, %363, %365, %367, %369 in 0 : vector<25x256xbf16>, vector<25x256xbf16>, vector<25x256xbf16>, vector<25x256xbf16>, vector<25x256xbf16> -> vector<125x256xbf16>
    %cst_409 = arith.constant dense<0.000000e+00> : vector<1x256xf32>
    %371 = tpu.matmul %11, %370, %cst_409 {dimension_numbers = #tpu.dot_dimension_numbers<[1], [0], [0], [1], [0, 0, 1, 1], [], []>} : vector<1x125xbf16>, vector<125x256xbf16>, vector<1x256xf32> -> vector<1x256xf32>
    %372 = vector.broadcast %15 : vector<1x1xf32> to vector<1x256xf32>
    %373 = arith.addf %371, %372 : vector<1x256xf32>
    %cst_410 = arith.constant 0.000000e+00 : f32
    %374 = vector.broadcast %cst_410 : f32 to vector<1x256xf32>
    %375 = arith.cmpf ogt, %373, %374 : vector<1x256xf32>
    %cst_411 = arith.constant 0.00999999977 : f32
    %376 = vector.broadcast %cst_411 : f32 to vector<1x256xf32>
    %377 = arith.mulf %376, %373 : vector<1x256xf32>
    %378 = arith.select %375, %373, %377 : vector<1x256xi1>, vector<1x256xf32>
    %cst_412 = arith.constant 0.000000e+00 : f32
    %379 = vector.broadcast %cst_412 : f32 to vector<1x256xf32>
    %380 = arith.select %5, %378, %379 : vector<1x256xi1>, vector<1x256xf32>
    %381 = vector.shape_cast %380 : vector<1x256xf32> to vector<1x1x256xf32>
    %382 = arith.truncf %381 : vector<1x1x256xf32> to vector<1x1x256xbf16>
    %c1_413 = arith.constant 1 : index
    %c0_414 = arith.constant 0 : index
    %c0_415 = arith.constant 0 : index
    %383 = vector.load %arg10[%c1_413, %c0_414, %c0_415] : memref<2x1x256xbf16, #tpu.memory_space<vmem>>, vector<1x1x256xbf16>
    tpu.vector_store %arg10[%c1_413, %c0_414, %c0_415], %382 {strides = array<i32>} : memref<2x1x256xbf16, #tpu.memory_space<vmem>>, vector<1x1x256xbf16>,
    return
  }
  func.func @transform_0(%arg0: i32) -> (i32, i32, i32) {
    %c0_i32 = arith.constant 0 : i32
    %c0_i32_0 = arith.constant 0 : i32
    %c0_i32_1 = arith.constant 0 : i32
    return %arg0, %c0_i32, %c0_i32_0 : i32, i32, i32
  }
  func.func @transform_1(%arg0: i32) -> (i32, i32) {
    %c0_i32 = arith.constant 0 : i32
    %c0_i32_0 = arith.constant 0 : i32
    %c0_i32_1 = arith.constant 0 : i32
    return %c0_i32, %c0_i32_0 : i32, i32
  }
  func.func @transform_2(%arg0: i32) -> (i32, i32) {
    %c0_i32 = arith.constant 0 : i32
    %c0_i32_0 = arith.constant 0 : i32
    %c0_i32_1 = arith.constant 0 : i32
    return %c0_i32, %c0_i32_0 : i32, i32
  }
  func.func @transform_3(%arg0: i32) -> (i32, i32) {
    %c0_i32 = arith.constant 0 : i32
    %c0_i32_0 = arith.constant 0 : i32
    %c0_i32_1 = arith.constant 0 : i32
    return %c0_i32, %c0_i32_0 : i32, i32
  }
  func.func @transform_4(%arg0: i32) -> (i32, i32) {
    %c0_i32 = arith.constant 0 : i32
    %c0_i32_0 = arith.constant 0 : i32
    %c0_i32_1 = arith.constant 0 : i32
    return %c0_i32, %c0_i32_0 : i32, i32
  }
  func.func @transform_5(%arg0: i32) -> (i32, i32) {
    %c0_i32 = arith.constant 0 : i32
    %c0_i32_0 = arith.constant 0 : i32
    %c0_i32_1 = arith.constant 0 : i32
    return %c0_i32, %c0_i32_0 : i32, i32
  }
  func.func @transform_6(%arg0: i32) -> (i32, i32) {
    %c0_i32 = arith.constant 0 : i32
    %c0_i32_0 = arith.constant 0 : i32
    %c0_i32_1 = arith.constant 0 : i32
    return %c0_i32, %c0_i32_0 : i32, i32
  }
  func.func @transform_7(%arg0: i32) -> (i32, i32) {
    %c0_i32 = arith.constant 0 : i32
    %c0_i32_0 = arith.constant 0 : i32
    %c0_i32_1 = arith.constant 0 : i32
    return %c0_i32, %c0_i32_0 : i32, i32
  }
  func.func @transform_8(%arg0: i32) -> (i32, i32) {
    %c0_i32 = arith.constant 0 : i32
    %c0_i32_0 = arith.constant 0 : i32
    %c0_i32_1 = arith.constant 0 : i32
    return %c0_i32, %c0_i32_0 : i32, i32
  }
  func.func @transform_9(%arg0: i32) -> (i32, i32, i32) {
    %c0_i32 = arith.constant 0 : i32
    %c0_i32_0 = arith.constant 0 : i32
    %c0_i32_1 = arith.constant 0 : i32
    return %arg0, %c0_i32, %c0_i32_0 : i32, i32, i32
  }
}

module attributes {stable_mosaic.version = 11 : i64} {
  func.func @fc_softplus_kernel(%arg0: i32, %arg1: i32, %arg2: memref<4x256xbf16, #tpu.memory_space<vmem>>, %arg3: memref<256x128xbf16, #tpu.memory_space<vmem>>, %arg4: memref<1x128xf32, #tpu.memory_space<vmem>>, %arg5: memref<4x128xf32, #tpu.memory_space<vmem>>, %arg6: memref<4x128xf32, #tpu.memory_space<vmem>>) attributes {dimension_semantics = [#tpu.dimension_semantics<parallel>, #tpu.dimension_semantics<arbitrary>], iteration_bounds = array<i64: 2, 1>, scalar_prefetch = 0 : i64, scratch_operands = 1 : i64, tpu.core_type = #tpu.core_type<tc>, window_params = [{transform_indices = @transform_0, window_bounds = array<i64: 4, 256>}, {transform_indices = @transform_1, window_bounds = array<i64: 256, 128>}, {transform_indices = @transform_2, window_bounds = array<i64: 1, 128>}, {transform_indices = @transform_3, window_bounds = array<i64: 4, 128>}]} {
    %c0_i32 = arith.constant 0 : i32
    %0 = arith.cmpi eq, %arg1, %c0_i32 : i32
    %1 = arith.extui %0 : i1 to i32
    %c0_i32_0 = arith.constant 0 : i32
    %2 = arith.cmpi ne, %1, %c0_i32_0 : i32
    scf.if %2 {
      %cst_10 = arith.constant 0.000000e+00 : f32
      %12 = vector.broadcast %cst_10 : f32 to vector<4x128xf32>
      %c0_11 = arith.constant 0 : index
      %c0_12 = arith.constant 0 : index
      %13 = vector.load %arg6[%c0_11, %c0_12] : memref<4x128xf32, #tpu.memory_space<vmem>>, vector<4x128xf32>
      tpu.vector_store %arg6[%c0_11, %c0_12], %12 {strides = array<i32>} : memref<4x128xf32, #tpu.memory_space<vmem>>, vector<4x128xf32>,
    } else {
    }
    %c0 = arith.constant 0 : index
    %c0_1 = arith.constant 0 : index
    %3 = vector.load %arg6[%c0, %c0_1] : memref<4x128xf32, #tpu.memory_space<vmem>>, vector<4x128xf32>
    %c0_2 = arith.constant 0 : index
    %c0_3 = arith.constant 0 : index
    %4 = vector.load %arg2[%c0_2, %c0_3] : memref<4x256xbf16, #tpu.memory_space<vmem>>, vector<4x256xbf16>
    %c0_4 = arith.constant 0 : index
    %c0_5 = arith.constant 0 : index
    %5 = vector.load %arg3[%c0_4, %c0_5] : memref<256x128xbf16, #tpu.memory_space<vmem>>, vector<256x128xbf16>
    %cst = arith.constant dense<0.000000e+00> : vector<4x128xf32>
    %6 = tpu.matmul %4, %5, %cst {dimension_numbers = #tpu.dot_dimension_numbers<[1], [0], [0], [1], [0, 0, 1, 1], [], []>} : vector<4x256xbf16>, vector<256x128xbf16>, vector<4x128xf32> -> vector<4x128xf32>
    %7 = arith.addf %3, %6 : vector<4x128xf32>
    %c0_6 = arith.constant 0 : index
    %c0_7 = arith.constant 0 : index
    %8 = vector.load %arg6[%c0_6, %c0_7] : memref<4x128xf32, #tpu.memory_space<vmem>>, vector<4x128xf32>
    tpu.vector_store %arg6[%c0_6, %c0_7], %7 {strides = array<i32>} : memref<4x128xf32, #tpu.memory_space<vmem>>, vector<4x128xf32>,
    %c0_i32_8 = arith.constant 0 : i32
    %9 = arith.cmpi eq, %arg1, %c0_i32_8 : i32
    %10 = arith.extui %9 : i1 to i32
    %c0_i32_9 = arith.constant 0 : i32
    %11 = arith.cmpi ne, %10, %c0_i32_9 : i32
    scf.if %11 {
      %c0_10 = arith.constant 0 : index
      %c0_11 = arith.constant 0 : index
      %12 = vector.load %arg6[%c0_10, %c0_11] : memref<4x128xf32, #tpu.memory_space<vmem>>, vector<4x128xf32>
      %c0_12 = arith.constant 0 : index
      %c0_13 = arith.constant 0 : index
      %13 = vector.load %arg4[%c0_12, %c0_13] : memref<1x128xf32, #tpu.memory_space<vmem>>, vector<1x128xf32>
      %14 = vector.broadcast %13 : vector<1x128xf32> to vector<4x128xf32>
      %15 = arith.addf %12, %14 : vector<4x128xf32>
      %cst_14 = arith.constant 0.000000e+00 : f32
      %16 = vector.broadcast %cst_14 : f32 to vector<4x128xf32>
      %17 = arith.maximumf %15, %16 : vector<4x128xf32>
      %18 = math.absf %15 : vector<4x128xf32>
      %cst_15 = arith.constant 0.000000e+00 : f32
      %19 = vector.broadcast %cst_15 : f32 to vector<4x128xf32>
      %20 = arith.subf %19, %18 : vector<4x128xf32>
      %21 = math.exp %20 : vector<4x128xf32>
      %cst_16 = arith.constant 1.000000e+00 : f32
      %22 = vector.broadcast %cst_16 : f32 to vector<4x128xf32>
      %23 = arith.addf %22, %21 : vector<4x128xf32>
      %24 = math.log %23 : vector<4x128xf32>
      %25 = arith.addf %17, %24 : vector<4x128xf32>
      %c0_17 = arith.constant 0 : index
      %c0_18 = arith.constant 0 : index
      %26 = vector.load %arg5[%c0_17, %c0_18] : memref<4x128xf32, #tpu.memory_space<vmem>>, vector<4x128xf32>
      tpu.vector_store %arg5[%c0_17, %c0_18], %25 {strides = array<i32>} : memref<4x128xf32, #tpu.memory_space<vmem>>, vector<4x128xf32>,
    } else {
    }
    return
  }
  func.func @transform_0(%arg0: i32, %arg1: i32) -> (i32, i32) {
    %c0_i32 = arith.constant 0 : i32
    %c0_i32_0 = arith.constant 0 : i32
    return %c0_i32, %arg1 : i32, i32
  }
  func.func @transform_1(%arg0: i32, %arg1: i32) -> (i32, i32) {
    %c0_i32 = arith.constant 0 : i32
    return %arg1, %arg0 : i32, i32
  }
  func.func @transform_2(%arg0: i32, %arg1: i32) -> (i32, i32) {
    %c0_i32 = arith.constant 0 : i32
    %c0_i32_0 = arith.constant 0 : i32
    return %c0_i32, %arg0 : i32, i32
  }
  func.func @transform_3(%arg0: i32, %arg1: i32) -> (i32, i32) {
    %c0_i32 = arith.constant 0 : i32
    %c0_i32_0 = arith.constant 0 : i32
    return %c0_i32, %arg0 : i32, i32
  }
}

</mosaic_0001>

<llo_original>
// kernel: simple_cnn4_forward.3
$region0: #{simple_cnn4_forward.3}
  #allocation0 [shape = 'u32[]', space=smem, size = 0x4, offset = 0x4, fixed_abs, tag = 'smem constant byte address 0x4 - core index']
  #allocation1 [shape = 'u32[144,128]{1,0:T(1,128)}', space=vmem, size = 0x12000, scoped, tag = 'internal scratch']
  #allocation2 [shape = 'f32[4,128]{1,0:T(4,128)}', space=vmem, size = 0x800, scoped, tag = 'scratch operand']
  %s0 = inlined_call_operand.vmem [shape: bf16[4,256], index: 0, kind: input, shape index: {}]
  %s1 = inlined_call_operand.vmem [shape: bf16[256,256], index: 1, kind: input, shape index: {}]
  %s2 = inlined_call_operand.vmem [shape: f32[1,256], index: 2, kind: input, shape index: {}]
  %s3 = inlined_call_operand.hbm [shape: f32[4,256], index: 3, kind: output, shape index: {}]
  %s4 = sld [smem:[#allocation0]]
  $region94: #{simple_cnn4_forward.3} parent=0
    _
  %s6 = ssub.s32 1, %s4
  %s7 = scalar_select 0, %s6, %s4
  $region1: #{simple_cnn4_forward.3} parent=0
    #allocation3 [shape = 'u8[131072]{0}', space=vmem, size = 0x20000, scoped, tag = 'input window, operand 1']
    #allocation4 [shape = 'u8[4096]{0}', space=vmem, size = 0x1000, scoped, tag = 'output window, operand 0']
    #allocation5 [shape = 's32[2]{0}', space=sflag, size = 0x8, scoped, tag = 'scoped memory for simple_cnn4_forward.3']
    %8 = vsyncpa [#allocation5], 0
    %s9 = scalar_lea.sflag [#allocation5], 1
    %10 = vsyncpa %s9, 0
    loop: start=0, step=1, limit=4
    $region2: #{simple_cnn4_forward.3} parent=1 // loop_pre_header
      _
    $region3: #{simple_cnn4_forward.3} parent=1 // loop_header
      %s12 = sphi 0, %s16
      %p13 = scmp.ge.s32.totalorder %s12, 4
      %s19 = sphi 0, %s31
      %s20 = sphi 0, %s27
      %s21 = sphi 0, %s19
      %s22 = sphi 0, %s20
      %s23 = sphi 0, %s21
      %s24 = sphi 0, %s22
      %s34 = sphi 0, %s36
      %s37 = sphi 0, %s34
      %s38 = sphi 0, %s37
      %s54 = sphi 0, %s38
      %s62 = sphi 0, %s64
      %s65 = sphi 0, %s62
      %s66 = sphi 0, %s65
      %s82 = sphi 0, %s66
      %s88 = sphi 0, %s90
      %s91 = sphi 0, %s88
      %s92 = sphi 0, %s91
      %s108 = sphi 0, %s92
      %s114 = sphi 0, %s116
      %s117 = sphi 0, %s114
      %s118 = sphi 0, %s117
      %s134 = sphi 0, %s118
    $region4: #{simple_cnn4_forward.3} parent=1 // loop_header_branch
      %15 = sbr.rel (%p13) target = $region8
    $region5: #{simple_cnn4_forward.3} parent=1 // loop_body
      %s17 = ssub.s32 %s12, 1
      %s18 = ssub.s32 %s12, 2
      %s25 = sadd.s32 1, %s20
      %p26 = scmp.ge.s32.totalorder %s25, 1
      %s27 = scalar_select %p26, 0, %s25
      %s28 = sadd.s32 1, %s19
      %s29 = scalar_select %p26, %s28, %s19
      %p30 = scmp.ge.s32.totalorder %s29, 2
      %s31 = scalar_select %p30, 0, %s29
      %s32 = ssub.s32 %s20, %s27
      %p33 = scmp.eq.s32.totalorder %s32, 0
      %s35 = sadd.s32 %s34, 1
      %s36 = scalar_select %p33, %s34, %s35
      %p39 = pneg %p33
      %p40 = scmp.eq.s32.totalorder %s12, 1
      %p41 = por %p39, %p40
      %p42 = scmp.ne.s32.totalorder %s34, %s37
      %p43 = scmp.eq.s32.totalorder %s12, 0
      %p44 = por %p42, %p43
      %p45 = scmp.ne.s32.totalorder %s34, %s37
      %p46 = scmp.eq.s32.totalorder %s17, 1
      %p47 = por %p45, %p46
      %p48 = scmp.ne.s32.totalorder %s37, %s38
      %p49 = scmp.eq.s32.totalorder %s17, 0
      %p50 = por %p48, %p49
      %p51 = scmp.ne.s32.totalorder %s37, %s38
      %p52 = scmp.eq.s32.totalorder %s18, 1
      %p53 = por %p51, %p52
      %p55 = scmp.ne.s32.totalorder %s38, %s54
      %p56 = scmp.eq.s32.totalorder %s18, 0
      %p57 = por %p55, %p56
      %s58 = ssub.s32 %s20, %s27
      %s59 = ssub.s32 %s19, %s31
      %s60 = sor.u32 %s58, %s59
      %p61 = scmp.eq.s32.totalorder %s60, 0
      %s63 = sadd.s32 %s62, 1
      %s64 = scalar_select %p61, %s62, %s63
      %p67 = pneg %p61
      %p68 = scmp.eq.s32.totalorder %s12, 1
      %p69 = por %p67, %p68
      %p70 = scmp.ne.s32.totalorder %s62, %s65
      %p71 = scmp.eq.s32.totalorder %s12, 0
      %p72 = por %p70, %p71
      %p73 = scmp.ne.s32.totalorder %s62, %s65
      %p74 = scmp.eq.s32.totalorder %s17, 1
      %p75 = por %p73, %p74
      %p76 = scmp.ne.s32.totalorder %s65, %s66
      %p77 = scmp.eq.s32.totalorder %s17, 0
      %p78 = por %p76, %p77
      %p79 = scmp.ne.s32.totalorder %s65, %s66
      %p80 = scmp.eq.s32.totalorder %s18, 1
      %p81 = por %p79, %p80
      %p83 = scmp.ne.s32.totalorder %s66, %s82
      %p84 = scmp.eq.s32.totalorder %s18, 0
      %p85 = por %p83, %p84
      %s86 = ssub.s32 %s19, %s31
      %p87 = scmp.eq.s32.totalorder %s86, 0
      %s89 = sadd.s32 %s88, 1
      %s90 = scalar_select %p87, %s88, %s89
      %p93 = pneg %p87
      %p94 = scmp.eq.s32.totalorder %s12, 1
      %p95 = por %p93, %p94
      %p96 = scmp.ne.s32.totalorder %s88, %s91
      %p97 = scmp.eq.s32.totalorder %s12, 0
      %p98 = por %p96, %p97
      %p99 = scmp.ne.s32.totalorder %s88, %s91
      %p100 = scmp.eq.s32.totalorder %s17, 1
      %p101 = por %p99, %p100
      %p102 = scmp.ne.s32.totalorder %s91, %s92
      %p103 = scmp.eq.s32.totalorder %s17, 0
      %p104 = por %p102, %p103
      %p105 = scmp.ne.s32.totalorder %s91, %s92
      %p106 = scmp.eq.s32.totalorder %s18, 1
      %p107 = por %p105, %p106
      %p109 = scmp.ne.s32.totalorder %s92, %s108
      %p110 = scmp.eq.s32.totalorder %s18, 0
      %p111 = por %p109, %p110
      %s112 = ssub.s32 %s19, %s31
      %p113 = scmp.eq.s32.totalorder %s112, 0
      %s115 = sadd.s32 %s114, 1
      %s116 = scalar_select %p113, %s114, %s115
      %p119 = pneg %p113
      %p120 = scmp.eq.s32.totalorder %s12, 1
      %p121 = por %p119, %p120
      %p122 = scmp.ne.s32.totalorder %s114, %s117
      %p123 = scmp.eq.s32.totalorder %s12, 0
      %p124 = por %p122, %p123
      %p125 = scmp.ne.s32.totalorder %s114, %s117
      %p126 = scmp.eq.s32.totalorder %s17, 1
      %p127 = por %p125, %p126
      %p128 = scmp.ne.s32.totalorder %s117, %s118
      %p129 = scmp.eq.s32.totalorder %s17, 0
      %p130 = por %p128, %p129
      %p131 = scmp.ne.s32.totalorder %s117, %s118
      %p132 = scmp.eq.s32.totalorder %s18, 1
      %p133 = por %p131, %p132
      %p135 = scmp.ne.s32.totalorder %s118, %s134
      %p136 = scmp.eq.s32.totalorder %s18, 0
      %p137 = por %p135, %p136
      %p138 = scmp.le.s32.totalorder 1, %s12
      %p139 = scmp.lt.s32.totalorder %s12, 3
      %p140 = pnand %p138, %p139
      %p141 = pneg %p140
      // Predicated region
      $region9: #{simple_cnn4_forward.3} parent=5 // pred_check
        _
      $region10: #{simple_cnn4_forward.3} parent=5 // pred_check_branch
        %143 = sbr.rel (%p140) target = $region12
      $region11: #{simple_cnn4_forward.3} parent=5 // pred_region
        %s144 = ssub.s32 %s12, 1
        // Predicated region
        $region13: #{simple_cnn4_forward.3} parent=11 // pred_check
          %p145 = pneg %p50
        $region14: #{simple_cnn4_forward.3} parent=11 // pred_check_branch
          %147 = sbr.rel (%p145) target = $region16
        $region15: #{simple_cnn4_forward.3} parent=11 // pred_region
          %s148 = smul.u32 2, %s22
          %p149 = scmp.lt.s32.totalorder %s148, 1
          %s150 = scalar_select %p149, %s148, 1
          %s151 = smul.addr %s150, 2
          %s152 = scalar_lea.vmem %s0, %s151
          %s153 = smul.u32 2, %s22
        $region16: #{simple_cnn4_forward.3} parent=11 // pred_fallthru
          _
      $region12: #{simple_cnn4_forward.3} parent=5 // pred_fallthru
        _
      %p154 = scmp.lt.s32.totalorder %s12, 2
      // Predicated region
      $region17: #{simple_cnn4_forward.3} parent=5 // pred_check
        %p155 = pneg %p154
      $region18: #{simple_cnn4_forward.3} parent=5 // pred_check_branch
        %157 = sbr.rel (%p155) target = $region20
      $region19: #{simple_cnn4_forward.3} parent=5 // pred_region
        // Predicated region
        $region21: #{simple_cnn4_forward.3} parent=19 // pred_check
          %p158 = pneg %p72
        $region22: #{simple_cnn4_forward.3} parent=19 // pred_check_branch
          %160 = sbr.rel (%p158) target = $region24
        $region23: #{simple_cnn4_forward.3} parent=19 // pred_region
          %s161 = sand.u32 %s62, 1
          %s162 = sand.u32 %s62, 1
          %s163 = smul.addr %s162, 128
          %s164 = scalar_lea.vmem [#allocation3], %s163
          %s165 = smul.u32 32, %s20
          %s166 = smul.addr %s165, 2
          %s167 = sadd.s32 %s19, %s166
          %s168 = smul.addr %s167, 4
          %s169 = scalar_lea.vmem %s1, %s168
          // Predicated region
          $region25: #{simple_cnn4_forward.3} parent=23 // pred_check
            _
          $region26: #{simple_cnn4_forward.3} parent=23 // pred_check_branch
            %171 = sbr.rel (0) target = $region28
          $region27: #{simple_cnn4_forward.3} parent=23 // pred_region
            // Predicated region
            $region29: #{simple_cnn4_forward.3} parent=27 // pred_check
              _
            $region30: #{simple_cnn4_forward.3} parent=27 // pred_check_branch
              %173 = sbr.rel target = $region32
            $region31: #{simple_cnn4_forward.3} parent=27 // pred_region
              // Predicated region
              $region44: #{simple_cnn4_forward.3} parent=31 // pred_check
                _
              $region45: #{simple_cnn4_forward.3} parent=31 // pred_check_branch
                %250 = sbr.rel (0) target = $region47
              $region46: #{simple_cnn4_forward.3} parent=31 // pred_region
                loop: start=0, step=1, limit=1
                $region48: #{simple_cnn4_forward.3} parent=46 // loop_pre_header
                  _
                $region49: #{simple_cnn4_forward.3} parent=46 // loop_header
                  %s252 = sphi 0, %s256
                  %p253 = scmp.ge.s32.totalorder %s252, 1
                  %s257 = sphi %s169, %s169
                  %s258 = sphi %s164, %s164
                $region50: #{simple_cnn4_forward.3} parent=46 // loop_header_branch
                  %255 = sbr.rel (%p253) target = $region54
                $region51: #{simple_cnn4_forward.3} parent=46 // loop_body
                  _
                $region52: #{simple_cnn4_forward.3} parent=46 // loop_footer
                  %s256 = sadd.s32 1, %s252
                $region53: #{simple_cnn4_forward.3} parent=46 // loop_footer_branch
                  %251 = sbr.rel target = $region49
                $region54: #{simple_cnn4_forward.3} parent=46 // loop_exit
                  _
                loop: start=0, step=1, limit=1
                $region55: #{simple_cnn4_forward.3} parent=46 // loop_pre_header
                  _
                $region56: #{simple_cnn4_forward.3} parent=46 // loop_header
                  %s261 = sphi 0, %s265
                  %p262 = scmp.ge.s32.totalorder %s261, 1
                  %s266 = sphi %s169, %s169
                  %s267 = sphi %s164, %s164
                $region57: #{simple_cnn4_forward.3} parent=46 // loop_header_branch
                  %264 = sbr.rel (%p262) target = $region61
                $region58: #{simple_cnn4_forward.3} parent=46 // loop_body
                  %v268 = vld [vmem:[%s266] sm:$0xf]
                  %269 = vst [vmem:[%s267] sm:$0xf] %v268
                  %v270 = vld [vmem:[%s266 + $0x8] sm:$0xf]
                  %271 = vst [vmem:[%s267 + $0x4] sm:$0xf] %v270
                  %v272 = vld [vmem:[%s266 + $0x10] sm:$0xf]
                  %273 = vst [vmem:[%s267 + $0x8] sm:$0xf] %v272
                  %v274 = vld [vmem:[%s266 + $0x18] sm:$0xf]
                  %275 = vst [vmem:[%s267 + $0xc] sm:$0xf] %v274
                  %v276 = vld [vmem:[%s266 + $0x20] sm:$0xf]
                  %277 = vst [vmem:[%s267 + $0x10] sm:$0xf] %v276
                  %v278 = vld [vmem:[%s266 + $0x28] sm:$0xf]
                  %279 = vst [vmem:[%s267 + $0x14] sm:$0xf] %v278
                  %v280 = vld [vmem:[%s266 + $0x30] sm:$0xf]
                  %281 = vst [vmem:[%s267 + $0x18] sm:$0xf] %v280
                  %v282 = vld [vmem:[%s266 + $0x38] sm:$0xf]
                  %283 = vst [vmem:[%s267 + $0x1c] sm:$0xf] %v282
                  %v284 = vld [vmem:[%s266 + $0x40] sm:$0xf]
                  %285 = vst [vmem:[%s267 + $0x20] sm:$0xf] %v284
                  %v286 = vld [vmem:[%s266 + $0x48] sm:$0xf]
                  %287 = vst [vmem:[%s267 + $0x24] sm:$0xf] %v286
                  %v288 = vld [vmem:[%s266 + $0x50] sm:$0xf]
                  %289 = vst [vmem:[%s267 + $0x28] sm:$0xf] %v288
                  %v290 = vld [vmem:[%s266 + $0x58] sm:$0xf]
                  %291 = vst [vmem:[%s267 + $0x2c] sm:$0xf] %v290
                  %v292 = vld [vmem:[%s266 + $0x60] sm:$0xf]
                  %293 = vst [vmem:[%s267 + $0x30] sm:$0xf] %v292
                  %v294 = vld [vmem:[%s266 + $0x68] sm:$0xf]
                  %295 = vst [vmem:[%s267 + $0x34] sm:$0xf] %v294
                  %v296 = vld [vmem:[%s266 + $0x70] sm:$0xf]
                  %297 = vst [vmem:[%s267 + $0x38] sm:$0xf] %v296
                  %v298 = vld [vmem:[%s266 + $0x78] sm:$0xf]
                  %299 = vst [vmem:[%s267 + $0x3c] sm:$0xf] %v298
                  %v300 = vld [vmem:[%s266 + $0x80] sm:$0xf]
                  %301 = vst [vmem:[%s267 + $0x40] sm:$0xf] %v300
                  %v302 = vld [vmem:[%s266 + $0x88] sm:$0xf]
                  %303 = vst [vmem:[%s267 + $0x44] sm:$0xf] %v302
                  %v304 = vld [vmem:[%s266 + $0x90] sm:$0xf]
                  %305 = vst [vmem:[%s267 + $0x48] sm:$0xf] %v304
                  %v306 = vld [vmem:[%s266 + $0x98] sm:$0xf]
                  %307 = vst [vmem:[%s267 + $0x4c] sm:$0xf] %v306
                  %v308 = vld [vmem:[%s266 + $0xa0] sm:$0xf]
                  %309 = vst [vmem:[%s267 + $0x50] sm:$0xf] %v308
                  %v310 = vld [vmem:[%s266 + $0xa8] sm:$0xf]
                  %311 = vst [vmem:[%s267 + $0x54] sm:$0xf] %v310
                  %v312 = vld [vmem:[%s266 + $0xb0] sm:$0xf]
                  %313 = vst [vmem:[%s267 + $0x58] sm:$0xf] %v312
                  %v314 = vld [vmem:[%s266 + $0xb8] sm:$0xf]
                  %315 = vst [vmem:[%s267 + $0x5c] sm:$0xf] %v314
                  %v316 = vld [vmem:[%s266 + $0xc0] sm:$0xf]
                  %317 = vst [vmem:[%s267 + $0x60] sm:$0xf] %v316
                  %v318 = vld [vmem:[%s266 + $0xc8] sm:$0xf]
                  %319 = vst [vmem:[%s267 + $0x64] sm:$0xf] %v318
                  %v320 = vld [vmem:[%s266 + $0xd0] sm:$0xf]
                  %321 = vst [vmem:[%s267 + $0x68] sm:$0xf] %v320
                  %v322 = vld [vmem:[%s266 + $0xd8] sm:$0xf]
                  %323 = vst [vmem:[%s267 + $0x6c] sm:$0xf] %v322
                  %v324 = vld [vmem:[%s266 + $0xe0] sm:$0xf]
                  %325 = vst [vmem:[%s267 + $0x70] sm:$0xf] %v324
                  %v326 = vld [vmem:[%s266 + $0xe8] sm:$0xf]
                  %327 = vst [vmem:[%s267 + $0x74] sm:$0xf] %v326
                  %v328 = vld [vmem:[%s266 + $0xf0] sm:$0xf]
                  %329 = vst [vmem:[%s267 + $0x78] sm:$0xf] %v328
                  %v330 = vld [vmem:[%s266 + $0xf8] sm:$0xf]
                  %331 = vst [vmem:[%s267 + $0x7c] sm:$0xf] %v330
                $region59: #{simple_cnn4_forward.3} parent=46 // loop_footer
                  %s265 = sadd.s32 1, %s261
                $region60: #{simple_cnn4_forward.3} parent=46 // loop_footer_branch
                  %260 = sbr.rel target = $region56
                $region61: #{simple_cnn4_forward.3} parent=46 // loop_exit
                  _
              $region47: #{simple_cnn4_forward.3} parent=31 // pred_fallthru
                _
            $region32: #{simple_cnn4_forward.3} parent=27 // pred_fallthru
              _
            // Predicated region
            $region33: #{simple_cnn4_forward.3} parent=27 // pred_check
              _
            $region34: #{simple_cnn4_forward.3} parent=27 // pred_check_branch
              %175 = sbr.rel (0) target = $region36
            $region35: #{simple_cnn4_forward.3} parent=27 // pred_region
              loop: start=0, step=1, limit=1
              $region37: #{simple_cnn4_forward.3} parent=35 // loop_pre_header
                _
              $region38: #{simple_cnn4_forward.3} parent=35 // loop_header
                %s178 = sphi 0, %s182
                %p179 = scmp.ge.s32.totalorder %s178, 1
                %s183 = sphi %s169, %s169
                %s184 = sphi %s164, %s164
              $region39: #{simple_cnn4_forward.3} parent=35 // loop_header_branch
                %181 = sbr.rel (%p179) target = $region43
              $region40: #{simple_cnn4_forward.3} parent=35 // loop_body
                %v185 = vld [vmem:[%s183] sm:$0xf]
                %186 = vst [vmem:[%s184] sm:$0xf] %v185
                %v187 = vld [vmem:[%s183 + $0x8] sm:$0xf]
                %188 = vst [vmem:[%s184 + $0x4] sm:$0xf] %v187
                %v189 = vld [vmem:[%s183 + $0x10] sm:$0xf]
                %190 = vst [vmem:[%s184 + $0x8] sm:$0xf] %v189
                %v191 = vld [vmem:[%s183 + $0x18] sm:$0xf]
                %192 = vst [vmem:[%s184 + $0xc] sm:$0xf] %v191
                %v193 = vld [vmem:[%s183 + $0x20] sm:$0xf]
                %194 = vst [vmem:[%s184 + $0x10] sm:$0xf] %v193
                %v195 = vld [vmem:[%s183 + $0x28] sm:$0xf]
                %196 = vst [vmem:[%s184 + $0x14] sm:$0xf] %v195
                %v197 = vld [vmem:[%s183 + $0x30] sm:$0xf]
                %198 = vst [vmem:[%s184 + $0x18] sm:$0xf] %v197
                %v199 = vld [vmem:[%s183 + $0x38] sm:$0xf]
                %200 = vst [vmem:[%s184 + $0x1c] sm:$0xf] %v199
                %v201 = vld [vmem:[%s183 + $0x40] sm:$0xf]
                %202 = vst [vmem:[%s184 + $0x20] sm:$0xf] %v201
                %v203 = vld [vmem:[%s183 + $0x48] sm:$0xf]
                %204 = vst [vmem:[%s184 + $0x24] sm:$0xf] %v203
                %v205 = vld [vmem:[%s183 + $0x50] sm:$0xf]
                %206 = vst [vmem:[%s184 + $0x28] sm:$0xf] %v205
                %v207 = vld [vmem:[%s183 + $0x58] sm:$0xf]
                %208 = vst [vmem:[%s184 + $0x2c] sm:$0xf] %v207
                %v209 = vld [vmem:[%s183 + $0x60] sm:$0xf]
                %210 = vst [vmem:[%s184 + $0x30] sm:$0xf] %v209
                %v211 = vld [vmem:[%s183 + $0x68] sm:$0xf]
                %212 = vst [vmem:[%s184 + $0x34] sm:$0xf] %v211
                %v213 = vld [vmem:[%s183 + $0x70] sm:$0xf]
                %214 = vst [vmem:[%s184 + $0x38] sm:$0xf] %v213
                %v215 = vld [vmem:[%s183 + $0x78] sm:$0xf]
                %216 = vst [vmem:[%s184 + $0x3c] sm:$0xf] %v215
                %v217 = vld [vmem:[%s183 + $0x80] sm:$0xf]
                %218 = vst [vmem:[%s184 + $0x40] sm:$0xf] %v217
                %v219 = vld [vmem:[%s183 + $0x88] sm:$0xf]
                %220 = vst [vmem:[%s184 + $0x44] sm:$0xf] %v219
                %v221 = vld [vmem:[%s183 + $0x90] sm:$0xf]
                %222 = vst [vmem:[%s184 + $0x48] sm:$0xf] %v221
                %v223 = vld [vmem:[%s183 + $0x98] sm:$0xf]
                %224 = vst [vmem:[%s184 + $0x4c] sm:$0xf] %v223
                %v225 = vld [vmem:[%s183 + $0xa0] sm:$0xf]
                %226 = vst [vmem:[%s184 + $0x50] sm:$0xf] %v225
                %v227 = vld [vmem:[%s183 + $0xa8] sm:$0xf]
                %228 = vst [vmem:[%s184 + $0x54] sm:$0xf] %v227
                %v229 = vld [vmem:[%s183 + $0xb0] sm:$0xf]
                %230 = vst [vmem:[%s184 + $0x58] sm:$0xf] %v229
                %v231 = vld [vmem:[%s183 + $0xb8] sm:$0xf]
                %232 = vst [vmem:[%s184 + $0x5c] sm:$0xf] %v231
                %v233 = vld [vmem:[%s183 + $0xc0] sm:$0xf]
                %234 = vst [vmem:[%s184 + $0x60] sm:$0xf] %v233
                %v235 = vld [vmem:[%s183 + $0xc8] sm:$0xf]
                %236 = vst [vmem:[%s184 + $0x64] sm:$0xf] %v235
                %v237 = vld [vmem:[%s183 + $0xd0] sm:$0xf]
                %238 = vst [vmem:[%s184 + $0x68] sm:$0xf] %v237
                %v239 = vld [vmem:[%s183 + $0xd8] sm:$0xf]
                %240 = vst [vmem:[%s184 + $0x6c] sm:$0xf] %v239
                %v241 = vld [vmem:[%s183 + $0xe0] sm:$0xf]
                %242 = vst [vmem:[%s184 + $0x70] sm:$0xf] %v241
                %v243 = vld [vmem:[%s183 + $0xe8] sm:$0xf]
                %244 = vst [vmem:[%s184 + $0x74] sm:$0xf] %v243
                %v245 = vld [vmem:[%s183 + $0xf0] sm:$0xf]
                %246 = vst [vmem:[%s184 + $0x78] sm:$0xf] %v245
                %v247 = vld [vmem:[%s183 + $0xf8] sm:$0xf]
                %248 = vst [vmem:[%s184 + $0x7c] sm:$0xf] %v247
              $region41: #{simple_cnn4_forward.3} parent=35 // loop_footer
                %s182 = sadd.s32 1, %s178
              $region42: #{simple_cnn4_forward.3} parent=35 // loop_footer_branch
                %177 = sbr.rel target = $region38
              $region43: #{simple_cnn4_forward.3} parent=35 // loop_exit
                _
            $region36: #{simple_cnn4_forward.3} parent=27 // pred_fallthru
              _
          $region28: #{simple_cnn4_forward.3} parent=23 // pred_fallthru
            _
          %332 = vnop
        $region24: #{simple_cnn4_forward.3} parent=19 // pred_fallthru
          _
        // Predicated region
        $region62: #{simple_cnn4_forward.3} parent=19 // pred_check
          %p333 = pneg %p98
        $region63: #{simple_cnn4_forward.3} parent=19 // pred_check_branch
          %335 = sbr.rel (%p333) target = $region65
        $region64: #{simple_cnn4_forward.3} parent=19 // pred_region
          %p336 = scmp.lt.s32.totalorder %s19, 1
          %s337 = scalar_select %p336, %s19, 1
          %s338 = scalar_lea.vmem %s2, %s337
        $region65: #{simple_cnn4_forward.3} parent=19 // pred_fallthru
          _
      $region20: #{simple_cnn4_forward.3} parent=5 // pred_fallthru
        _
      %p339 = scmp.le.s32.totalorder 1, %s12
      %p340 = scmp.lt.s32.totalorder %s12, 3
      %p341 = pnand %p339, %p340
      %p342 = pneg %p341
      // Predicated region
      $region66: #{simple_cnn4_forward.3} parent=5 // pred_check
        _
      $region67: #{simple_cnn4_forward.3} parent=5 // pred_check_branch
        %344 = sbr.rel (%p341) target = $region69
      $region68: #{simple_cnn4_forward.3} parent=5 // pred_region
        %s345 = ssub.s32 %s12, 1
        %s346 = sand.u32 %s65, 1
        %s347 = sand.u32 %s65, 1
        %s348 = smul.addr %s347, 128
        %s349 = scalar_lea.vmem [#allocation3], %s348
        // Predicated region
        $region70: #{simple_cnn4_forward.3} parent=68 // pred_check
          %p350 = pneg %p78
        $region71: #{simple_cnn4_forward.3} parent=68 // pred_check_branch
          %352 = sbr.rel (%p350) target = $region73
        $region72: #{simple_cnn4_forward.3} parent=68 // pred_region
          _
        $region73: #{simple_cnn4_forward.3} parent=68 // pred_fallthru
          _
        %s353 = smul.u32 2, %s22
        %p354 = scmp.lt.s32.totalorder %s353, 1
        %s355 = scalar_select %p354, %s353, 1
        %s356 = smul.addr %s355, 2
        %s357 = scalar_lea.vmem %s0, %s356
        %p358 = pneg %p50
        %p359 = pneg %p47
        %s360 = sand.u32 %s65, 1
        %s361 = sand.u32 %s65, 1
        %s362 = smul.addr %s361, 128
        %s363 = scalar_lea.vmem [#allocation3], %s362
        %p364 = pneg %p78
        %p365 = pneg %p75
        %p366 = scmp.lt.s32.totalorder %s21, 1
        %s367 = scalar_select %p366, %s21, 1
        %s368 = scalar_lea.vmem %s2, %s367
        %p369 = pneg %p104
        %p370 = pneg %p101
        %p371 = pneg %p130
        %p372 = pneg %p127
        %s373 = sand.u32 %s117, 1
        %s374 = scalar_lea.sflag [#allocation5], %s373
        %s375 = sand.u32 %s117, 1
        %s376 = smul.addr %s375, 4
        %s377 = scalar_lea.vmem [#allocation4], %s376
        %s378 = smul.u32 2, %s22
        %p379 = scmp.lt.s32.totalorder %s378, 1
        %s380 = scalar_select %p379, %s378, 1
        %s381 = smul.addr %s380, 2
        %s382 = scalar_lea.vmem %s0, %s381
        %s383 = smul.u32 2, %s22
        %s384 = smul.u32 32, %s22
        %p385 = scmp.lt.s32.totalorder %s21, 1
        %s386 = scalar_select %p385, %s21, 1
        %s387 = scalar_lea.vmem %s2, %s386
        %p389 = scmp.eq.s32.totalorder %s22, 0
        // Predicated region
        $region74: #{simple_cnn4_forward.3} parent=68 // pred_check
          %p390 = pneg %p389
        $region75: #{simple_cnn4_forward.3} parent=68 // pred_check_branch
          %392 = sbr.rel (%p390) target = $region77
        $region76: #{simple_cnn4_forward.3} parent=68 // pred_region
          %393 = vst [vmem:[#allocation2] sm:$0xf] 0.0
        $region77: #{simple_cnn4_forward.3} parent=68 // pred_fallthru
          _
        %v394 = vld [vmem:[#allocation2] sm:$0xf]
        %v395 = vld [vmem:[%s382] sm:$0xf]
        %v396 = vld [vmem:[%s349] sm:$0xf]
        %v397 = vld [vmem:[%s349 + $0x4] sm:$0xf]
        %v398 = vld [vmem:[%s349 + $0x8] sm:$0xf]
        %v399 = vld [vmem:[%s349 + $0xc] sm:$0xf]
        %v400 = vld [vmem:[%s349 + $0x10] sm:$0xf]
        %v401 = vld [vmem:[%s349 + $0x14] sm:$0xf]
        %v402 = vld [vmem:[%s349 + $0x18] sm:$0xf]
        %v403 = vld [vmem:[%s349 + $0x1c] sm:$0xf]
        %v404 = vld [vmem:[%s349 + $0x20] sm:$0xf]
        %v405 = vld [vmem:[%s349 + $0x24] sm:$0xf]
        %v406 = vld [vmem:[%s349 + $0x28] sm:$0xf]
        %v407 = vld [vmem:[%s349 + $0x2c] sm:$0xf]
        %v408 = vld [vmem:[%s349 + $0x30] sm:$0xf]
        %v409 = vld [vmem:[%s349 + $0x34] sm:$0xf]
        %v410 = vld [vmem:[%s349 + $0x38] sm:$0xf]
        %v411 = vld [vmem:[%s349 + $0x3c] sm:$0xf]
        %v412 = vld [vmem:[%s349 + $0x40] sm:$0xf]
        %v413 = vld [vmem:[%s349 + $0x44] sm:$0xf]
        %v414 = vld [vmem:[%s349 + $0x48] sm:$0xf]
        %v415 = vld [vmem:[%s349 + $0x4c] sm:$0xf]
        %v416 = vld [vmem:[%s349 + $0x50] sm:$0xf]
        %v417 = vld [vmem:[%s349 + $0x54] sm:$0xf]
        %v418 = vld [vmem:[%s349 + $0x58] sm:$0xf]
        %v419 = vld [vmem:[%s349 + $0x5c] sm:$0xf]
        %v420 = vld [vmem:[%s349 + $0x60] sm:$0xf]
        %v421 = vld [vmem:[%s349 + $0x64] sm:$0xf]
        %v422 = vld [vmem:[%s349 + $0x68] sm:$0xf]
        %v423 = vld [vmem:[%s349 + $0x6c] sm:$0xf]
        %v424 = vld [vmem:[%s349 + $0x70] sm:$0xf]
        %v425 = vld [vmem:[%s349 + $0x74] sm:$0xf]
        %v426 = vld [vmem:[%s349 + $0x78] sm:$0xf]
        %v427 = vld [vmem:[%s349 + $0x7c] sm:$0xf]
        %v430 = vunpack.c.l.s4 1983009808
        %v431 = vunpack.c.0.s8 %v430
        %v432 = vlaneseq
        %v433 = vshrl.u32 %v432, 7
        %v434 = vsub.s32 %v431, %v433
        %v435 = vrot.slane %v395, %v434
        %v436 = vcombine.high %v435, %v435
        %v471 = vunpack.c.l.b16 %v396
        %v472 = vunpack.c.l.b16 %v397
        %v473 = vunpack.c.l.b16 %v398
        %v474 = vunpack.c.l.b16 %v399
        %v475 = vunpack.c.l.b16 %v400
        %v476 = vunpack.c.l.b16 %v401
        %v477 = vunpack.c.l.b16 %v402
        %v478 = vunpack.c.l.b16 %v403
        %v479 = vunpack.c.l.b16 %v404
        %v480 = vunpack.c.l.b16 %v405
        %v481 = vunpack.c.l.b16 %v406
        %v482 = vunpack.c.l.b16 %v407
        %v483 = vunpack.c.l.b16 %v408
        %v484 = vunpack.c.l.b16 %v409
        %v485 = vunpack.c.l.b16 %v410
        %v486 = vunpack.c.l.b16 %v411
        %v487 = vunpack.c.l.b16 %v412
        %v488 = vunpack.c.l.b16 %v413
        %v489 = vunpack.c.l.b16 %v414
        %v490 = vunpack.c.l.b16 %v415
        %v491 = vunpack.c.l.b16 %v416
        %v492 = vunpack.c.l.b16 %v417
        %v493 = vunpack.c.l.b16 %v418
        %v494 = vunpack.c.l.b16 %v419
        %v495 = vunpack.c.l.b16 %v420
        %v496 = vunpack.c.l.b16 %v421
        %v497 = vunpack.c.l.b16 %v422
        %v498 = vunpack.c.l.b16 %v423
        %v499 = vunpack.c.l.b16 %v424
        %v500 = vunpack.c.l.b16 %v425
        %v501 = vunpack.c.l.b16 %v426
        %v502 = vunpack.c.l.b16 %v427
        %v503 = vpack.c.b16 %v472, %v471
        %v504 = vpack.c.b16 %v474, %v473
        %v505 = vpack.c.b16 %v476, %v475
        %v506 = vpack.c.b16 %v478, %v477
        %v507 = vpack.c.b16 %v480, %v479
        %v508 = vpack.c.b16 %v482, %v481
        %v509 = vpack.c.b16 %v484, %v483
        %v510 = vpack.c.b16 %v486, %v485
        %v511 = vpack.c.b16 %v488, %v487
        %v512 = vpack.c.b16 %v490, %v489
        %v513 = vpack.c.b16 %v492, %v491
        %v514 = vpack.c.b16 %v494, %v493
        %v515 = vpack.c.b16 %v496, %v495
        %v516 = vpack.c.b16 %v498, %v497
        %v517 = vpack.c.b16 %v500, %v499
        %v518 = vpack.c.b16 %v502, %v501
        %535 = vmatprep.subr.bf16.mxu0 0
        %536 = vmatpush1.bf16.msra.mxu0 %v503
        %537 = vmatprep.subr.bf16.mxu0 0
        %538 = vmatpush1.bf16.msra.mxu0 %v504
        %539 = vmatprep.subr.bf16.mxu0 0
        %540 = vmatpush1.bf16.msra.mxu0 %v505
        %541 = vmatprep.subr.bf16.mxu0 0
        %542 = vmatpush1.bf16.msra.mxu0 %v506
        %543 = vmatprep.subr.bf16.mxu0 0
        %544 = vmatpush1.bf16.msra.mxu0 %v507
        %545 = vmatprep.subr.bf16.mxu0 0
        %546 = vmatpush1.bf16.msra.mxu0 %v508
        %547 = vmatprep.subr.bf16.mxu0 0
        %548 = vmatpush1.bf16.msra.mxu0 %v509
        %549 = vmatprep.subr.bf16.mxu0 0
        %550 = vmatpush1.bf16.msra.mxu0 %v510
        %551 = vmatprep.subr.bf16.mxu0 0
        %552 = vmatpush1.bf16.msra.mxu0 %v511
        %553 = vmatprep.subr.bf16.mxu0 0
        %554 = vmatpush1.bf16.msra.mxu0 %v512
        %555 = vmatprep.subr.bf16.mxu0 0
        %556 = vmatpush1.bf16.msra.mxu0 %v513
        %557 = vmatprep.subr.bf16.mxu0 0
        %558 = vmatpush1.bf16.msra.mxu0 %v514
        %559 = vmatprep.subr.bf16.mxu0 0
        %560 = vmatpush1.bf16.msra.mxu0 %v515
        %561 = vmatprep.subr.bf16.mxu0 0
        %562 = vmatpush1.bf16.msra.mxu0 %v516
        %563 = vmatprep.subr.bf16.mxu0 0
        %564 = vmatpush1.bf16.msra.mxu0 %v517
        %565 = vmatprep.subr.bf16.mxu0 0
        %566 = vmatpush1.bf16.msra.mxu0 %v518
        %567 = vmatprep.mubr.bf16.mxu0 %v436
        %568 = vmatmul.mubr.bf16.gmra.mrb[0].mxu0 %v435
        %v569 = vpop.f32.mrb[0].mxu0
        %v570 = vadd.f32 0.0, %v569
        %v571 = vpop.f32.mrb[0].mxu0
        %v572 = vpop.f32.mrb[0].mxu0
        %v573 = vpop.f32.mrb[0].mxu0
        %574 = vdwg.mxu0
        %v575 = vadd.f32 %v394, %v570
        %576 = vst [vmem:[#allocation2] sm:$0xf] %v575
        // Predicated region
        $region78: #{simple_cnn4_forward.3} parent=68 // pred_check
          %p577 = pneg %p389
        $region79: #{simple_cnn4_forward.3} parent=68 // pred_check_branch
          %579 = sbr.rel (%p577) target = $region81
        $region80: #{simple_cnn4_forward.3} parent=68 // pred_region
          %v580 = vld [vmem:[#allocation2] sm:$0xf]
          %v581 = vld [vmem:[%s387] sm:$0x1]
          %v583 = vlaneseq
          %v584 = vshrl.u32 %v583, 7
          %v585 = vsub.s32 0, %v584
          %v586 = vrot.slane %v581, %v585
          %v588 = vadd.f32 %v580, %v586
          %v589 = vmax.f32 %v588, 0.0
          %v590 = vand.u32 2147483647, %v588
          %v591 = vsub.f32 0.0, %v590
          %v592 = vmul.f32 %v591, 1.442695
          %v593 = vpow.pop %v592
          %v594 = vadd.f32 %v593, 1.0
          %v595 = vlog2.pop %v594
          %v596 = vmul.f32 %v595, 0.6931472
          %v597 = vadd.f32 %v589, %v596
          %598 = vst [vmem:[%s377] sm:$0xf] %v597
        $region81: #{simple_cnn4_forward.3} parent=68 // pred_fallthru
          _
        %s599 = sand.u32 %s117, 1
        %s600 = scalar_lea.sflag [#allocation5], %s599
        %s601 = sand.u32 %s117, 1
        %s602 = smul.addr %s601, 4
        %s603 = scalar_lea.vmem [#allocation4], %s602
        // Predicated region
        $region82: #{simple_cnn4_forward.3} parent=68 // pred_check
          %p604 = pneg %p127
        $region83: #{simple_cnn4_forward.3} parent=68 // pred_check_branch
          %606 = sbr.rel (%p604) target = $region85
        $region84: #{simple_cnn4_forward.3} parent=68 // pred_region
          %s608 = ssub.s32 64, 64
          %609 = vsyncadd %s600, %s608
          %s610 = smul.addr %s21, 64
          %s611 = scalar_lea.hbm %s3, %s610
          %s613 = sshll.u32 %s603, 4
          %s614 = int_to_ptr.vmem [resolvable:$true] %s613
          %616 = dma.vmem_to_hbm [thread:$0]  %s614, 64, %s611, %s600
        $region85: #{simple_cnn4_forward.3} parent=68 // pred_fallthru
          _
      $region69: #{simple_cnn4_forward.3} parent=5 // pred_fallthru
        _
      %p617 = scmp.le.s32.totalorder 2, %s12
      // Predicated region
      $region86: #{simple_cnn4_forward.3} parent=5 // pred_check
        %p618 = pneg %p617
      $region87: #{simple_cnn4_forward.3} parent=5 // pred_check_branch
        %620 = sbr.rel (%p618) target = $region89
      $region88: #{simple_cnn4_forward.3} parent=5 // pred_region
        %s621 = ssub.s32 %s12, 2
        // Predicated region
        $region90: #{simple_cnn4_forward.3} parent=88 // pred_check
          %p622 = pneg %p133
        $region91: #{simple_cnn4_forward.3} parent=88 // pred_check_branch
          %624 = sbr.rel (%p622) target = $region93
        $region92: #{simple_cnn4_forward.3} parent=88 // pred_region
          %s625 = sand.u32 %s118, 1
          %s626 = scalar_lea.sflag [#allocation5], %s625
          %s627 = sand.u32 %s118, 1
          %s628 = smul.addr %s627, 4
          %s629 = scalar_lea.vmem [#allocation4], %s628
          %630 = dma.done %s626, 64
        $region93: #{simple_cnn4_forward.3} parent=88 // pred_fallthru
          _
      $region89: #{simple_cnn4_forward.3} parent=5 // pred_fallthru
        _
    $region6: #{simple_cnn4_forward.3} parent=1 // loop_footer
      %s16 = sadd.s32 1, %s12
    $region7: #{simple_cnn4_forward.3} parent=1 // loop_footer_branch
      %11 = sbr.rel target = $region3
    $region8: #{simple_cnn4_forward.3} parent=1 // loop_exit
      _
    %631 = vsyncpa [#allocation5], 1
    %s632 = scalar_lea.sflag [#allocation5], 1
    %633 = vsyncpa %s632, 1

// kernel: simple_cnn4_forward.2
$region0: #{simple_cnn4_forward.2}
  #allocation0 [shape = 'u32[]', space=smem, size = 0x4, offset = 0x4, fixed_abs, tag = 'smem constant byte address 0x4 - core index']
  #allocation1 [shape = 'u32[144,128]{1,0:T(1,128)}', space=vmem, size = 0x12000, scoped, tag = 'internal scratch']
  #allocation2 [shape = 'bf16[2,25,512]{2,1,0:T(8,128)(2,1)}', space=vmem, size = 0x10000, scoped, tag = 'scratch operand']
  #allocation3 [shape = 'f32[1,1]{1,0:T(1,128)S(1)}', space=vmem, size = 0x200, scoped, tag = 'scoped memory for simple_cnn4_forward.2']
  %s0 = inlined_call_operand.vmem [shape: bf16[4,1,256], index: 0, kind: input, shape index: {}]
  %s1 = inlined_call_operand.vmem [shape: bf16[25,25], index: 1, kind: input, shape index: {}]
  %s2 = inlined_call_operand.vmem [shape: f32[25,1], index: 2, kind: input, shape index: {}]
  %s3 = inlined_call_operand.vmem [shape: bf16[25,375], index: 3, kind: input, shape index: {}]
  %s4 = inlined_call_operand.vmem [shape: f32[25,1], index: 4, kind: input, shape index: {}]
  %s5 = inlined_call_operand.vmem [shape: bf16[25,375], index: 5, kind: input, shape index: {}]
  %s6 = inlined_call_operand.vmem [shape: f32[25,1], index: 6, kind: input, shape index: {}]
  %s7 = inlined_call_operand.vmem [shape: bf16[1,125], index: 7, kind: input, shape index: {}]
  %s8 = inlined_call_operand.<no memory space> [shape: f32[1,1], index: 8, kind: input, shape index: {}]
  %s9 = inlined_call_operand.vmem [shape: bf16[4,1,256], index: 9, kind: output, shape index: {}]
  %s10 = sld [smem:[#allocation0]]
  $region69: #{simple_cnn4_forward.2} parent=0
    _
  %s12 = ssub.s32 1, %s10
  %s13 = scalar_select 0, %s12, %s10
  %v14 = vstv %s8
  %15 = vst [vmem:[#allocation3] sm:$0x1] %v14
  loop: start=0, step=1, limit=4
  $region2: #{simple_cnn4_forward.2} parent=0 // loop_pre_header
    _
  $region3: #{simple_cnn4_forward.2} parent=0 // loop_header
    %s17 = sphi 0, %s21
    %p18 = scmp.ge.s32.totalorder %s17, 4
    %s27 = sphi 0, %s29
    %s30 = sphi 0, %s27
    %s31 = sphi 0, %s30
    %s47 = sphi 0, %s31
    %s51 = sphi 0, %s51
    %s53 = sphi 0, %s51
    %s54 = sphi 0, %s53
    %s68 = sphi 0, %s54
    %s72 = sphi 0, %s72
    %s74 = sphi 0, %s72
    %s75 = sphi 0, %s74
    %s89 = sphi 0, %s75
    %s93 = sphi 0, %s93
    %s95 = sphi 0, %s93
    %s96 = sphi 0, %s95
    %s110 = sphi 0, %s96
    %s114 = sphi 0, %s114
    %s116 = sphi 0, %s114
    %s117 = sphi 0, %s116
    %s131 = sphi 0, %s117
    %s135 = sphi 0, %s135
    %s137 = sphi 0, %s135
    %s138 = sphi 0, %s137
    %s152 = sphi 0, %s138
    %s156 = sphi 0, %s156
    %s158 = sphi 0, %s156
    %s159 = sphi 0, %s158
    %s173 = sphi 0, %s159
    %s177 = sphi 0, %s177
    %s179 = sphi 0, %s177
    %s180 = sphi 0, %s179
    %s194 = sphi 0, %s180
    %s198 = sphi 0, %s198
    %s200 = sphi 0, %s198
    %s201 = sphi 0, %s200
    %s215 = sphi 0, %s201
    %s221 = sphi 0, %s223
    %s224 = sphi 0, %s221
    %s225 = sphi 0, %s224
    %s241 = sphi 0, %s225
  $region4: #{simple_cnn4_forward.2} parent=0 // loop_header_branch
    %20 = sbr.rel (%p18) target = $region8
  $region5: #{simple_cnn4_forward.2} parent=0 // loop_body
    %s22 = ssub.s32 %s17, 1
    %s23 = ssub.s32 %s17, 2
    %s24 = sadd.s32 %s17, 1
    %s25 = ssub.s32 %s17, %s24
    %p26 = scmp.eq.s32.totalorder %s25, 0
    %s28 = sadd.s32 %s27, 1
    %s29 = scalar_select %p26, %s27, %s28
    %p32 = pneg %p26
    %p33 = scmp.eq.s32.totalorder %s17, 1
    %p34 = por %p32, %p33
    %p35 = scmp.ne.s32.totalorder %s27, %s30
    %p36 = scmp.eq.s32.totalorder %s17, 0
    %p37 = por %p35, %p36
    %p38 = scmp.ne.s32.totalorder %s27, %s30
    %p39 = scmp.eq.s32.totalorder %s22, 1
    %p40 = por %p38, %p39
    %p41 = scmp.ne.s32.totalorder %s30, %s31
    %p42 = scmp.eq.s32.totalorder %s22, 0
    %p43 = por %p41, %p42
    %p44 = scmp.ne.s32.totalorder %s30, %s31
    %p45 = scmp.eq.s32.totalorder %s23, 1
    %p46 = por %p44, %p45
    %p48 = scmp.ne.s32.totalorder %s31, %s47
    %p49 = scmp.eq.s32.totalorder %s23, 0
    %p50 = por %p48, %p49
    %s52 = sadd.s32 %s51, 1
    %p55 = scmp.eq.s32.totalorder %s17, 1
    %p56 = scmp.ne.s32.totalorder %s51, %s53
    %p57 = scmp.eq.s32.totalorder %s17, 0
    %p58 = por %p56, %p57
    %p59 = scmp.ne.s32.totalorder %s51, %s53
    %p60 = scmp.eq.s32.totalorder %s22, 1
    %p61 = por %p59, %p60
    %p62 = scmp.ne.s32.totalorder %s53, %s54
    %p63 = scmp.eq.s32.totalorder %s22, 0
    %p64 = por %p62, %p63
    %p65 = scmp.ne.s32.totalorder %s53, %s54
    %p66 = scmp.eq.s32.totalorder %s23, 1
    %p67 = por %p65, %p66
    %p69 = scmp.ne.s32.totalorder %s54, %s68
    %p70 = scmp.eq.s32.totalorder %s23, 0
    %p71 = por %p69, %p70
    %s73 = sadd.s32 %s72, 1
    %p76 = scmp.eq.s32.totalorder %s17, 1
    %p77 = scmp.ne.s32.totalorder %s72, %s74
    %p78 = scmp.eq.s32.totalorder %s17, 0
    %p79 = por %p77, %p78
    %p80 = scmp.ne.s32.totalorder %s72, %s74
    %p81 = scmp.eq.s32.totalorder %s22, 1
    %p82 = por %p80, %p81
    %p83 = scmp.ne.s32.totalorder %s74, %s75
    %p84 = scmp.eq.s32.totalorder %s22, 0
    %p85 = por %p83, %p84
    %p86 = scmp.ne.s32.totalorder %s74, %s75
    %p87 = scmp.eq.s32.totalorder %s23, 1
    %p88 = por %p86, %p87
    %p90 = scmp.ne.s32.totalorder %s75, %s89
    %p91 = scmp.eq.s32.totalorder %s23, 0
    %p92 = por %p90, %p91
    %s94 = sadd.s32 %s93, 1
    %p97 = scmp.eq.s32.totalorder %s17, 1
    %p98 = scmp.ne.s32.totalorder %s93, %s95
    %p99 = scmp.eq.s32.totalorder %s17, 0
    %p100 = por %p98, %p99
    %p101 = scmp.ne.s32.totalorder %s93, %s95
    %p102 = scmp.eq.s32.totalorder %s22, 1
    %p103 = por %p101, %p102
    %p104 = scmp.ne.s32.totalorder %s95, %s96
    %p105 = scmp.eq.s32.totalorder %s22, 0
    %p106 = por %p104, %p105
    %p107 = scmp.ne.s32.totalorder %s95, %s96
    %p108 = scmp.eq.s32.totalorder %s23, 1
    %p109 = por %p107, %p108
    %p111 = scmp.ne.s32.totalorder %s96, %s110
    %p112 = scmp.eq.s32.totalorder %s23, 0
    %p113 = por %p111, %p112
    %s115 = sadd.s32 %s114, 1
    %p118 = scmp.eq.s32.totalorder %s17, 1
    %p119 = scmp.ne.s32.totalorder %s114, %s116
    %p120 = scmp.eq.s32.totalorder %s17, 0
    %p121 = por %p119, %p120
    %p122 = scmp.ne.s32.totalorder %s114, %s116
    %p123 = scmp.eq.s32.totalorder %s22, 1
    %p124 = por %p122, %p123
    %p125 = scmp.ne.s32.totalorder %s116, %s117
    %p126 = scmp.eq.s32.totalorder %s22, 0
    %p127 = por %p125, %p126
    %p128 = scmp.ne.s32.totalorder %s116, %s117
    %p129 = scmp.eq.s32.totalorder %s23, 1
    %p130 = por %p128, %p129
    %p132 = scmp.ne.s32.totalorder %s117, %s131
    %p133 = scmp.eq.s32.totalorder %s23, 0
    %p134 = por %p132, %p133
    %s136 = sadd.s32 %s135, 1
    %p139 = scmp.eq.s32.totalorder %s17, 1
    %p140 = scmp.ne.s32.totalorder %s135, %s137
    %p141 = scmp.eq.s32.totalorder %s17, 0
    %p142 = por %p140, %p141
    %p143 = scmp.ne.s32.totalorder %s135, %s137
    %p144 = scmp.eq.s32.totalorder %s22, 1
    %p145 = por %p143, %p144
    %p146 = scmp.ne.s32.totalorder %s137, %s138
    %p147 = scmp.eq.s32.totalorder %s22, 0
    %p148 = por %p146, %p147
    %p149 = scmp.ne.s32.totalorder %s137, %s138
    %p150 = scmp.eq.s32.totalorder %s23, 1
    %p151 = por %p149, %p150
    %p153 = scmp.ne.s32.totalorder %s138, %s152
    %p154 = scmp.eq.s32.totalorder %s23, 0
    %p155 = por %p153, %p154
    %s157 = sadd.s32 %s156, 1
    %p160 = scmp.eq.s32.totalorder %s17, 1
    %p161 = scmp.ne.s32.totalorder %s156, %s158
    %p162 = scmp.eq.s32.totalorder %s17, 0
    %p163 = por %p161, %p162
    %p164 = scmp.ne.s32.totalorder %s156, %s158
    %p165 = scmp.eq.s32.totalorder %s22, 1
    %p166 = por %p164, %p165
    %p167 = scmp.ne.s32.totalorder %s158, %s159
    %p168 = scmp.eq.s32.totalorder %s22, 0
    %p169 = por %p167, %p168
    %p170 = scmp.ne.s32.totalorder %s158, %s159
    %p171 = scmp.eq.s32.totalorder %s23, 1
    %p172 = por %p170, %p171
    %p174 = scmp.ne.s32.totalorder %s159, %s173
    %p175 = scmp.eq.s32.totalorder %s23, 0
    %p176 = por %p174, %p175
    %s178 = sadd.s32 %s177, 1
    %p181 = scmp.eq.s32.totalorder %s17, 1
    %p182 = scmp.ne.s32.totalorder %s177, %s179
    %p183 = scmp.eq.s32.totalorder %s17, 0
    %p184 = por %p182, %p183
    %p185 = scmp.ne.s32.totalorder %s177, %s179
    %p186 = scmp.eq.s32.totalorder %s22, 1
    %p187 = por %p185, %p186
    %p188 = scmp.ne.s32.totalorder %s179, %s180
    %p189 = scmp.eq.s32.totalorder %s22, 0
    %p190 = por %p188, %p189
    %p191 = scmp.ne.s32.totalorder %s179, %s180
    %p192 = scmp.eq.s32.totalorder %s23, 1
    %p193 = por %p191, %p192
    %p195 = scmp.ne.s32.totalorder %s180, %s194
    %p196 = scmp.eq.s32.totalorder %s23, 0
    %p197 = por %p195, %p196
    %s199 = sadd.s32 %s198, 1
    %p202 = scmp.eq.s32.totalorder %s17, 1
    %p203 = scmp.ne.s32.totalorder %s198, %s200
    %p204 = scmp.eq.s32.totalorder %s17, 0
    %p205 = por %p203, %p204
    %p206 = scmp.ne.s32.totalorder %s198, %s200
    %p207 = scmp.eq.s32.totalorder %s22, 1
    %p208 = por %p206, %p207
    %p209 = scmp.ne.s32.totalorder %s200, %s201
    %p210 = scmp.eq.s32.totalorder %s22, 0
    %p211 = por %p209, %p210
    %p212 = scmp.ne.s32.totalorder %s200, %s201
    %p213 = scmp.eq.s32.totalorder %s23, 1
    %p214 = por %p212, %p213
    %p216 = scmp.ne.s32.totalorder %s201, %s215
    %p217 = scmp.eq.s32.totalorder %s23, 0
    %p218 = por %p216, %p217
    %s219 = ssub.s32 %s17, %s24
    %p220 = scmp.eq.s32.totalorder %s219, 0
    %s222 = sadd.s32 %s221, 1
    %s223 = scalar_select %p220, %s221, %s222
    %p226 = pneg %p220
    %p227 = scmp.eq.s32.totalorder %s17, 1
    %p228 = por %p226, %p227
    %p229 = scmp.ne.s32.totalorder %s221, %s224
    %p230 = scmp.eq.s32.totalorder %s17, 0
    %p231 = por %p229, %p230
    %p232 = scmp.ne.s32.totalorder %s221, %s224
    %p233 = scmp.eq.s32.totalorder %s22, 1
    %p234 = por %p232, %p233
    %p235 = scmp.ne.s32.totalorder %s224, %s225
    %p236 = scmp.eq.s32.totalorder %s22, 0
    %p237 = por %p235, %p236
    %p238 = scmp.ne.s32.totalorder %s224, %s225
    %p239 = scmp.eq.s32.totalorder %s23, 1
    %p240 = por %p238, %p239
    %p242 = scmp.ne.s32.totalorder %s225, %s241
    %p243 = scmp.eq.s32.totalorder %s23, 0
    %p244 = por %p242, %p243
    %p245 = scmp.le.s32.totalorder 1, %s17
    %p246 = scmp.lt.s32.totalorder %s17, 3
    %p247 = pnand %p245, %p246
    %p248 = pneg %p247
    // Predicated region
    $region9: #{simple_cnn4_forward.2} parent=5 // pred_check
      _
    $region10: #{simple_cnn4_forward.2} parent=5 // pred_check_branch
      %250 = sbr.rel (%p247) target = $region12
    $region11: #{simple_cnn4_forward.2} parent=5 // pred_region
      %s251 = ssub.s32 %s17, 1
      // Predicated region
      $region13: #{simple_cnn4_forward.2} parent=11 // pred_check
        %p252 = pneg %p64
      $region14: #{simple_cnn4_forward.2} parent=11 // pred_check_branch
        %254 = sbr.rel (%p252) target = $region16
      $region15: #{simple_cnn4_forward.2} parent=11 // pred_region
        _
      $region16: #{simple_cnn4_forward.2} parent=11 // pred_fallthru
        _
      // Predicated region
      $region17: #{simple_cnn4_forward.2} parent=11 // pred_check
        %p255 = pneg %p85
      $region18: #{simple_cnn4_forward.2} parent=11 // pred_check_branch
        %257 = sbr.rel (%p255) target = $region20
      $region19: #{simple_cnn4_forward.2} parent=11 // pred_region
        _
      $region20: #{simple_cnn4_forward.2} parent=11 // pred_fallthru
        _
      // Predicated region
      $region21: #{simple_cnn4_forward.2} parent=11 // pred_check
        %p258 = pneg %p106
      $region22: #{simple_cnn4_forward.2} parent=11 // pred_check_branch
        %260 = sbr.rel (%p258) target = $region24
      $region23: #{simple_cnn4_forward.2} parent=11 // pred_region
        _
      $region24: #{simple_cnn4_forward.2} parent=11 // pred_fallthru
        _
      // Predicated region
      $region25: #{simple_cnn4_forward.2} parent=11 // pred_check
        %p261 = pneg %p127
      $region26: #{simple_cnn4_forward.2} parent=11 // pred_check_branch
        %263 = sbr.rel (%p261) target = $region28
      $region27: #{simple_cnn4_forward.2} parent=11 // pred_region
        _
      $region28: #{simple_cnn4_forward.2} parent=11 // pred_fallthru
        _
      // Predicated region
      $region29: #{simple_cnn4_forward.2} parent=11 // pred_check
        %p264 = pneg %p148
      $region30: #{simple_cnn4_forward.2} parent=11 // pred_check_branch
        %266 = sbr.rel (%p264) target = $region32
      $region31: #{simple_cnn4_forward.2} parent=11 // pred_region
        _
      $region32: #{simple_cnn4_forward.2} parent=11 // pred_fallthru
        _
      // Predicated region
      $region33: #{simple_cnn4_forward.2} parent=11 // pred_check
        %p267 = pneg %p169
      $region34: #{simple_cnn4_forward.2} parent=11 // pred_check_branch
        %269 = sbr.rel (%p267) target = $region36
      $region35: #{simple_cnn4_forward.2} parent=11 // pred_region
        _
      $region36: #{simple_cnn4_forward.2} parent=11 // pred_fallthru
        _
      // Predicated region
      $region37: #{simple_cnn4_forward.2} parent=11 // pred_check
        %p270 = pneg %p190
      $region38: #{simple_cnn4_forward.2} parent=11 // pred_check_branch
        %272 = sbr.rel (%p270) target = $region40
      $region39: #{simple_cnn4_forward.2} parent=11 // pred_region
        _
      $region40: #{simple_cnn4_forward.2} parent=11 // pred_fallthru
        _
      // Predicated region
      $region41: #{simple_cnn4_forward.2} parent=11 // pred_check
        %p273 = pneg %p211
      $region42: #{simple_cnn4_forward.2} parent=11 // pred_check_branch
        %275 = sbr.rel (%p273) target = $region44
      $region43: #{simple_cnn4_forward.2} parent=11 // pred_region
        _
      $region44: #{simple_cnn4_forward.2} parent=11 // pred_fallthru
        _
    $region12: #{simple_cnn4_forward.2} parent=5 // pred_fallthru
      _
    %p276 = scmp.lt.s32.totalorder %s17, 2
    // Predicated region
    $region45: #{simple_cnn4_forward.2} parent=5 // pred_check
      %p277 = pneg %p276
    $region46: #{simple_cnn4_forward.2} parent=5 // pred_check_branch
      %279 = sbr.rel (%p277) target = $region48
    $region47: #{simple_cnn4_forward.2} parent=5 // pred_region
      // Predicated region
      $region49: #{simple_cnn4_forward.2} parent=47 // pred_check
        %p280 = pneg %p37
      $region50: #{simple_cnn4_forward.2} parent=47 // pred_check_branch
        %282 = sbr.rel (%p280) target = $region52
      $region51: #{simple_cnn4_forward.2} parent=47 // pred_region
        %s283 = smul.u32 2, %s17
        %p284 = scmp.lt.s32.totalorder %s283, 3
        %s285 = scalar_select %p284, %s283, 3
        %s286 = smul.addr %s285, 2
        %s287 = scalar_lea.vmem %s0, %s286
        %s288 = smul.u32 2, %s17
      $region52: #{simple_cnn4_forward.2} parent=47 // pred_fallthru
        _
    $region48: #{simple_cnn4_forward.2} parent=5 // pred_fallthru
      _
    %p289 = scmp.le.s32.totalorder 1, %s17
    %p290 = scmp.lt.s32.totalorder %s17, 3
    %p291 = pnand %p289, %p290
    %p292 = pneg %p291
    // Predicated region
    $region53: #{simple_cnn4_forward.2} parent=5 // pred_check
      _
    $region54: #{simple_cnn4_forward.2} parent=5 // pred_check_branch
      %294 = sbr.rel (%p291) target = $region56
    $region55: #{simple_cnn4_forward.2} parent=5 // pred_region
      %s295 = ssub.s32 %s17, 1
      %s296 = smul.u32 2, %s22
      %p297 = scmp.lt.s32.totalorder %s296, 3
      %s298 = scalar_select %p297, %s296, 3
      %s299 = smul.addr %s298, 2
      %s300 = scalar_lea.vmem %s0, %s299
      %p301 = pneg %p43
      %p302 = pneg %p40
      %p303 = pneg %p64
      %p304 = pneg %p61
      %p305 = pneg %p85
      %p306 = pneg %p82
      %p307 = pneg %p106
      %p308 = pneg %p103
      %p309 = pneg %p127
      %p310 = pneg %p124
      %p311 = pneg %p148
      %p312 = pneg %p145
      %p313 = pneg %p169
      %p314 = pneg %p166
      %p315 = pneg %p190
      %p316 = pneg %p187
      %p317 = pneg %p211
      %p318 = pneg %p208
      %p319 = pneg %p237
      %p320 = pneg %p234
      %s321 = smul.u32 2, %s22
      %p322 = scmp.lt.s32.totalorder %s321, 3
      %s323 = scalar_select %p322, %s321, 3
      %s324 = smul.addr %s323, 2
      %s325 = scalar_lea.vmem %s9, %s324
      %s326 = smul.u32 2, %s22
      %p327 = scmp.lt.s32.totalorder %s326, 3
      %s328 = scalar_select %p327, %s326, 3
      %s329 = smul.addr %s328, 2
      %s330 = scalar_lea.vmem %s0, %s329
      %s331 = smul.u32 2, %s22
      %s332 = smul.u32 2, %s22
      %p333 = scmp.lt.s32.totalorder %s332, 3
      %s334 = scalar_select %p333, %s332, 3
      %s335 = smul.addr %s334, 2
      %s336 = scalar_lea.vmem %s9, %s335
      %s337 = smul.u32 2, %s22
      %339 = vst [vmem:[#allocation2] sm:$0xf] 0
      %340 = vst [vmem:[#allocation2 + $0x10] sm:$0xf] 0
      %341 = vst [vmem:[#allocation2 + $0x20] sm:$0xf] 0
      %vm342 = vcmask 1040384
      %vm343 = vsmask.f32 256
      %vm344 = vmand %vm342, %vm343
      %v345 = vld [vmem:[#allocation2 + $0x30] sm:$0x1]
      %v346 = vsel %vm344, 0, %v345
      %347 = vst [vmem:[#allocation2 + $0x30] sm:$0x1] %v346
      %348 = vst [vmem:[#allocation2 + $0x40] sm:$0xf] 0
      %349 = vst [vmem:[#allocation2 + $0x50] sm:$0xf] 0
      %350 = vst [vmem:[#allocation2 + $0x60] sm:$0xf] 0
      %v351 = vld [vmem:[#allocation2 + $0x70] sm:$0x1]
      %v352 = vsel %vm344, 0, %v351
      %353 = vst [vmem:[#allocation2 + $0x70] sm:$0x1] %v352
      %354 = vst [vmem:[#allocation2 + $0xc] sm:$0xf] 0
      %355 = vst [vmem:[#allocation2 + $0x1c] sm:$0xf] 0
      %356 = vst [vmem:[#allocation2 + $0x2c] sm:$0xf] 0
      %v357 = vld [vmem:[#allocation2 + $0x3c] sm:$0x1]
      %v358 = vsel %vm344, 0, %v357
      %359 = vst [vmem:[#allocation2 + $0x3c] sm:$0x1] %v358
      %360 = vst [vmem:[#allocation2 + $0x4c] sm:$0xf] 0
      %361 = vst [vmem:[#allocation2 + $0x5c] sm:$0xf] 0
      %362 = vst [vmem:[#allocation2 + $0x6c] sm:$0xf] 0
      %v363 = vld [vmem:[#allocation2 + $0x7c] sm:$0x1]
      %v364 = vsel %vm344, 0, %v363
      %365 = vst [vmem:[#allocation2 + $0x7c] sm:$0x1] %v364
      %v366 = vlaneseq
      %v367 = vand.u32 %v366, 127
      %v368 = vadd.s32 %v367, 128
      %vm369 = vcmp.lt.s32.totalorder %v367, 200
      %vm370 = vcmp.lt.s32.totalorder %v368, 200
      %v371 = vld [vmem:[%s330] sm:$0x3]
      %v372 = vld [vmem:[%s330 + $0x2] sm:$0x3]
      %v376 = vunpack.c.l.s4 1935823168
      %v377 = vunpack.c.0.s8 %v376
      %v378 = vlaneseq
      %v379 = vshrl.u32 %v378, 7
      %v380 = vsub.s32 %v377, %v379
      %v381 = vrot.slane %v371, %v380
      %v383 = vunpack.c.l.s4 1935823168
      %v384 = vunpack.c.0.s8 %v383
      %v385 = vlaneseq
      %v386 = vshrl.u32 %v385, 7
      %v387 = vsub.s32 %v384, %v386
      %v388 = vrot.slane %v381, %v387
      %v390 = vunpack.c.l.s4 1935823168
      %v391 = vunpack.c.0.s8 %v390
      %v392 = vlaneseq
      %v393 = vshrl.u32 %v392, 7
      %v394 = vsub.s32 %v391, %v393
      %v395 = vrot.slane %v372, %v394
      %v397 = vunpack.c.l.s4 1935823168
      %v398 = vunpack.c.0.s8 %v397
      %v399 = vlaneseq
      %v400 = vshrl.u32 %v399, 7
      %v401 = vsub.s32 %v398, %v400
      %v402 = vrot.slane %v395, %v401
      %vm405 = vcmask 1044484
      %vm406 = vsmask.f32 4352
      %vm407 = vmand %vm405, %vm406
      %vm408 = vmor %vm407, %vm344
      %v409 = vld [vmem:[#allocation2 + $0x4] sm:$0x11]
      %v410 = vsel %vm408, %v388, %v409
      %411 = vst [vmem:[#allocation2 + $0x4] sm:$0x11] %v410
      %v412 = vld [vmem:[#allocation2 + $0x44] sm:$0x11]
      %v413 = vsel %vm408, %v402, %v412
      %414 = vst [vmem:[#allocation2 + $0x44] sm:$0x11] %v413
      %v415 = vld [vmem:[%s1] sm:$0xf]
      %v416 = vld [vmem:[%s1 + $0x4] sm:$0xf]
      %v417 = vld [vmem:[%s1 + $0x8] sm:$0xf]
      %v418 = vld [vmem:[%s1 + $0xc] sm:$0x1]
      %v419 = vld [vmem:[%s3] sm:$0xff]
      %v420 = vld [vmem:[%s3 + $0x8] sm:$0xf]
      %v421 = vld [vmem:[%s3 + $0xc] sm:$0xff]
      %v422 = vld [vmem:[%s3 + $0x14] sm:$0xf]
      %v423 = vld [vmem:[%s3 + $0x18] sm:$0xff]
      %v424 = vld [vmem:[%s3 + $0x20] sm:$0xf]
      %v425 = vld [vmem:[%s3 + $0x24] sm:$0x11]
      %v426 = vld [vmem:[%s3 + $0x2c] sm:$0x1]
      %v427 = vld [vmem:[%s5] sm:$0xff]
      %v428 = vld [vmem:[%s5 + $0x8] sm:$0xf]
      %v429 = vld [vmem:[%s5 + $0xc] sm:$0xff]
      %v430 = vld [vmem:[%s5 + $0x14] sm:$0xf]
      %v431 = vld [vmem:[%s5 + $0x18] sm:$0xff]
      %v432 = vld [vmem:[%s5 + $0x20] sm:$0xf]
      %v433 = vld [vmem:[%s5 + $0x24] sm:$0x11]
      %v434 = vld [vmem:[%s5 + $0x2c] sm:$0x1]
      %v435 = vld [vmem:[%s7] sm:$0x1]
      %v436 = vld [vmem:[%s2] sm:$0xff]
      %v437 = vld [vmem:[%s2 + $0x8] sm:$0xff]
      %v438 = vld [vmem:[%s2 + $0x10] sm:$0xff]
      %v439 = vld [vmem:[%s2 + $0x18] sm:$0x1]
      %v440 = vld [vmem:[%s4] sm:$0xff]
      %v441 = vld [vmem:[%s4 + $0x8] sm:$0xff]
      %v442 = vld [vmem:[%s4 + $0x10] sm:$0xff]
      %v443 = vld [vmem:[%s4 + $0x18] sm:$0x1]
      %v444 = vld [vmem:[%s6] sm:$0xff]
      %v445 = vld [vmem:[%s6 + $0x8] sm:$0xff]
      %v446 = vld [vmem:[%s6 + $0x10] sm:$0xff]
      %v447 = vld [vmem:[%s6 + $0x18] sm:$0x1]
      %v448 = vld [vmem:[#allocation3] sm:$0x1]
      %v449 = vld [vmem:[#allocation2] sm:$0x11]
      %v450 = vld [vmem:[#allocation2 + $0x8] sm:$0x1]
      %v451 = vld [vmem:[#allocation2 + $0x4] sm:$0x11]
      %v452 = vld [vmem:[#allocation2 + $0xc] sm:$0x1]
      %v455 = vunpack.c.l.b16 %v449
      %v456 = vunpack.c.h.b16 %v449
      %v457 = vunpack.c.l.b16 %v450
      %v458 = vpack.c.b16 %v455, %v455
      %v459 = vpack.c.b16 %v456, %v456
      %v460 = vpack.c.b16 %v457, %v457
      %v465 = vshll.u32 %v458, 16
      %v468 = vshll.u32 %v459, 16
      %v471 = vshll.u32 %v460, 16
      %473 = vrot.lane.b32.xlu0 %v465, 127
      %v474 = vpop.permute.xlu0 %473
      %475 = vrot.lane.b32.xlu0 %v468, 127
      %v476 = vpop.permute.xlu0 %475
      %477 = vrot.lane.b32.xlu0 %v471, 127
      %v478 = vpop.permute.xlu0 %477
      %vm479 = vcmask 1039360
      %v480 = vsel %vm479, %v474, %v476
      %v481 = vsel %vm479, %v476, %v478
      %v485 = vrot.slane %v458, 7
      %v486 = vrot.slane %v459, 7
      %v487 = vrot.slane %v460, 7
      %488 = vrot.lane.b32.xlu0 %v485, 126
      %v489 = vpop.permute.xlu0 %488
      %490 = vrot.lane.b32.xlu0 %v486, 126
      %v491 = vpop.permute.xlu0 %490
      %492 = vrot.lane.b32.xlu0 %v487, 126
      %v493 = vpop.permute.xlu0 %492
      %vm494 = vcmask 1031168
      %v495 = vsel %vm494, %v489, %v491
      %v496 = vsel %vm494, %v491, %v493
      %v497 = vrot.slane %v465, 7
      %v498 = vrot.slane %v468, 7
      %v499 = vrot.slane %v471, 7
      %500 = vrot.lane.b32.xlu0 %v497, 125
      %v501 = vpop.permute.xlu0 %500
      %502 = vrot.lane.b32.xlu0 %v498, 125
      %v503 = vpop.permute.xlu0 %502
      %504 = vrot.lane.b32.xlu0 %v499, 125
      %v505 = vpop.permute.xlu0 %504
      %vm506 = vcmask 1022976
      %v507 = vsel %vm506, %v501, %v503
      %v508 = vsel %vm506, %v503, %v505
      %v512 = vrot.slane %v458, 6
      %v513 = vrot.slane %v459, 6
      %v514 = vrot.slane %v460, 6
      %515 = vrot.lane.b32.xlu0 %v512, 124
      %v516 = vpop.permute.xlu0 %515
      %517 = vrot.lane.b32.xlu0 %v513, 124
      %v518 = vpop.permute.xlu0 %517
      %519 = vrot.lane.b32.xlu0 %v514, 124
      %v520 = vpop.permute.xlu0 %519
      %vm521 = vcmask 1014784
      %v522 = vsel %vm521, %v516, %v518
      %v523 = vsel %vm521, %v518, %v520
      %v524 = vrot.slane %v465, 6
      %v525 = vrot.slane %v468, 6
      %v526 = vrot.slane %v471, 6
      %527 = vrot.lane.b32.xlu0 %v524, 123
      %v528 = vpop.permute.xlu0 %527
      %529 = vrot.lane.b32.xlu0 %v525, 123
      %v530 = vpop.permute.xlu0 %529
      %531 = vrot.lane.b32.xlu0 %v526, 123
      %v532 = vpop.permute.xlu0 %531
      %vm533 = vcmask 1006592
      %v534 = vsel %vm533, %v528, %v530
      %v535 = vsel %vm533, %v530, %v532
      %v539 = vrot.slane %v458, 5
      %v540 = vrot.slane %v459, 5
      %v541 = vrot.slane %v460, 5
      %542 = vrot.lane.b32.xlu0 %v539, 122
      %v543 = vpop.permute.xlu0 %542
      %544 = vrot.lane.b32.xlu0 %v540, 122
      %v545 = vpop.permute.xlu0 %544
      %546 = vrot.lane.b32.xlu0 %v541, 122
      %v547 = vpop.permute.xlu0 %546
      %vm548 = vcmask 998400
      %v549 = vsel %vm548, %v543, %v545
      %v550 = vsel %vm548, %v545, %v547
      %v551 = vrot.slane %v465, 5
      %v552 = vrot.slane %v468, 5
      %v553 = vrot.slane %v471, 5
      %554 = vrot.lane.b32.xlu0 %v551, 121
      %v555 = vpop.permute.xlu0 %554
      %556 = vrot.lane.b32.xlu0 %v552, 121
      %v557 = vpop.permute.xlu0 %556
      %558 = vrot.lane.b32.xlu0 %v553, 121
      %v559 = vpop.permute.xlu0 %558
      %vm560 = vcmask 990208
      %v561 = vsel %vm560, %v555, %v557
      %v562 = vsel %vm560, %v557, %v559
      %566 = vrot.lane.b32.xlu0 %v458, 120
      %v567 = vpop.permute.xlu0 %566
      %568 = vrot.lane.b32.xlu0 %v459, 120
      %v569 = vpop.permute.xlu0 %568
      %570 = vrot.lane.b32.xlu0 %v460, 120
      %v571 = vpop.permute.xlu0 %570
      %vm572 = vcmask 982016
      %v573 = vsel %vm572, %v567, %v569
      %v574 = vsel %vm572, %v569, %v571
      %v575 = vrot.slane %v465, 4
      %v576 = vrot.slane %v468, 4
      %v577 = vrot.slane %v471, 4
      %578 = vrot.lane.b32.xlu0 %v575, 119
      %v579 = vpop.permute.xlu0 %578
      %580 = vrot.lane.b32.xlu0 %v576, 119
      %v581 = vpop.permute.xlu0 %580
      %582 = vrot.lane.b32.xlu0 %v577, 119
      %v583 = vpop.permute.xlu0 %582
      %vm584 = vcmask 973824
      %v585 = vsel %vm584, %v579, %v581
      %v586 = vsel %vm584, %v581, %v583
      %v590 = vrot.slane %v458, 3
      %v591 = vrot.slane %v459, 3
      %v592 = vrot.slane %v460, 3
      %593 = vrot.lane.b32.xlu0 %v590, 118
      %v594 = vpop.permute.xlu0 %593
      %595 = vrot.lane.b32.xlu0 %v591, 118
      %v596 = vpop.permute.xlu0 %595
      %597 = vrot.lane.b32.xlu0 %v592, 118
      %v598 = vpop.permute.xlu0 %597
      %vm599 = vcmask 965632
      %v600 = vsel %vm599, %v594, %v596
      %v601 = vsel %vm599, %v596, %v598
      %v602 = vrot.slane %v465, 3
      %v603 = vrot.slane %v468, 3
      %v604 = vrot.slane %v471, 3
      %605 = vrot.lane.b32.xlu0 %v602, 117
      %v606 = vpop.permute.xlu0 %605
      %607 = vrot.lane.b32.xlu0 %v603, 117
      %v608 = vpop.permute.xlu0 %607
      %609 = vrot.lane.b32.xlu0 %v604, 117
      %v610 = vpop.permute.xlu0 %609
      %vm611 = vcmask 957440
      %v612 = vsel %vm611, %v606, %v608
      %v613 = vsel %vm611, %v608, %v610
      %v618 = vunpack.c.l.b16 %v451
      %v619 = vunpack.c.h.b16 %v451
      %v620 = vpack.c.b16 %v618, %v618
      %v621 = vpack.c.b16 %v619, %v619
      %v622 = vrot.slane %v620, 2
      %v623 = vrot.slane %v621, 2
      %624 = vrot.lane.b32.xlu0 %v622, 116
      %v625 = vpop.permute.xlu0 %624
      %626 = vrot.lane.b32.xlu0 %v623, 116
      %v627 = vpop.permute.xlu0 %626
      %vm628 = vcmask 949248
      %v629 = vsel %vm628, %v625, %v627
      %v631 = vunpack.c.l.b16 %v452
      %v632 = vpack.c.b16 %v631, %v631
      %v634 = vshll.u32 %v620, 16
      %v636 = vrot.slane %v634, 2
      %v638 = vshll.u32 %v621, 16
      %v640 = vrot.slane %v638, 2
      %v642 = vshll.u32 %v632, 16
      %v644 = vrot.slane %v642, 2
      %645 = vrot.lane.b32.xlu0 %v636, 115
      %v646 = vpop.permute.xlu0 %645
      %647 = vrot.lane.b32.xlu0 %v640, 115
      %v648 = vpop.permute.xlu0 %647
      %649 = vrot.lane.b32.xlu0 %v644, 115
      %v650 = vpop.permute.xlu0 %649
      %vm651 = vcmask 941056
      %v652 = vsel %vm651, %v646, %v648
      %v653 = vsel %vm651, %v648, %v650
      %v657 = vrot.slane %v620, 1
      %v658 = vrot.slane %v621, 1
      %v659 = vrot.slane %v632, 1
      %660 = vrot.lane.b32.xlu0 %v657, 114
      %v661 = vpop.permute.xlu0 %660
      %662 = vrot.lane.b32.xlu0 %v658, 114
      %v663 = vpop.permute.xlu0 %662
      %664 = vrot.lane.b32.xlu0 %v659, 114
      %v665 = vpop.permute.xlu0 %664
      %vm666 = vcmask 932864
      %v667 = vsel %vm666, %v661, %v663
      %v668 = vsel %vm666, %v663, %v665
      %v669 = vrot.slane %v634, 1
      %v670 = vrot.slane %v638, 1
      %v671 = vrot.slane %v642, 1
      %672 = vrot.lane.b32.xlu0 %v669, 113
      %v673 = vpop.permute.xlu0 %672
      %674 = vrot.lane.b32.xlu0 %v670, 113
      %v675 = vpop.permute.xlu0 %674
      %676 = vrot.lane.b32.xlu0 %v671, 113
      %v677 = vpop.permute.xlu0 %676
      %vm678 = vcmask 924672
      %v679 = vsel %vm678, %v673, %v675
      %v680 = vsel %vm678, %v675, %v677
      %v684 = vsel %vm344, %v458, %v480
      %v685 = vsel %vm344, %v459, %v481
      %v686 = vsel %vm344, %v460, %v478
      %vm687 = vcmask 1040384
      %v690 = vsel %vm687, %v684, %v495
      %v694 = vsel %vm687, %v685, %v496
      %v698 = vsel %vm687, %v686, %v493
      %vm700 = vcmask 1041408
      %vm701 = vsmask.f32 1280
      %vm702 = vmand %vm700, %vm701
      %v703 = vsel %vm702, %v690, %v507
      %v704 = vsel %vm702, %v694, %v508
      %v705 = vsel %vm702, %v698, %v505
      %vm706 = vcmask 1041408
      %v709 = vsel %vm706, %v703, %v522
      %v713 = vsel %vm706, %v704, %v523
      %v717 = vsel %vm706, %v705, %v520
      %vm719 = vcmask 1042432
      %vm720 = vsmask.f32 2304
      %vm721 = vmand %vm719, %vm720
      %v722 = vsel %vm721, %v709, %v534
      %v723 = vsel %vm721, %v713, %v535
      %v724 = vsel %vm721, %v717, %v532
      %vm725 = vcmask 1042432
      %v728 = vsel %vm725, %v722, %v549
      %v732 = vsel %vm725, %v723, %v550
      %v736 = vsel %vm725, %v724, %v547
      %vm738 = vcmask 1043456
      %vm739 = vsmask.f32 3328
      %vm740 = vmand %vm738, %vm739
      %v741 = vsel %vm740, %v728, %v561
      %v742 = vsel %vm740, %v732, %v562
      %v743 = vsel %vm740, %v736, %v559
      %vm744 = vcmask 1043456
      %v747 = vsel %vm744, %v741, %v573
      %v751 = vsel %vm744, %v742, %v574
      %v755 = vsel %vm744, %v743, %v571
      %vm757 = vcmask 1044480
      %vm758 = vmand %vm757, %vm406
      %v759 = vsel %vm758, %v747, %v585
      %v760 = vsel %vm758, %v751, %v586
      %v761 = vsel %vm758, %v755, %v583
      %vm762 = vcmask 1044480
      %v765 = vsel %vm762, %v759, %v600
      %v769 = vsel %vm762, %v760, %v601
      %v773 = vsel %vm762, %v761, %v598
      %vm775 = vcmask 1045504
      %vm776 = vsmask.f32 5376
      %vm777 = vmand %vm775, %vm776
      %v778 = vsel %vm777, %v765, %v612
      %v779 = vsel %vm777, %v769, %v613
      %v780 = vsel %vm777, %v773, %v610
      %vm781 = vcmask 1045504
      %v784 = vsel %vm781, %v778, %v625
      %v788 = vsel %vm781, %v779, %v629
      %v792 = vsel %vm781, %v780, %v627
      %vm794 = vcmask 1046528
      %vm795 = vsmask.f32 6400
      %vm796 = vmand %vm794, %vm795
      %v797 = vsel %vm796, %v784, %v646
      %v798 = vsel %vm796, %v788, %v652
      %v799 = vsel %vm796, %v792, %v653
      %vm800 = vcmask 1046528
      %v803 = vsel %vm800, %v797, %v661
      %v807 = vsel %vm800, %v798, %v667
      %v811 = vsel %vm800, %v799, %v668
      %vm813 = vcmask 1047552
      %vm814 = vsmask.f32 7424
      %vm815 = vmand %vm813, %vm814
      %v816 = vsel %vm815, %v803, %v673
      %v817 = vsel %vm815, %v807, %v679
      %v818 = vsel %vm815, %v811, %v680
      %822 = vrot.lane.b32.xlu0 %v634, 127
      %v823 = vpop.permute.xlu0 %822
      %824 = vrot.lane.b32.xlu0 %v638, 127
      %v825 = vpop.permute.xlu0 %824
      %826 = vrot.lane.b32.xlu0 %v642, 127
      %v827 = vpop.permute.xlu0 %826
      %v828 = vsel %vm479, %v823, %v825
      %v829 = vsel %vm479, %v825, %v827
      %v833 = vrot.slane %v620, 7
      %v834 = vrot.slane %v621, 7
      %v835 = vrot.slane %v632, 7
      %836 = vrot.lane.b32.xlu0 %v833, 126
      %v837 = vpop.permute.xlu0 %836
      %838 = vrot.lane.b32.xlu0 %v834, 126
      %v839 = vpop.permute.xlu0 %838
      %840 = vrot.lane.b32.xlu0 %v835, 126
      %v841 = vpop.permute.xlu0 %840
      %v842 = vsel %vm494, %v837, %v839
      %v843 = vsel %vm494, %v839, %v841
      %v844 = vrot.slane %v634, 7
      %v845 = vrot.slane %v638, 7
      %v846 = vrot.slane %v642, 7
      %847 = vrot.lane.b32.xlu0 %v844, 125
      %v848 = vpop.permute.xlu0 %847
      %849 = vrot.lane.b32.xlu0 %v845, 125
      %v850 = vpop.permute.xlu0 %849
      %851 = vrot.lane.b32.xlu0 %v846, 125
      %v852 = vpop.permute.xlu0 %851
      %v853 = vsel %vm506, %v848, %v850
      %v854 = vsel %vm506, %v850, %v852
      %v858 = vrot.slane %v620, 6
      %v859 = vrot.slane %v621, 6
      %v860 = vrot.slane %v632, 6
      %861 = vrot.lane.b32.xlu0 %v858, 124
      %v862 = vpop.permute.xlu0 %861
      %863 = vrot.lane.b32.xlu0 %v859, 124
      %v864 = vpop.permute.xlu0 %863
      %865 = vrot.lane.b32.xlu0 %v860, 124
      %v866 = vpop.permute.xlu0 %865
      %v867 = vsel %vm521, %v862, %v864
      %v868 = vsel %vm521, %v864, %v866
      %v869 = vrot.slane %v634, 6
      %v870 = vrot.slane %v638, 6
      %v871 = vrot.slane %v642, 6
      %872 = vrot.lane.b32.xlu0 %v869, 123
      %v873 = vpop.permute.xlu0 %872
      %874 = vrot.lane.b32.xlu0 %v870, 123
      %v875 = vpop.permute.xlu0 %874
      %876 = vrot.lane.b32.xlu0 %v871, 123
      %v877 = vpop.permute.xlu0 %876
      %v878 = vsel %vm533, %v873, %v875
      %v879 = vsel %vm533, %v875, %v877
      %v883 = vrot.slane %v620, 5
      %v884 = vrot.slane %v621, 5
      %v885 = vrot.slane %v632, 5
      %886 = vrot.lane.b32.xlu0 %v883, 122
      %v887 = vpop.permute.xlu0 %886
      %888 = vrot.lane.b32.xlu0 %v884, 122
      %v889 = vpop.permute.xlu0 %888
      %890 = vrot.lane.b32.xlu0 %v885, 122
      %v891 = vpop.permute.xlu0 %890
      %v892 = vsel %vm548, %v887, %v889
      %v893 = vsel %vm548, %v889, %v891
      %v894 = vrot.slane %v634, 5
      %v895 = vrot.slane %v638, 5
      %v896 = vrot.slane %v642, 5
      %897 = vrot.lane.b32.xlu0 %v894, 121
      %v898 = vpop.permute.xlu0 %897
      %899 = vrot.lane.b32.xlu0 %v895, 121
      %v900 = vpop.permute.xlu0 %899
      %901 = vrot.lane.b32.xlu0 %v896, 121
      %v902 = vpop.permute.xlu0 %901
      %v903 = vsel %vm560, %v898, %v900
      %v904 = vsel %vm560, %v900, %v902
      %908 = vrot.lane.b32.xlu0 %v620, 120
      %v909 = vpop.permute.xlu0 %908
      %910 = vrot.lane.b32.xlu0 %v621, 120
      %v911 = vpop.permute.xlu0 %910
      %912 = vrot.lane.b32.xlu0 %v632, 120
      %v913 = vpop.permute.xlu0 %912
      %v914 = vsel %vm572, %v909, %v911
      %v915 = vsel %vm572, %v911, %v913
      %v916 = vsel %vm344, %v620, %v828
      %v917 = vsel %vm344, %v621, %v829
      %v918 = vsel %vm344, %v632, %v827
      %v921 = vsel %vm687, %v916, %v842
      %v925 = vsel %vm687, %v917, %v843
      %v929 = vsel %vm687, %v918, %v841
      %v931 = vsel %vm702, %v921, %v853
      %v932 = vsel %vm702, %v925, %v854
      %v933 = vsel %vm702, %v929, %v852
      %v936 = vsel %vm706, %v931, %v867
      %v940 = vsel %vm706, %v932, %v868
      %v944 = vsel %vm706, %v933, %v866
      %v946 = vsel %vm721, %v936, %v878
      %v947 = vsel %vm721, %v940, %v879
      %v948 = vsel %vm721, %v944, %v877
      %v951 = vsel %vm725, %v946, %v892
      %v955 = vsel %vm725, %v947, %v893
      %v959 = vsel %vm725, %v948, %v891
      %v961 = vsel %vm740, %v951, %v903
      %v962 = vsel %vm740, %v955, %v904
      %v963 = vsel %vm740, %v959, %v902
      %v966 = vsel %vm744, %v961, %v914
      %v969 = vsel %vm744, %v962, %v915
      %v972 = vsel %vm744, %v963, %v913
      %976 = vrot.lane.b32.xlu0 %v966, 112
      %v977 = vpop.permute.xlu0 %976
      %978 = vrot.lane.b32.xlu0 %v969, 112
      %v979 = vpop.permute.xlu0 %978
      %980 = vrot.lane.b32.xlu0 %v972, 112
      %v981 = vpop.permute.xlu0 %980
      %vm982 = vcmask 916480
      %v983 = vsel %vm982, %v977, %v979
      %v984 = vsel %vm982, %v979, %v981
      %986 = vset.pattern.permute.xlu0 0
      %987 = vperm.xlu0 %986, %v436
      %v988 = vpop.permute.xlu0 %987
      %991 = vset.pattern.permute.xlu0 0
      %992 = vperm.xlu0 %991, %v437
      %v993 = vpop.permute.xlu0 %992
      %996 = vset.pattern.permute.xlu0 0
      %997 = vperm.xlu0 %996, %v438
      %v998 = vpop.permute.xlu0 %997
      %1001 = vset.pattern.permute.xlu0 0
      %1002 = vperm.xlu0 %1001, %v439
      %v1003 = vpop.permute.xlu0 %1002
      %v1009 = vunpack.c.l.b16 %v415
      %v1010 = vunpack.c.l.b16 %v416
      %v1011 = vunpack.c.l.b16 %v417
      %v1012 = vunpack.c.l.b16 %v418
      %v1013 = vpack.c.b16 %v1010, %v1009
      %v1014 = vpack.c.b16 %v1012, %v1011
      %1018 = vrot.lane.b32.xlu0 %v816, 12
      %v1019 = vpop.permute.xlu0 %1018
      %1020 = vrot.lane.b32.xlu0 %v817, 12
      %v1021 = vpop.permute.xlu0 %1020
      %1022 = vrot.lane.b32.xlu0 %v818, 12
      %v1023 = vpop.permute.xlu0 %1022
      %1024 = vrot.lane.b32.xlu0 %v977, 12
      %v1025 = vpop.permute.xlu0 %1024
      %1026 = vrot.lane.b32.xlu0 %v983, 12
      %v1027 = vpop.permute.xlu0 %1026
      %1028 = vrot.lane.b32.xlu0 %v984, 12
      %v1029 = vpop.permute.xlu0 %1028
      %vm1030 = vcmask 97280
      %v1031 = vsel %vm1030, %v1019, %v1021
      %v1032 = vsel %vm1030, %v1021, %v1023
      %v1033 = vsel %vm1030, %v1025, %v1027
      %v1034 = vsel %vm1030, %v1027, %v1029
      %vm1037 = vcmask 203776
      %v1039 = vsel %vm1037, %v1013, 0
      %v1042 = vsel %vm1037, %v1014, 0
      %v1044 = vsel %vm744, 4294967295, 65535
      %v1045 = vsel %vm762, %v1044, 0
      %v1047 = vand.u32 %v1033, %v1045
      %v1050 = vand.u32 %v1034, %v1045
      %1052 = vmatprep.subr.bf16.mxu0 %v1032
      %1053 = vmatpush1.bf16.msra.mxu0 %v1031
      %1054 = vmatprep.subr.bf16.mxu0 %v1050
      %1055 = vmatpush1.bf16.msra.mxu0 %v1047
      %1056 = vmatprep.subr.bf16.mxu0 0
      %1057 = vmatpush1.bf16.msra.mxu0 0
      %1058 = vmatprep.subr.bf16.mxu0 0
      %1059 = vmatpush1.bf16.msra.mxu0 0
      %1060 = vmatprep.subr.bf16.mxu0 0
      %1061 = vmatpush1.bf16.msra.mxu0 0
      %1062 = vmatprep.subr.bf16.mxu0 0
      %1063 = vmatpush1.bf16.msra.mxu0 0
      %1064 = vmatprep.subr.bf16.mxu0 0
      %1065 = vmatpush1.bf16.msra.mxu0 0
      %1066 = vmatprep.subr.bf16.mxu0 0
      %1067 = vmatpush1.bf16.msra.mxu0 0
      %1068 = vmatprep.subr.bf16.mxu0 0
      %1069 = vmatpush1.bf16.msra.mxu0 0
      %1070 = vmatprep.subr.bf16.mxu0 0
      %1071 = vmatpush1.bf16.msra.mxu0 0
      %1072 = vmatprep.subr.bf16.mxu0 0
      %1073 = vmatpush1.bf16.msra.mxu0 0
      %1074 = vmatprep.subr.bf16.mxu0 0
      %1075 = vmatpush1.bf16.msra.mxu0 0
      %1076 = vmatprep.subr.bf16.mxu0 0
      %1077 = vmatpush1.bf16.msra.mxu0 0
      %1078 = vmatprep.subr.bf16.mxu0 0
      %1079 = vmatpush1.bf16.msra.mxu0 0
      %1080 = vmatprep.subr.bf16.mxu0 0
      %1081 = vmatpush1.bf16.msra.mxu0 0
      %1082 = vmatprep.subr.bf16.mxu0 0
      %1083 = vmatpush1.bf16.msra.mxu0 0
      %1084 = vmatprep.mubr.bf16.mxu0 0
      %1085 = vmatmul.mubr.bf16.gmra.mrb[0].mxu0 %v1039
      %v1086 = vpop.f32.mrb[0].mxu0
      %v1087 = vadd.f32 %v988, %v1086
      %v1088 = vpop.f32.mrb[0].mxu0
      %v1089 = vadd.f32 %v988, %v1088
      %v1090 = vpop.f32.mrb[0].mxu0
      %v1091 = vadd.f32 %v993, %v1090
      %v1092 = vpop.f32.mrb[0].mxu0
      %v1093 = vadd.f32 %v993, %v1092
      %1094 = vmatprep.mubr.bf16.mxu0 0
      %1095 = vmatmul.mubr.bf16.gmra.mrb[0].mxu0 %v1042
      %v1096 = vpop.f32.mrb[0].mxu0
      %v1097 = vadd.f32 %v998, %v1096
      %v1098 = vpop.f32.mrb[0].mxu0
      %v1099 = vadd.f32 %v998, %v1098
      %v1100 = vpop.f32.mrb[0].mxu0
      %v1101 = vadd.f32 %v1003, %v1100
      %v1102 = vpop.f32.mrb[0].mxu0
      %v1103 = vadd.f32 %v1003, %v1102
      %1104 = vdwg.mxu0
      %vm1105 = vcmp.gt.f32.partialorder %v1087, 0.0
      %vm1106 = vcmp.gt.f32.partialorder %v1089, 0.0
      %vm1107 = vcmp.gt.f32.partialorder %v1091, 0.0
      %vm1108 = vcmp.gt.f32.partialorder %v1093, 0.0
      %vm1109 = vcmp.gt.f32.partialorder %v1097, 0.0
      %vm1110 = vcmp.gt.f32.partialorder %v1099, 0.0
      %vm1111 = vcmp.gt.f32.partialorder %v1101, 0.0
      %vm1112 = vcmp.gt.f32.partialorder %v1103, 0.0
      %v1113 = vmul.f32 %v1087, 0.01
      %v1114 = vmul.f32 %v1089, 0.01
      %v1115 = vmul.f32 %v1091, 0.01
      %v1116 = vmul.f32 %v1093, 0.01
      %v1117 = vmul.f32 %v1097, 0.01
      %v1118 = vmul.f32 %v1099, 0.01
      %v1119 = vmul.f32 %v1101, 0.01
      %v1120 = vmul.f32 %v1103, 0.01
      %v1121 = vsel %vm1105, %v1087, %v1113
      %v1122 = vsel %vm1106, %v1089, %v1114
      %v1123 = vsel %vm1107, %v1091, %v1115
      %v1124 = vsel %vm1108, %v1093, %v1116
      %v1125 = vsel %vm1109, %v1097, %v1117
      %v1126 = vsel %vm1110, %v1099, %v1118
      %v1127 = vsel %vm1111, %v1101, %v1119
      %v1128 = vsel %vm1112, %v1103, %v1120
      %v1129 = vsel %vm369, 1, 0
      %v1130 = vsel %vm370, 1, 0
      %vm1131 = vcmp.eq.s32.totalorder %v1129, 1
      %vm1132 = vcmp.eq.s32.totalorder %v1130, 1
      %v1133 = vsel %vm1131, %v1121, 0.0
      %v1134 = vsel %vm1132, %v1122, 0.0
      %v1135 = vsel %vm1131, %v1123, 0.0
      %v1136 = vsel %vm1132, %v1124, 0.0
      %v1137 = vsel %vm1131, %v1125, 0.0
      %v1138 = vsel %vm1132, %v1126, 0.0
      %v1139 = vsel %vm1131, %v1127, 0.0
      %v1140 = vsel %vm1132, %v1128, 0.0
      %v1141 = vpack.c.bf16 %v1135, %v1133
      %v1142 = vpack.c.bf16 %v1136, %v1134
      %v1143 = vpack.c.bf16 %v1139, %v1137
      %v1144 = vpack.c.bf16 %v1140, %v1138
      %v1149 = vunpack.c.l.b16 %v1141
      %v1150 = vunpack.c.l.b16 %v1142
      %v1151 = vunpack.c.h.b16 %v1141
      %v1152 = vunpack.c.h.b16 %v1142
      %v1153 = vunpack.c.l.b16 %v1143
      %v1154 = vunpack.c.l.b16 %v1144
      %v1155 = vunpack.c.h.b16 %v1143
      %v1156 = vunpack.c.h.b16 %v1144
      %v1157 = vpack.c.b16 %v1150, %v1149
      %v1158 = vpack.c.b16 %v1152, %v1151
      %v1159 = vpack.c.b16 %v1154, %v1153
      %v1160 = vpack.c.b16 %v1156, %v1155
      %1165 = vst [vmem:[#allocation2 + $0x4] sm:$0xff] %v1157
      %1166 = vst [vmem:[#allocation2 + $0x14] sm:$0xff] %v1158
      %1167 = vst [vmem:[#allocation2 + $0x24] sm:$0xff] %v1159
      %v1168 = vld [vmem:[#allocation2 + $0x34] sm:$0x11]
      %v1169 = vsel %vm408, %v1160, %v1168
      %1170 = vst [vmem:[#allocation2 + $0x34] sm:$0x11] %v1169
      %v1171 = vld [vmem:[#allocation2] sm:$0xff]
      %v1172 = vld [vmem:[#allocation2 + $0x8] sm:$0xf]
      %v1173 = vld [vmem:[#allocation2 + $0x10] sm:$0xff]
      %v1174 = vld [vmem:[#allocation2 + $0x18] sm:$0xf]
      %v1175 = vld [vmem:[#allocation2 + $0x20] sm:$0xff]
      %v1176 = vld [vmem:[#allocation2 + $0x28] sm:$0xf]
      %v1177 = vld [vmem:[#allocation2 + $0x30] sm:$0x11]
      %v1178 = vld [vmem:[#allocation2 + $0x38] sm:$0x1]
      %v1179 = vld [vmem:[#allocation2 + $0x4] sm:$0xff]
      %v1180 = vld [vmem:[#allocation2 + $0x14] sm:$0xff]
      %v1181 = vld [vmem:[#allocation2 + $0x24] sm:$0xff]
      %v1182 = vld [vmem:[#allocation2 + $0x34] sm:$0x11]
      %v1183 = vld [vmem:[#allocation2 + $0xc] sm:$0xf]
      %v1184 = vld [vmem:[#allocation2 + $0x1c] sm:$0xf]
      %v1185 = vld [vmem:[#allocation2 + $0x2c] sm:$0xf]
      %v1186 = vld [vmem:[#allocation2 + $0x3c] sm:$0x1]
      %v1195 = vunpack.c.l.b16 %v1171
      %v1196 = vunpack.c.h.b16 %v1171
      %v1197 = vunpack.c.l.b16 %v1172
      %v1198 = vunpack.c.l.b16 %v1173
      %v1199 = vunpack.c.h.b16 %v1173
      %v1200 = vunpack.c.l.b16 %v1174
      %v1201 = vunpack.c.l.b16 %v1175
      %v1202 = vunpack.c.h.b16 %v1175
      %v1203 = vunpack.c.l.b16 %v1176
      %v1204 = vunpack.c.l.b16 %v1177
      %v1205 = vunpack.c.h.b16 %v1177
      %v1206 = vunpack.c.l.b16 %v1178
      %v1207 = vpack.c.b16 %v1198, %v1195
      %v1208 = vpack.c.b16 %v1199, %v1196
      %v1209 = vpack.c.b16 %v1200, %v1197
      %v1210 = vpack.c.b16 %v1204, %v1201
      %v1211 = vpack.c.b16 %v1205, %v1202
      %v1212 = vpack.c.b16 %v1206, %v1203
      %v1217 = vshrl.u32 %v1207, 16
      %v1219 = vrot.slane %v1217, 3
      %v1220 = vshll.u32 %v1207, 16
      %v1222 = vrot.slane %v1220, 4
      %v1223 = vor.u32 %v1219, %v1222
      %v1225 = vshrl.u32 %v1208, 16
      %v1227 = vrot.slane %v1225, 3
      %v1228 = vshll.u32 %v1208, 16
      %v1230 = vrot.slane %v1228, 4
      %v1231 = vor.u32 %v1227, %v1230
      %v1233 = vshrl.u32 %v1209, 16
      %v1235 = vrot.slane %v1233, 3
      %v1236 = vshll.u32 %v1209, 16
      %v1238 = vrot.slane %v1236, 4
      %v1239 = vor.u32 %v1235, %v1238
      %v1241 = vshrl.u32 %v1210, 16
      %v1243 = vrot.slane %v1241, 3
      %v1244 = vshll.u32 %v1210, 16
      %v1246 = vrot.slane %v1244, 4
      %v1247 = vor.u32 %v1243, %v1246
      %v1248 = vsel %vm406, %v1223, %v1247
      %v1250 = vshrl.u32 %v1211, 16
      %v1252 = vrot.slane %v1250, 3
      %v1253 = vshll.u32 %v1211, 16
      %v1255 = vrot.slane %v1253, 4
      %v1256 = vor.u32 %v1252, %v1255
      %v1257 = vsel %vm406, %v1231, %v1256
      %v1259 = vshrl.u32 %v1212, 16
      %v1261 = vrot.slane %v1259, 3
      %v1262 = vshll.u32 %v1212, 16
      %v1264 = vrot.slane %v1262, 4
      %v1265 = vor.u32 %v1261, %v1264
      %v1266 = vsel %vm406, %v1239, %v1265
      %1267 = vrot.lane.b32.xlu0 %v1223, 127
      %v1268 = vpop.permute.xlu0 %1267
      %1269 = vrot.lane.b32.xlu0 %v1231, 127
      %v1270 = vpop.permute.xlu0 %1269
      %1271 = vrot.lane.b32.xlu0 %v1239, 127
      %v1272 = vpop.permute.xlu0 %1271
      %1273 = vrot.lane.b32.xlu0 %v1248, 127
      %v1274 = vpop.permute.xlu0 %1273
      %1275 = vrot.lane.b32.xlu0 %v1257, 127
      %v1276 = vpop.permute.xlu0 %1275
      %1277 = vrot.lane.b32.xlu0 %v1266, 127
      %v1278 = vpop.permute.xlu0 %1277
      %1279 = vrot.lane.b32.xlu0 %v1247, 127
      %v1280 = vpop.permute.xlu0 %1279
      %1281 = vrot.lane.b32.xlu0 %v1256, 127
      %v1282 = vpop.permute.xlu0 %1281
      %1283 = vrot.lane.b32.xlu0 %v1265, 127
      %v1284 = vpop.permute.xlu0 %1283
      %v1285 = vsel %vm479, %v1268, %v1270
      %v1286 = vsel %vm479, %v1270, %v1272
      %v1287 = vsel %vm479, %v1274, %v1276
      %v1288 = vsel %vm479, %v1276, %v1278
      %v1289 = vsel %vm479, %v1280, %v1282
      %v1290 = vsel %vm479, %v1282, %v1284
      %v1294 = vrot.slane %v1207, 7
      %v1295 = vrot.slane %v1208, 7
      %v1296 = vrot.slane %v1209, 7
      %v1297 = vrot.slane %v1210, 7
      %v1298 = vsel %vm342, %v1294, %v1297
      %v1299 = vrot.slane %v1211, 7
      %v1300 = vsel %vm342, %v1295, %v1299
      %v1301 = vrot.slane %v1212, 7
      %v1302 = vsel %vm342, %v1296, %v1301
      %1303 = vrot.lane.b32.xlu0 %v1294, 126
      %v1304 = vpop.permute.xlu0 %1303
      %1305 = vrot.lane.b32.xlu0 %v1295, 126
      %v1306 = vpop.permute.xlu0 %1305
      %1307 = vrot.lane.b32.xlu0 %v1296, 126
      %v1308 = vpop.permute.xlu0 %1307
      %1309 = vrot.lane.b32.xlu0 %v1298, 126
      %v1310 = vpop.permute.xlu0 %1309
      %1311 = vrot.lane.b32.xlu0 %v1300, 126
      %v1312 = vpop.permute.xlu0 %1311
      %1313 = vrot.lane.b32.xlu0 %v1302, 126
      %v1314 = vpop.permute.xlu0 %1313
      %v1315 = vsel %vm494, %v1304, %v1306
      %v1316 = vsel %vm494, %v1306, %v1308
      %v1317 = vsel %vm494, %v1310, %v1312
      %v1318 = vsel %vm494, %v1312, %v1314
      %v1322 = vrot.slane %v1217, 2
      %v1323 = vrot.slane %v1220, 3
      %v1324 = vor.u32 %v1322, %v1323
      %v1325 = vrot.slane %v1225, 2
      %v1326 = vrot.slane %v1228, 3
      %v1327 = vor.u32 %v1325, %v1326
      %v1328 = vrot.slane %v1233, 2
      %v1329 = vrot.slane %v1236, 3
      %v1330 = vor.u32 %v1328, %v1329
      %v1331 = vrot.slane %v1241, 2
      %v1332 = vrot.slane %v1244, 3
      %v1333 = vor.u32 %v1331, %v1332
      %v1334 = vsel %vm776, %v1324, %v1333
      %v1335 = vrot.slane %v1250, 2
      %v1336 = vrot.slane %v1253, 3
      %v1337 = vor.u32 %v1335, %v1336
      %v1338 = vsel %vm776, %v1327, %v1337
      %v1339 = vrot.slane %v1259, 2
      %v1340 = vrot.slane %v1262, 3
      %v1341 = vor.u32 %v1339, %v1340
      %v1342 = vsel %vm776, %v1330, %v1341
      %1343 = vrot.lane.b32.xlu0 %v1324, 125
      %v1344 = vpop.permute.xlu0 %1343
      %1345 = vrot.lane.b32.xlu0 %v1327, 125
      %v1346 = vpop.permute.xlu0 %1345
      %1347 = vrot.lane.b32.xlu0 %v1330, 125
      %v1348 = vpop.permute.xlu0 %1347
      %1349 = vrot.lane.b32.xlu0 %v1334, 125
      %v1350 = vpop.permute.xlu0 %1349
      %1351 = vrot.lane.b32.xlu0 %v1338, 125
      %v1352 = vpop.permute.xlu0 %1351
      %1353 = vrot.lane.b32.xlu0 %v1342, 125
      %v1354 = vpop.permute.xlu0 %1353
      %1355 = vrot.lane.b32.xlu0 %v1333, 125
      %v1356 = vpop.permute.xlu0 %1355
      %1357 = vrot.lane.b32.xlu0 %v1337, 125
      %v1358 = vpop.permute.xlu0 %1357
      %1359 = vrot.lane.b32.xlu0 %v1341, 125
      %v1360 = vpop.permute.xlu0 %1359
      %v1361 = vsel %vm506, %v1344, %v1346
      %v1362 = vsel %vm506, %v1346, %v1348
      %v1363 = vsel %vm506, %v1350, %v1352
      %v1364 = vsel %vm506, %v1352, %v1354
      %v1365 = vsel %vm506, %v1356, %v1358
      %v1366 = vsel %vm506, %v1358, %v1360
      %v1370 = vrot.slane %v1207, 6
      %v1371 = vrot.slane %v1208, 6
      %v1372 = vrot.slane %v1209, 6
      %v1373 = vrot.slane %v1210, 6
      %v1374 = vsel %vm700, %v1370, %v1373
      %v1375 = vrot.slane %v1211, 6
      %v1376 = vsel %vm700, %v1371, %v1375
      %v1377 = vrot.slane %v1212, 6
      %v1378 = vsel %vm700, %v1372, %v1377
      %1379 = vrot.lane.b32.xlu0 %v1370, 124
      %v1380 = vpop.permute.xlu0 %1379
      %1381 = vrot.lane.b32.xlu0 %v1371, 124
      %v1382 = vpop.permute.xlu0 %1381
      %1383 = vrot.lane.b32.xlu0 %v1372, 124
      %v1384 = vpop.permute.xlu0 %1383
      %1385 = vrot.lane.b32.xlu0 %v1374, 124
      %v1386 = vpop.permute.xlu0 %1385
      %1387 = vrot.lane.b32.xlu0 %v1376, 124
      %v1388 = vpop.permute.xlu0 %1387
      %1389 = vrot.lane.b32.xlu0 %v1378, 124
      %v1390 = vpop.permute.xlu0 %1389
      %v1391 = vsel %vm521, %v1380, %v1382
      %v1392 = vsel %vm521, %v1382, %v1384
      %v1393 = vsel %vm521, %v1386, %v1388
      %v1394 = vsel %vm521, %v1388, %v1390
      %v1398 = vrot.slane %v1217, 1
      %v1399 = vrot.slane %v1220, 2
      %v1400 = vor.u32 %v1398, %v1399
      %v1401 = vrot.slane %v1225, 1
      %v1402 = vrot.slane %v1228, 2
      %v1403 = vor.u32 %v1401, %v1402
      %v1404 = vrot.slane %v1233, 1
      %v1405 = vrot.slane %v1236, 2
      %v1406 = vor.u32 %v1404, %v1405
      %v1407 = vrot.slane %v1241, 1
      %v1408 = vrot.slane %v1244, 2
      %v1409 = vor.u32 %v1407, %v1408
      %v1410 = vsel %vm795, %v1400, %v1409
      %v1411 = vrot.slane %v1250, 1
      %v1412 = vrot.slane %v1253, 2
      %v1413 = vor.u32 %v1411, %v1412
      %v1414 = vsel %vm795, %v1403, %v1413
      %v1415 = vrot.slane %v1259, 1
      %v1416 = vrot.slane %v1262, 2
      %v1417 = vor.u32 %v1415, %v1416
      %v1418 = vsel %vm795, %v1406, %v1417
      %1419 = vrot.lane.b32.xlu0 %v1400, 123
      %v1420 = vpop.permute.xlu0 %1419
      %1421 = vrot.lane.b32.xlu0 %v1403, 123
      %v1422 = vpop.permute.xlu0 %1421
      %1423 = vrot.lane.b32.xlu0 %v1406, 123
      %v1424 = vpop.permute.xlu0 %1423
      %1425 = vrot.lane.b32.xlu0 %v1410, 123
      %v1426 = vpop.permute.xlu0 %1425
      %1427 = vrot.lane.b32.xlu0 %v1414, 123
      %v1428 = vpop.permute.xlu0 %1427
      %1429 = vrot.lane.b32.xlu0 %v1418, 123
      %v1430 = vpop.permute.xlu0 %1429
      %1431 = vrot.lane.b32.xlu0 %v1409, 123
      %v1432 = vpop.permute.xlu0 %1431
      %1433 = vrot.lane.b32.xlu0 %v1413, 123
      %v1434 = vpop.permute.xlu0 %1433
      %1435 = vrot.lane.b32.xlu0 %v1417, 123
      %v1436 = vpop.permute.xlu0 %1435
      %v1437 = vsel %vm533, %v1420, %v1422
      %v1438 = vsel %vm533, %v1422, %v1424
      %v1439 = vsel %vm533, %v1426, %v1428
      %v1440 = vsel %vm533, %v1428, %v1430
      %v1441 = vsel %vm533, %v1432, %v1434
      %v1442 = vsel %vm533, %v1434, %v1436
      %v1446 = vrot.slane %v1207, 5
      %v1447 = vrot.slane %v1208, 5
      %v1448 = vrot.slane %v1209, 5
      %v1449 = vrot.slane %v1210, 5
      %v1450 = vsel %vm719, %v1446, %v1449
      %v1451 = vrot.slane %v1211, 5
      %v1452 = vsel %vm719, %v1447, %v1451
      %v1453 = vrot.slane %v1212, 5
      %v1454 = vsel %vm719, %v1448, %v1453
      %1455 = vrot.lane.b32.xlu0 %v1446, 122
      %v1456 = vpop.permute.xlu0 %1455
      %1457 = vrot.lane.b32.xlu0 %v1447, 122
      %v1458 = vpop.permute.xlu0 %1457
      %1459 = vrot.lane.b32.xlu0 %v1448, 122
      %v1460 = vpop.permute.xlu0 %1459
      %1461 = vrot.lane.b32.xlu0 %v1450, 122
      %v1462 = vpop.permute.xlu0 %1461
      %1463 = vrot.lane.b32.xlu0 %v1452, 122
      %v1464 = vpop.permute.xlu0 %1463
      %1465 = vrot.lane.b32.xlu0 %v1454, 122
      %v1466 = vpop.permute.xlu0 %1465
      %v1467 = vsel %vm548, %v1456, %v1458
      %v1468 = vsel %vm548, %v1458, %v1460
      %v1469 = vsel %vm548, %v1462, %v1464
      %v1470 = vsel %vm548, %v1464, %v1466
      %v1478 = vunpack.c.l.b16 %v1179
      %v1479 = vunpack.c.h.b16 %v1179
      %v1480 = vunpack.c.l.b16 %v1180
      %v1481 = vunpack.c.h.b16 %v1180
      %v1482 = vunpack.c.l.b16 %v1181
      %v1483 = vunpack.c.h.b16 %v1181
      %v1484 = vunpack.c.l.b16 %v1182
      %v1485 = vunpack.c.h.b16 %v1182
      %v1486 = vpack.c.b16 %v1480, %v1478
      %v1487 = vpack.c.b16 %v1481, %v1479
      %v1488 = vpack.c.b16 %v1484, %v1482
      %v1489 = vpack.c.b16 %v1485, %v1483
      %v1491 = vshll.u32 %v1486, 16
      %v1493 = vrot.slane %v1491, 1
      %v1495 = vshll.u32 %v1487, 16
      %v1497 = vrot.slane %v1495, 1
      %v1498 = vshrl.u32 %v1486, 16
      %v1500 = vor.u32 %v1498, %v1493
      %v1502 = vshll.u32 %v1488, 16
      %v1504 = vrot.slane %v1502, 1
      %v1505 = vsel %vm814, %v1500, %v1504
      %v1506 = vshrl.u32 %v1487, 16
      %v1508 = vor.u32 %v1506, %v1497
      %v1510 = vshll.u32 %v1489, 16
      %v1512 = vrot.slane %v1510, 1
      %v1513 = vsel %vm814, %v1508, %v1512
      %v1514 = vshrl.u32 %v1488, 16
      %v1516 = vor.u32 %v1514, %v1504
      %v1517 = vshrl.u32 %v1489, 16
      %v1519 = vor.u32 %v1517, %v1512
      %1520 = vrot.lane.b32.xlu0 %v1493, 121
      %v1521 = vpop.permute.xlu0 %1520
      %1522 = vrot.lane.b32.xlu0 %v1497, 121
      %v1523 = vpop.permute.xlu0 %1522
      %1524 = vrot.lane.b32.xlu0 %v1505, 121
      %v1525 = vpop.permute.xlu0 %1524
      %1526 = vrot.lane.b32.xlu0 %v1513, 121
      %v1527 = vpop.permute.xlu0 %1526
      %1528 = vrot.lane.b32.xlu0 %v1516, 121
      %v1529 = vpop.permute.xlu0 %1528
      %1530 = vrot.lane.b32.xlu0 %v1519, 121
      %v1531 = vpop.permute.xlu0 %1530
      %v1532 = vsel %vm560, %v1521, %v1523
      %v1533 = vsel %vm560, %v1525, %v1527
      %v1534 = vsel %vm560, %v1529, %v1531
      %v1542 = vunpack.c.l.b16 %v1183
      %v1543 = vunpack.c.l.b16 %v1184
      %v1544 = vunpack.c.l.b16 %v1185
      %v1545 = vunpack.c.l.b16 %v1186
      %v1546 = vpack.c.b16 %v1478, %v1478
      %v1547 = vpack.c.b16 %v1479, %v1479
      %v1548 = vpack.c.b16 %v1542, %v1542
      %v1549 = vpack.c.b16 %v1482, %v1480
      %v1550 = vpack.c.b16 %v1483, %v1481
      %v1551 = vpack.c.b16 %v1544, %v1543
      %v1552 = vpack.c.b16 %v1484, %v1484
      %v1553 = vpack.c.b16 %v1485, %v1485
      %v1554 = vpack.c.b16 %v1545, %v1545
      %1555 = vrot.lane.b32.xlu0 %v1546, 120
      %v1556 = vpop.permute.xlu0 %1555
      %1557 = vrot.lane.b32.xlu0 %v1547, 120
      %v1558 = vpop.permute.xlu0 %1557
      %1559 = vrot.lane.b32.xlu0 %v1548, 120
      %v1560 = vpop.permute.xlu0 %1559
      %1561 = vrot.lane.b32.xlu0 %v1549, 120
      %v1562 = vpop.permute.xlu0 %1561
      %1563 = vrot.lane.b32.xlu0 %v1550, 120
      %v1564 = vpop.permute.xlu0 %1563
      %1565 = vrot.lane.b32.xlu0 %v1551, 120
      %v1566 = vpop.permute.xlu0 %1565
      %1567 = vrot.lane.b32.xlu0 %v1552, 120
      %v1568 = vpop.permute.xlu0 %1567
      %1569 = vrot.lane.b32.xlu0 %v1553, 120
      %v1570 = vpop.permute.xlu0 %1569
      %1571 = vrot.lane.b32.xlu0 %v1554, 120
      %v1572 = vpop.permute.xlu0 %1571
      %v1573 = vsel %vm572, %v1556, %v1558
      %v1574 = vsel %vm572, %v1558, %v1560
      %v1575 = vsel %vm572, %v1562, %v1564
      %v1576 = vsel %vm572, %v1564, %v1566
      %v1577 = vsel %vm572, %v1568, %v1570
      %v1578 = vsel %vm572, %v1570, %v1572
      %v1582 = vpack.c.b16 %v1543, %v1542
      %v1583 = vpack.c.b16 %v1545, %v1544
      %v1584 = vrot.slane %v1498, 7
      %v1585 = vor.u32 %v1584, %v1491
      %v1586 = vrot.slane %v1506, 7
      %v1587 = vor.u32 %v1586, %v1495
      %v1589 = vshrl.u32 %v1582, 16
      %v1591 = vrot.slane %v1589, 7
      %v1592 = vshll.u32 %v1582, 16
      %v1594 = vor.u32 %v1591, %v1592
      %v1595 = vrot.slane %v1514, 7
      %v1596 = vor.u32 %v1595, %v1502
      %v1597 = vsel %vm343, %v1584, %v1596
      %v1598 = vrot.slane %v1517, 7
      %v1599 = vor.u32 %v1598, %v1510
      %v1600 = vsel %vm343, %v1586, %v1599
      %v1602 = vshrl.u32 %v1583, 16
      %v1604 = vrot.slane %v1602, 7
      %v1605 = vshll.u32 %v1583, 16
      %v1607 = vor.u32 %v1604, %v1605
      %v1608 = vsel %vm343, %v1591, %v1607
      %1609 = vrot.lane.b32.xlu0 %v1585, 119
      %v1610 = vpop.permute.xlu0 %1609
      %1611 = vrot.lane.b32.xlu0 %v1587, 119
      %v1612 = vpop.permute.xlu0 %1611
      %1613 = vrot.lane.b32.xlu0 %v1594, 119
      %v1614 = vpop.permute.xlu0 %1613
      %1615 = vrot.lane.b32.xlu0 %v1597, 119
      %v1616 = vpop.permute.xlu0 %1615
      %1617 = vrot.lane.b32.xlu0 %v1600, 119
      %v1618 = vpop.permute.xlu0 %1617
      %1619 = vrot.lane.b32.xlu0 %v1608, 119
      %v1620 = vpop.permute.xlu0 %1619
      %v1621 = vsel %vm584, %v1610, %v1612
      %v1622 = vsel %vm584, %v1612, %v1614
      %v1623 = vsel %vm584, %v1616, %v1618
      %v1624 = vsel %vm584, %v1618, %v1620
      %v1628 = vrot.slane %v1486, 3
      %v1629 = vrot.slane %v1487, 3
      %v1630 = vrot.slane %v1582, 3
      %v1631 = vrot.slane %v1488, 3
      %v1632 = vsel %vm757, %v1628, %v1631
      %v1633 = vrot.slane %v1489, 3
      %v1634 = vsel %vm757, %v1629, %v1633
      %v1635 = vrot.slane %v1583, 3
      %v1636 = vsel %vm757, %v1630, %v1635
      %1637 = vrot.lane.b32.xlu0 %v1628, 118
      %v1638 = vpop.permute.xlu0 %1637
      %1639 = vrot.lane.b32.xlu0 %v1629, 118
      %v1640 = vpop.permute.xlu0 %1639
      %1641 = vrot.lane.b32.xlu0 %v1630, 118
      %v1642 = vpop.permute.xlu0 %1641
      %1643 = vrot.lane.b32.xlu0 %v1632, 118
      %v1644 = vpop.permute.xlu0 %1643
      %1645 = vrot.lane.b32.xlu0 %v1634, 118
      %v1646 = vpop.permute.xlu0 %1645
      %1647 = vrot.lane.b32.xlu0 %v1636, 118
      %v1648 = vpop.permute.xlu0 %1647
      %1649 = vrot.lane.b32.xlu0 %v1631, 118
      %v1650 = vpop.permute.xlu0 %1649
      %1651 = vrot.lane.b32.xlu0 %v1633, 118
      %v1652 = vpop.permute.xlu0 %1651
      %1653 = vrot.lane.b32.xlu0 %v1635, 118
      %v1654 = vpop.permute.xlu0 %1653
      %v1655 = vsel %vm599, %v1638, %v1640
      %v1656 = vsel %vm599, %v1640, %v1642
      %v1657 = vsel %vm599, %v1644, %v1646
      %v1658 = vsel %vm599, %v1646, %v1648
      %v1659 = vsel %vm599, %v1650, %v1652
      %v1660 = vsel %vm599, %v1652, %v1654
      %v1664 = vrot.slane %v1498, 6
      %v1665 = vrot.slane %v1491, 7
      %v1666 = vor.u32 %v1664, %v1665
      %v1667 = vrot.slane %v1506, 6
      %v1668 = vrot.slane %v1495, 7
      %v1669 = vor.u32 %v1667, %v1668
      %v1670 = vrot.slane %v1589, 6
      %v1671 = vrot.slane %v1592, 7
      %v1672 = vor.u32 %v1670, %v1671
      %v1673 = vrot.slane %v1514, 6
      %v1674 = vrot.slane %v1502, 7
      %v1675 = vor.u32 %v1673, %v1674
      %v1676 = vsel %vm701, %v1666, %v1675
      %v1677 = vrot.slane %v1517, 6
      %v1678 = vrot.slane %v1510, 7
      %v1679 = vor.u32 %v1677, %v1678
      %v1680 = vsel %vm701, %v1669, %v1679
      %v1681 = vrot.slane %v1602, 6
      %v1682 = vrot.slane %v1605, 7
      %v1683 = vor.u32 %v1681, %v1682
      %v1684 = vsel %vm701, %v1672, %v1683
      %1685 = vrot.lane.b32.xlu0 %v1666, 117
      %v1686 = vpop.permute.xlu0 %1685
      %1687 = vrot.lane.b32.xlu0 %v1669, 117
      %v1688 = vpop.permute.xlu0 %1687
      %1689 = vrot.lane.b32.xlu0 %v1672, 117
      %v1690 = vpop.permute.xlu0 %1689
      %1691 = vrot.lane.b32.xlu0 %v1676, 117
      %v1692 = vpop.permute.xlu0 %1691
      %1693 = vrot.lane.b32.xlu0 %v1680, 117
      %v1694 = vpop.permute.xlu0 %1693
      %1695 = vrot.lane.b32.xlu0 %v1684, 117
      %v1696 = vpop.permute.xlu0 %1695
      %v1697 = vsel %vm611, %v1686, %v1688
      %v1698 = vsel %vm611, %v1688, %v1690
      %v1699 = vsel %vm611, %v1692, %v1694
      %v1700 = vsel %vm611, %v1694, %v1696
      %v1704 = vrot.slane %v1486, 2
      %v1705 = vrot.slane %v1487, 2
      %v1706 = vrot.slane %v1582, 2
      %v1707 = vrot.slane %v1488, 2
      %v1708 = vsel %vm775, %v1704, %v1707
      %v1709 = vrot.slane %v1489, 2
      %v1710 = vsel %vm775, %v1705, %v1709
      %v1711 = vrot.slane %v1583, 2
      %v1712 = vsel %vm775, %v1706, %v1711
      %1713 = vrot.lane.b32.xlu0 %v1704, 116
      %v1714 = vpop.permute.xlu0 %1713
      %1715 = vrot.lane.b32.xlu0 %v1705, 116
      %v1716 = vpop.permute.xlu0 %1715
      %1717 = vrot.lane.b32.xlu0 %v1706, 116
      %v1718 = vpop.permute.xlu0 %1717
      %1719 = vrot.lane.b32.xlu0 %v1708, 116
      %v1720 = vpop.permute.xlu0 %1719
      %1721 = vrot.lane.b32.xlu0 %v1710, 116
      %v1722 = vpop.permute.xlu0 %1721
      %1723 = vrot.lane.b32.xlu0 %v1712, 116
      %v1724 = vpop.permute.xlu0 %1723
      %1725 = vrot.lane.b32.xlu0 %v1707, 116
      %v1726 = vpop.permute.xlu0 %1725
      %1727 = vrot.lane.b32.xlu0 %v1709, 116
      %v1728 = vpop.permute.xlu0 %1727
      %1729 = vrot.lane.b32.xlu0 %v1711, 116
      %v1730 = vpop.permute.xlu0 %1729
      %v1731 = vsel %vm628, %v1714, %v1716
      %v1732 = vsel %vm628, %v1716, %v1718
      %v1733 = vsel %vm628, %v1720, %v1722
      %v1734 = vsel %vm628, %v1722, %v1724
      %v1735 = vsel %vm628, %v1726, %v1728
      %v1736 = vsel %vm628, %v1728, %v1730
      %v1740 = vrot.slane %v1498, 5
      %v1741 = vrot.slane %v1491, 6
      %v1742 = vor.u32 %v1740, %v1741
      %v1743 = vrot.slane %v1506, 5
      %v1744 = vrot.slane %v1495, 6
      %v1745 = vor.u32 %v1743, %v1744
      %v1746 = vrot.slane %v1589, 5
      %v1747 = vrot.slane %v1592, 6
      %v1748 = vor.u32 %v1746, %v1747
      %v1749 = vrot.slane %v1514, 5
      %v1750 = vrot.slane %v1502, 6
      %v1751 = vor.u32 %v1749, %v1750
      %v1752 = vsel %vm720, %v1742, %v1751
      %v1753 = vrot.slane %v1517, 5
      %v1754 = vrot.slane %v1510, 6
      %v1755 = vor.u32 %v1753, %v1754
      %v1756 = vsel %vm720, %v1745, %v1755
      %v1757 = vrot.slane %v1602, 5
      %v1758 = vrot.slane %v1605, 6
      %v1759 = vor.u32 %v1757, %v1758
      %v1760 = vsel %vm720, %v1748, %v1759
      %1761 = vrot.lane.b32.xlu0 %v1742, 115
      %v1762 = vpop.permute.xlu0 %1761
      %1763 = vrot.lane.b32.xlu0 %v1745, 115
      %v1764 = vpop.permute.xlu0 %1763
      %1765 = vrot.lane.b32.xlu0 %v1748, 115
      %v1766 = vpop.permute.xlu0 %1765
      %1767 = vrot.lane.b32.xlu0 %v1752, 115
      %v1768 = vpop.permute.xlu0 %1767
      %1769 = vrot.lane.b32.xlu0 %v1756, 115
      %v1770 = vpop.permute.xlu0 %1769
      %1771 = vrot.lane.b32.xlu0 %v1760, 115
      %v1772 = vpop.permute.xlu0 %1771
      %v1773 = vsel %vm651, %v1762, %v1764
      %v1774 = vsel %vm651, %v1764, %v1766
      %v1775 = vsel %vm651, %v1768, %v1770
      %v1776 = vsel %vm651, %v1770, %v1772
      %v1780 = vrot.slane %v1486, 1
      %v1781 = vrot.slane %v1487, 1
      %v1782 = vrot.slane %v1582, 1
      %v1783 = vrot.slane %v1488, 1
      %v1784 = vsel %vm794, %v1780, %v1783
      %v1785 = vrot.slane %v1489, 1
      %v1786 = vsel %vm794, %v1781, %v1785
      %v1787 = vrot.slane %v1583, 1
      %v1788 = vsel %vm794, %v1782, %v1787
      %1789 = vrot.lane.b32.xlu0 %v1780, 114
      %v1790 = vpop.permute.xlu0 %1789
      %1791 = vrot.lane.b32.xlu0 %v1781, 114
      %v1792 = vpop.permute.xlu0 %1791
      %1793 = vrot.lane.b32.xlu0 %v1782, 114
      %v1794 = vpop.permute.xlu0 %1793
      %1795 = vrot.lane.b32.xlu0 %v1784, 114
      %v1796 = vpop.permute.xlu0 %1795
      %1797 = vrot.lane.b32.xlu0 %v1786, 114
      %v1798 = vpop.permute.xlu0 %1797
      %1799 = vrot.lane.b32.xlu0 %v1788, 114
      %v1800 = vpop.permute.xlu0 %1799
      %1801 = vrot.lane.b32.xlu0 %v1783, 114
      %v1802 = vpop.permute.xlu0 %1801
      %1803 = vrot.lane.b32.xlu0 %v1785, 114
      %v1804 = vpop.permute.xlu0 %1803
      %1805 = vrot.lane.b32.xlu0 %v1787, 114
      %v1806 = vpop.permute.xlu0 %1805
      %v1807 = vsel %vm666, %v1790, %v1792
      %v1808 = vsel %vm666, %v1792, %v1794
      %v1809 = vsel %vm666, %v1796, %v1798
      %v1810 = vsel %vm666, %v1798, %v1800
      %v1811 = vsel %vm666, %v1802, %v1804
      %v1812 = vsel %vm666, %v1804, %v1806
      %v1813 = vsel %vm758, %v1210, %v1285
      %v1814 = vsel %vm758, %v1211, %v1286
      %v1815 = vsel %vm758, %v1212, %v1272
      %v1818 = vsel %vm687, %v1289, %v1315
      %v1821 = vsel %vm687, %v1290, %v1316
      %v1824 = vsel %vm687, %v1284, %v1308
      %v1825 = vsel %vm777, %v1317, %v1361
      %v1826 = vsel %vm777, %v1318, %v1362
      %v1827 = vsel %vm777, %v1314, %v1348
      %v1830 = vsel %vm706, %v1365, %v1391
      %v1833 = vsel %vm706, %v1366, %v1392
      %v1836 = vsel %vm706, %v1360, %v1384
      %v1837 = vsel %vm796, %v1393, %v1437
      %v1838 = vsel %vm796, %v1394, %v1438
      %v1839 = vsel %vm796, %v1390, %v1424
      %v1842 = vsel %vm725, %v1441, %v1467
      %v1845 = vsel %vm725, %v1442, %v1468
      %v1848 = vsel %vm725, %v1436, %v1460
      %v1849 = vsel %vm815, %v1469, %v1521
      %v1850 = vsel %vm815, %v1470, %v1532
      %v1851 = vsel %vm815, %v1466, %v1523
      %v1854 = vsel %vm744, %v1529, %v1556
      %v1857 = vsel %vm744, %v1534, %v1573
      %v1860 = vsel %vm744, %v1531, %v1574
      %v1861 = vsel %vm344, %v1568, %v1610
      %v1862 = vsel %vm344, %v1577, %v1621
      %v1863 = vsel %vm344, %v1578, %v1622
      %v1866 = vsel %vm762, %v1616, %v1638
      %v1869 = vsel %vm762, %v1623, %v1655
      %v1872 = vsel %vm762, %v1624, %v1656
      %v1873 = vsel %vm702, %v1650, %v1686
      %v1874 = vsel %vm702, %v1659, %v1697
      %v1875 = vsel %vm702, %v1660, %v1698
      %v1878 = vsel %vm781, %v1692, %v1714
      %v1881 = vsel %vm781, %v1699, %v1731
      %v1884 = vsel %vm781, %v1700, %v1732
      %v1885 = vsel %vm721, %v1726, %v1762
      %v1886 = vsel %vm721, %v1735, %v1773
      %v1887 = vsel %vm721, %v1736, %v1774
      %v1890 = vsel %vm800, %v1768, %v1790
      %v1893 = vsel %vm800, %v1775, %v1807
      %v1896 = vsel %vm800, %v1776, %v1808
      %1898 = vset.pattern.permute.xlu0 0
      %1899 = vperm.xlu0 %1898, %v440
      %v1900 = vpop.permute.xlu0 %1899
      %1903 = vset.pattern.permute.xlu0 0
      %1904 = vperm.xlu0 %1903, %v441
      %v1905 = vpop.permute.xlu0 %1904
      %1908 = vset.pattern.permute.xlu0 0
      %1909 = vperm.xlu0 %1908, %v442
      %v1910 = vpop.permute.xlu0 %1909
      %1913 = vset.pattern.permute.xlu0 0
      %1914 = vperm.xlu0 %1913, %v443
      %v1915 = vpop.permute.xlu0 %1914
      %v1925 = vunpack.c.l.b16 %v419
      %v1926 = vunpack.c.h.b16 %v419
      %v1927 = vunpack.c.l.b16 %v420
      %v1928 = vunpack.c.l.b16 %v421
      %v1929 = vunpack.c.h.b16 %v421
      %v1930 = vunpack.c.l.b16 %v422
      %v1931 = vunpack.c.l.b16 %v423
      %v1932 = vunpack.c.h.b16 %v423
      %v1933 = vunpack.c.l.b16 %v424
      %v1934 = vunpack.c.l.b16 %v425
      %v1935 = vunpack.c.h.b16 %v425
      %v1936 = vunpack.c.l.b16 %v426
      %v1937 = vpack.c.b16 %v1928, %v1925
      %v1938 = vpack.c.b16 %v1929, %v1926
      %v1939 = vpack.c.b16 %v1930, %v1927
      %v1940 = vpack.c.b16 %v1934, %v1931
      %v1941 = vpack.c.b16 %v1935, %v1932
      %v1942 = vpack.c.b16 %v1936, %v1933
      %1989 = vrot.lane.b32.xlu0 %v1207, 7
      %v1990 = vpop.permute.xlu0 %1989
      %1991 = vrot.lane.b32.xlu0 %v1208, 7
      %v1992 = vpop.permute.xlu0 %1991
      %1993 = vrot.lane.b32.xlu0 %v1209, 7
      %v1994 = vpop.permute.xlu0 %1993
      %1995 = vrot.lane.b32.xlu0 %v1813, 7
      %v1996 = vpop.permute.xlu0 %1995
      %1997 = vrot.lane.b32.xlu0 %v1814, 7
      %v1998 = vpop.permute.xlu0 %1997
      %1999 = vrot.lane.b32.xlu0 %v1815, 7
      %v2000 = vpop.permute.xlu0 %1999
      %2001 = vrot.lane.b32.xlu0 %v1287, 7
      %v2002 = vpop.permute.xlu0 %2001
      %2003 = vrot.lane.b32.xlu0 %v1288, 7
      %v2004 = vpop.permute.xlu0 %2003
      %2005 = vrot.lane.b32.xlu0 %v1278, 7
      %v2006 = vpop.permute.xlu0 %2005
      %2007 = vrot.lane.b32.xlu0 %v1818, 7
      %v2008 = vpop.permute.xlu0 %2007
      %2009 = vrot.lane.b32.xlu0 %v1821, 7
      %v2010 = vpop.permute.xlu0 %2009
      %2011 = vrot.lane.b32.xlu0 %v1824, 7
      %v2012 = vpop.permute.xlu0 %2011
      %2013 = vrot.lane.b32.xlu0 %v1825, 7
      %v2014 = vpop.permute.xlu0 %2013
      %2015 = vrot.lane.b32.xlu0 %v1826, 7
      %v2016 = vpop.permute.xlu0 %2015
      %2017 = vrot.lane.b32.xlu0 %v1827, 7
      %v2018 = vpop.permute.xlu0 %2017
      %2019 = vrot.lane.b32.xlu0 %v1363, 7
      %v2020 = vpop.permute.xlu0 %2019
      %2021 = vrot.lane.b32.xlu0 %v1364, 7
      %v2022 = vpop.permute.xlu0 %2021
      %2023 = vrot.lane.b32.xlu0 %v1354, 7
      %v2024 = vpop.permute.xlu0 %2023
      %2025 = vrot.lane.b32.xlu0 %v1830, 7
      %v2026 = vpop.permute.xlu0 %2025
      %2027 = vrot.lane.b32.xlu0 %v1833, 7
      %v2028 = vpop.permute.xlu0 %2027
      %2029 = vrot.lane.b32.xlu0 %v1836, 7
      %v2030 = vpop.permute.xlu0 %2029
      %2031 = vrot.lane.b32.xlu0 %v1837, 7
      %v2032 = vpop.permute.xlu0 %2031
      %2033 = vrot.lane.b32.xlu0 %v1838, 7
      %v2034 = vpop.permute.xlu0 %2033
      %2035 = vrot.lane.b32.xlu0 %v1839, 7
      %v2036 = vpop.permute.xlu0 %2035
      %2037 = vrot.lane.b32.xlu0 %v1439, 7
      %v2038 = vpop.permute.xlu0 %2037
      %2039 = vrot.lane.b32.xlu0 %v1440, 7
      %v2040 = vpop.permute.xlu0 %2039
      %2041 = vrot.lane.b32.xlu0 %v1430, 7
      %v2042 = vpop.permute.xlu0 %2041
      %2043 = vrot.lane.b32.xlu0 %v1842, 7
      %v2044 = vpop.permute.xlu0 %2043
      %2045 = vrot.lane.b32.xlu0 %v1845, 7
      %v2046 = vpop.permute.xlu0 %2045
      %2047 = vrot.lane.b32.xlu0 %v1848, 7
      %v2048 = vpop.permute.xlu0 %2047
      %2049 = vrot.lane.b32.xlu0 %v1849, 7
      %v2050 = vpop.permute.xlu0 %2049
      %2051 = vrot.lane.b32.xlu0 %v1850, 7
      %v2052 = vpop.permute.xlu0 %2051
      %2053 = vrot.lane.b32.xlu0 %v1851, 7
      %v2054 = vpop.permute.xlu0 %2053
      %2055 = vrot.lane.b32.xlu0 %v1525, 7
      %v2056 = vpop.permute.xlu0 %2055
      %2057 = vrot.lane.b32.xlu0 %v1533, 7
      %v2058 = vpop.permute.xlu0 %2057
      %2059 = vrot.lane.b32.xlu0 %v1527, 7
      %v2060 = vpop.permute.xlu0 %2059
      %2061 = vrot.lane.b32.xlu0 %v1854, 7
      %v2062 = vpop.permute.xlu0 %2061
      %2063 = vrot.lane.b32.xlu0 %v1857, 7
      %v2064 = vpop.permute.xlu0 %2063
      %2065 = vrot.lane.b32.xlu0 %v1860, 7
      %v2066 = vpop.permute.xlu0 %2065
      %2067 = vrot.lane.b32.xlu0 %v1562, 7
      %v2068 = vpop.permute.xlu0 %2067
      %2069 = vrot.lane.b32.xlu0 %v1575, 7
      %v2070 = vpop.permute.xlu0 %2069
      %2071 = vrot.lane.b32.xlu0 %v1576, 7
      %v2072 = vpop.permute.xlu0 %2071
      %2073 = vrot.lane.b32.xlu0 %v1861, 7
      %v2074 = vpop.permute.xlu0 %2073
      %2075 = vrot.lane.b32.xlu0 %v1862, 7
      %v2076 = vpop.permute.xlu0 %2075
      %2077 = vrot.lane.b32.xlu0 %v1863, 7
      %v2078 = vpop.permute.xlu0 %2077
      %2079 = vrot.lane.b32.xlu0 %v1866, 7
      %v2080 = vpop.permute.xlu0 %2079
      %2081 = vrot.lane.b32.xlu0 %v1869, 7
      %v2082 = vpop.permute.xlu0 %2081
      %2083 = vrot.lane.b32.xlu0 %v1872, 7
      %v2084 = vpop.permute.xlu0 %2083
      %2085 = vrot.lane.b32.xlu0 %v1644, 7
      %v2086 = vpop.permute.xlu0 %2085
      %2087 = vrot.lane.b32.xlu0 %v1657, 7
      %v2088 = vpop.permute.xlu0 %2087
      %2089 = vrot.lane.b32.xlu0 %v1658, 7
      %v2090 = vpop.permute.xlu0 %2089
      %2091 = vrot.lane.b32.xlu0 %v1873, 7
      %v2092 = vpop.permute.xlu0 %2091
      %2093 = vrot.lane.b32.xlu0 %v1874, 7
      %v2094 = vpop.permute.xlu0 %2093
      %2095 = vrot.lane.b32.xlu0 %v1875, 7
      %v2096 = vpop.permute.xlu0 %2095
      %2097 = vrot.lane.b32.xlu0 %v1878, 7
      %v2098 = vpop.permute.xlu0 %2097
      %2099 = vrot.lane.b32.xlu0 %v1881, 7
      %v2100 = vpop.permute.xlu0 %2099
      %2101 = vrot.lane.b32.xlu0 %v1884, 7
      %v2102 = vpop.permute.xlu0 %2101
      %2103 = vrot.lane.b32.xlu0 %v1720, 7
      %v2104 = vpop.permute.xlu0 %2103
      %2105 = vrot.lane.b32.xlu0 %v1733, 7
      %v2106 = vpop.permute.xlu0 %2105
      %2107 = vrot.lane.b32.xlu0 %v1734, 7
      %v2108 = vpop.permute.xlu0 %2107
      %2109 = vrot.lane.b32.xlu0 %v1885, 7
      %v2110 = vpop.permute.xlu0 %2109
      %2111 = vrot.lane.b32.xlu0 %v1886, 7
      %v2112 = vpop.permute.xlu0 %2111
      %2113 = vrot.lane.b32.xlu0 %v1887, 7
      %v2114 = vpop.permute.xlu0 %2113
      %2115 = vrot.lane.b32.xlu0 %v1890, 7
      %v2116 = vpop.permute.xlu0 %2115
      %2117 = vrot.lane.b32.xlu0 %v1893, 7
      %v2118 = vpop.permute.xlu0 %2117
      %2119 = vrot.lane.b32.xlu0 %v1896, 7
      %v2120 = vpop.permute.xlu0 %2119
      %2121 = vrot.lane.b32.xlu0 %v1796, 7
      %v2122 = vpop.permute.xlu0 %2121
      %2123 = vrot.lane.b32.xlu0 %v1809, 7
      %v2124 = vpop.permute.xlu0 %2123
      %2125 = vrot.lane.b32.xlu0 %v1810, 7
      %v2126 = vpop.permute.xlu0 %2125
      %2127 = vrot.lane.b32.xlu0 %v1802, 7
      %v2128 = vpop.permute.xlu0 %2127
      %2129 = vrot.lane.b32.xlu0 %v1811, 7
      %v2130 = vpop.permute.xlu0 %2129
      %2131 = vrot.lane.b32.xlu0 %v1812, 7
      %v2132 = vpop.permute.xlu0 %2131
      %vm2133 = vcmask 56320
      %v2134 = vsel %vm2133, %v1990, %v1992
      %v2135 = vsel %vm2133, %v1992, %v1994
      %v2136 = vsel %vm2133, %v1996, %v1998
      %v2137 = vsel %vm2133, %v1998, %v2000
      %v2138 = vsel %vm2133, %v2002, %v2004
      %v2139 = vsel %vm2133, %v2004, %v2006
      %v2140 = vsel %vm2133, %v2008, %v2010
      %v2141 = vsel %vm2133, %v2010, %v2012
      %v2142 = vsel %vm2133, %v2014, %v2016
      %v2143 = vsel %vm2133, %v2016, %v2018
      %v2144 = vsel %vm2133, %v2020, %v2022
      %v2145 = vsel %vm2133, %v2022, %v2024
      %v2146 = vsel %vm2133, %v2026, %v2028
      %v2147 = vsel %vm2133, %v2028, %v2030
      %v2148 = vsel %vm2133, %v2032, %v2034
      %v2149 = vsel %vm2133, %v2034, %v2036
      %v2150 = vsel %vm2133, %v2038, %v2040
      %v2151 = vsel %vm2133, %v2040, %v2042
      %v2152 = vsel %vm2133, %v2044, %v2046
      %v2153 = vsel %vm2133, %v2046, %v2048
      %v2154 = vsel %vm2133, %v2050, %v2052
      %v2155 = vsel %vm2133, %v2052, %v2054
      %v2156 = vsel %vm2133, %v2056, %v2058
      %v2157 = vsel %vm2133, %v2058, %v2060
      %v2158 = vsel %vm2133, %v2062, %v2064
      %v2159 = vsel %vm2133, %v2064, %v2066
      %v2160 = vsel %vm2133, %v2068, %v2070
      %v2161 = vsel %vm2133, %v2070, %v2072
      %v2162 = vsel %vm2133, %v2074, %v2076
      %v2163 = vsel %vm2133, %v2076, %v2078
      %v2164 = vsel %vm2133, %v2080, %v2082
      %v2165 = vsel %vm2133, %v2082, %v2084
      %v2166 = vsel %vm2133, %v2086, %v2088
      %v2167 = vsel %vm2133, %v2088, %v2090
      %v2168 = vsel %vm2133, %v2092, %v2094
      %v2169 = vsel %vm2133, %v2094, %v2096
      %v2170 = vsel %vm2133, %v2098, %v2100
      %v2171 = vsel %vm2133, %v2100, %v2102
      %v2172 = vsel %vm2133, %v2104, %v2106
      %v2173 = vsel %vm2133, %v2106, %v2108
      %v2174 = vsel %vm2133, %v2110, %v2112
      %v2175 = vsel %vm2133, %v2112, %v2114
      %v2176 = vsel %vm2133, %v2116, %v2118
      %v2177 = vsel %vm2133, %v2118, %v2120
      %v2178 = vsel %vm2133, %v2122, %v2124
      %v2179 = vsel %vm2133, %v2124, %v2126
      %v2180 = vsel %vm2133, %v2128, %v2130
      %v2181 = vsel %vm2133, %v2130, %v2132
      %vm2228 = vcmask 973824
      %v2230 = vsel %vm2228, %v1939, 0
      %v2233 = vsel %vm2228, %v1942, 0
      %v2235 = vsel %vm725, 4294967295, 65535
      %v2236 = vsel %vm744, %v2235, 0
      %v2238 = vand.u32 %v2180, %v2236
      %v2241 = vand.u32 %v2181, %v2236
      %2243 = vmatprep.subr.bf16.mxu0 %v2135
      %2244 = vmatpush1.bf16.msra.mxu0 %v2134
      %2245 = vmatprep.subr.bf16.mxu0 %v2137
      %2246 = vmatpush1.bf16.msra.mxu0 %v2136
      %2247 = vmatprep.subr.bf16.mxu0 %v2139
      %2248 = vmatpush1.bf16.msra.mxu0 %v2138
      %2249 = vmatprep.subr.bf16.mxu0 %v2141
      %2250 = vmatpush1.bf16.msra.mxu0 %v2140
      %2251 = vmatprep.subr.bf16.mxu0 %v2143
      %2252 = vmatpush1.bf16.msra.mxu0 %v2142
      %2253 = vmatprep.subr.bf16.mxu0 %v2145
      %2254 = vmatpush1.bf16.msra.mxu0 %v2144
      %2255 = vmatprep.subr.bf16.mxu0 %v2147
      %2256 = vmatpush1.bf16.msra.mxu0 %v2146
      %2257 = vmatprep.subr.bf16.mxu0 %v2149
      %2258 = vmatpush1.bf16.msra.mxu0 %v2148
      %2259 = vmatprep.subr.bf16.mxu0 %v2151
      %2260 = vmatpush1.bf16.msra.mxu0 %v2150
      %2261 = vmatprep.subr.bf16.mxu0 %v2153
      %2262 = vmatpush1.bf16.msra.mxu0 %v2152
      %2263 = vmatprep.subr.bf16.mxu0 %v2155
      %2264 = vmatpush1.bf16.msra.mxu0 %v2154
      %2265 = vmatprep.subr.bf16.mxu0 %v2157
      %2266 = vmatpush1.bf16.msra.mxu0 %v2156
      %2267 = vmatprep.subr.bf16.mxu0 %v2159
      %2268 = vmatpush1.bf16.msra.mxu0 %v2158
      %2269 = vmatprep.subr.bf16.mxu0 %v2161
      %2270 = vmatpush1.bf16.msra.mxu0 %v2160
      %2271 = vmatprep.subr.bf16.mxu0 %v2163
      %2272 = vmatpush1.bf16.msra.mxu0 %v2162
      %2273 = vmatprep.subr.bf16.mxu0 %v2165
      %2274 = vmatpush1.bf16.msra.mxu0 %v2164
      %2275 = vmatprep.mubr.bf16.mxu0 %v1938
      %2276 = vmatmul.mubr.bf16.gmra.mrb[0].mxu0 %v1937
      %v2277 = vpop.f32.mrb[0].mxu0
      %v2278 = vadd.f32 %v1900, %v2277
      %v2279 = vpop.f32.mrb[0].mxu0
      %v2280 = vadd.f32 %v1900, %v2279
      %v2281 = vpop.f32.mrb[0].mxu0
      %v2282 = vadd.f32 %v1905, %v2281
      %v2283 = vpop.f32.mrb[0].mxu0
      %v2284 = vadd.f32 %v1905, %v2283
      %2285 = vmatprep.mubr.bf16.mxu0 %v1941
      %2286 = vmatmul.mubr.bf16.gmra.mrb[0].mxu0 %v1940
      %v2287 = vpop.f32.mrb[0].mxu0
      %v2288 = vadd.f32 %v1910, %v2287
      %v2289 = vpop.f32.mrb[0].mxu0
      %v2290 = vadd.f32 %v1910, %v2289
      %v2291 = vpop.f32.mrb[0].mxu0
      %v2292 = vadd.f32 %v1915, %v2291
      %v2293 = vpop.f32.mrb[0].mxu0
      %v2294 = vadd.f32 %v1915, %v2293
      %2295 = vdwg.mxu0
      %2296 = vmatprep.subr.bf16.mxu0 %v2167
      %2297 = vmatpush1.bf16.msra.mxu0 %v2166
      %2298 = vmatprep.subr.bf16.mxu0 %v2169
      %2299 = vmatpush1.bf16.msra.mxu0 %v2168
      %2300 = vmatprep.subr.bf16.mxu0 %v2171
      %2301 = vmatpush1.bf16.msra.mxu0 %v2170
      %2302 = vmatprep.subr.bf16.mxu0 %v2173
      %2303 = vmatpush1.bf16.msra.mxu0 %v2172
      %2304 = vmatprep.subr.bf16.mxu0 %v2175
      %2305 = vmatpush1.bf16.msra.mxu0 %v2174
      %2306 = vmatprep.subr.bf16.mxu0 %v2177
      %2307 = vmatpush1.bf16.msra.mxu0 %v2176
      %2308 = vmatprep.subr.bf16.mxu0 %v2179
      %2309 = vmatpush1.bf16.msra.mxu0 %v2178
      %2310 = vmatprep.subr.bf16.mxu0 %v2241
      %2311 = vmatpush1.bf16.msra.mxu0 %v2238
      %2312 = vmatprep.subr.bf16.mxu0 0
      %2313 = vmatpush1.bf16.msra.mxu0 0
      %2314 = vmatprep.subr.bf16.mxu0 0
      %2315 = vmatpush1.bf16.msra.mxu0 0
      %2316 = vmatprep.subr.bf16.mxu0 0
      %2317 = vmatpush1.bf16.msra.mxu0 0
      %2318 = vmatprep.subr.bf16.mxu0 0
      %2319 = vmatpush1.bf16.msra.mxu0 0
      %2320 = vmatprep.subr.bf16.mxu0 0
      %2321 = vmatpush1.bf16.msra.mxu0 0
      %2322 = vmatprep.subr.bf16.mxu0 0
      %2323 = vmatpush1.bf16.msra.mxu0 0
      %2324 = vmatprep.subr.bf16.mxu0 0
      %2325 = vmatpush1.bf16.msra.mxu0 0
      %2326 = vmatprep.subr.bf16.mxu0 0
      %2327 = vmatpush1.bf16.msra.mxu0 0
      %2328 = vmatprep.mubr.bf16.mxu0 0
      %2329 = vmatmul.mubr.bf16.gmra.mrb[0].mxu0 %v2230
      %v2330 = vpop.f32.mrb[0].mxu0
      %v2331 = vadd.f32 %v2278, %v2330
      %v2332 = vpop.f32.mrb[0].mxu0
      %v2333 = vadd.f32 %v2280, %v2332
      %v2334 = vpop.f32.mrb[0].mxu0
      %v2335 = vadd.f32 %v2282, %v2334
      %v2336 = vpop.f32.mrb[0].mxu0
      %v2337 = vadd.f32 %v2284, %v2336
      %2338 = vmatprep.mubr.bf16.mxu0 0
      %2339 = vmatmul.mubr.bf16.gmra.mrb[0].mxu0 %v2233
      %v2340 = vpop.f32.mrb[0].mxu0
      %v2341 = vadd.f32 %v2288, %v2340
      %v2342 = vpop.f32.mrb[0].mxu0
      %v2343 = vadd.f32 %v2290, %v2342
      %v2344 = vpop.f32.mrb[0].mxu0
      %v2345 = vadd.f32 %v2292, %v2344
      %v2346 = vpop.f32.mrb[0].mxu0
      %v2347 = vadd.f32 %v2294, %v2346
      %2348 = vdwg.mxu0
      %vm2349 = vcmp.gt.f32.partialorder %v2331, 0.0
      %vm2350 = vcmp.gt.f32.partialorder %v2333, 0.0
      %vm2351 = vcmp.gt.f32.partialorder %v2335, 0.0
      %vm2352 = vcmp.gt.f32.partialorder %v2337, 0.0
      %vm2353 = vcmp.gt.f32.partialorder %v2341, 0.0
      %vm2354 = vcmp.gt.f32.partialorder %v2343, 0.0
      %vm2355 = vcmp.gt.f32.partialorder %v2345, 0.0
      %vm2356 = vcmp.gt.f32.partialorder %v2347, 0.0
      %v2357 = vmul.f32 %v2331, 0.01
      %v2358 = vmul.f32 %v2333, 0.01
      %v2359 = vmul.f32 %v2335, 0.01
      %v2360 = vmul.f32 %v2337, 0.01
      %v2361 = vmul.f32 %v2341, 0.01
      %v2362 = vmul.f32 %v2343, 0.01
      %v2363 = vmul.f32 %v2345, 0.01
      %v2364 = vmul.f32 %v2347, 0.01
      %v2365 = vsel %vm2349, %v2331, %v2357
      %v2366 = vsel %vm2350, %v2333, %v2358
      %v2367 = vsel %vm2351, %v2335, %v2359
      %v2368 = vsel %vm2352, %v2337, %v2360
      %v2369 = vsel %vm2353, %v2341, %v2361
      %v2370 = vsel %vm2354, %v2343, %v2362
      %v2371 = vsel %vm2355, %v2345, %v2363
      %v2372 = vsel %vm2356, %v2347, %v2364
      %v2373 = vsel %vm1131, %v2365, 0.0
      %v2374 = vsel %vm1132, %v2366, 0.0
      %v2375 = vsel %vm1131, %v2367, 0.0
      %v2376 = vsel %vm1132, %v2368, 0.0
      %v2377 = vsel %vm1131, %v2369, 0.0
      %v2378 = vsel %vm1132, %v2370, 0.0
      %v2379 = vsel %vm1131, %v2371, 0.0
      %v2380 = vsel %vm1132, %v2372, 0.0
      %v2381 = vpack.c.bf16 %v2375, %v2373
      %v2382 = vpack.c.bf16 %v2376, %v2374
      %v2383 = vpack.c.bf16 %v2379, %v2377
      %v2384 = vpack.c.bf16 %v2380, %v2378
      %v2389 = vunpack.c.l.b16 %v2381
      %v2390 = vunpack.c.l.b16 %v2382
      %v2391 = vunpack.c.h.b16 %v2381
      %v2392 = vunpack.c.h.b16 %v2382
      %v2393 = vunpack.c.l.b16 %v2383
      %v2394 = vunpack.c.l.b16 %v2384
      %v2395 = vunpack.c.h.b16 %v2383
      %v2396 = vunpack.c.h.b16 %v2384
      %v2397 = vpack.c.b16 %v2390, %v2389
      %v2398 = vpack.c.b16 %v2392, %v2391
      %v2399 = vpack.c.b16 %v2394, %v2393
      %v2400 = vpack.c.b16 %v2396, %v2395
      %2405 = vst [vmem:[#allocation2 + $0x4] sm:$0xff] %v2397
      %2406 = vst [vmem:[#allocation2 + $0x14] sm:$0xff] %v2398
      %2407 = vst [vmem:[#allocation2 + $0x24] sm:$0xff] %v2399
      %v2408 = vld [vmem:[#allocation2 + $0x34] sm:$0x11]
      %v2409 = vsel %vm408, %v2400, %v2408
      %2410 = vst [vmem:[#allocation2 + $0x34] sm:$0x11] %v2409
      %v2411 = vld [vmem:[#allocation2] sm:$0xff]
      %v2412 = vld [vmem:[#allocation2 + $0x8] sm:$0xf]
      %v2413 = vld [vmem:[#allocation2 + $0x10] sm:$0xff]
      %v2414 = vld [vmem:[#allocation2 + $0x18] sm:$0xf]
      %v2415 = vld [vmem:[#allocation2 + $0x20] sm:$0xff]
      %v2416 = vld [vmem:[#allocation2 + $0x28] sm:$0xf]
      %v2417 = vld [vmem:[#allocation2 + $0x30] sm:$0x11]
      %v2418 = vld [vmem:[#allocation2 + $0x38] sm:$0x1]
      %v2419 = vld [vmem:[#allocation2 + $0x4] sm:$0xff]
      %v2420 = vld [vmem:[#allocation2 + $0x14] sm:$0xff]
      %v2421 = vld [vmem:[#allocation2 + $0x24] sm:$0xff]
      %v2422 = vld [vmem:[#allocation2 + $0x34] sm:$0x11]
      %v2423 = vld [vmem:[#allocation2 + $0xc] sm:$0xf]
      %v2424 = vld [vmem:[#allocation2 + $0x1c] sm:$0xf]
      %v2425 = vld [vmem:[#allocation2 + $0x2c] sm:$0xf]
      %v2426 = vld [vmem:[#allocation2 + $0x3c] sm:$0x1]
      %v2435 = vunpack.c.l.b16 %v2411
      %v2436 = vunpack.c.h.b16 %v2411
      %v2437 = vunpack.c.l.b16 %v2412
      %v2438 = vunpack.c.l.b16 %v2413
      %v2439 = vunpack.c.h.b16 %v2413
      %v2440 = vunpack.c.l.b16 %v2414
      %v2441 = vunpack.c.l.b16 %v2415
      %v2442 = vunpack.c.h.b16 %v2415
      %v2443 = vunpack.c.l.b16 %v2416
      %v2444 = vunpack.c.l.b16 %v2417
      %v2445 = vunpack.c.h.b16 %v2417
      %v2446 = vunpack.c.l.b16 %v2418
      %v2447 = vpack.c.b16 %v2438, %v2435
      %v2448 = vpack.c.b16 %v2439, %v2436
      %v2449 = vpack.c.b16 %v2440, %v2437
      %v2450 = vpack.c.b16 %v2444, %v2441
      %v2451 = vpack.c.b16 %v2445, %v2442
      %v2452 = vpack.c.b16 %v2446, %v2443
      %v2457 = vshrl.u32 %v2447, 16
      %v2459 = vrot.slane %v2457, 3
      %v2460 = vshll.u32 %v2447, 16
      %v2462 = vrot.slane %v2460, 4
      %v2463 = vor.u32 %v2459, %v2462
      %v2465 = vshrl.u32 %v2448, 16
      %v2467 = vrot.slane %v2465, 3
      %v2468 = vshll.u32 %v2448, 16
      %v2470 = vrot.slane %v2468, 4
      %v2471 = vor.u32 %v2467, %v2470
      %v2473 = vshrl.u32 %v2449, 16
      %v2475 = vrot.slane %v2473, 3
      %v2476 = vshll.u32 %v2449, 16
      %v2478 = vrot.slane %v2476, 4
      %v2479 = vor.u32 %v2475, %v2478
      %v2481 = vshrl.u32 %v2450, 16
      %v2483 = vrot.slane %v2481, 3
      %v2484 = vshll.u32 %v2450, 16
      %v2486 = vrot.slane %v2484, 4
      %v2487 = vor.u32 %v2483, %v2486
      %v2488 = vsel %vm406, %v2463, %v2487
      %v2490 = vshrl.u32 %v2451, 16
      %v2492 = vrot.slane %v2490, 3
      %v2493 = vshll.u32 %v2451, 16
      %v2495 = vrot.slane %v2493, 4
      %v2496 = vor.u32 %v2492, %v2495
      %v2497 = vsel %vm406, %v2471, %v2496
      %v2499 = vshrl.u32 %v2452, 16
      %v2501 = vrot.slane %v2499, 3
      %v2502 = vshll.u32 %v2452, 16
      %v2504 = vrot.slane %v2502, 4
      %v2505 = vor.u32 %v2501, %v2504
      %v2506 = vsel %vm406, %v2479, %v2505
      %2507 = vrot.lane.b32.xlu0 %v2463, 127
      %v2508 = vpop.permute.xlu0 %2507
      %2509 = vrot.lane.b32.xlu0 %v2471, 127
      %v2510 = vpop.permute.xlu0 %2509
      %2511 = vrot.lane.b32.xlu0 %v2479, 127
      %v2512 = vpop.permute.xlu0 %2511
      %2513 = vrot.lane.b32.xlu0 %v2488, 127
      %v2514 = vpop.permute.xlu0 %2513
      %2515 = vrot.lane.b32.xlu0 %v2497, 127
      %v2516 = vpop.permute.xlu0 %2515
      %2517 = vrot.lane.b32.xlu0 %v2506, 127
      %v2518 = vpop.permute.xlu0 %2517
      %2519 = vrot.lane.b32.xlu0 %v2487, 127
      %v2520 = vpop.permute.xlu0 %2519
      %2521 = vrot.lane.b32.xlu0 %v2496, 127
      %v2522 = vpop.permute.xlu0 %2521
      %2523 = vrot.lane.b32.xlu0 %v2505, 127
      %v2524 = vpop.permute.xlu0 %2523
      %v2525 = vsel %vm479, %v2508, %v2510
      %v2526 = vsel %vm479, %v2510, %v2512
      %v2527 = vsel %vm479, %v2514, %v2516
      %v2528 = vsel %vm479, %v2516, %v2518
      %v2529 = vsel %vm479, %v2520, %v2522
      %v2530 = vsel %vm479, %v2522, %v2524
      %v2534 = vrot.slane %v2447, 7
      %v2535 = vrot.slane %v2448, 7
      %v2536 = vrot.slane %v2449, 7
      %v2537 = vrot.slane %v2450, 7
      %v2538 = vsel %vm342, %v2534, %v2537
      %v2539 = vrot.slane %v2451, 7
      %v2540 = vsel %vm342, %v2535, %v2539
      %v2541 = vrot.slane %v2452, 7
      %v2542 = vsel %vm342, %v2536, %v2541
      %2543 = vrot.lane.b32.xlu0 %v2534, 126
      %v2544 = vpop.permute.xlu0 %2543
      %2545 = vrot.lane.b32.xlu0 %v2535, 126
      %v2546 = vpop.permute.xlu0 %2545
      %2547 = vrot.lane.b32.xlu0 %v2536, 126
      %v2548 = vpop.permute.xlu0 %2547
      %2549 = vrot.lane.b32.xlu0 %v2538, 126
      %v2550 = vpop.permute.xlu0 %2549
      %2551 = vrot.lane.b32.xlu0 %v2540, 126
      %v2552 = vpop.permute.xlu0 %2551
      %2553 = vrot.lane.b32.xlu0 %v2542, 126
      %v2554 = vpop.permute.xlu0 %2553
      %v2555 = vsel %vm494, %v2544, %v2546
      %v2556 = vsel %vm494, %v2546, %v2548
      %v2557 = vsel %vm494, %v2550, %v2552
      %v2558 = vsel %vm494, %v2552, %v2554
      %v2562 = vrot.slane %v2457, 2
      %v2563 = vrot.slane %v2460, 3
      %v2564 = vor.u32 %v2562, %v2563
      %v2565 = vrot.slane %v2465, 2
      %v2566 = vrot.slane %v2468, 3
      %v2567 = vor.u32 %v2565, %v2566
      %v2568 = vrot.slane %v2473, 2
      %v2569 = vrot.slane %v2476, 3
      %v2570 = vor.u32 %v2568, %v2569
      %v2571 = vrot.slane %v2481, 2
      %v2572 = vrot.slane %v2484, 3
      %v2573 = vor.u32 %v2571, %v2572
      %v2574 = vsel %vm776, %v2564, %v2573
      %v2575 = vrot.slane %v2490, 2
      %v2576 = vrot.slane %v2493, 3
      %v2577 = vor.u32 %v2575, %v2576
      %v2578 = vsel %vm776, %v2567, %v2577
      %v2579 = vrot.slane %v2499, 2
      %v2580 = vrot.slane %v2502, 3
      %v2581 = vor.u32 %v2579, %v2580
      %v2582 = vsel %vm776, %v2570, %v2581
      %2583 = vrot.lane.b32.xlu0 %v2564, 125
      %v2584 = vpop.permute.xlu0 %2583
      %2585 = vrot.lane.b32.xlu0 %v2567, 125
      %v2586 = vpop.permute.xlu0 %2585
      %2587 = vrot.lane.b32.xlu0 %v2570, 125
      %v2588 = vpop.permute.xlu0 %2587
      %2589 = vrot.lane.b32.xlu0 %v2574, 125
      %v2590 = vpop.permute.xlu0 %2589
      %2591 = vrot.lane.b32.xlu0 %v2578, 125
      %v2592 = vpop.permute.xlu0 %2591
      %2593 = vrot.lane.b32.xlu0 %v2582, 125
      %v2594 = vpop.permute.xlu0 %2593
      %2595 = vrot.lane.b32.xlu0 %v2573, 125
      %v2596 = vpop.permute.xlu0 %2595
      %2597 = vrot.lane.b32.xlu0 %v2577, 125
      %v2598 = vpop.permute.xlu0 %2597
      %2599 = vrot.lane.b32.xlu0 %v2581, 125
      %v2600 = vpop.permute.xlu0 %2599
      %v2601 = vsel %vm506, %v2584, %v2586
      %v2602 = vsel %vm506, %v2586, %v2588
      %v2603 = vsel %vm506, %v2590, %v2592
      %v2604 = vsel %vm506, %v2592, %v2594
      %v2605 = vsel %vm506, %v2596, %v2598
      %v2606 = vsel %vm506, %v2598, %v2600
      %v2610 = vrot.slane %v2447, 6
      %v2611 = vrot.slane %v2448, 6
      %v2612 = vrot.slane %v2449, 6
      %v2613 = vrot.slane %v2450, 6
      %v2614 = vsel %vm700, %v2610, %v2613
      %v2615 = vrot.slane %v2451, 6
      %v2616 = vsel %vm700, %v2611, %v2615
      %v2617 = vrot.slane %v2452, 6
      %v2618 = vsel %vm700, %v2612, %v2617
      %2619 = vrot.lane.b32.xlu0 %v2610, 124
      %v2620 = vpop.permute.xlu0 %2619
      %2621 = vrot.lane.b32.xlu0 %v2611, 124
      %v2622 = vpop.permute.xlu0 %2621
      %2623 = vrot.lane.b32.xlu0 %v2612, 124
      %v2624 = vpop.permute.xlu0 %2623
      %2625 = vrot.lane.b32.xlu0 %v2614, 124
      %v2626 = vpop.permute.xlu0 %2625
      %2627 = vrot.lane.b32.xlu0 %v2616, 124
      %v2628 = vpop.permute.xlu0 %2627
      %2629 = vrot.lane.b32.xlu0 %v2618, 124
      %v2630 = vpop.permute.xlu0 %2629
      %v2631 = vsel %vm521, %v2620, %v2622
      %v2632 = vsel %vm521, %v2622, %v2624
      %v2633 = vsel %vm521, %v2626, %v2628
      %v2634 = vsel %vm521, %v2628, %v2630
      %v2638 = vrot.slane %v2457, 1
      %v2639 = vrot.slane %v2460, 2
      %v2640 = vor.u32 %v2638, %v2639
      %v2641 = vrot.slane %v2465, 1
      %v2642 = vrot.slane %v2468, 2
      %v2643 = vor.u32 %v2641, %v2642
      %v2644 = vrot.slane %v2473, 1
      %v2645 = vrot.slane %v2476, 2
      %v2646 = vor.u32 %v2644, %v2645
      %v2647 = vrot.slane %v2481, 1
      %v2648 = vrot.slane %v2484, 2
      %v2649 = vor.u32 %v2647, %v2648
      %v2650 = vsel %vm795, %v2640, %v2649
      %v2651 = vrot.slane %v2490, 1
      %v2652 = vrot.slane %v2493, 2
      %v2653 = vor.u32 %v2651, %v2652
      %v2654 = vsel %vm795, %v2643, %v2653
      %v2655 = vrot.slane %v2499, 1
      %v2656 = vrot.slane %v2502, 2
      %v2657 = vor.u32 %v2655, %v2656
      %v2658 = vsel %vm795, %v2646, %v2657
      %2659 = vrot.lane.b32.xlu0 %v2640, 123
      %v2660 = vpop.permute.xlu0 %2659
      %2661 = vrot.lane.b32.xlu0 %v2643, 123
      %v2662 = vpop.permute.xlu0 %2661
      %2663 = vrot.lane.b32.xlu0 %v2646, 123
      %v2664 = vpop.permute.xlu0 %2663
      %2665 = vrot.lane.b32.xlu0 %v2650, 123
      %v2666 = vpop.permute.xlu0 %2665
      %2667 = vrot.lane.b32.xlu0 %v2654, 123
      %v2668 = vpop.permute.xlu0 %2667
      %2669 = vrot.lane.b32.xlu0 %v2658, 123
      %v2670 = vpop.permute.xlu0 %2669
      %2671 = vrot.lane.b32.xlu0 %v2649, 123
      %v2672 = vpop.permute.xlu0 %2671
      %2673 = vrot.lane.b32.xlu0 %v2653, 123
      %v2674 = vpop.permute.xlu0 %2673
      %2675 = vrot.lane.b32.xlu0 %v2657, 123
      %v2676 = vpop.permute.xlu0 %2675
      %v2677 = vsel %vm533, %v2660, %v2662
      %v2678 = vsel %vm533, %v2662, %v2664
      %v2679 = vsel %vm533, %v2666, %v2668
      %v2680 = vsel %vm533, %v2668, %v2670
      %v2681 = vsel %vm533, %v2672, %v2674
      %v2682 = vsel %vm533, %v2674, %v2676
      %v2686 = vrot.slane %v2447, 5
      %v2687 = vrot.slane %v2448, 5
      %v2688 = vrot.slane %v2449, 5
      %v2689 = vrot.slane %v2450, 5
      %v2690 = vsel %vm719, %v2686, %v2689
      %v2691 = vrot.slane %v2451, 5
      %v2692 = vsel %vm719, %v2687, %v2691
      %v2693 = vrot.slane %v2452, 5
      %v2694 = vsel %vm719, %v2688, %v2693
      %2695 = vrot.lane.b32.xlu0 %v2686, 122
      %v2696 = vpop.permute.xlu0 %2695
      %2697 = vrot.lane.b32.xlu0 %v2687, 122
      %v2698 = vpop.permute.xlu0 %2697
      %2699 = vrot.lane.b32.xlu0 %v2688, 122
      %v2700 = vpop.permute.xlu0 %2699
      %2701 = vrot.lane.b32.xlu0 %v2690, 122
      %v2702 = vpop.permute.xlu0 %2701
      %2703 = vrot.lane.b32.xlu0 %v2692, 122
      %v2704 = vpop.permute.xlu0 %2703
      %2705 = vrot.lane.b32.xlu0 %v2694, 122
      %v2706 = vpop.permute.xlu0 %2705
      %v2707 = vsel %vm548, %v2696, %v2698
      %v2708 = vsel %vm548, %v2698, %v2700
      %v2709 = vsel %vm548, %v2702, %v2704
      %v2710 = vsel %vm548, %v2704, %v2706
      %v2718 = vunpack.c.l.b16 %v2419
      %v2719 = vunpack.c.h.b16 %v2419
      %v2720 = vunpack.c.l.b16 %v2420
      %v2721 = vunpack.c.h.b16 %v2420
      %v2722 = vunpack.c.l.b16 %v2421
      %v2723 = vunpack.c.h.b16 %v2421
      %v2724 = vunpack.c.l.b16 %v2422
      %v2725 = vunpack.c.h.b16 %v2422
      %v2726 = vpack.c.b16 %v2720, %v2718
      %v2727 = vpack.c.b16 %v2721, %v2719
      %v2728 = vpack.c.b16 %v2724, %v2722
      %v2729 = vpack.c.b16 %v2725, %v2723
      %v2731 = vshll.u32 %v2726, 16
      %v2733 = vrot.slane %v2731, 1
      %v2735 = vshll.u32 %v2727, 16
      %v2737 = vrot.slane %v2735, 1
      %v2738 = vshrl.u32 %v2726, 16
      %v2740 = vor.u32 %v2738, %v2733
      %v2742 = vshll.u32 %v2728, 16
      %v2744 = vrot.slane %v2742, 1
      %v2745 = vsel %vm814, %v2740, %v2744
      %v2746 = vshrl.u32 %v2727, 16
      %v2748 = vor.u32 %v2746, %v2737
      %v2750 = vshll.u32 %v2729, 16
      %v2752 = vrot.slane %v2750, 1
      %v2753 = vsel %vm814, %v2748, %v2752
      %v2754 = vshrl.u32 %v2728, 16
      %v2756 = vor.u32 %v2754, %v2744
      %v2757 = vshrl.u32 %v2729, 16
      %v2759 = vor.u32 %v2757, %v2752
      %2760 = vrot.lane.b32.xlu0 %v2733, 121
      %v2761 = vpop.permute.xlu0 %2760
      %2762 = vrot.lane.b32.xlu0 %v2737, 121
      %v2763 = vpop.permute.xlu0 %2762
      %2764 = vrot.lane.b32.xlu0 %v2745, 121
      %v2765 = vpop.permute.xlu0 %2764
      %2766 = vrot.lane.b32.xlu0 %v2753, 121
      %v2767 = vpop.permute.xlu0 %2766
      %2768 = vrot.lane.b32.xlu0 %v2756, 121
      %v2769 = vpop.permute.xlu0 %2768
      %2770 = vrot.lane.b32.xlu0 %v2759, 121
      %v2771 = vpop.permute.xlu0 %2770
      %v2772 = vsel %vm560, %v2761, %v2763
      %v2773 = vsel %vm560, %v2765, %v2767
      %v2774 = vsel %vm560, %v2769, %v2771
      %v2782 = vunpack.c.l.b16 %v2423
      %v2783 = vunpack.c.l.b16 %v2424
      %v2784 = vunpack.c.l.b16 %v2425
      %v2785 = vunpack.c.l.b16 %v2426
      %v2786 = vpack.c.b16 %v2718, %v2718
      %v2787 = vpack.c.b16 %v2719, %v2719
      %v2788 = vpack.c.b16 %v2782, %v2782
      %v2789 = vpack.c.b16 %v2722, %v2720
      %v2790 = vpack.c.b16 %v2723, %v2721
      %v2791 = vpack.c.b16 %v2784, %v2783
      %v2792 = vpack.c.b16 %v2724, %v2724
      %v2793 = vpack.c.b16 %v2725, %v2725
      %v2794 = vpack.c.b16 %v2785, %v2785
      %2795 = vrot.lane.b32.xlu0 %v2786, 120
      %v2796 = vpop.permute.xlu0 %2795
      %2797 = vrot.lane.b32.xlu0 %v2787, 120
      %v2798 = vpop.permute.xlu0 %2797
      %2799 = vrot.lane.b32.xlu0 %v2788, 120
      %v2800 = vpop.permute.xlu0 %2799
      %2801 = vrot.lane.b32.xlu0 %v2789, 120
      %v2802 = vpop.permute.xlu0 %2801
      %2803 = vrot.lane.b32.xlu0 %v2790, 120
      %v2804 = vpop.permute.xlu0 %2803
      %2805 = vrot.lane.b32.xlu0 %v2791, 120
      %v2806 = vpop.permute.xlu0 %2805
      %2807 = vrot.lane.b32.xlu0 %v2792, 120
      %v2808 = vpop.permute.xlu0 %2807
      %2809 = vrot.lane.b32.xlu0 %v2793, 120
      %v2810 = vpop.permute.xlu0 %2809
      %2811 = vrot.lane.b32.xlu0 %v2794, 120
      %v2812 = vpop.permute.xlu0 %2811
      %v2813 = vsel %vm572, %v2796, %v2798
      %v2814 = vsel %vm572, %v2798, %v2800
      %v2815 = vsel %vm572, %v2802, %v2804
      %v2816 = vsel %vm572, %v2804, %v2806
      %v2817 = vsel %vm572, %v2808, %v2810
      %v2818 = vsel %vm572, %v2810, %v2812
      %v2822 = vpack.c.b16 %v2783, %v2782
      %v2823 = vpack.c.b16 %v2785, %v2784
      %v2824 = vrot.slane %v2738, 7
      %v2825 = vor.u32 %v2824, %v2731
      %v2826 = vrot.slane %v2746, 7
      %v2827 = vor.u32 %v2826, %v2735
      %v2829 = vshrl.u32 %v2822, 16
      %v2831 = vrot.slane %v2829, 7
      %v2832 = vshll.u32 %v2822, 16
      %v2834 = vor.u32 %v2831, %v2832
      %v2835 = vrot.slane %v2754, 7
      %v2836 = vor.u32 %v2835, %v2742
      %v2837 = vsel %vm343, %v2824, %v2836
      %v2838 = vrot.slane %v2757, 7
      %v2839 = vor.u32 %v2838, %v2750
      %v2840 = vsel %vm343, %v2826, %v2839
      %v2842 = vshrl.u32 %v2823, 16
      %v2844 = vrot.slane %v2842, 7
      %v2845 = vshll.u32 %v2823, 16
      %v2847 = vor.u32 %v2844, %v2845
      %v2848 = vsel %vm343, %v2831, %v2847
      %2849 = vrot.lane.b32.xlu0 %v2825, 119
      %v2850 = vpop.permute.xlu0 %2849
      %2851 = vrot.lane.b32.xlu0 %v2827, 119
      %v2852 = vpop.permute.xlu0 %2851
      %2853 = vrot.lane.b32.xlu0 %v2834, 119
      %v2854 = vpop.permute.xlu0 %2853
      %2855 = vrot.lane.b32.xlu0 %v2837, 119
      %v2856 = vpop.permute.xlu0 %2855
      %2857 = vrot.lane.b32.xlu0 %v2840, 119
      %v2858 = vpop.permute.xlu0 %2857
      %2859 = vrot.lane.b32.xlu0 %v2848, 119
      %v2860 = vpop.permute.xlu0 %2859
      %v2861 = vsel %vm584, %v2850, %v2852
      %v2862 = vsel %vm584, %v2852, %v2854
      %v2863 = vsel %vm584, %v2856, %v2858
      %v2864 = vsel %vm584, %v2858, %v2860
      %v2868 = vrot.slane %v2726, 3
      %v2869 = vrot.slane %v2727, 3
      %v2870 = vrot.slane %v2822, 3
      %v2871 = vrot.slane %v2728, 3
      %v2872 = vsel %vm757, %v2868, %v2871
      %v2873 = vrot.slane %v2729, 3
      %v2874 = vsel %vm757, %v2869, %v2873
      %v2875 = vrot.slane %v2823, 3
      %v2876 = vsel %vm757, %v2870, %v2875
      %2877 = vrot.lane.b32.xlu0 %v2868, 118
      %v2878 = vpop.permute.xlu0 %2877
      %2879 = vrot.lane.b32.xlu0 %v2869, 118
      %v2880 = vpop.permute.xlu0 %2879
      %2881 = vrot.lane.b32.xlu0 %v2870, 118
      %v2882 = vpop.permute.xlu0 %2881
      %2883 = vrot.lane.b32.xlu0 %v2872, 118
      %v2884 = vpop.permute.xlu0 %2883
      %2885 = vrot.lane.b32.xlu0 %v2874, 118
      %v2886 = vpop.permute.xlu0 %2885
      %2887 = vrot.lane.b32.xlu0 %v2876, 118
      %v2888 = vpop.permute.xlu0 %2887
      %2889 = vrot.lane.b32.xlu0 %v2871, 118
      %v2890 = vpop.permute.xlu0 %2889
      %2891 = vrot.lane.b32.xlu0 %v2873, 118
      %v2892 = vpop.permute.xlu0 %2891
      %2893 = vrot.lane.b32.xlu0 %v2875, 118
      %v2894 = vpop.permute.xlu0 %2893
      %v2895 = vsel %vm599, %v2878, %v2880
      %v2896 = vsel %vm599, %v2880, %v2882
      %v2897 = vsel %vm599, %v2884, %v2886
      %v2898 = vsel %vm599, %v2886, %v2888
      %v2899 = vsel %vm599, %v2890, %v2892
      %v2900 = vsel %vm599, %v2892, %v2894
      %v2904 = vrot.slane %v2738, 6
      %v2905 = vrot.slane %v2731, 7
      %v2906 = vor.u32 %v2904, %v2905
      %v2907 = vrot.slane %v2746, 6
      %v2908 = vrot.slane %v2735, 7
      %v2909 = vor.u32 %v2907, %v2908
      %v2910 = vrot.slane %v2829, 6
      %v2911 = vrot.slane %v2832, 7
      %v2912 = vor.u32 %v2910, %v2911
      %v2913 = vrot.slane %v2754, 6
      %v2914 = vrot.slane %v2742, 7
      %v2915 = vor.u32 %v2913, %v2914
      %v2916 = vsel %vm701, %v2906, %v2915
      %v2917 = vrot.slane %v2757, 6
      %v2918 = vrot.slane %v2750, 7
      %v2919 = vor.u32 %v2917, %v2918
      %v2920 = vsel %vm701, %v2909, %v2919
      %v2921 = vrot.slane %v2842, 6
      %v2922 = vrot.slane %v2845, 7
      %v2923 = vor.u32 %v2921, %v2922
      %v2924 = vsel %vm701, %v2912, %v2923
      %2925 = vrot.lane.b32.xlu0 %v2906, 117
      %v2926 = vpop.permute.xlu0 %2925
      %2927 = vrot.lane.b32.xlu0 %v2909, 117
      %v2928 = vpop.permute.xlu0 %2927
      %2929 = vrot.lane.b32.xlu0 %v2912, 117
      %v2930 = vpop.permute.xlu0 %2929
      %2931 = vrot.lane.b32.xlu0 %v2916, 117
      %v2932 = vpop.permute.xlu0 %2931
      %2933 = vrot.lane.b32.xlu0 %v2920, 117
      %v2934 = vpop.permute.xlu0 %2933
      %2935 = vrot.lane.b32.xlu0 %v2924, 117
      %v2936 = vpop.permute.xlu0 %2935
      %v2937 = vsel %vm611, %v2926, %v2928
      %v2938 = vsel %vm611, %v2928, %v2930
      %v2939 = vsel %vm611, %v2932, %v2934
      %v2940 = vsel %vm611, %v2934, %v2936
      %v2944 = vrot.slane %v2726, 2
      %v2945 = vrot.slane %v2727, 2
      %v2946 = vrot.slane %v2822, 2
      %v2947 = vrot.slane %v2728, 2
      %v2948 = vsel %vm775, %v2944, %v2947
      %v2949 = vrot.slane %v2729, 2
      %v2950 = vsel %vm775, %v2945, %v2949
      %v2951 = vrot.slane %v2823, 2
      %v2952 = vsel %vm775, %v2946, %v2951
      %2953 = vrot.lane.b32.xlu0 %v2944, 116
      %v2954 = vpop.permute.xlu0 %2953
      %2955 = vrot.lane.b32.xlu0 %v2945, 116
      %v2956 = vpop.permute.xlu0 %2955
      %2957 = vrot.lane.b32.xlu0 %v2946, 116
      %v2958 = vpop.permute.xlu0 %2957
      %2959 = vrot.lane.b32.xlu0 %v2948, 116
      %v2960 = vpop.permute.xlu0 %2959
      %2961 = vrot.lane.b32.xlu0 %v2950, 116
      %v2962 = vpop.permute.xlu0 %2961
      %2963 = vrot.lane.b32.xlu0 %v2952, 116
      %v2964 = vpop.permute.xlu0 %2963
      %2965 = vrot.lane.b32.xlu0 %v2947, 116
      %v2966 = vpop.permute.xlu0 %2965
      %2967 = vrot.lane.b32.xlu0 %v2949, 116
      %v2968 = vpop.permute.xlu0 %2967
      %2969 = vrot.lane.b32.xlu0 %v2951, 116
      %v2970 = vpop.permute.xlu0 %2969
      %v2971 = vsel %vm628, %v2954, %v2956
      %v2972 = vsel %vm628, %v2956, %v2958
      %v2973 = vsel %vm628, %v2960, %v2962
      %v2974 = vsel %vm628, %v2962, %v2964
      %v2975 = vsel %vm628, %v2966, %v2968
      %v2976 = vsel %vm628, %v2968, %v2970
      %v2980 = vrot.slane %v2738, 5
      %v2981 = vrot.slane %v2731, 6
      %v2982 = vor.u32 %v2980, %v2981
      %v2983 = vrot.slane %v2746, 5
      %v2984 = vrot.slane %v2735, 6
      %v2985 = vor.u32 %v2983, %v2984
      %v2986 = vrot.slane %v2829, 5
      %v2987 = vrot.slane %v2832, 6
      %v2988 = vor.u32 %v2986, %v2987
      %v2989 = vrot.slane %v2754, 5
      %v2990 = vrot.slane %v2742, 6
      %v2991 = vor.u32 %v2989, %v2990
      %v2992 = vsel %vm720, %v2982, %v2991
      %v2993 = vrot.slane %v2757, 5
      %v2994 = vrot.slane %v2750, 6
      %v2995 = vor.u32 %v2993, %v2994
      %v2996 = vsel %vm720, %v2985, %v2995
      %v2997 = vrot.slane %v2842, 5
      %v2998 = vrot.slane %v2845, 6
      %v2999 = vor.u32 %v2997, %v2998
      %v3000 = vsel %vm720, %v2988, %v2999
      %3001 = vrot.lane.b32.xlu0 %v2982, 115
      %v3002 = vpop.permute.xlu0 %3001
      %3003 = vrot.lane.b32.xlu0 %v2985, 115
      %v3004 = vpop.permute.xlu0 %3003
      %3005 = vrot.lane.b32.xlu0 %v2988, 115
      %v3006 = vpop.permute.xlu0 %3005
      %3007 = vrot.lane.b32.xlu0 %v2992, 115
      %v3008 = vpop.permute.xlu0 %3007
      %3009 = vrot.lane.b32.xlu0 %v2996, 115
      %v3010 = vpop.permute.xlu0 %3009
      %3011 = vrot.lane.b32.xlu0 %v3000, 115
      %v3012 = vpop.permute.xlu0 %3011
      %v3013 = vsel %vm651, %v3002, %v3004
      %v3014 = vsel %vm651, %v3004, %v3006
      %v3015 = vsel %vm651, %v3008, %v3010
      %v3016 = vsel %vm651, %v3010, %v3012
      %v3020 = vrot.slane %v2726, 1
      %v3021 = vrot.slane %v2727, 1
      %v3022 = vrot.slane %v2822, 1
      %v3023 = vrot.slane %v2728, 1
      %v3024 = vsel %vm794, %v3020, %v3023
      %v3025 = vrot.slane %v2729, 1
      %v3026 = vsel %vm794, %v3021, %v3025
      %v3027 = vrot.slane %v2823, 1
      %v3028 = vsel %vm794, %v3022, %v3027
      %3029 = vrot.lane.b32.xlu0 %v3020, 114
      %v3030 = vpop.permute.xlu0 %3029
      %3031 = vrot.lane.b32.xlu0 %v3021, 114
      %v3032 = vpop.permute.xlu0 %3031
      %3033 = vrot.lane.b32.xlu0 %v3022, 114
      %v3034 = vpop.permute.xlu0 %3033
      %3035 = vrot.lane.b32.xlu0 %v3024, 114
      %v3036 = vpop.permute.xlu0 %3035
      %3037 = vrot.lane.b32.xlu0 %v3026, 114
      %v3038 = vpop.permute.xlu0 %3037
      %3039 = vrot.lane.b32.xlu0 %v3028, 114
      %v3040 = vpop.permute.xlu0 %3039
      %3041 = vrot.lane.b32.xlu0 %v3023, 114
      %v3042 = vpop.permute.xlu0 %3041
      %3043 = vrot.lane.b32.xlu0 %v3025, 114
      %v3044 = vpop.permute.xlu0 %3043
      %3045 = vrot.lane.b32.xlu0 %v3027, 114
      %v3046 = vpop.permute.xlu0 %3045
      %v3047 = vsel %vm666, %v3030, %v3032
      %v3048 = vsel %vm666, %v3032, %v3034
      %v3049 = vsel %vm666, %v3036, %v3038
      %v3050 = vsel %vm666, %v3038, %v3040
      %v3051 = vsel %vm666, %v3042, %v3044
      %v3052 = vsel %vm666, %v3044, %v3046
      %v3053 = vsel %vm758, %v2450, %v2525
      %v3054 = vsel %vm758, %v2451, %v2526
      %v3055 = vsel %vm758, %v2452, %v2512
      %v3058 = vsel %vm687, %v2529, %v2555
      %v3061 = vsel %vm687, %v2530, %v2556
      %v3064 = vsel %vm687, %v2524, %v2548
      %v3065 = vsel %vm777, %v2557, %v2601
      %v3066 = vsel %vm777, %v2558, %v2602
      %v3067 = vsel %vm777, %v2554, %v2588
      %v3070 = vsel %vm706, %v2605, %v2631
      %v3073 = vsel %vm706, %v2606, %v2632
      %v3076 = vsel %vm706, %v2600, %v2624
      %v3077 = vsel %vm796, %v2633, %v2677
      %v3078 = vsel %vm796, %v2634, %v2678
      %v3079 = vsel %vm796, %v2630, %v2664
      %v3082 = vsel %vm725, %v2681, %v2707
      %v3085 = vsel %vm725, %v2682, %v2708
      %v3088 = vsel %vm725, %v2676, %v2700
      %v3089 = vsel %vm815, %v2709, %v2761
      %v3090 = vsel %vm815, %v2710, %v2772
      %v3091 = vsel %vm815, %v2706, %v2763
      %v3094 = vsel %vm744, %v2769, %v2796
      %v3097 = vsel %vm744, %v2774, %v2813
      %v3100 = vsel %vm744, %v2771, %v2814
      %v3101 = vsel %vm344, %v2808, %v2850
      %v3102 = vsel %vm344, %v2817, %v2861
      %v3103 = vsel %vm344, %v2818, %v2862
      %v3106 = vsel %vm762, %v2856, %v2878
      %v3109 = vsel %vm762, %v2863, %v2895
      %v3112 = vsel %vm762, %v2864, %v2896
      %v3113 = vsel %vm702, %v2890, %v2926
      %v3114 = vsel %vm702, %v2899, %v2937
      %v3115 = vsel %vm702, %v2900, %v2938
      %v3118 = vsel %vm781, %v2932, %v2954
      %v3121 = vsel %vm781, %v2939, %v2971
      %v3124 = vsel %vm781, %v2940, %v2972
      %v3125 = vsel %vm721, %v2966, %v3002
      %v3126 = vsel %vm721, %v2975, %v3013
      %v3127 = vsel %vm721, %v2976, %v3014
      %v3130 = vsel %vm800, %v3008, %v3030
      %v3133 = vsel %vm800, %v3015, %v3047
      %v3136 = vsel %vm800, %v3016, %v3048
      %3138 = vset.pattern.permute.xlu0 0
      %3139 = vperm.xlu0 %3138, %v444
      %v3140 = vpop.permute.xlu0 %3139
      %3143 = vset.pattern.permute.xlu0 0
      %3144 = vperm.xlu0 %3143, %v445
      %v3145 = vpop.permute.xlu0 %3144
      %3148 = vset.pattern.permute.xlu0 0
      %3149 = vperm.xlu0 %3148, %v446
      %v3150 = vpop.permute.xlu0 %3149
      %3153 = vset.pattern.permute.xlu0 0
      %3154 = vperm.xlu0 %3153, %v447
      %v3155 = vpop.permute.xlu0 %3154
      %v3165 = vunpack.c.l.b16 %v427
      %v3166 = vunpack.c.h.b16 %v427
      %v3167 = vunpack.c.l.b16 %v428
      %v3168 = vunpack.c.l.b16 %v429
      %v3169 = vunpack.c.h.b16 %v429
      %v3170 = vunpack.c.l.b16 %v430
      %v3171 = vunpack.c.l.b16 %v431
      %v3172 = vunpack.c.h.b16 %v431
      %v3173 = vunpack.c.l.b16 %v432
      %v3174 = vunpack.c.l.b16 %v433
      %v3175 = vunpack.c.h.b16 %v433
      %v3176 = vunpack.c.l.b16 %v434
      %v3177 = vpack.c.b16 %v3168, %v3165
      %v3178 = vpack.c.b16 %v3169, %v3166
      %v3179 = vpack.c.b16 %v3170, %v3167
      %v3180 = vpack.c.b16 %v3174, %v3171
      %v3181 = vpack.c.b16 %v3175, %v3172
      %v3182 = vpack.c.b16 %v3176, %v3173
      %3229 = vrot.lane.b32.xlu0 %v2447, 7
      %v3230 = vpop.permute.xlu0 %3229
      %3231 = vrot.lane.b32.xlu0 %v2448, 7
      %v3232 = vpop.permute.xlu0 %3231
      %3233 = vrot.lane.b32.xlu0 %v2449, 7
      %v3234 = vpop.permute.xlu0 %3233
      %3235 = vrot.lane.b32.xlu0 %v3053, 7
      %v3236 = vpop.permute.xlu0 %3235
      %3237 = vrot.lane.b32.xlu0 %v3054, 7
      %v3238 = vpop.permute.xlu0 %3237
      %3239 = vrot.lane.b32.xlu0 %v3055, 7
      %v3240 = vpop.permute.xlu0 %3239
      %3241 = vrot.lane.b32.xlu0 %v2527, 7
      %v3242 = vpop.permute.xlu0 %3241
      %3243 = vrot.lane.b32.xlu0 %v2528, 7
      %v3244 = vpop.permute.xlu0 %3243
      %3245 = vrot.lane.b32.xlu0 %v2518, 7
      %v3246 = vpop.permute.xlu0 %3245
      %3247 = vrot.lane.b32.xlu0 %v3058, 7
      %v3248 = vpop.permute.xlu0 %3247
      %3249 = vrot.lane.b32.xlu0 %v3061, 7
      %v3250 = vpop.permute.xlu0 %3249
      %3251 = vrot.lane.b32.xlu0 %v3064, 7
      %v3252 = vpop.permute.xlu0 %3251
      %3253 = vrot.lane.b32.xlu0 %v3065, 7
      %v3254 = vpop.permute.xlu0 %3253
      %3255 = vrot.lane.b32.xlu0 %v3066, 7
      %v3256 = vpop.permute.xlu0 %3255
      %3257 = vrot.lane.b32.xlu0 %v3067, 7
      %v3258 = vpop.permute.xlu0 %3257
      %3259 = vrot.lane.b32.xlu0 %v2603, 7
      %v3260 = vpop.permute.xlu0 %3259
      %3261 = vrot.lane.b32.xlu0 %v2604, 7
      %v3262 = vpop.permute.xlu0 %3261
      %3263 = vrot.lane.b32.xlu0 %v2594, 7
      %v3264 = vpop.permute.xlu0 %3263
      %3265 = vrot.lane.b32.xlu0 %v3070, 7
      %v3266 = vpop.permute.xlu0 %3265
      %3267 = vrot.lane.b32.xlu0 %v3073, 7
      %v3268 = vpop.permute.xlu0 %3267
      %3269 = vrot.lane.b32.xlu0 %v3076, 7
      %v3270 = vpop.permute.xlu0 %3269
      %3271 = vrot.lane.b32.xlu0 %v3077, 7
      %v3272 = vpop.permute.xlu0 %3271
      %3273 = vrot.lane.b32.xlu0 %v3078, 7
      %v3274 = vpop.permute.xlu0 %3273
      %3275 = vrot.lane.b32.xlu0 %v3079, 7
      %v3276 = vpop.permute.xlu0 %3275
      %3277 = vrot.lane.b32.xlu0 %v2679, 7
      %v3278 = vpop.permute.xlu0 %3277
      %3279 = vrot.lane.b32.xlu0 %v2680, 7
      %v3280 = vpop.permute.xlu0 %3279
      %3281 = vrot.lane.b32.xlu0 %v2670, 7
      %v3282 = vpop.permute.xlu0 %3281
      %3283 = vrot.lane.b32.xlu0 %v3082, 7
      %v3284 = vpop.permute.xlu0 %3283
      %3285 = vrot.lane.b32.xlu0 %v3085, 7
      %v3286 = vpop.permute.xlu0 %3285
      %3287 = vrot.lane.b32.xlu0 %v3088, 7
      %v3288 = vpop.permute.xlu0 %3287
      %3289 = vrot.lane.b32.xlu0 %v3089, 7
      %v3290 = vpop.permute.xlu0 %3289
      %3291 = vrot.lane.b32.xlu0 %v3090, 7
      %v3292 = vpop.permute.xlu0 %3291
      %3293 = vrot.lane.b32.xlu0 %v3091, 7
      %v3294 = vpop.permute.xlu0 %3293
      %3295 = vrot.lane.b32.xlu0 %v2765, 7
      %v3296 = vpop.permute.xlu0 %3295
      %3297 = vrot.lane.b32.xlu0 %v2773, 7
      %v3298 = vpop.permute.xlu0 %3297
      %3299 = vrot.lane.b32.xlu0 %v2767, 7
      %v3300 = vpop.permute.xlu0 %3299
      %3301 = vrot.lane.b32.xlu0 %v3094, 7
      %v3302 = vpop.permute.xlu0 %3301
      %3303 = vrot.lane.b32.xlu0 %v3097, 7
      %v3304 = vpop.permute.xlu0 %3303
      %3305 = vrot.lane.b32.xlu0 %v3100, 7
      %v3306 = vpop.permute.xlu0 %3305
      %3307 = vrot.lane.b32.xlu0 %v2802, 7
      %v3308 = vpop.permute.xlu0 %3307
      %3309 = vrot.lane.b32.xlu0 %v2815, 7
      %v3310 = vpop.permute.xlu0 %3309
      %3311 = vrot.lane.b32.xlu0 %v2816, 7
      %v3312 = vpop.permute.xlu0 %3311
      %3313 = vrot.lane.b32.xlu0 %v3101, 7
      %v3314 = vpop.permute.xlu0 %3313
      %3315 = vrot.lane.b32.xlu0 %v3102, 7
      %v3316 = vpop.permute.xlu0 %3315
      %3317 = vrot.lane.b32.xlu0 %v3103, 7
      %v3318 = vpop.permute.xlu0 %3317
      %3319 = vrot.lane.b32.xlu0 %v3106, 7
      %v3320 = vpop.permute.xlu0 %3319
      %3321 = vrot.lane.b32.xlu0 %v3109, 7
      %v3322 = vpop.permute.xlu0 %3321
      %3323 = vrot.lane.b32.xlu0 %v3112, 7
      %v3324 = vpop.permute.xlu0 %3323
      %3325 = vrot.lane.b32.xlu0 %v2884, 7
      %v3326 = vpop.permute.xlu0 %3325
      %3327 = vrot.lane.b32.xlu0 %v2897, 7
      %v3328 = vpop.permute.xlu0 %3327
      %3329 = vrot.lane.b32.xlu0 %v2898, 7
      %v3330 = vpop.permute.xlu0 %3329
      %3331 = vrot.lane.b32.xlu0 %v3113, 7
      %v3332 = vpop.permute.xlu0 %3331
      %3333 = vrot.lane.b32.xlu0 %v3114, 7
      %v3334 = vpop.permute.xlu0 %3333
      %3335 = vrot.lane.b32.xlu0 %v3115, 7
      %v3336 = vpop.permute.xlu0 %3335
      %3337 = vrot.lane.b32.xlu0 %v3118, 7
      %v3338 = vpop.permute.xlu0 %3337
      %3339 = vrot.lane.b32.xlu0 %v3121, 7
      %v3340 = vpop.permute.xlu0 %3339
      %3341 = vrot.lane.b32.xlu0 %v3124, 7
      %v3342 = vpop.permute.xlu0 %3341
      %3343 = vrot.lane.b32.xlu0 %v2960, 7
      %v3344 = vpop.permute.xlu0 %3343
      %3345 = vrot.lane.b32.xlu0 %v2973, 7
      %v3346 = vpop.permute.xlu0 %3345
      %3347 = vrot.lane.b32.xlu0 %v2974, 7
      %v3348 = vpop.permute.xlu0 %3347
      %3349 = vrot.lane.b32.xlu0 %v3125, 7
      %v3350 = vpop.permute.xlu0 %3349
      %3351 = vrot.lane.b32.xlu0 %v3126, 7
      %v3352 = vpop.permute.xlu0 %3351
      %3353 = vrot.lane.b32.xlu0 %v3127, 7
      %v3354 = vpop.permute.xlu0 %3353
      %3355 = vrot.lane.b32.xlu0 %v3130, 7
      %v3356 = vpop.permute.xlu0 %3355
      %3357 = vrot.lane.b32.xlu0 %v3133, 7
      %v3358 = vpop.permute.xlu0 %3357
      %3359 = vrot.lane.b32.xlu0 %v3136, 7
      %v3360 = vpop.permute.xlu0 %3359
      %3361 = vrot.lane.b32.xlu0 %v3036, 7
      %v3362 = vpop.permute.xlu0 %3361
      %3363 = vrot.lane.b32.xlu0 %v3049, 7
      %v3364 = vpop.permute.xlu0 %3363
      %3365 = vrot.lane.b32.xlu0 %v3050, 7
      %v3366 = vpop.permute.xlu0 %3365
      %3367 = vrot.lane.b32.xlu0 %v3042, 7
      %v3368 = vpop.permute.xlu0 %3367
      %3369 = vrot.lane.b32.xlu0 %v3051, 7
      %v3370 = vpop.permute.xlu0 %3369
      %3371 = vrot.lane.b32.xlu0 %v3052, 7
      %v3372 = vpop.permute.xlu0 %3371
      %v3373 = vsel %vm2133, %v3230, %v3232
      %v3374 = vsel %vm2133, %v3232, %v3234
      %v3375 = vsel %vm2133, %v3236, %v3238
      %v3376 = vsel %vm2133, %v3238, %v3240
      %v3377 = vsel %vm2133, %v3242, %v3244
      %v3378 = vsel %vm2133, %v3244, %v3246
      %v3379 = vsel %vm2133, %v3248, %v3250
      %v3380 = vsel %vm2133, %v3250, %v3252
      %v3381 = vsel %vm2133, %v3254, %v3256
      %v3382 = vsel %vm2133, %v3256, %v3258
      %v3383 = vsel %vm2133, %v3260, %v3262
      %v3384 = vsel %vm2133, %v3262, %v3264
      %v3385 = vsel %vm2133, %v3266, %v3268
      %v3386 = vsel %vm2133, %v3268, %v3270
      %v3387 = vsel %vm2133, %v3272, %v3274
      %v3388 = vsel %vm2133, %v3274, %v3276
      %v3389 = vsel %vm2133, %v3278, %v3280
      %v3390 = vsel %vm2133, %v3280, %v3282
      %v3391 = vsel %vm2133, %v3284, %v3286
      %v3392 = vsel %vm2133, %v3286, %v3288
      %v3393 = vsel %vm2133, %v3290, %v3292
      %v3394 = vsel %vm2133, %v3292, %v3294
      %v3395 = vsel %vm2133, %v3296, %v3298
      %v3396 = vsel %vm2133, %v3298, %v3300
      %v3397 = vsel %vm2133, %v3302, %v3304
      %v3398 = vsel %vm2133, %v3304, %v3306
      %v3399 = vsel %vm2133, %v3308, %v3310
      %v3400 = vsel %vm2133, %v3310, %v3312
      %v3401 = vsel %vm2133, %v3314, %v3316
      %v3402 = vsel %vm2133, %v3316, %v3318
      %v3403 = vsel %vm2133, %v3320, %v3322
      %v3404 = vsel %vm2133, %v3322, %v3324
      %v3405 = vsel %vm2133, %v3326, %v3328
      %v3406 = vsel %vm2133, %v3328, %v3330
      %v3407 = vsel %vm2133, %v3332, %v3334
      %v3408 = vsel %vm2133, %v3334, %v3336
      %v3409 = vsel %vm2133, %v3338, %v3340
      %v3410 = vsel %vm2133, %v3340, %v3342
      %v3411 = vsel %vm2133, %v3344, %v3346
      %v3412 = vsel %vm2133, %v3346, %v3348
      %v3413 = vsel %vm2133, %v3350, %v3352
      %v3414 = vsel %vm2133, %v3352, %v3354
      %v3415 = vsel %vm2133, %v3356, %v3358
      %v3416 = vsel %vm2133, %v3358, %v3360
      %v3417 = vsel %vm2133, %v3362, %v3364
      %v3418 = vsel %vm2133, %v3364, %v3366
      %v3419 = vsel %vm2133, %v3368, %v3370
      %v3420 = vsel %vm2133, %v3370, %v3372
      %v3468 = vsel %vm2228, %v3179, 0
      %v3471 = vsel %vm2228, %v3182, 0
      %v3474 = vand.u32 %v3419, %v2236
      %v3477 = vand.u32 %v3420, %v2236
      %3479 = vmatprep.subr.bf16.mxu0 %v3374
      %3480 = vmatpush1.bf16.msra.mxu0 %v3373
      %3481 = vmatprep.subr.bf16.mxu0 %v3376
      %3482 = vmatpush1.bf16.msra.mxu0 %v3375
      %3483 = vmatprep.subr.bf16.mxu0 %v3378
      %3484 = vmatpush1.bf16.msra.mxu0 %v3377
      %3485 = vmatprep.subr.bf16.mxu0 %v3380
      %3486 = vmatpush1.bf16.msra.mxu0 %v3379
      %3487 = vmatprep.subr.bf16.mxu0 %v3382
      %3488 = vmatpush1.bf16.msra.mxu0 %v3381
      %3489 = vmatprep.subr.bf16.mxu0 %v3384
      %3490 = vmatpush1.bf16.msra.mxu0 %v3383
      %3491 = vmatprep.subr.bf16.mxu0 %v3386
      %3492 = vmatpush1.bf16.msra.mxu0 %v3385
      %3493 = vmatprep.subr.bf16.mxu0 %v3388
      %3494 = vmatpush1.bf16.msra.mxu0 %v3387
      %3495 = vmatprep.subr.bf16.mxu0 %v3390
      %3496 = vmatpush1.bf16.msra.mxu0 %v3389
      %3497 = vmatprep.subr.bf16.mxu0 %v3392
      %3498 = vmatpush1.bf16.msra.mxu0 %v3391
      %3499 = vmatprep.subr.bf16.mxu0 %v3394
      %3500 = vmatpush1.bf16.msra.mxu0 %v3393
      %3501 = vmatprep.subr.bf16.mxu0 %v3396
      %3502 = vmatpush1.bf16.msra.mxu0 %v3395
      %3503 = vmatprep.subr.bf16.mxu0 %v3398
      %3504 = vmatpush1.bf16.msra.mxu0 %v3397
      %3505 = vmatprep.subr.bf16.mxu0 %v3400
      %3506 = vmatpush1.bf16.msra.mxu0 %v3399
      %3507 = vmatprep.subr.bf16.mxu0 %v3402
      %3508 = vmatpush1.bf16.msra.mxu0 %v3401
      %3509 = vmatprep.subr.bf16.mxu0 %v3404
      %3510 = vmatpush1.bf16.msra.mxu0 %v3403
      %3511 = vmatprep.mubr.bf16.mxu0 %v3178
      %3512 = vmatmul.mubr.bf16.gmra.mrb[0].mxu0 %v3177
      %v3513 = vpop.f32.mrb[0].mxu0
      %v3514 = vadd.f32 %v3140, %v3513
      %v3515 = vpop.f32.mrb[0].mxu0
      %v3516 = vadd.f32 %v3140, %v3515
      %v3517 = vpop.f32.mrb[0].mxu0
      %v3518 = vadd.f32 %v3145, %v3517
      %v3519 = vpop.f32.mrb[0].mxu0
      %v3520 = vadd.f32 %v3145, %v3519
      %3521 = vmatprep.mubr.bf16.mxu0 %v3181
      %3522 = vmatmul.mubr.bf16.gmra.mrb[0].mxu0 %v3180
      %v3523 = vpop.f32.mrb[0].mxu0
      %v3524 = vadd.f32 %v3150, %v3523
      %v3525 = vpop.f32.mrb[0].mxu0
      %v3526 = vadd.f32 %v3150, %v3525
      %v3527 = vpop.f32.mrb[0].mxu0
      %v3528 = vadd.f32 %v3155, %v3527
      %v3529 = vpop.f32.mrb[0].mxu0
      %v3530 = vadd.f32 %v3155, %v3529
      %3531 = vdwg.mxu0
      %3532 = vmatprep.subr.bf16.mxu0 %v3406
      %3533 = vmatpush1.bf16.msra.mxu0 %v3405
      %3534 = vmatprep.subr.bf16.mxu0 %v3408
      %3535 = vmatpush1.bf16.msra.mxu0 %v3407
      %3536 = vmatprep.subr.bf16.mxu0 %v3410
      %3537 = vmatpush1.bf16.msra.mxu0 %v3409
      %3538 = vmatprep.subr.bf16.mxu0 %v3412
      %3539 = vmatpush1.bf16.msra.mxu0 %v3411
      %3540 = vmatprep.subr.bf16.mxu0 %v3414
      %3541 = vmatpush1.bf16.msra.mxu0 %v3413
      %3542 = vmatprep.subr.bf16.mxu0 %v3416
      %3543 = vmatpush1.bf16.msra.mxu0 %v3415
      %3544 = vmatprep.subr.bf16.mxu0 %v3418
      %3545 = vmatpush1.bf16.msra.mxu0 %v3417
      %3546 = vmatprep.subr.bf16.mxu0 %v3477
      %3547 = vmatpush1.bf16.msra.mxu0 %v3474
      %3548 = vmatprep.subr.bf16.mxu0 0
      %3549 = vmatpush1.bf16.msra.mxu0 0
      %3550 = vmatprep.subr.bf16.mxu0 0
      %3551 = vmatpush1.bf16.msra.mxu0 0
      %3552 = vmatprep.subr.bf16.mxu0 0
      %3553 = vmatpush1.bf16.msra.mxu0 0
      %3554 = vmatprep.subr.bf16.mxu0 0
      %3555 = vmatpush1.bf16.msra.mxu0 0
      %3556 = vmatprep.subr.bf16.mxu0 0
      %3557 = vmatpush1.bf16.msra.mxu0 0
      %3558 = vmatprep.subr.bf16.mxu0 0
      %3559 = vmatpush1.bf16.msra.mxu0 0
      %3560 = vmatprep.subr.bf16.mxu0 0
      %3561 = vmatpush1.bf16.msra.mxu0 0
      %3562 = vmatprep.subr.bf16.mxu0 0
      %3563 = vmatpush1.bf16.msra.mxu0 0
      %3564 = vmatprep.mubr.bf16.mxu0 0
      %3565 = vmatmul.mubr.bf16.gmra.mrb[0].mxu0 %v3468
      %v3566 = vpop.f32.mrb[0].mxu0
      %v3567 = vadd.f32 %v3514, %v3566
      %v3568 = vpop.f32.mrb[0].mxu0
      %v3569 = vadd.f32 %v3516, %v3568
      %v3570 = vpop.f32.mrb[0].mxu0
      %v3571 = vadd.f32 %v3518, %v3570
      %v3572 = vpop.f32.mrb[0].mxu0
      %v3573 = vadd.f32 %v3520, %v3572
      %3574 = vmatprep.mubr.bf16.mxu0 0
      %3575 = vmatmul.mubr.bf16.gmra.mrb[0].mxu0 %v3471
      %v3576 = vpop.f32.mrb[0].mxu0
      %v3577 = vadd.f32 %v3524, %v3576
      %v3578 = vpop.f32.mrb[0].mxu0
      %v3579 = vadd.f32 %v3526, %v3578
      %v3580 = vpop.f32.mrb[0].mxu0
      %v3581 = vadd.f32 %v3528, %v3580
      %v3582 = vpop.f32.mrb[0].mxu0
      %v3583 = vadd.f32 %v3530, %v3582
      %3584 = vdwg.mxu0
      %vm3585 = vcmp.gt.f32.partialorder %v3567, 0.0
      %vm3586 = vcmp.gt.f32.partialorder %v3569, 0.0
      %vm3587 = vcmp.gt.f32.partialorder %v3571, 0.0
      %vm3588 = vcmp.gt.f32.partialorder %v3573, 0.0
      %vm3589 = vcmp.gt.f32.partialorder %v3577, 0.0
      %vm3590 = vcmp.gt.f32.partialorder %v3579, 0.0
      %vm3591 = vcmp.gt.f32.partialorder %v3581, 0.0
      %vm3592 = vcmp.gt.f32.partialorder %v3583, 0.0
      %v3593 = vmul.f32 %v3567, 0.01
      %v3594 = vmul.f32 %v3569, 0.01
      %v3595 = vmul.f32 %v3571, 0.01
      %v3596 = vmul.f32 %v3573, 0.01
      %v3597 = vmul.f32 %v3577, 0.01
      %v3598 = vmul.f32 %v3579, 0.01
      %v3599 = vmul.f32 %v3581, 0.01
      %v3600 = vmul.f32 %v3583, 0.01
      %v3601 = vsel %vm3585, %v3567, %v3593
      %v3602 = vsel %vm3586, %v3569, %v3594
      %v3603 = vsel %vm3587, %v3571, %v3595
      %v3604 = vsel %vm3588, %v3573, %v3596
      %v3605 = vsel %vm3589, %v3577, %v3597
      %v3606 = vsel %vm3590, %v3579, %v3598
      %v3607 = vsel %vm3591, %v3581, %v3599
      %v3608 = vsel %vm3592, %v3583, %v3600
      %v3609 = vsel %vm1131, %v3601, 0.0
      %v3610 = vsel %vm1132, %v3602, 0.0
      %v3611 = vsel %vm1131, %v3603, 0.0
      %v3612 = vsel %vm1132, %v3604, 0.0
      %v3613 = vsel %vm1131, %v3605, 0.0
      %v3614 = vsel %vm1132, %v3606, 0.0
      %v3615 = vsel %vm1131, %v3607, 0.0
      %v3616 = vsel %vm1132, %v3608, 0.0
      %v3617 = vpack.c.bf16 %v3611, %v3609
      %v3618 = vpack.c.bf16 %v3612, %v3610
      %v3619 = vpack.c.bf16 %v3615, %v3613
      %v3620 = vpack.c.bf16 %v3616, %v3614
      %v3625 = vunpack.c.l.b16 %v3617
      %v3626 = vunpack.c.l.b16 %v3618
      %v3627 = vunpack.c.h.b16 %v3617
      %v3628 = vunpack.c.h.b16 %v3618
      %v3629 = vunpack.c.l.b16 %v3619
      %v3630 = vunpack.c.l.b16 %v3620
      %v3631 = vunpack.c.h.b16 %v3619
      %v3632 = vunpack.c.h.b16 %v3620
      %v3633 = vpack.c.b16 %v3626, %v3625
      %v3634 = vpack.c.b16 %v3628, %v3627
      %v3635 = vpack.c.b16 %v3630, %v3629
      %v3636 = vpack.c.b16 %v3632, %v3631
      %3641 = vst [vmem:[#allocation2 + $0x4] sm:$0xff] %v3633
      %3642 = vst [vmem:[#allocation2 + $0x14] sm:$0xff] %v3634
      %3643 = vst [vmem:[#allocation2 + $0x24] sm:$0xff] %v3635
      %v3644 = vld [vmem:[#allocation2 + $0x34] sm:$0x11]
      %v3645 = vsel %vm408, %v3636, %v3644
      %3646 = vst [vmem:[#allocation2 + $0x34] sm:$0x11] %v3645
      %v3647 = vld [vmem:[#allocation2] sm:$0xff]
      %v3648 = vld [vmem:[#allocation2 + $0x8] sm:$0xf]
      %v3649 = vld [vmem:[#allocation2 + $0x10] sm:$0xff]
      %v3650 = vld [vmem:[#allocation2 + $0x18] sm:$0xf]
      %v3651 = vld [vmem:[#allocation2 + $0x20] sm:$0xff]
      %v3652 = vld [vmem:[#allocation2 + $0x28] sm:$0xf]
      %v3653 = vld [vmem:[#allocation2 + $0x30] sm:$0x11]
      %v3654 = vld [vmem:[#allocation2 + $0x38] sm:$0x1]
      %v3655 = vld [vmem:[#allocation2 + $0x4] sm:$0xff]
      %v3656 = vld [vmem:[#allocation2 + $0x14] sm:$0xff]
      %v3657 = vld [vmem:[#allocation2 + $0x24] sm:$0xff]
      %v3658 = vld [vmem:[#allocation2 + $0x34] sm:$0x11]
      %v3659 = vld [vmem:[#allocation2 + $0xc] sm:$0xf]
      %v3660 = vld [vmem:[#allocation2 + $0x1c] sm:$0xf]
      %v3661 = vld [vmem:[#allocation2 + $0x2c] sm:$0xf]
      %v3662 = vld [vmem:[#allocation2 + $0x3c] sm:$0x1]
      %v3671 = vunpack.c.l.b16 %v3647
      %v3672 = vunpack.c.h.b16 %v3647
      %v3673 = vunpack.c.l.b16 %v3648
      %v3674 = vunpack.c.l.b16 %v3649
      %v3675 = vunpack.c.h.b16 %v3649
      %v3676 = vunpack.c.l.b16 %v3650
      %v3677 = vunpack.c.l.b16 %v3651
      %v3678 = vunpack.c.h.b16 %v3651
      %v3679 = vunpack.c.l.b16 %v3652
      %v3680 = vunpack.c.l.b16 %v3653
      %v3681 = vunpack.c.h.b16 %v3653
      %v3682 = vunpack.c.l.b16 %v3654
      %v3683 = vpack.c.b16 %v3674, %v3671
      %v3684 = vpack.c.b16 %v3675, %v3672
      %v3685 = vpack.c.b16 %v3676, %v3673
      %v3686 = vpack.c.b16 %v3680, %v3677
      %v3687 = vpack.c.b16 %v3681, %v3678
      %v3688 = vpack.c.b16 %v3682, %v3679
      %v3693 = vshrl.u32 %v3683, 16
      %v3695 = vrot.slane %v3693, 3
      %v3696 = vshll.u32 %v3683, 16
      %v3698 = vrot.slane %v3696, 4
      %v3699 = vor.u32 %v3695, %v3698
      %v3701 = vshrl.u32 %v3684, 16
      %v3703 = vrot.slane %v3701, 3
      %v3704 = vshll.u32 %v3684, 16
      %v3706 = vrot.slane %v3704, 4
      %v3707 = vor.u32 %v3703, %v3706
      %v3709 = vshrl.u32 %v3685, 16
      %v3711 = vrot.slane %v3709, 3
      %v3712 = vshll.u32 %v3685, 16
      %v3714 = vrot.slane %v3712, 4
      %v3715 = vor.u32 %v3711, %v3714
      %v3717 = vshrl.u32 %v3686, 16
      %v3719 = vrot.slane %v3717, 3
      %v3720 = vshll.u32 %v3686, 16
      %v3722 = vrot.slane %v3720, 4
      %v3723 = vor.u32 %v3719, %v3722
      %v3724 = vsel %vm406, %v3699, %v3723
      %v3726 = vshrl.u32 %v3687, 16
      %v3728 = vrot.slane %v3726, 3
      %v3729 = vshll.u32 %v3687, 16
      %v3731 = vrot.slane %v3729, 4
      %v3732 = vor.u32 %v3728, %v3731
      %v3733 = vsel %vm406, %v3707, %v3732
      %v3735 = vshrl.u32 %v3688, 16
      %v3737 = vrot.slane %v3735, 3
      %v3738 = vshll.u32 %v3688, 16
      %v3740 = vrot.slane %v3738, 4
      %v3741 = vor.u32 %v3737, %v3740
      %v3742 = vsel %vm406, %v3715, %v3741
      %3743 = vrot.lane.b32.xlu0 %v3699, 127
      %v3744 = vpop.permute.xlu0 %3743
      %3745 = vrot.lane.b32.xlu0 %v3707, 127
      %v3746 = vpop.permute.xlu0 %3745
      %3747 = vrot.lane.b32.xlu0 %v3715, 127
      %v3748 = vpop.permute.xlu0 %3747
      %3749 = vrot.lane.b32.xlu0 %v3724, 127
      %v3750 = vpop.permute.xlu0 %3749
      %3751 = vrot.lane.b32.xlu0 %v3733, 127
      %v3752 = vpop.permute.xlu0 %3751
      %3753 = vrot.lane.b32.xlu0 %v3742, 127
      %v3754 = vpop.permute.xlu0 %3753
      %3755 = vrot.lane.b32.xlu0 %v3723, 127
      %v3756 = vpop.permute.xlu0 %3755
      %3757 = vrot.lane.b32.xlu0 %v3732, 127
      %v3758 = vpop.permute.xlu0 %3757
      %3759 = vrot.lane.b32.xlu0 %v3741, 127
      %v3760 = vpop.permute.xlu0 %3759
      %v3761 = vsel %vm479, %v3744, %v3746
      %v3762 = vsel %vm479, %v3746, %v3748
      %v3763 = vsel %vm479, %v3750, %v3752
      %v3764 = vsel %vm479, %v3752, %v3754
      %v3765 = vsel %vm479, %v3756, %v3758
      %v3766 = vsel %vm479, %v3758, %v3760
      %v3774 = vunpack.c.l.b16 %v3655
      %v3775 = vunpack.c.h.b16 %v3655
      %v3776 = vunpack.c.l.b16 %v3656
      %v3777 = vunpack.c.h.b16 %v3656
      %v3778 = vunpack.c.l.b16 %v3657
      %v3779 = vunpack.c.h.b16 %v3657
      %v3780 = vunpack.c.l.b16 %v3658
      %v3781 = vunpack.c.h.b16 %v3658
      %v3782 = vpack.c.b16 %v3776, %v3774
      %v3783 = vpack.c.b16 %v3777, %v3775
      %v3784 = vpack.c.b16 %v3780, %v3778
      %v3785 = vpack.c.b16 %v3781, %v3779
      %v3786 = vrot.slane %v3782, 7
      %v3787 = vrot.slane %v3783, 7
      %v3788 = vrot.slane %v3784, 7
      %v3789 = vsel %vm342, %v3786, %v3788
      %v3790 = vrot.slane %v3785, 7
      %v3791 = vsel %vm342, %v3787, %v3790
      %3792 = vrot.lane.b32.xlu0 %v3786, 126
      %v3793 = vpop.permute.xlu0 %3792
      %3794 = vrot.lane.b32.xlu0 %v3787, 126
      %v3795 = vpop.permute.xlu0 %3794
      %3796 = vrot.lane.b32.xlu0 %v3789, 126
      %v3797 = vpop.permute.xlu0 %3796
      %3798 = vrot.lane.b32.xlu0 %v3791, 126
      %v3799 = vpop.permute.xlu0 %3798
      %v3800 = vsel %vm494, %v3793, %v3795
      %v3801 = vsel %vm494, %v3797, %v3799
      %v3809 = vunpack.c.l.b16 %v3659
      %v3810 = vunpack.c.l.b16 %v3660
      %v3811 = vunpack.c.l.b16 %v3661
      %v3812 = vunpack.c.l.b16 %v3662
      %v3813 = vpack.c.b16 %v3810, %v3809
      %v3814 = vpack.c.b16 %v3812, %v3811
      %v3816 = vshrl.u32 %v3782, 16
      %v3818 = vrot.slane %v3816, 2
      %v3819 = vshll.u32 %v3782, 16
      %v3821 = vrot.slane %v3819, 3
      %v3822 = vor.u32 %v3818, %v3821
      %v3824 = vshrl.u32 %v3783, 16
      %v3826 = vrot.slane %v3824, 2
      %v3827 = vshll.u32 %v3783, 16
      %v3829 = vrot.slane %v3827, 3
      %v3830 = vor.u32 %v3826, %v3829
      %v3832 = vshrl.u32 %v3813, 16
      %v3834 = vrot.slane %v3832, 2
      %v3835 = vshll.u32 %v3813, 16
      %v3837 = vrot.slane %v3835, 3
      %v3838 = vor.u32 %v3834, %v3837
      %v3840 = vshrl.u32 %v3784, 16
      %v3842 = vrot.slane %v3840, 2
      %v3843 = vshll.u32 %v3784, 16
      %v3845 = vrot.slane %v3843, 3
      %v3846 = vor.u32 %v3842, %v3845
      %v3847 = vsel %vm776, %v3822, %v3846
      %v3849 = vshrl.u32 %v3785, 16
      %v3851 = vrot.slane %v3849, 2
      %v3852 = vshll.u32 %v3785, 16
      %v3854 = vrot.slane %v3852, 3
      %v3855 = vor.u32 %v3851, %v3854
      %v3856 = vsel %vm776, %v3830, %v3855
      %v3858 = vshrl.u32 %v3814, 16
      %v3860 = vrot.slane %v3858, 2
      %v3861 = vshll.u32 %v3814, 16
      %v3863 = vrot.slane %v3861, 3
      %v3864 = vor.u32 %v3860, %v3863
      %v3865 = vsel %vm776, %v3838, %v3864
      %3866 = vrot.lane.b32.xlu0 %v3822, 125
      %v3867 = vpop.permute.xlu0 %3866
      %3868 = vrot.lane.b32.xlu0 %v3830, 125
      %v3869 = vpop.permute.xlu0 %3868
      %3870 = vrot.lane.b32.xlu0 %v3838, 125
      %v3871 = vpop.permute.xlu0 %3870
      %3872 = vrot.lane.b32.xlu0 %v3847, 125
      %v3873 = vpop.permute.xlu0 %3872
      %3874 = vrot.lane.b32.xlu0 %v3856, 125
      %v3875 = vpop.permute.xlu0 %3874
      %3876 = vrot.lane.b32.xlu0 %v3865, 125
      %v3877 = vpop.permute.xlu0 %3876
      %3878 = vrot.lane.b32.xlu0 %v3846, 125
      %v3879 = vpop.permute.xlu0 %3878
      %3880 = vrot.lane.b32.xlu0 %v3855, 125
      %v3881 = vpop.permute.xlu0 %3880
      %3882 = vrot.lane.b32.xlu0 %v3864, 125
      %v3883 = vpop.permute.xlu0 %3882
      %v3884 = vsel %vm506, %v3867, %v3869
      %v3885 = vsel %vm506, %v3869, %v3871
      %v3886 = vsel %vm506, %v3873, %v3875
      %v3887 = vsel %vm506, %v3875, %v3877
      %v3888 = vsel %vm506, %v3879, %v3881
      %v3889 = vsel %vm506, %v3881, %v3883
      %v3893 = vrot.slane %v3782, 6
      %v3894 = vrot.slane %v3783, 6
      %v3895 = vrot.slane %v3813, 6
      %v3896 = vrot.slane %v3784, 6
      %v3897 = vsel %vm700, %v3893, %v3896
      %v3898 = vrot.slane %v3785, 6
      %v3899 = vsel %vm700, %v3894, %v3898
      %v3900 = vrot.slane %v3814, 6
      %v3901 = vsel %vm700, %v3895, %v3900
      %3902 = vrot.lane.b32.xlu0 %v3893, 124
      %v3903 = vpop.permute.xlu0 %3902
      %3904 = vrot.lane.b32.xlu0 %v3894, 124
      %v3905 = vpop.permute.xlu0 %3904
      %3906 = vrot.lane.b32.xlu0 %v3895, 124
      %v3907 = vpop.permute.xlu0 %3906
      %3908 = vrot.lane.b32.xlu0 %v3897, 124
      %v3909 = vpop.permute.xlu0 %3908
      %3910 = vrot.lane.b32.xlu0 %v3899, 124
      %v3911 = vpop.permute.xlu0 %3910
      %3912 = vrot.lane.b32.xlu0 %v3901, 124
      %v3913 = vpop.permute.xlu0 %3912
      %v3914 = vsel %vm521, %v3903, %v3905
      %v3915 = vsel %vm521, %v3905, %v3907
      %v3916 = vsel %vm521, %v3909, %v3911
      %v3917 = vsel %vm521, %v3911, %v3913
      %v3918 = vsel %vm758, %v3686, %v3761
      %v3919 = vsel %vm758, %v3687, %v3762
      %v3920 = vsel %vm758, %v3688, %v3748
      %v3923 = vsel %vm687, %v3765, %v3793
      %v3926 = vsel %vm687, %v3766, %v3800
      %v3929 = vsel %vm687, %v3760, %v3795
      %v3930 = vsel %vm777, %v3797, %v3867
      %v3931 = vsel %vm777, %v3801, %v3884
      %v3932 = vsel %vm777, %v3799, %v3885
      %v3935 = vsel %vm706, %v3879, %v3903
      %v3938 = vsel %vm706, %v3888, %v3914
      %v3941 = vsel %vm706, %v3889, %v3915
      %3943 = vset.pattern.permute.xlu0 0
      %3944 = vperm.xlu0 %3943, %v448
      %v3945 = vpop.permute.xlu0 %3944
      %v3947 = vlaneseq
      %v3948 = vshrl.u32 %v3947, 7
      %v3949 = vsub.s32 0, %v3948
      %v3950 = vrot.slane %v3945, %v3949
      %3963 = vrot.lane.b32.xlu0 %v3683, 2
      %v3964 = vpop.permute.xlu0 %3963
      %3965 = vrot.lane.b32.xlu0 %v3684, 2
      %v3966 = vpop.permute.xlu0 %3965
      %3967 = vrot.lane.b32.xlu0 %v3685, 2
      %v3968 = vpop.permute.xlu0 %3967
      %3969 = vrot.lane.b32.xlu0 %v3918, 2
      %v3970 = vpop.permute.xlu0 %3969
      %3971 = vrot.lane.b32.xlu0 %v3919, 2
      %v3972 = vpop.permute.xlu0 %3971
      %3973 = vrot.lane.b32.xlu0 %v3920, 2
      %v3974 = vpop.permute.xlu0 %3973
      %3975 = vrot.lane.b32.xlu0 %v3763, 2
      %v3976 = vpop.permute.xlu0 %3975
      %3977 = vrot.lane.b32.xlu0 %v3764, 2
      %v3978 = vpop.permute.xlu0 %3977
      %3979 = vrot.lane.b32.xlu0 %v3754, 2
      %v3980 = vpop.permute.xlu0 %3979
      %3981 = vrot.lane.b32.xlu0 %v3923, 2
      %v3982 = vpop.permute.xlu0 %3981
      %3983 = vrot.lane.b32.xlu0 %v3926, 2
      %v3984 = vpop.permute.xlu0 %3983
      %3985 = vrot.lane.b32.xlu0 %v3929, 2
      %v3986 = vpop.permute.xlu0 %3985
      %3987 = vrot.lane.b32.xlu0 %v3930, 2
      %v3988 = vpop.permute.xlu0 %3987
      %3989 = vrot.lane.b32.xlu0 %v3931, 2
      %v3990 = vpop.permute.xlu0 %3989
      %3991 = vrot.lane.b32.xlu0 %v3932, 2
      %v3992 = vpop.permute.xlu0 %3991
      %3993 = vrot.lane.b32.xlu0 %v3873, 2
      %v3994 = vpop.permute.xlu0 %3993
      %3995 = vrot.lane.b32.xlu0 %v3886, 2
      %v3996 = vpop.permute.xlu0 %3995
      %3997 = vrot.lane.b32.xlu0 %v3887, 2
      %v3998 = vpop.permute.xlu0 %3997
      %3999 = vrot.lane.b32.xlu0 %v3935, 2
      %v4000 = vpop.permute.xlu0 %3999
      %4001 = vrot.lane.b32.xlu0 %v3938, 2
      %v4002 = vpop.permute.xlu0 %4001
      %4003 = vrot.lane.b32.xlu0 %v3941, 2
      %v4004 = vpop.permute.xlu0 %4003
      %4005 = vrot.lane.b32.xlu0 %v3909, 2
      %v4006 = vpop.permute.xlu0 %4005
      %4007 = vrot.lane.b32.xlu0 %v3916, 2
      %v4008 = vpop.permute.xlu0 %4007
      %4009 = vrot.lane.b32.xlu0 %v3917, 2
      %v4010 = vpop.permute.xlu0 %4009
      %vm4011 = vcmask 15360
      %v4012 = vsel %vm4011, %v3964, %v3966
      %v4013 = vsel %vm4011, %v3966, %v3968
      %v4014 = vsel %vm4011, %v3970, %v3972
      %v4015 = vsel %vm4011, %v3972, %v3974
      %v4016 = vsel %vm4011, %v3976, %v3978
      %v4017 = vsel %vm4011, %v3978, %v3980
      %v4018 = vsel %vm4011, %v3982, %v3984
      %v4019 = vsel %vm4011, %v3984, %v3986
      %v4020 = vsel %vm4011, %v3988, %v3990
      %v4021 = vsel %vm4011, %v3990, %v3992
      %v4022 = vsel %vm4011, %v3994, %v3996
      %v4023 = vsel %vm4011, %v3996, %v3998
      %v4024 = vsel %vm4011, %v4000, %v4002
      %v4025 = vsel %vm4011, %v4002, %v4004
      %v4026 = vsel %vm4011, %v4006, %v4008
      %v4027 = vsel %vm4011, %v4008, %v4010
      %vm4042 = vcmask 1022976
      %v4044 = vsel %vm4042, %v435, 0
      %v4046 = vsel %vm781, 4294967295, 65535
      %v4047 = vsel %vm800, %v4046, 0
      %v4049 = vand.u32 %v4026, %v4047
      %v4052 = vand.u32 %v4027, %v4047
      %4054 = vmatprep.subr.bf16.mxu0 %v4013
      %4055 = vmatpush1.bf16.msra.mxu0 %v4012
      %4056 = vmatprep.subr.bf16.mxu0 %v4015
      %4057 = vmatpush1.bf16.msra.mxu0 %v4014
      %4058 = vmatprep.subr.bf16.mxu0 %v4017
      %4059 = vmatpush1.bf16.msra.mxu0 %v4016
      %4060 = vmatprep.subr.bf16.mxu0 %v4019
      %4061 = vmatpush1.bf16.msra.mxu0 %v4018
      %4062 = vmatprep.subr.bf16.mxu0 %v4021
      %4063 = vmatpush1.bf16.msra.mxu0 %v4020
      %4064 = vmatprep.subr.bf16.mxu0 %v4023
      %4065 = vmatpush1.bf16.msra.mxu0 %v4022
      %4066 = vmatprep.subr.bf16.mxu0 %v4025
      %4067 = vmatpush1.bf16.msra.mxu0 %v4024
      %4068 = vmatprep.subr.bf16.mxu0 %v4052
      %4069 = vmatpush1.bf16.msra.mxu0 %v4049
      %4070 = vmatprep.subr.bf16.mxu0 0
      %4071 = vmatpush1.bf16.msra.mxu0 0
      %4072 = vmatprep.subr.bf16.mxu0 0
      %4073 = vmatpush1.bf16.msra.mxu0 0
      %4074 = vmatprep.subr.bf16.mxu0 0
      %4075 = vmatpush1.bf16.msra.mxu0 0
      %4076 = vmatprep.subr.bf16.mxu0 0
      %4077 = vmatpush1.bf16.msra.mxu0 0
      %4078 = vmatprep.subr.bf16.mxu0 0
      %4079 = vmatpush1.bf16.msra.mxu0 0
      %4080 = vmatprep.subr.bf16.mxu0 0
      %4081 = vmatpush1.bf16.msra.mxu0 0
      %4082 = vmatprep.subr.bf16.mxu0 0
      %4083 = vmatpush1.bf16.msra.mxu0 0
      %4084 = vmatprep.subr.bf16.mxu0 0
      %4085 = vmatpush1.bf16.msra.mxu0 0
      %4086 = vmatprep.mubr.bf16.mxu0 0
      %4087 = vmatmul.mubr.bf16.gmra.mrb[0].mxu0 %v4044
      %v4088 = vpop.f32.mrb[0].mxu0
      %v4089 = vadd.f32 %v3950, %v4088
      %v4090 = vpop.f32.mrb[0].mxu0
      %v4091 = vadd.f32 %v3950, %v4090
      %v4092 = vpop.f32.mrb[0].mxu0
      %v4093 = vpop.f32.mrb[0].mxu0
      %4094 = vdwg.mxu0
      %vm4095 = vcmp.gt.f32.partialorder %v4089, 0.0
      %vm4096 = vcmp.gt.f32.partialorder %v4091, 0.0
      %v4097 = vmul.f32 %v4089, 0.01
      %v4098 = vmul.f32 %v4091, 0.01
      %v4099 = vsel %vm4095, %v4089, %v4097
      %v4100 = vsel %vm4096, %v4091, %v4098
      %v4101 = vsel %vm369, %v4099, 0.0
      %v4102 = vsel %vm370, %v4100, 0.0
      %v4103 = vpack.c.bf16 %v4101, %v4101
      %v4104 = vpack.c.bf16 %v4102, %v4102
      %v4107 = vcombine.low %v4103, %v4104
      %v4109 = vunpack.c.l.s4 1966171168
      %v4110 = vunpack.c.0.s8 %v4109
      %v4111 = vlaneseq
      %v4112 = vshrl.u32 %v4111, 7
      %v4113 = vsub.s32 %v4110, %v4112
      %v4114 = vrot.slane %v4107, %v4113
      %v4116 = vunpack.c.l.s4 1966171168
      %v4117 = vunpack.c.0.s8 %v4116
      %v4118 = vlaneseq
      %v4119 = vshrl.u32 %v4118, 7
      %v4120 = vsub.s32 %v4117, %v4119
      %v4121 = vrot.slane %v4114, %v4120
      %vm4123 = vcmask 1041409
      %vm4124 = vmand %vm4123, %vm701
      %vm4125 = vmor %vm4124, %vm344
      %v4126 = vld [vmem:[%s336] sm:$0x3]
      %v4127 = vsel %vm4125, %v4121, %v4126
      %4128 = vst [vmem:[%s336] sm:$0x3] %v4127
      %s4129 = scalar_lea.vmem [#allocation2], 64
      %v4130 = vld [vmem:[%s4129] sm:$0x11]
      %v4131 = vld [vmem:[%s4129 + $0x8] sm:$0x1]
      %v4132 = vld [vmem:[%s4129 + $0x4] sm:$0x11]
      %v4133 = vld [vmem:[%s4129 + $0xc] sm:$0x1]
      %v4136 = vunpack.c.l.b16 %v4130
      %v4137 = vunpack.c.h.b16 %v4130
      %v4138 = vunpack.c.l.b16 %v4131
      %v4139 = vpack.c.b16 %v4136, %v4136
      %v4140 = vpack.c.b16 %v4137, %v4137
      %v4141 = vpack.c.b16 %v4138, %v4138
      %v4146 = vshll.u32 %v4139, 16
      %v4149 = vshll.u32 %v4140, 16
      %v4152 = vshll.u32 %v4141, 16
      %4154 = vrot.lane.b32.xlu0 %v4146, 127
      %v4155 = vpop.permute.xlu0 %4154
      %4156 = vrot.lane.b32.xlu0 %v4149, 127
      %v4157 = vpop.permute.xlu0 %4156
      %4158 = vrot.lane.b32.xlu0 %v4152, 127
      %v4159 = vpop.permute.xlu0 %4158
      %v4160 = vsel %vm479, %v4155, %v4157
      %v4161 = vsel %vm479, %v4157, %v4159
      %v4165 = vrot.slane %v4139, 7
      %v4166 = vrot.slane %v4140, 7
      %v4167 = vrot.slane %v4141, 7
      %4168 = vrot.lane.b32.xlu0 %v4165, 126
      %v4169 = vpop.permute.xlu0 %4168
      %4170 = vrot.lane.b32.xlu0 %v4166, 126
      %v4171 = vpop.permute.xlu0 %4170
      %4172 = vrot.lane.b32.xlu0 %v4167, 126
      %v4173 = vpop.permute.xlu0 %4172
      %v4174 = vsel %vm494, %v4169, %v4171
      %v4175 = vsel %vm494, %v4171, %v4173
      %v4176 = vrot.slane %v4146, 7
      %v4177 = vrot.slane %v4149, 7
      %v4178 = vrot.slane %v4152, 7
      %4179 = vrot.lane.b32.xlu0 %v4176, 125
      %v4180 = vpop.permute.xlu0 %4179
      %4181 = vrot.lane.b32.xlu0 %v4177, 125
      %v4182 = vpop.permute.xlu0 %4181
      %4183 = vrot.lane.b32.xlu0 %v4178, 125
      %v4184 = vpop.permute.xlu0 %4183
      %v4185 = vsel %vm506, %v4180, %v4182
      %v4186 = vsel %vm506, %v4182, %v4184
      %v4190 = vrot.slane %v4139, 6
      %v4191 = vrot.slane %v4140, 6
      %v4192 = vrot.slane %v4141, 6
      %4193 = vrot.lane.b32.xlu0 %v4190, 124
      %v4194 = vpop.permute.xlu0 %4193
      %4195 = vrot.lane.b32.xlu0 %v4191, 124
      %v4196 = vpop.permute.xlu0 %4195
      %4197 = vrot.lane.b32.xlu0 %v4192, 124
      %v4198 = vpop.permute.xlu0 %4197
      %v4199 = vsel %vm521, %v4194, %v4196
      %v4200 = vsel %vm521, %v4196, %v4198
      %v4201 = vrot.slane %v4146, 6
      %v4202 = vrot.slane %v4149, 6
      %v4203 = vrot.slane %v4152, 6
      %4204 = vrot.lane.b32.xlu0 %v4201, 123
      %v4205 = vpop.permute.xlu0 %4204
      %4206 = vrot.lane.b32.xlu0 %v4202, 123
      %v4207 = vpop.permute.xlu0 %4206
      %4208 = vrot.lane.b32.xlu0 %v4203, 123
      %v4209 = vpop.permute.xlu0 %4208
      %v4210 = vsel %vm533, %v4205, %v4207
      %v4211 = vsel %vm533, %v4207, %v4209
      %v4215 = vrot.slane %v4139, 5
      %v4216 = vrot.slane %v4140, 5
      %v4217 = vrot.slane %v4141, 5
      %4218 = vrot.lane.b32.xlu0 %v4215, 122
      %v4219 = vpop.permute.xlu0 %4218
      %4220 = vrot.lane.b32.xlu0 %v4216, 122
      %v4221 = vpop.permute.xlu0 %4220
      %4222 = vrot.lane.b32.xlu0 %v4217, 122
      %v4223 = vpop.permute.xlu0 %4222
      %v4224 = vsel %vm548, %v4219, %v4221
      %v4225 = vsel %vm548, %v4221, %v4223
      %v4226 = vrot.slane %v4146, 5
      %v4227 = vrot.slane %v4149, 5
      %v4228 = vrot.slane %v4152, 5
      %4229 = vrot.lane.b32.xlu0 %v4226, 121
      %v4230 = vpop.permute.xlu0 %4229
      %4231 = vrot.lane.b32.xlu0 %v4227, 121
      %v4232 = vpop.permute.xlu0 %4231
      %4233 = vrot.lane.b32.xlu0 %v4228, 121
      %v4234 = vpop.permute.xlu0 %4233
      %v4235 = vsel %vm560, %v4230, %v4232
      %v4236 = vsel %vm560, %v4232, %v4234
      %4240 = vrot.lane.b32.xlu0 %v4139, 120
      %v4241 = vpop.permute.xlu0 %4240
      %4242 = vrot.lane.b32.xlu0 %v4140, 120
      %v4243 = vpop.permute.xlu0 %4242
      %4244 = vrot.lane.b32.xlu0 %v4141, 120
      %v4245 = vpop.permute.xlu0 %4244
      %v4246 = vsel %vm572, %v4241, %v4243
      %v4247 = vsel %vm572, %v4243, %v4245
      %v4248 = vrot.slane %v4146, 4
      %v4249 = vrot.slane %v4149, 4
      %v4250 = vrot.slane %v4152, 4
      %4251 = vrot.lane.b32.xlu0 %v4248, 119
      %v4252 = vpop.permute.xlu0 %4251
      %4253 = vrot.lane.b32.xlu0 %v4249, 119
      %v4254 = vpop.permute.xlu0 %4253
      %4255 = vrot.lane.b32.xlu0 %v4250, 119
      %v4256 = vpop.permute.xlu0 %4255
      %v4257 = vsel %vm584, %v4252, %v4254
      %v4258 = vsel %vm584, %v4254, %v4256
      %v4262 = vrot.slane %v4139, 3
      %v4263 = vrot.slane %v4140, 3
      %v4264 = vrot.slane %v4141, 3
      %4265 = vrot.lane.b32.xlu0 %v4262, 118
      %v4266 = vpop.permute.xlu0 %4265
      %4267 = vrot.lane.b32.xlu0 %v4263, 118
      %v4268 = vpop.permute.xlu0 %4267
      %4269 = vrot.lane.b32.xlu0 %v4264, 118
      %v4270 = vpop.permute.xlu0 %4269
      %v4271 = vsel %vm599, %v4266, %v4268
      %v4272 = vsel %vm599, %v4268, %v4270
      %v4273 = vrot.slane %v4146, 3
      %v4274 = vrot.slane %v4149, 3
      %v4275 = vrot.slane %v4152, 3
      %4276 = vrot.lane.b32.xlu0 %v4273, 117
      %v4277 = vpop.permute.xlu0 %4276
      %4278 = vrot.lane.b32.xlu0 %v4274, 117
      %v4279 = vpop.permute.xlu0 %4278
      %4280 = vrot.lane.b32.xlu0 %v4275, 117
      %v4281 = vpop.permute.xlu0 %4280
      %v4282 = vsel %vm611, %v4277, %v4279
      %v4283 = vsel %vm611, %v4279, %v4281
      %v4288 = vunpack.c.l.b16 %v4132
      %v4289 = vunpack.c.h.b16 %v4132
      %v4290 = vpack.c.b16 %v4288, %v4288
      %v4291 = vpack.c.b16 %v4289, %v4289
      %v4292 = vrot.slane %v4290, 2
      %v4293 = vrot.slane %v4291, 2
      %4294 = vrot.lane.b32.xlu0 %v4292, 116
      %v4295 = vpop.permute.xlu0 %4294
      %4296 = vrot.lane.b32.xlu0 %v4293, 116
      %v4297 = vpop.permute.xlu0 %4296
      %v4298 = vsel %vm628, %v4295, %v4297
      %v4300 = vunpack.c.l.b16 %v4133
      %v4301 = vpack.c.b16 %v4300, %v4300
      %v4303 = vshll.u32 %v4290, 16
      %v4305 = vrot.slane %v4303, 2
      %v4307 = vshll.u32 %v4291, 16
      %v4309 = vrot.slane %v4307, 2
      %v4311 = vshll.u32 %v4301, 16
      %v4313 = vrot.slane %v4311, 2
      %4314 = vrot.lane.b32.xlu0 %v4305, 115
      %v4315 = vpop.permute.xlu0 %4314
      %4316 = vrot.lane.b32.xlu0 %v4309, 115
      %v4317 = vpop.permute.xlu0 %4316
      %4318 = vrot.lane.b32.xlu0 %v4313, 115
      %v4319 = vpop.permute.xlu0 %4318
      %v4320 = vsel %vm651, %v4315, %v4317
      %v4321 = vsel %vm651, %v4317, %v4319
      %v4325 = vrot.slane %v4290, 1
      %v4326 = vrot.slane %v4291, 1
      %v4327 = vrot.slane %v4301, 1
      %4328 = vrot.lane.b32.xlu0 %v4325, 114
      %v4329 = vpop.permute.xlu0 %4328
      %4330 = vrot.lane.b32.xlu0 %v4326, 114
      %v4331 = vpop.permute.xlu0 %4330
      %4332 = vrot.lane.b32.xlu0 %v4327, 114
      %v4333 = vpop.permute.xlu0 %4332
      %v4334 = vsel %vm666, %v4329, %v4331
      %v4335 = vsel %vm666, %v4331, %v4333
      %v4336 = vrot.slane %v4303, 1
      %v4337 = vrot.slane %v4307, 1
      %v4338 = vrot.slane %v4311, 1
      %4339 = vrot.lane.b32.xlu0 %v4336, 113
      %v4340 = vpop.permute.xlu0 %4339
      %4341 = vrot.lane.b32.xlu0 %v4337, 113
      %v4342 = vpop.permute.xlu0 %4341
      %4343 = vrot.lane.b32.xlu0 %v4338, 113
      %v4344 = vpop.permute.xlu0 %4343
      %v4345 = vsel %vm678, %v4340, %v4342
      %v4346 = vsel %vm678, %v4342, %v4344
      %v4350 = vsel %vm344, %v4139, %v4160
      %v4351 = vsel %vm344, %v4140, %v4161
      %v4352 = vsel %vm344, %v4141, %v4159
      %v4355 = vsel %vm687, %v4350, %v4174
      %v4359 = vsel %vm687, %v4351, %v4175
      %v4363 = vsel %vm687, %v4352, %v4173
      %v4365 = vsel %vm702, %v4355, %v4185
      %v4366 = vsel %vm702, %v4359, %v4186
      %v4367 = vsel %vm702, %v4363, %v4184
      %v4370 = vsel %vm706, %v4365, %v4199
      %v4374 = vsel %vm706, %v4366, %v4200
      %v4378 = vsel %vm706, %v4367, %v4198
      %v4380 = vsel %vm721, %v4370, %v4210
      %v4381 = vsel %vm721, %v4374, %v4211
      %v4382 = vsel %vm721, %v4378, %v4209
      %v4385 = vsel %vm725, %v4380, %v4224
      %v4389 = vsel %vm725, %v4381, %v4225
      %v4393 = vsel %vm725, %v4382, %v4223
      %v4395 = vsel %vm740, %v4385, %v4235
      %v4396 = vsel %vm740, %v4389, %v4236
      %v4397 = vsel %vm740, %v4393, %v4234
      %v4400 = vsel %vm744, %v4395, %v4246
      %v4404 = vsel %vm744, %v4396, %v4247
      %v4408 = vsel %vm744, %v4397, %v4245
      %v4410 = vsel %vm758, %v4400, %v4257
      %v4411 = vsel %vm758, %v4404, %v4258
      %v4412 = vsel %vm758, %v4408, %v4256
      %v4415 = vsel %vm762, %v4410, %v4271
      %v4419 = vsel %vm762, %v4411, %v4272
      %v4423 = vsel %vm762, %v4412, %v4270
      %v4425 = vsel %vm777, %v4415, %v4282
      %v4426 = vsel %vm777, %v4419, %v4283
      %v4427 = vsel %vm777, %v4423, %v4281
      %v4430 = vsel %vm781, %v4425, %v4295
      %v4434 = vsel %vm781, %v4426, %v4298
      %v4438 = vsel %vm781, %v4427, %v4297
      %v4440 = vsel %vm796, %v4430, %v4315
      %v4441 = vsel %vm796, %v4434, %v4320
      %v4442 = vsel %vm796, %v4438, %v4321
      %v4445 = vsel %vm800, %v4440, %v4329
      %v4449 = vsel %vm800, %v4441, %v4334
      %v4453 = vsel %vm800, %v4442, %v4335
      %v4455 = vsel %vm815, %v4445, %v4340
      %v4456 = vsel %vm815, %v4449, %v4345
      %v4457 = vsel %vm815, %v4453, %v4346
      %4461 = vrot.lane.b32.xlu0 %v4303, 127
      %v4462 = vpop.permute.xlu0 %4461
      %4463 = vrot.lane.b32.xlu0 %v4307, 127
      %v4464 = vpop.permute.xlu0 %4463
      %4465 = vrot.lane.b32.xlu0 %v4311, 127
      %v4466 = vpop.permute.xlu0 %4465
      %v4467 = vsel %vm479, %v4462, %v4464
      %v4468 = vsel %vm479, %v4464, %v4466
      %v4472 = vrot.slane %v4290, 7
      %v4473 = vrot.slane %v4291, 7
      %v4474 = vrot.slane %v4301, 7
      %4475 = vrot.lane.b32.xlu0 %v4472, 126
      %v4476 = vpop.permute.xlu0 %4475
      %4477 = vrot.lane.b32.xlu0 %v4473, 126
      %v4478 = vpop.permute.xlu0 %4477
      %4479 = vrot.lane.b32.xlu0 %v4474, 126
      %v4480 = vpop.permute.xlu0 %4479
      %v4481 = vsel %vm494, %v4476, %v4478
      %v4482 = vsel %vm494, %v4478, %v4480
      %v4483 = vrot.slane %v4303, 7
      %v4484 = vrot.slane %v4307, 7
      %v4485 = vrot.slane %v4311, 7
      %4486 = vrot.lane.b32.xlu0 %v4483, 125
      %v4487 = vpop.permute.xlu0 %4486
      %4488 = vrot.lane.b32.xlu0 %v4484, 125
      %v4489 = vpop.permute.xlu0 %4488
      %4490 = vrot.lane.b32.xlu0 %v4485, 125
      %v4491 = vpop.permute.xlu0 %4490
      %v4492 = vsel %vm506, %v4487, %v4489
      %v4493 = vsel %vm506, %v4489, %v4491
      %v4497 = vrot.slane %v4290, 6
      %v4498 = vrot.slane %v4291, 6
      %v4499 = vrot.slane %v4301, 6
      %4500 = vrot.lane.b32.xlu0 %v4497, 124
      %v4501 = vpop.permute.xlu0 %4500
      %4502 = vrot.lane.b32.xlu0 %v4498, 124
      %v4503 = vpop.permute.xlu0 %4502
      %4504 = vrot.lane.b32.xlu0 %v4499, 124
      %v4505 = vpop.permute.xlu0 %4504
      %v4506 = vsel %vm521, %v4501, %v4503
      %v4507 = vsel %vm521, %v4503, %v4505
      %v4508 = vrot.slane %v4303, 6
      %v4509 = vrot.slane %v4307, 6
      %v4510 = vrot.slane %v4311, 6
      %4511 = vrot.lane.b32.xlu0 %v4508, 123
      %v4512 = vpop.permute.xlu0 %4511
      %4513 = vrot.lane.b32.xlu0 %v4509, 123
      %v4514 = vpop.permute.xlu0 %4513
      %4515 = vrot.lane.b32.xlu0 %v4510, 123
      %v4516 = vpop.permute.xlu0 %4515
      %v4517 = vsel %vm533, %v4512, %v4514
      %v4518 = vsel %vm533, %v4514, %v4516
      %v4522 = vrot.slane %v4290, 5
      %v4523 = vrot.slane %v4291, 5
      %v4524 = vrot.slane %v4301, 5
      %4525 = vrot.lane.b32.xlu0 %v4522, 122
      %v4526 = vpop.permute.xlu0 %4525
      %4527 = vrot.lane.b32.xlu0 %v4523, 122
      %v4528 = vpop.permute.xlu0 %4527
      %4529 = vrot.lane.b32.xlu0 %v4524, 122
      %v4530 = vpop.permute.xlu0 %4529
      %v4531 = vsel %vm548, %v4526, %v4528
      %v4532 = vsel %vm548, %v4528, %v4530
      %v4533 = vrot.slane %v4303, 5
      %v4534 = vrot.slane %v4307, 5
      %v4535 = vrot.slane %v4311, 5
      %4536 = vrot.lane.b32.xlu0 %v4533, 121
      %v4537 = vpop.permute.xlu0 %4536
      %4538 = vrot.lane.b32.xlu0 %v4534, 121
      %v4539 = vpop.permute.xlu0 %4538
      %4540 = vrot.lane.b32.xlu0 %v4535, 121
      %v4541 = vpop.permute.xlu0 %4540
      %v4542 = vsel %vm560, %v4537, %v4539
      %v4543 = vsel %vm560, %v4539, %v4541
      %4547 = vrot.lane.b32.xlu0 %v4290, 120
      %v4548 = vpop.permute.xlu0 %4547
      %4549 = vrot.lane.b32.xlu0 %v4291, 120
      %v4550 = vpop.permute.xlu0 %4549
      %4551 = vrot.lane.b32.xlu0 %v4301, 120
      %v4552 = vpop.permute.xlu0 %4551
      %v4553 = vsel %vm572, %v4548, %v4550
      %v4554 = vsel %vm572, %v4550, %v4552
      %v4555 = vsel %vm344, %v4290, %v4467
      %v4556 = vsel %vm344, %v4291, %v4468
      %v4557 = vsel %vm344, %v4301, %v4466
      %v4560 = vsel %vm687, %v4555, %v4481
      %v4564 = vsel %vm687, %v4556, %v4482
      %v4568 = vsel %vm687, %v4557, %v4480
      %v4570 = vsel %vm702, %v4560, %v4492
      %v4571 = vsel %vm702, %v4564, %v4493
      %v4572 = vsel %vm702, %v4568, %v4491
      %v4575 = vsel %vm706, %v4570, %v4506
      %v4579 = vsel %vm706, %v4571, %v4507
      %v4583 = vsel %vm706, %v4572, %v4505
      %v4585 = vsel %vm721, %v4575, %v4517
      %v4586 = vsel %vm721, %v4579, %v4518
      %v4587 = vsel %vm721, %v4583, %v4516
      %v4590 = vsel %vm725, %v4585, %v4531
      %v4594 = vsel %vm725, %v4586, %v4532
      %v4598 = vsel %vm725, %v4587, %v4530
      %v4600 = vsel %vm740, %v4590, %v4542
      %v4601 = vsel %vm740, %v4594, %v4543
      %v4602 = vsel %vm740, %v4598, %v4541
      %v4605 = vsel %vm744, %v4600, %v4553
      %v4608 = vsel %vm744, %v4601, %v4554
      %v4611 = vsel %vm744, %v4602, %v4552
      %4615 = vrot.lane.b32.xlu0 %v4605, 112
      %v4616 = vpop.permute.xlu0 %4615
      %4617 = vrot.lane.b32.xlu0 %v4608, 112
      %v4618 = vpop.permute.xlu0 %4617
      %4619 = vrot.lane.b32.xlu0 %v4611, 112
      %v4620 = vpop.permute.xlu0 %4619
      %v4621 = vsel %vm982, %v4616, %v4618
      %v4622 = vsel %vm982, %v4618, %v4620
      %4626 = vrot.lane.b32.xlu0 %v4455, 12
      %v4627 = vpop.permute.xlu0 %4626
      %4628 = vrot.lane.b32.xlu0 %v4456, 12
      %v4629 = vpop.permute.xlu0 %4628
      %4630 = vrot.lane.b32.xlu0 %v4457, 12
      %v4631 = vpop.permute.xlu0 %4630
      %4632 = vrot.lane.b32.xlu0 %v4616, 12
      %v4633 = vpop.permute.xlu0 %4632
      %4634 = vrot.lane.b32.xlu0 %v4621, 12
      %v4635 = vpop.permute.xlu0 %4634
      %4636 = vrot.lane.b32.xlu0 %v4622, 12
      %v4637 = vpop.permute.xlu0 %4636
      %v4638 = vsel %vm1030, %v4627, %v4629
      %v4639 = vsel %vm1030, %v4629, %v4631
      %v4640 = vsel %vm1030, %v4633, %v4635
      %v4641 = vsel %vm1030, %v4635, %v4637
      %v4645 = vand.u32 %v4640, %v1045
      %v4648 = vand.u32 %v4641, %v1045
      %4650 = vmatprep.subr.bf16.mxu0 %v4639
      %4651 = vmatpush1.bf16.msra.mxu0 %v4638
      %4652 = vmatprep.subr.bf16.mxu0 %v4648
      %4653 = vmatpush1.bf16.msra.mxu0 %v4645
      %4654 = vmatprep.subr.bf16.mxu0 0
      %4655 = vmatpush1.bf16.msra.mxu0 0
      %4656 = vmatprep.subr.bf16.mxu0 0
      %4657 = vmatpush1.bf16.msra.mxu0 0
      %4658 = vmatprep.subr.bf16.mxu0 0
      %4659 = vmatpush1.bf16.msra.mxu0 0
      %4660 = vmatprep.subr.bf16.mxu0 0
      %4661 = vmatpush1.bf16.msra.mxu0 0
      %4662 = vmatprep.subr.bf16.mxu0 0
      %4663 = vmatpush1.bf16.msra.mxu0 0
      %4664 = vmatprep.subr.bf16.mxu0 0
      %4665 = vmatpush1.bf16.msra.mxu0 0
      %4666 = vmatprep.subr.bf16.mxu0 0
      %4667 = vmatpush1.bf16.msra.mxu0 0
      %4668 = vmatprep.subr.bf16.mxu0 0
      %4669 = vmatpush1.bf16.msra.mxu0 0
      %4670 = vmatprep.subr.bf16.mxu0 0
      %4671 = vmatpush1.bf16.msra.mxu0 0
      %4672 = vmatprep.subr.bf16.mxu0 0
      %4673 = vmatpush1.bf16.msra.mxu0 0
      %4674 = vmatprep.subr.bf16.mxu0 0
      %4675 = vmatpush1.bf16.msra.mxu0 0
      %4676 = vmatprep.subr.bf16.mxu0 0
      %4677 = vmatpush1.bf16.msra.mxu0 0
      %4678 = vmatprep.subr.bf16.mxu0 0
      %4679 = vmatpush1.bf16.msra.mxu0 0
      %4680 = vmatprep.subr.bf16.mxu0 0
      %4681 = vmatpush1.bf16.msra.mxu0 0
      %4682 = vmatprep.mubr.bf16.mxu0 0
      %4683 = vmatmul.mubr.bf16.gmra.mrb[0].mxu0 %v1039
      %v4684 = vpop.f32.mrb[0].mxu0
      %v4685 = vadd.f32 %v988, %v4684
      %v4686 = vpop.f32.mrb[0].mxu0
      %v4687 = vadd.f32 %v988, %v4686
      %v4688 = vpop.f32.mrb[0].mxu0
      %v4689 = vadd.f32 %v993, %v4688
      %v4690 = vpop.f32.mrb[0].mxu0
      %v4691 = vadd.f32 %v993, %v4690
      %4692 = vmatprep.mubr.bf16.mxu0 0
      %4693 = vmatmul.mubr.bf16.gmra.mrb[0].mxu0 %v1042
      %v4694 = vpop.f32.mrb[0].mxu0
      %v4695 = vadd.f32 %v998, %v4694
      %v4696 = vpop.f32.mrb[0].mxu0
      %v4697 = vadd.f32 %v998, %v4696
      %v4698 = vpop.f32.mrb[0].mxu0
      %v4699 = vadd.f32 %v1003, %v4698
      %v4700 = vpop.f32.mrb[0].mxu0
      %v4701 = vadd.f32 %v1003, %v4700
      %4702 = vdwg.mxu0
      %vm4703 = vcmp.gt.f32.partialorder %v4685, 0.0
      %vm4704 = vcmp.gt.f32.partialorder %v4687, 0.0
      %vm4705 = vcmp.gt.f32.partialorder %v4689, 0.0
      %vm4706 = vcmp.gt.f32.partialorder %v4691, 0.0
      %vm4707 = vcmp.gt.f32.partialorder %v4695, 0.0
      %vm4708 = vcmp.gt.f32.partialorder %v4697, 0.0
      %vm4709 = vcmp.gt.f32.partialorder %v4699, 0.0
      %vm4710 = vcmp.gt.f32.partialorder %v4701, 0.0
      %v4711 = vmul.f32 %v4685, 0.01
      %v4712 = vmul.f32 %v4687, 0.01
      %v4713 = vmul.f32 %v4689, 0.01
      %v4714 = vmul.f32 %v4691, 0.01
      %v4715 = vmul.f32 %v4695, 0.01
      %v4716 = vmul.f32 %v4697, 0.01
      %v4717 = vmul.f32 %v4699, 0.01
      %v4718 = vmul.f32 %v4701, 0.01
      %v4719 = vsel %vm4703, %v4685, %v4711
      %v4720 = vsel %vm4704, %v4687, %v4712
      %v4721 = vsel %vm4705, %v4689, %v4713
      %v4722 = vsel %vm4706, %v4691, %v4714
      %v4723 = vsel %vm4707, %v4695, %v4715
      %v4724 = vsel %vm4708, %v4697, %v4716
      %v4725 = vsel %vm4709, %v4699, %v4717
      %v4726 = vsel %vm4710, %v4701, %v4718
      %v4727 = vsel %vm1131, %v4719, 0.0
      %v4728 = vsel %vm1132, %v4720, 0.0
      %v4729 = vsel %vm1131, %v4721, 0.0
      %v4730 = vsel %vm1132, %v4722, 0.0
      %v4731 = vsel %vm1131, %v4723, 0.0
      %v4732 = vsel %vm1132, %v4724, 0.0
      %v4733 = vsel %vm1131, %v4725, 0.0
      %v4734 = vsel %vm1132, %v4726, 0.0
      %v4735 = vpack.c.bf16 %v4729, %v4727
      %v4736 = vpack.c.bf16 %v4730, %v4728
      %v4737 = vpack.c.bf16 %v4733, %v4731
      %v4738 = vpack.c.bf16 %v4734, %v4732
      %v4743 = vunpack.c.l.b16 %v4735
      %v4744 = vunpack.c.l.b16 %v4736
      %v4745 = vunpack.c.h.b16 %v4735
      %v4746 = vunpack.c.h.b16 %v4736
      %v4747 = vunpack.c.l.b16 %v4737
      %v4748 = vunpack.c.l.b16 %v4738
      %v4749 = vunpack.c.h.b16 %v4737
      %v4750 = vunpack.c.h.b16 %v4738
      %v4751 = vpack.c.b16 %v4744, %v4743
      %v4752 = vpack.c.b16 %v4746, %v4745
      %v4753 = vpack.c.b16 %v4748, %v4747
      %v4754 = vpack.c.b16 %v4750, %v4749
      %4759 = vst [vmem:[%s4129 + $0x4] sm:$0xff] %v4751
      %4760 = vst [vmem:[%s4129 + $0x14] sm:$0xff] %v4752
      %4761 = vst [vmem:[%s4129 + $0x24] sm:$0xff] %v4753
      %v4762 = vld [vmem:[%s4129 + $0x34] sm:$0x11]
      %v4763 = vsel %vm408, %v4754, %v4762
      %4764 = vst [vmem:[%s4129 + $0x34] sm:$0x11] %v4763
      %v4765 = vld [vmem:[%s4129] sm:$0xff]
      %v4766 = vld [vmem:[%s4129 + $0x8] sm:$0xf]
      %v4767 = vld [vmem:[%s4129 + $0x10] sm:$0xff]
      %v4768 = vld [vmem:[%s4129 + $0x18] sm:$0xf]
      %v4769 = vld [vmem:[%s4129 + $0x20] sm:$0xff]
      %v4770 = vld [vmem:[%s4129 + $0x28] sm:$0xf]
      %v4771 = vld [vmem:[%s4129 + $0x30] sm:$0x11]
      %v4772 = vld [vmem:[%s4129 + $0x38] sm:$0x1]
      %v4773 = vld [vmem:[%s4129 + $0x4] sm:$0xff]
      %v4774 = vld [vmem:[%s4129 + $0x14] sm:$0xff]
      %v4775 = vld [vmem:[%s4129 + $0x24] sm:$0xff]
      %v4776 = vld [vmem:[%s4129 + $0x34] sm:$0x11]
      %v4777 = vld [vmem:[%s4129 + $0xc] sm:$0xf]
      %v4778 = vld [vmem:[%s4129 + $0x1c] sm:$0xf]
      %v4779 = vld [vmem:[%s4129 + $0x2c] sm:$0xf]
      %v4780 = vld [vmem:[%s4129 + $0x3c] sm:$0x1]
      %v4789 = vunpack.c.l.b16 %v4765
      %v4790 = vunpack.c.h.b16 %v4765
      %v4791 = vunpack.c.l.b16 %v4766
      %v4792 = vunpack.c.l.b16 %v4767
      %v4793 = vunpack.c.h.b16 %v4767
      %v4794 = vunpack.c.l.b16 %v4768
      %v4795 = vunpack.c.l.b16 %v4769
      %v4796 = vunpack.c.h.b16 %v4769
      %v4797 = vunpack.c.l.b16 %v4770
      %v4798 = vunpack.c.l.b16 %v4771
      %v4799 = vunpack.c.h.b16 %v4771
      %v4800 = vunpack.c.l.b16 %v4772
      %v4801 = vpack.c.b16 %v4792, %v4789
      %v4802 = vpack.c.b16 %v4793, %v4790
      %v4803 = vpack.c.b16 %v4794, %v4791
      %v4804 = vpack.c.b16 %v4798, %v4795
      %v4805 = vpack.c.b16 %v4799, %v4796
      %v4806 = vpack.c.b16 %v4800, %v4797
      %v4811 = vshrl.u32 %v4801, 16
      %v4813 = vrot.slane %v4811, 3
      %v4814 = vshll.u32 %v4801, 16
      %v4816 = vrot.slane %v4814, 4
      %v4817 = vor.u32 %v4813, %v4816
      %v4819 = vshrl.u32 %v4802, 16
      %v4821 = vrot.slane %v4819, 3
      %v4822 = vshll.u32 %v4802, 16
      %v4824 = vrot.slane %v4822, 4
      %v4825 = vor.u32 %v4821, %v4824
      %v4827 = vshrl.u32 %v4803, 16
      %v4829 = vrot.slane %v4827, 3
      %v4830 = vshll.u32 %v4803, 16
      %v4832 = vrot.slane %v4830, 4
      %v4833 = vor.u32 %v4829, %v4832
      %v4835 = vshrl.u32 %v4804, 16
      %v4837 = vrot.slane %v4835, 3
      %v4838 = vshll.u32 %v4804, 16
      %v4840 = vrot.slane %v4838, 4
      %v4841 = vor.u32 %v4837, %v4840
      %v4842 = vsel %vm406, %v4817, %v4841
      %v4844 = vshrl.u32 %v4805, 16
      %v4846 = vrot.slane %v4844, 3
      %v4847 = vshll.u32 %v4805, 16
      %v4849 = vrot.slane %v4847, 4
      %v4850 = vor.u32 %v4846, %v4849
      %v4851 = vsel %vm406, %v4825, %v4850
      %v4853 = vshrl.u32 %v4806, 16
      %v4855 = vrot.slane %v4853, 3
      %v4856 = vshll.u32 %v4806, 16
      %v4858 = vrot.slane %v4856, 4
      %v4859 = vor.u32 %v4855, %v4858
      %v4860 = vsel %vm406, %v4833, %v4859
      %4861 = vrot.lane.b32.xlu0 %v4817, 127
      %v4862 = vpop.permute.xlu0 %4861
      %4863 = vrot.lane.b32.xlu0 %v4825, 127
      %v4864 = vpop.permute.xlu0 %4863
      %4865 = vrot.lane.b32.xlu0 %v4833, 127
      %v4866 = vpop.permute.xlu0 %4865
      %4867 = vrot.lane.b32.xlu0 %v4842, 127
      %v4868 = vpop.permute.xlu0 %4867
      %4869 = vrot.lane.b32.xlu0 %v4851, 127
      %v4870 = vpop.permute.xlu0 %4869
      %4871 = vrot.lane.b32.xlu0 %v4860, 127
      %v4872 = vpop.permute.xlu0 %4871
      %4873 = vrot.lane.b32.xlu0 %v4841, 127
      %v4874 = vpop.permute.xlu0 %4873
      %4875 = vrot.lane.b32.xlu0 %v4850, 127
      %v4876 = vpop.permute.xlu0 %4875
      %4877 = vrot.lane.b32.xlu0 %v4859, 127
      %v4878 = vpop.permute.xlu0 %4877
      %v4879 = vsel %vm479, %v4862, %v4864
      %v4880 = vsel %vm479, %v4864, %v4866
      %v4881 = vsel %vm479, %v4868, %v4870
      %v4882 = vsel %vm479, %v4870, %v4872
      %v4883 = vsel %vm479, %v4874, %v4876
      %v4884 = vsel %vm479, %v4876, %v4878
      %v4888 = vrot.slane %v4801, 7
      %v4889 = vrot.slane %v4802, 7
      %v4890 = vrot.slane %v4803, 7
      %v4891 = vrot.slane %v4804, 7
      %v4892 = vsel %vm342, %v4888, %v4891
      %v4893 = vrot.slane %v4805, 7
      %v4894 = vsel %vm342, %v4889, %v4893
      %v4895 = vrot.slane %v4806, 7
      %v4896 = vsel %vm342, %v4890, %v4895
      %4897 = vrot.lane.b32.xlu0 %v4888, 126
      %v4898 = vpop.permute.xlu0 %4897
      %4899 = vrot.lane.b32.xlu0 %v4889, 126
      %v4900 = vpop.permute.xlu0 %4899
      %4901 = vrot.lane.b32.xlu0 %v4890, 126
      %v4902 = vpop.permute.xlu0 %4901
      %4903 = vrot.lane.b32.xlu0 %v4892, 126
      %v4904 = vpop.permute.xlu0 %4903
      %4905 = vrot.lane.b32.xlu0 %v4894, 126
      %v4906 = vpop.permute.xlu0 %4905
      %4907 = vrot.lane.b32.xlu0 %v4896, 126
      %v4908 = vpop.permute.xlu0 %4907
      %v4909 = vsel %vm494, %v4898, %v4900
      %v4910 = vsel %vm494, %v4900, %v4902
      %v4911 = vsel %vm494, %v4904, %v4906
      %v4912 = vsel %vm494, %v4906, %v4908
      %v4916 = vrot.slane %v4811, 2
      %v4917 = vrot.slane %v4814, 3
      %v4918 = vor.u32 %v4916, %v4917
      %v4919 = vrot.slane %v4819, 2
      %v4920 = vrot.slane %v4822, 3
      %v4921 = vor.u32 %v4919, %v4920
      %v4922 = vrot.slane %v4827, 2
      %v4923 = vrot.slane %v4830, 3
      %v4924 = vor.u32 %v4922, %v4923
      %v4925 = vrot.slane %v4835, 2
      %v4926 = vrot.slane %v4838, 3
      %v4927 = vor.u32 %v4925, %v4926
      %v4928 = vsel %vm776, %v4918, %v4927
      %v4929 = vrot.slane %v4844, 2
      %v4930 = vrot.slane %v4847, 3
      %v4931 = vor.u32 %v4929, %v4930
      %v4932 = vsel %vm776, %v4921, %v4931
      %v4933 = vrot.slane %v4853, 2
      %v4934 = vrot.slane %v4856, 3
      %v4935 = vor.u32 %v4933, %v4934
      %v4936 = vsel %vm776, %v4924, %v4935
      %4937 = vrot.lane.b32.xlu0 %v4918, 125
      %v4938 = vpop.permute.xlu0 %4937
      %4939 = vrot.lane.b32.xlu0 %v4921, 125
      %v4940 = vpop.permute.xlu0 %4939
      %4941 = vrot.lane.b32.xlu0 %v4924, 125
      %v4942 = vpop.permute.xlu0 %4941
      %4943 = vrot.lane.b32.xlu0 %v4928, 125
      %v4944 = vpop.permute.xlu0 %4943
      %4945 = vrot.lane.b32.xlu0 %v4932, 125
      %v4946 = vpop.permute.xlu0 %4945
      %4947 = vrot.lane.b32.xlu0 %v4936, 125
      %v4948 = vpop.permute.xlu0 %4947
      %4949 = vrot.lane.b32.xlu0 %v4927, 125
      %v4950 = vpop.permute.xlu0 %4949
      %4951 = vrot.lane.b32.xlu0 %v4931, 125
      %v4952 = vpop.permute.xlu0 %4951
      %4953 = vrot.lane.b32.xlu0 %v4935, 125
      %v4954 = vpop.permute.xlu0 %4953
      %v4955 = vsel %vm506, %v4938, %v4940
      %v4956 = vsel %vm506, %v4940, %v4942
      %v4957 = vsel %vm506, %v4944, %v4946
      %v4958 = vsel %vm506, %v4946, %v4948
      %v4959 = vsel %vm506, %v4950, %v4952
      %v4960 = vsel %vm506, %v4952, %v4954
      %v4964 = vrot.slane %v4801, 6
      %v4965 = vrot.slane %v4802, 6
      %v4966 = vrot.slane %v4803, 6
      %v4967 = vrot.slane %v4804, 6
      %v4968 = vsel %vm700, %v4964, %v4967
      %v4969 = vrot.slane %v4805, 6
      %v4970 = vsel %vm700, %v4965, %v4969
      %v4971 = vrot.slane %v4806, 6
      %v4972 = vsel %vm700, %v4966, %v4971
      %4973 = vrot.lane.b32.xlu0 %v4964, 124
      %v4974 = vpop.permute.xlu0 %4973
      %4975 = vrot.lane.b32.xlu0 %v4965, 124
      %v4976 = vpop.permute.xlu0 %4975
      %4977 = vrot.lane.b32.xlu0 %v4966, 124
      %v4978 = vpop.permute.xlu0 %4977
      %4979 = vrot.lane.b32.xlu0 %v4968, 124
      %v4980 = vpop.permute.xlu0 %4979
      %4981 = vrot.lane.b32.xlu0 %v4970, 124
      %v4982 = vpop.permute.xlu0 %4981
      %4983 = vrot.lane.b32.xlu0 %v4972, 124
      %v4984 = vpop.permute.xlu0 %4983
      %v4985 = vsel %vm521, %v4974, %v4976
      %v4986 = vsel %vm521, %v4976, %v4978
      %v4987 = vsel %vm521, %v4980, %v4982
      %v4988 = vsel %vm521, %v4982, %v4984
      %v4992 = vrot.slane %v4811, 1
      %v4993 = vrot.slane %v4814, 2
      %v4994 = vor.u32 %v4992, %v4993
      %v4995 = vrot.slane %v4819, 1
      %v4996 = vrot.slane %v4822, 2
      %v4997 = vor.u32 %v4995, %v4996
      %v4998 = vrot.slane %v4827, 1
      %v4999 = vrot.slane %v4830, 2
      %v5000 = vor.u32 %v4998, %v4999
      %v5001 = vrot.slane %v4835, 1
      %v5002 = vrot.slane %v4838, 2
      %v5003 = vor.u32 %v5001, %v5002
      %v5004 = vsel %vm795, %v4994, %v5003
      %v5005 = vrot.slane %v4844, 1
      %v5006 = vrot.slane %v4847, 2
      %v5007 = vor.u32 %v5005, %v5006
      %v5008 = vsel %vm795, %v4997, %v5007
      %v5009 = vrot.slane %v4853, 1
      %v5010 = vrot.slane %v4856, 2
      %v5011 = vor.u32 %v5009, %v5010
      %v5012 = vsel %vm795, %v5000, %v5011
      %5013 = vrot.lane.b32.xlu0 %v4994, 123
      %v5014 = vpop.permute.xlu0 %5013
      %5015 = vrot.lane.b32.xlu0 %v4997, 123
      %v5016 = vpop.permute.xlu0 %5015
      %5017 = vrot.lane.b32.xlu0 %v5000, 123
      %v5018 = vpop.permute.xlu0 %5017
      %5019 = vrot.lane.b32.xlu0 %v5004, 123
      %v5020 = vpop.permute.xlu0 %5019
      %5021 = vrot.lane.b32.xlu0 %v5008, 123
      %v5022 = vpop.permute.xlu0 %5021
      %5023 = vrot.lane.b32.xlu0 %v5012, 123
      %v5024 = vpop.permute.xlu0 %5023
      %5025 = vrot.lane.b32.xlu0 %v5003, 123
      %v5026 = vpop.permute.xlu0 %5025
      %5027 = vrot.lane.b32.xlu0 %v5007, 123
      %v5028 = vpop.permute.xlu0 %5027
      %5029 = vrot.lane.b32.xlu0 %v5011, 123
      %v5030 = vpop.permute.xlu0 %5029
      %v5031 = vsel %vm533, %v5014, %v5016
      %v5032 = vsel %vm533, %v5016, %v5018
      %v5033 = vsel %vm533, %v5020, %v5022
      %v5034 = vsel %vm533, %v5022, %v5024
      %v5035 = vsel %vm533, %v5026, %v5028
      %v5036 = vsel %vm533, %v5028, %v5030
      %v5040 = vrot.slane %v4801, 5
      %v5041 = vrot.slane %v4802, 5
      %v5042 = vrot.slane %v4803, 5
      %v5043 = vrot.slane %v4804, 5
      %v5044 = vsel %vm719, %v5040, %v5043
      %v5045 = vrot.slane %v4805, 5
      %v5046 = vsel %vm719, %v5041, %v5045
      %v5047 = vrot.slane %v4806, 5
      %v5048 = vsel %vm719, %v5042, %v5047
      %5049 = vrot.lane.b32.xlu0 %v5040, 122
      %v5050 = vpop.permute.xlu0 %5049
      %5051 = vrot.lane.b32.xlu0 %v5041, 122
      %v5052 = vpop.permute.xlu0 %5051
      %5053 = vrot.lane.b32.xlu0 %v5042, 122
      %v5054 = vpop.permute.xlu0 %5053
      %5055 = vrot.lane.b32.xlu0 %v5044, 122
      %v5056 = vpop.permute.xlu0 %5055
      %5057 = vrot.lane.b32.xlu0 %v5046, 122
      %v5058 = vpop.permute.xlu0 %5057
      %5059 = vrot.lane.b32.xlu0 %v5048, 122
      %v5060 = vpop.permute.xlu0 %5059
      %v5061 = vsel %vm548, %v5050, %v5052
      %v5062 = vsel %vm548, %v5052, %v5054
      %v5063 = vsel %vm548, %v5056, %v5058
      %v5064 = vsel %vm548, %v5058, %v5060
      %v5072 = vunpack.c.l.b16 %v4773
      %v5073 = vunpack.c.h.b16 %v4773
      %v5074 = vunpack.c.l.b16 %v4774
      %v5075 = vunpack.c.h.b16 %v4774
      %v5076 = vunpack.c.l.b16 %v4775
      %v5077 = vunpack.c.h.b16 %v4775
      %v5078 = vunpack.c.l.b16 %v4776
      %v5079 = vunpack.c.h.b16 %v4776
      %v5080 = vpack.c.b16 %v5074, %v5072
      %v5081 = vpack.c.b16 %v5075, %v5073
      %v5082 = vpack.c.b16 %v5078, %v5076
      %v5083 = vpack.c.b16 %v5079, %v5077
      %v5085 = vshll.u32 %v5080, 16
      %v5087 = vrot.slane %v5085, 1
      %v5089 = vshll.u32 %v5081, 16
      %v5091 = vrot.slane %v5089, 1
      %v5092 = vshrl.u32 %v5080, 16
      %v5094 = vor.u32 %v5092, %v5087
      %v5096 = vshll.u32 %v5082, 16
      %v5098 = vrot.slane %v5096, 1
      %v5099 = vsel %vm814, %v5094, %v5098
      %v5100 = vshrl.u32 %v5081, 16
      %v5102 = vor.u32 %v5100, %v5091
      %v5104 = vshll.u32 %v5083, 16
      %v5106 = vrot.slane %v5104, 1
      %v5107 = vsel %vm814, %v5102, %v5106
      %v5108 = vshrl.u32 %v5082, 16
      %v5110 = vor.u32 %v5108, %v5098
      %v5111 = vshrl.u32 %v5083, 16
      %v5113 = vor.u32 %v5111, %v5106
      %5114 = vrot.lane.b32.xlu0 %v5087, 121
      %v5115 = vpop.permute.xlu0 %5114
      %5116 = vrot.lane.b32.xlu0 %v5091, 121
      %v5117 = vpop.permute.xlu0 %5116
      %5118 = vrot.lane.b32.xlu0 %v5099, 121
      %v5119 = vpop.permute.xlu0 %5118
      %5120 = vrot.lane.b32.xlu0 %v5107, 121
      %v5121 = vpop.permute.xlu0 %5120
      %5122 = vrot.lane.b32.xlu0 %v5110, 121
      %v5123 = vpop.permute.xlu0 %5122
      %5124 = vrot.lane.b32.xlu0 %v5113, 121
      %v5125 = vpop.permute.xlu0 %5124
      %v5126 = vsel %vm560, %v5115, %v5117
      %v5127 = vsel %vm560, %v5119, %v5121
      %v5128 = vsel %vm560, %v5123, %v5125
      %v5136 = vunpack.c.l.b16 %v4777
      %v5137 = vunpack.c.l.b16 %v4778
      %v5138 = vunpack.c.l.b16 %v4779
      %v5139 = vunpack.c.l.b16 %v4780
      %v5140 = vpack.c.b16 %v5072, %v5072
      %v5141 = vpack.c.b16 %v5073, %v5073
      %v5142 = vpack.c.b16 %v5136, %v5136
      %v5143 = vpack.c.b16 %v5076, %v5074
      %v5144 = vpack.c.b16 %v5077, %v5075
      %v5145 = vpack.c.b16 %v5138, %v5137
      %v5146 = vpack.c.b16 %v5078, %v5078
      %v5147 = vpack.c.b16 %v5079, %v5079
      %v5148 = vpack.c.b16 %v5139, %v5139
      %5149 = vrot.lane.b32.xlu0 %v5140, 120
      %v5150 = vpop.permute.xlu0 %5149
      %5151 = vrot.lane.b32.xlu0 %v5141, 120
      %v5152 = vpop.permute.xlu0 %5151
      %5153 = vrot.lane.b32.xlu0 %v5142, 120
      %v5154 = vpop.permute.xlu0 %5153
      %5155 = vrot.lane.b32.xlu0 %v5143, 120
      %v5156 = vpop.permute.xlu0 %5155
      %5157 = vrot.lane.b32.xlu0 %v5144, 120
      %v5158 = vpop.permute.xlu0 %5157
      %5159 = vrot.lane.b32.xlu0 %v5145, 120
      %v5160 = vpop.permute.xlu0 %5159
      %5161 = vrot.lane.b32.xlu0 %v5146, 120
      %v5162 = vpop.permute.xlu0 %5161
      %5163 = vrot.lane.b32.xlu0 %v5147, 120
      %v5164 = vpop.permute.xlu0 %5163
      %5165 = vrot.lane.b32.xlu0 %v5148, 120
      %v5166 = vpop.permute.xlu0 %5165
      %v5167 = vsel %vm572, %v5150, %v5152
      %v5168 = vsel %vm572, %v5152, %v5154
      %v5169 = vsel %vm572, %v5156, %v5158
      %v5170 = vsel %vm572, %v5158, %v5160
      %v5171 = vsel %vm572, %v5162, %v5164
      %v5172 = vsel %vm572, %v5164, %v5166
      %v5176 = vpack.c.b16 %v5137, %v5136
      %v5177 = vpack.c.b16 %v5139, %v5138
      %v5178 = vrot.slane %v5092, 7
      %v5179 = vor.u32 %v5178, %v5085
      %v5180 = vrot.slane %v5100, 7
      %v5181 = vor.u32 %v5180, %v5089
      %v5183 = vshrl.u32 %v5176, 16
      %v5185 = vrot.slane %v5183, 7
      %v5186 = vshll.u32 %v5176, 16
      %v5188 = vor.u32 %v5185, %v5186
      %v5189 = vrot.slane %v5108, 7
      %v5190 = vor.u32 %v5189, %v5096
      %v5191 = vsel %vm343, %v5178, %v5190
      %v5192 = vrot.slane %v5111, 7
      %v5193 = vor.u32 %v5192, %v5104
      %v5194 = vsel %vm343, %v5180, %v5193
      %v5196 = vshrl.u32 %v5177, 16
      %v5198 = vrot.slane %v5196, 7
      %v5199 = vshll.u32 %v5177, 16
      %v5201 = vor.u32 %v5198, %v5199
      %v5202 = vsel %vm343, %v5185, %v5201
      %5203 = vrot.lane.b32.xlu0 %v5179, 119
      %v5204 = vpop.permute.xlu0 %5203
      %5205 = vrot.lane.b32.xlu0 %v5181, 119
      %v5206 = vpop.permute.xlu0 %5205
      %5207 = vrot.lane.b32.xlu0 %v5188, 119
      %v5208 = vpop.permute.xlu0 %5207
      %5209 = vrot.lane.b32.xlu0 %v5191, 119
      %v5210 = vpop.permute.xlu0 %5209
      %5211 = vrot.lane.b32.xlu0 %v5194, 119
      %v5212 = vpop.permute.xlu0 %5211
      %5213 = vrot.lane.b32.xlu0 %v5202, 119
      %v5214 = vpop.permute.xlu0 %5213
      %v5215 = vsel %vm584, %v5204, %v5206
      %v5216 = vsel %vm584, %v5206, %v5208
      %v5217 = vsel %vm584, %v5210, %v5212
      %v5218 = vsel %vm584, %v5212, %v5214
      %v5222 = vrot.slane %v5080, 3
      %v5223 = vrot.slane %v5081, 3
      %v5224 = vrot.slane %v5176, 3
      %v5225 = vrot.slane %v5082, 3
      %v5226 = vsel %vm757, %v5222, %v5225
      %v5227 = vrot.slane %v5083, 3
      %v5228 = vsel %vm757, %v5223, %v5227
      %v5229 = vrot.slane %v5177, 3
      %v5230 = vsel %vm757, %v5224, %v5229
      %5231 = vrot.lane.b32.xlu0 %v5222, 118
      %v5232 = vpop.permute.xlu0 %5231
      %5233 = vrot.lane.b32.xlu0 %v5223, 118
      %v5234 = vpop.permute.xlu0 %5233
      %5235 = vrot.lane.b32.xlu0 %v5224, 118
      %v5236 = vpop.permute.xlu0 %5235
      %5237 = vrot.lane.b32.xlu0 %v5226, 118
      %v5238 = vpop.permute.xlu0 %5237
      %5239 = vrot.lane.b32.xlu0 %v5228, 118
      %v5240 = vpop.permute.xlu0 %5239
      %5241 = vrot.lane.b32.xlu0 %v5230, 118
      %v5242 = vpop.permute.xlu0 %5241
      %5243 = vrot.lane.b32.xlu0 %v5225, 118
      %v5244 = vpop.permute.xlu0 %5243
      %5245 = vrot.lane.b32.xlu0 %v5227, 118
      %v5246 = vpop.permute.xlu0 %5245
      %5247 = vrot.lane.b32.xlu0 %v5229, 118
      %v5248 = vpop.permute.xlu0 %5247
      %v5249 = vsel %vm599, %v5232, %v5234
      %v5250 = vsel %vm599, %v5234, %v5236
      %v5251 = vsel %vm599, %v5238, %v5240
      %v5252 = vsel %vm599, %v5240, %v5242
      %v5253 = vsel %vm599, %v5244, %v5246
      %v5254 = vsel %vm599, %v5246, %v5248
      %v5258 = vrot.slane %v5092, 6
      %v5259 = vrot.slane %v5085, 7
      %v5260 = vor.u32 %v5258, %v5259
      %v5261 = vrot.slane %v5100, 6
      %v5262 = vrot.slane %v5089, 7
      %v5263 = vor.u32 %v5261, %v5262
      %v5264 = vrot.slane %v5183, 6
      %v5265 = vrot.slane %v5186, 7
      %v5266 = vor.u32 %v5264, %v5265
      %v5267 = vrot.slane %v5108, 6
      %v5268 = vrot.slane %v5096, 7
      %v5269 = vor.u32 %v5267, %v5268
      %v5270 = vsel %vm701, %v5260, %v5269
      %v5271 = vrot.slane %v5111, 6
      %v5272 = vrot.slane %v5104, 7
      %v5273 = vor.u32 %v5271, %v5272
      %v5274 = vsel %vm701, %v5263, %v5273
      %v5275 = vrot.slane %v5196, 6
      %v5276 = vrot.slane %v5199, 7
      %v5277 = vor.u32 %v5275, %v5276
      %v5278 = vsel %vm701, %v5266, %v5277
      %5279 = vrot.lane.b32.xlu0 %v5260, 117
      %v5280 = vpop.permute.xlu0 %5279
      %5281 = vrot.lane.b32.xlu0 %v5263, 117
      %v5282 = vpop.permute.xlu0 %5281
      %5283 = vrot.lane.b32.xlu0 %v5266, 117
      %v5284 = vpop.permute.xlu0 %5283
      %5285 = vrot.lane.b32.xlu0 %v5270, 117
      %v5286 = vpop.permute.xlu0 %5285
      %5287 = vrot.lane.b32.xlu0 %v5274, 117
      %v5288 = vpop.permute.xlu0 %5287
      %5289 = vrot.lane.b32.xlu0 %v5278, 117
      %v5290 = vpop.permute.xlu0 %5289
      %v5291 = vsel %vm611, %v5280, %v5282
      %v5292 = vsel %vm611, %v5282, %v5284
      %v5293 = vsel %vm611, %v5286, %v5288
      %v5294 = vsel %vm611, %v5288, %v5290
      %v5298 = vrot.slane %v5080, 2
      %v5299 = vrot.slane %v5081, 2
      %v5300 = vrot.slane %v5176, 2
      %v5301 = vrot.slane %v5082, 2
      %v5302 = vsel %vm775, %v5298, %v5301
      %v5303 = vrot.slane %v5083, 2
      %v5304 = vsel %vm775, %v5299, %v5303
      %v5305 = vrot.slane %v5177, 2
      %v5306 = vsel %vm775, %v5300, %v5305
      %5307 = vrot.lane.b32.xlu0 %v5298, 116
      %v5308 = vpop.permute.xlu0 %5307
      %5309 = vrot.lane.b32.xlu0 %v5299, 116
      %v5310 = vpop.permute.xlu0 %5309
      %5311 = vrot.lane.b32.xlu0 %v5300, 116
      %v5312 = vpop.permute.xlu0 %5311
      %5313 = vrot.lane.b32.xlu0 %v5302, 116
      %v5314 = vpop.permute.xlu0 %5313
      %5315 = vrot.lane.b32.xlu0 %v5304, 116
      %v5316 = vpop.permute.xlu0 %5315
      %5317 = vrot.lane.b32.xlu0 %v5306, 116
      %v5318 = vpop.permute.xlu0 %5317
      %5319 = vrot.lane.b32.xlu0 %v5301, 116
      %v5320 = vpop.permute.xlu0 %5319
      %5321 = vrot.lane.b32.xlu0 %v5303, 116
      %v5322 = vpop.permute.xlu0 %5321
      %5323 = vrot.lane.b32.xlu0 %v5305, 116
      %v5324 = vpop.permute.xlu0 %5323
      %v5325 = vsel %vm628, %v5308, %v5310
      %v5326 = vsel %vm628, %v5310, %v5312
      %v5327 = vsel %vm628, %v5314, %v5316
      %v5328 = vsel %vm628, %v5316, %v5318
      %v5329 = vsel %vm628, %v5320, %v5322
      %v5330 = vsel %vm628, %v5322, %v5324
      %v5334 = vrot.slane %v5092, 5
      %v5335 = vrot.slane %v5085, 6
      %v5336 = vor.u32 %v5334, %v5335
      %v5337 = vrot.slane %v5100, 5
      %v5338 = vrot.slane %v5089, 6
      %v5339 = vor.u32 %v5337, %v5338
      %v5340 = vrot.slane %v5183, 5
      %v5341 = vrot.slane %v5186, 6
      %v5342 = vor.u32 %v5340, %v5341
      %v5343 = vrot.slane %v5108, 5
      %v5344 = vrot.slane %v5096, 6
      %v5345 = vor.u32 %v5343, %v5344
      %v5346 = vsel %vm720, %v5336, %v5345
      %v5347 = vrot.slane %v5111, 5
      %v5348 = vrot.slane %v5104, 6
      %v5349 = vor.u32 %v5347, %v5348
      %v5350 = vsel %vm720, %v5339, %v5349
      %v5351 = vrot.slane %v5196, 5
      %v5352 = vrot.slane %v5199, 6
      %v5353 = vor.u32 %v5351, %v5352
      %v5354 = vsel %vm720, %v5342, %v5353
      %5355 = vrot.lane.b32.xlu0 %v5336, 115
      %v5356 = vpop.permute.xlu0 %5355
      %5357 = vrot.lane.b32.xlu0 %v5339, 115
      %v5358 = vpop.permute.xlu0 %5357
      %5359 = vrot.lane.b32.xlu0 %v5342, 115
      %v5360 = vpop.permute.xlu0 %5359
      %5361 = vrot.lane.b32.xlu0 %v5346, 115
      %v5362 = vpop.permute.xlu0 %5361
      %5363 = vrot.lane.b32.xlu0 %v5350, 115
      %v5364 = vpop.permute.xlu0 %5363
      %5365 = vrot.lane.b32.xlu0 %v5354, 115
      %v5366 = vpop.permute.xlu0 %5365
      %v5367 = vsel %vm651, %v5356, %v5358
      %v5368 = vsel %vm651, %v5358, %v5360
      %v5369 = vsel %vm651, %v5362, %v5364
      %v5370 = vsel %vm651, %v5364, %v5366
      %v5374 = vrot.slane %v5080, 1
      %v5375 = vrot.slane %v5081, 1
      %v5376 = vrot.slane %v5176, 1
      %v5377 = vrot.slane %v5082, 1
      %v5378 = vsel %vm794, %v5374, %v5377
      %v5379 = vrot.slane %v5083, 1
      %v5380 = vsel %vm794, %v5375, %v5379
      %v5381 = vrot.slane %v5177, 1
      %v5382 = vsel %vm794, %v5376, %v5381
      %5383 = vrot.lane.b32.xlu0 %v5374, 114
      %v5384 = vpop.permute.xlu0 %5383
      %5385 = vrot.lane.b32.xlu0 %v5375, 114
      %v5386 = vpop.permute.xlu0 %5385
      %5387 = vrot.lane.b32.xlu0 %v5376, 114
      %v5388 = vpop.permute.xlu0 %5387
      %5389 = vrot.lane.b32.xlu0 %v5378, 114
      %v5390 = vpop.permute.xlu0 %5389
      %5391 = vrot.lane.b32.xlu0 %v5380, 114
      %v5392 = vpop.permute.xlu0 %5391
      %5393 = vrot.lane.b32.xlu0 %v5382, 114
      %v5394 = vpop.permute.xlu0 %5393
      %5395 = vrot.lane.b32.xlu0 %v5377, 114
      %v5396 = vpop.permute.xlu0 %5395
      %5397 = vrot.lane.b32.xlu0 %v5379, 114
      %v5398 = vpop.permute.xlu0 %5397
      %5399 = vrot.lane.b32.xlu0 %v5381, 114
      %v5400 = vpop.permute.xlu0 %5399
      %v5401 = vsel %vm666, %v5384, %v5386
      %v5402 = vsel %vm666, %v5386, %v5388
      %v5403 = vsel %vm666, %v5390, %v5392
      %v5404 = vsel %vm666, %v5392, %v5394
      %v5405 = vsel %vm666, %v5396, %v5398
      %v5406 = vsel %vm666, %v5398, %v5400
      %v5407 = vsel %vm758, %v4804, %v4879
      %v5408 = vsel %vm758, %v4805, %v4880
      %v5409 = vsel %vm758, %v4806, %v4866
      %v5412 = vsel %vm687, %v4883, %v4909
      %v5415 = vsel %vm687, %v4884, %v4910
      %v5418 = vsel %vm687, %v4878, %v4902
      %v5419 = vsel %vm777, %v4911, %v4955
      %v5420 = vsel %vm777, %v4912, %v4956
      %v5421 = vsel %vm777, %v4908, %v4942
      %v5424 = vsel %vm706, %v4959, %v4985
      %v5427 = vsel %vm706, %v4960, %v4986
      %v5430 = vsel %vm706, %v4954, %v4978
      %v5431 = vsel %vm796, %v4987, %v5031
      %v5432 = vsel %vm796, %v4988, %v5032
      %v5433 = vsel %vm796, %v4984, %v5018
      %v5436 = vsel %vm725, %v5035, %v5061
      %v5439 = vsel %vm725, %v5036, %v5062
      %v5442 = vsel %vm725, %v5030, %v5054
      %v5443 = vsel %vm815, %v5063, %v5115
      %v5444 = vsel %vm815, %v5064, %v5126
      %v5445 = vsel %vm815, %v5060, %v5117
      %v5448 = vsel %vm744, %v5123, %v5150
      %v5451 = vsel %vm744, %v5128, %v5167
      %v5454 = vsel %vm744, %v5125, %v5168
      %v5455 = vsel %vm344, %v5162, %v5204
      %v5456 = vsel %vm344, %v5171, %v5215
      %v5457 = vsel %vm344, %v5172, %v5216
      %v5460 = vsel %vm762, %v5210, %v5232
      %v5463 = vsel %vm762, %v5217, %v5249
      %v5466 = vsel %vm762, %v5218, %v5250
      %v5467 = vsel %vm702, %v5244, %v5280
      %v5468 = vsel %vm702, %v5253, %v5291
      %v5469 = vsel %vm702, %v5254, %v5292
      %v5472 = vsel %vm781, %v5286, %v5308
      %v5475 = vsel %vm781, %v5293, %v5325
      %v5478 = vsel %vm781, %v5294, %v5326
      %v5479 = vsel %vm721, %v5320, %v5356
      %v5480 = vsel %vm721, %v5329, %v5367
      %v5481 = vsel %vm721, %v5330, %v5368
      %v5484 = vsel %vm800, %v5362, %v5384
      %v5487 = vsel %vm800, %v5369, %v5401
      %v5490 = vsel %vm800, %v5370, %v5402
      %5533 = vrot.lane.b32.xlu0 %v4801, 7
      %v5534 = vpop.permute.xlu0 %5533
      %5535 = vrot.lane.b32.xlu0 %v4802, 7
      %v5536 = vpop.permute.xlu0 %5535
      %5537 = vrot.lane.b32.xlu0 %v4803, 7
      %v5538 = vpop.permute.xlu0 %5537
      %5539 = vrot.lane.b32.xlu0 %v5407, 7
      %v5540 = vpop.permute.xlu0 %5539
      %5541 = vrot.lane.b32.xlu0 %v5408, 7
      %v5542 = vpop.permute.xlu0 %5541
      %5543 = vrot.lane.b32.xlu0 %v5409, 7
      %v5544 = vpop.permute.xlu0 %5543
      %5545 = vrot.lane.b32.xlu0 %v4881, 7
      %v5546 = vpop.permute.xlu0 %5545
      %5547 = vrot.lane.b32.xlu0 %v4882, 7
      %v5548 = vpop.permute.xlu0 %5547
      %5549 = vrot.lane.b32.xlu0 %v4872, 7
      %v5550 = vpop.permute.xlu0 %5549
      %5551 = vrot.lane.b32.xlu0 %v5412, 7
      %v5552 = vpop.permute.xlu0 %5551
      %5553 = vrot.lane.b32.xlu0 %v5415, 7
      %v5554 = vpop.permute.xlu0 %5553
      %5555 = vrot.lane.b32.xlu0 %v5418, 7
      %v5556 = vpop.permute.xlu0 %5555
      %5557 = vrot.lane.b32.xlu0 %v5419, 7
      %v5558 = vpop.permute.xlu0 %5557
      %5559 = vrot.lane.b32.xlu0 %v5420, 7
      %v5560 = vpop.permute.xlu0 %5559
      %5561 = vrot.lane.b32.xlu0 %v5421, 7
      %v5562 = vpop.permute.xlu0 %5561
      %5563 = vrot.lane.b32.xlu0 %v4957, 7
      %v5564 = vpop.permute.xlu0 %5563
      %5565 = vrot.lane.b32.xlu0 %v4958, 7
      %v5566 = vpop.permute.xlu0 %5565
      %5567 = vrot.lane.b32.xlu0 %v4948, 7
      %v5568 = vpop.permute.xlu0 %5567
      %5569 = vrot.lane.b32.xlu0 %v5424, 7
      %v5570 = vpop.permute.xlu0 %5569
      %5571 = vrot.lane.b32.xlu0 %v5427, 7
      %v5572 = vpop.permute.xlu0 %5571
      %5573 = vrot.lane.b32.xlu0 %v5430, 7
      %v5574 = vpop.permute.xlu0 %5573
      %5575 = vrot.lane.b32.xlu0 %v5431, 7
      %v5576 = vpop.permute.xlu0 %5575
      %5577 = vrot.lane.b32.xlu0 %v5432, 7
      %v5578 = vpop.permute.xlu0 %5577
      %5579 = vrot.lane.b32.xlu0 %v5433, 7
      %v5580 = vpop.permute.xlu0 %5579
      %5581 = vrot.lane.b32.xlu0 %v5033, 7
      %v5582 = vpop.permute.xlu0 %5581
      %5583 = vrot.lane.b32.xlu0 %v5034, 7
      %v5584 = vpop.permute.xlu0 %5583
      %5585 = vrot.lane.b32.xlu0 %v5024, 7
      %v5586 = vpop.permute.xlu0 %5585
      %5587 = vrot.lane.b32.xlu0 %v5436, 7
      %v5588 = vpop.permute.xlu0 %5587
      %5589 = vrot.lane.b32.xlu0 %v5439, 7
      %v5590 = vpop.permute.xlu0 %5589
      %5591 = vrot.lane.b32.xlu0 %v5442, 7
      %v5592 = vpop.permute.xlu0 %5591
      %5593 = vrot.lane.b32.xlu0 %v5443, 7
      %v5594 = vpop.permute.xlu0 %5593
      %5595 = vrot.lane.b32.xlu0 %v5444, 7
      %v5596 = vpop.permute.xlu0 %5595
      %5597 = vrot.lane.b32.xlu0 %v5445, 7
      %v5598 = vpop.permute.xlu0 %5597
      %5599 = vrot.lane.b32.xlu0 %v5119, 7
      %v5600 = vpop.permute.xlu0 %5599
      %5601 = vrot.lane.b32.xlu0 %v5127, 7
      %v5602 = vpop.permute.xlu0 %5601
      %5603 = vrot.lane.b32.xlu0 %v5121, 7
      %v5604 = vpop.permute.xlu0 %5603
      %5605 = vrot.lane.b32.xlu0 %v5448, 7
      %v5606 = vpop.permute.xlu0 %5605
      %5607 = vrot.lane.b32.xlu0 %v5451, 7
      %v5608 = vpop.permute.xlu0 %5607
      %5609 = vrot.lane.b32.xlu0 %v5454, 7
      %v5610 = vpop.permute.xlu0 %5609
      %5611 = vrot.lane.b32.xlu0 %v5156, 7
      %v5612 = vpop.permute.xlu0 %5611
      %5613 = vrot.lane.b32.xlu0 %v5169, 7
      %v5614 = vpop.permute.xlu0 %5613
      %5615 = vrot.lane.b32.xlu0 %v5170, 7
      %v5616 = vpop.permute.xlu0 %5615
      %5617 = vrot.lane.b32.xlu0 %v5455, 7
      %v5618 = vpop.permute.xlu0 %5617
      %5619 = vrot.lane.b32.xlu0 %v5456, 7
      %v5620 = vpop.permute.xlu0 %5619
      %5621 = vrot.lane.b32.xlu0 %v5457, 7
      %v5622 = vpop.permute.xlu0 %5621
      %5623 = vrot.lane.b32.xlu0 %v5460, 7
      %v5624 = vpop.permute.xlu0 %5623
      %5625 = vrot.lane.b32.xlu0 %v5463, 7
      %v5626 = vpop.permute.xlu0 %5625
      %5627 = vrot.lane.b32.xlu0 %v5466, 7
      %v5628 = vpop.permute.xlu0 %5627
      %5629 = vrot.lane.b32.xlu0 %v5238, 7
      %v5630 = vpop.permute.xlu0 %5629
      %5631 = vrot.lane.b32.xlu0 %v5251, 7
      %v5632 = vpop.permute.xlu0 %5631
      %5633 = vrot.lane.b32.xlu0 %v5252, 7
      %v5634 = vpop.permute.xlu0 %5633
      %5635 = vrot.lane.b32.xlu0 %v5467, 7
      %v5636 = vpop.permute.xlu0 %5635
      %5637 = vrot.lane.b32.xlu0 %v5468, 7
      %v5638 = vpop.permute.xlu0 %5637
      %5639 = vrot.lane.b32.xlu0 %v5469, 7
      %v5640 = vpop.permute.xlu0 %5639
      %5641 = vrot.lane.b32.xlu0 %v5472, 7
      %v5642 = vpop.permute.xlu0 %5641
      %5643 = vrot.lane.b32.xlu0 %v5475, 7
      %v5644 = vpop.permute.xlu0 %5643
      %5645 = vrot.lane.b32.xlu0 %v5478, 7
      %v5646 = vpop.permute.xlu0 %5645
      %5647 = vrot.lane.b32.xlu0 %v5314, 7
      %v5648 = vpop.permute.xlu0 %5647
      %5649 = vrot.lane.b32.xlu0 %v5327, 7
      %v5650 = vpop.permute.xlu0 %5649
      %5651 = vrot.lane.b32.xlu0 %v5328, 7
      %v5652 = vpop.permute.xlu0 %5651
      %5653 = vrot.lane.b32.xlu0 %v5479, 7
      %v5654 = vpop.permute.xlu0 %5653
      %5655 = vrot.lane.b32.xlu0 %v5480, 7
      %v5656 = vpop.permute.xlu0 %5655
      %5657 = vrot.lane.b32.xlu0 %v5481, 7
      %v5658 = vpop.permute.xlu0 %5657
      %5659 = vrot.lane.b32.xlu0 %v5484, 7
      %v5660 = vpop.permute.xlu0 %5659
      %5661 = vrot.lane.b32.xlu0 %v5487, 7
      %v5662 = vpop.permute.xlu0 %5661
      %5663 = vrot.lane.b32.xlu0 %v5490, 7
      %v5664 = vpop.permute.xlu0 %5663
      %5665 = vrot.lane.b32.xlu0 %v5390, 7
      %v5666 = vpop.permute.xlu0 %5665
      %5667 = vrot.lane.b32.xlu0 %v5403, 7
      %v5668 = vpop.permute.xlu0 %5667
      %5669 = vrot.lane.b32.xlu0 %v5404, 7
      %v5670 = vpop.permute.xlu0 %5669
      %5671 = vrot.lane.b32.xlu0 %v5396, 7
      %v5672 = vpop.permute.xlu0 %5671
      %5673 = vrot.lane.b32.xlu0 %v5405, 7
      %v5674 = vpop.permute.xlu0 %5673
      %5675 = vrot.lane.b32.xlu0 %v5406, 7
      %v5676 = vpop.permute.xlu0 %5675
      %v5677 = vsel %vm2133, %v5534, %v5536
      %v5678 = vsel %vm2133, %v5536, %v5538
      %v5679 = vsel %vm2133, %v5540, %v5542
      %v5680 = vsel %vm2133, %v5542, %v5544
      %v5681 = vsel %vm2133, %v5546, %v5548
      %v5682 = vsel %vm2133, %v5548, %v5550
      %v5683 = vsel %vm2133, %v5552, %v5554
      %v5684 = vsel %vm2133, %v5554, %v5556
      %v5685 = vsel %vm2133, %v5558, %v5560
      %v5686 = vsel %vm2133, %v5560, %v5562
      %v5687 = vsel %vm2133, %v5564, %v5566
      %v5688 = vsel %vm2133, %v5566, %v5568
      %v5689 = vsel %vm2133, %v5570, %v5572
      %v5690 = vsel %vm2133, %v5572, %v5574
      %v5691 = vsel %vm2133, %v5576, %v5578
      %v5692 = vsel %vm2133, %v5578, %v5580
      %v5693 = vsel %vm2133, %v5582, %v5584
      %v5694 = vsel %vm2133, %v5584, %v5586
      %v5695 = vsel %vm2133, %v5588, %v5590
      %v5696 = vsel %vm2133, %v5590, %v5592
      %v5697 = vsel %vm2133, %v5594, %v5596
      %v5698 = vsel %vm2133, %v5596, %v5598
      %v5699 = vsel %vm2133, %v5600, %v5602
      %v5700 = vsel %vm2133, %v5602, %v5604
      %v5701 = vsel %vm2133, %v5606, %v5608
      %v5702 = vsel %vm2133, %v5608, %v5610
      %v5703 = vsel %vm2133, %v5612, %v5614
      %v5704 = vsel %vm2133, %v5614, %v5616
      %v5705 = vsel %vm2133, %v5618, %v5620
      %v5706 = vsel %vm2133, %v5620, %v5622
      %v5707 = vsel %vm2133, %v5624, %v5626
      %v5708 = vsel %vm2133, %v5626, %v5628
      %v5709 = vsel %vm2133, %v5630, %v5632
      %v5710 = vsel %vm2133, %v5632, %v5634
      %v5711 = vsel %vm2133, %v5636, %v5638
      %v5712 = vsel %vm2133, %v5638, %v5640
      %v5713 = vsel %vm2133, %v5642, %v5644
      %v5714 = vsel %vm2133, %v5644, %v5646
      %v5715 = vsel %vm2133, %v5648, %v5650
      %v5716 = vsel %vm2133, %v5650, %v5652
      %v5717 = vsel %vm2133, %v5654, %v5656
      %v5718 = vsel %vm2133, %v5656, %v5658
      %v5719 = vsel %vm2133, %v5660, %v5662
      %v5720 = vsel %vm2133, %v5662, %v5664
      %v5721 = vsel %vm2133, %v5666, %v5668
      %v5722 = vsel %vm2133, %v5668, %v5670
      %v5723 = vsel %vm2133, %v5672, %v5674
      %v5724 = vsel %vm2133, %v5674, %v5676
      %v5772 = vand.u32 %v5723, %v2236
      %v5775 = vand.u32 %v5724, %v2236
      %5777 = vmatprep.subr.bf16.mxu0 %v5678
      %5778 = vmatpush1.bf16.msra.mxu0 %v5677
      %5779 = vmatprep.subr.bf16.mxu0 %v5680
      %5780 = vmatpush1.bf16.msra.mxu0 %v5679
      %5781 = vmatprep.subr.bf16.mxu0 %v5682
      %5782 = vmatpush1.bf16.msra.mxu0 %v5681
      %5783 = vmatprep.subr.bf16.mxu0 %v5684
      %5784 = vmatpush1.bf16.msra.mxu0 %v5683
      %5785 = vmatprep.subr.bf16.mxu0 %v5686
      %5786 = vmatpush1.bf16.msra.mxu0 %v5685
      %5787 = vmatprep.subr.bf16.mxu0 %v5688
      %5788 = vmatpush1.bf16.msra.mxu0 %v5687
      %5789 = vmatprep.subr.bf16.mxu0 %v5690
      %5790 = vmatpush1.bf16.msra.mxu0 %v5689
      %5791 = vmatprep.subr.bf16.mxu0 %v5692
      %5792 = vmatpush1.bf16.msra.mxu0 %v5691
      %5793 = vmatprep.subr.bf16.mxu0 %v5694
      %5794 = vmatpush1.bf16.msra.mxu0 %v5693
      %5795 = vmatprep.subr.bf16.mxu0 %v5696
      %5796 = vmatpush1.bf16.msra.mxu0 %v5695
      %5797 = vmatprep.subr.bf16.mxu0 %v5698
      %5798 = vmatpush1.bf16.msra.mxu0 %v5697
      %5799 = vmatprep.subr.bf16.mxu0 %v5700
      %5800 = vmatpush1.bf16.msra.mxu0 %v5699
      %5801 = vmatprep.subr.bf16.mxu0 %v5702
      %5802 = vmatpush1.bf16.msra.mxu0 %v5701
      %5803 = vmatprep.subr.bf16.mxu0 %v5704
      %5804 = vmatpush1.bf16.msra.mxu0 %v5703
      %5805 = vmatprep.subr.bf16.mxu0 %v5706
      %5806 = vmatpush1.bf16.msra.mxu0 %v5705
      %5807 = vmatprep.subr.bf16.mxu0 %v5708
      %5808 = vmatpush1.bf16.msra.mxu0 %v5707
      %5809 = vmatprep.mubr.bf16.mxu0 %v1938
      %5810 = vmatmul.mubr.bf16.gmra.mrb[0].mxu0 %v1937
      %v5811 = vpop.f32.mrb[0].mxu0
      %v5812 = vadd.f32 %v1900, %v5811
      %v5813 = vpop.f32.mrb[0].mxu0
      %v5814 = vadd.f32 %v1900, %v5813
      %v5815 = vpop.f32.mrb[0].mxu0
      %v5816 = vadd.f32 %v1905, %v5815
      %v5817 = vpop.f32.mrb[0].mxu0
      %v5818 = vadd.f32 %v1905, %v5817
      %5819 = vmatprep.mubr.bf16.mxu0 %v1941
      %5820 = vmatmul.mubr.bf16.gmra.mrb[0].mxu0 %v1940
      %v5821 = vpop.f32.mrb[0].mxu0
      %v5822 = vadd.f32 %v1910, %v5821
      %v5823 = vpop.f32.mrb[0].mxu0
      %v5824 = vadd.f32 %v1910, %v5823
      %v5825 = vpop.f32.mrb[0].mxu0
      %v5826 = vadd.f32 %v1915, %v5825
      %v5827 = vpop.f32.mrb[0].mxu0
      %v5828 = vadd.f32 %v1915, %v5827
      %5829 = vdwg.mxu0
      %5830 = vmatprep.subr.bf16.mxu0 %v5710
      %5831 = vmatpush1.bf16.msra.mxu0 %v5709
      %5832 = vmatprep.subr.bf16.mxu0 %v5712
      %5833 = vmatpush1.bf16.msra.mxu0 %v5711
      %5834 = vmatprep.subr.bf16.mxu0 %v5714
      %5835 = vmatpush1.bf16.msra.mxu0 %v5713
      %5836 = vmatprep.subr.bf16.mxu0 %v5716
      %5837 = vmatpush1.bf16.msra.mxu0 %v5715
      %5838 = vmatprep.subr.bf16.mxu0 %v5718
      %5839 = vmatpush1.bf16.msra.mxu0 %v5717
      %5840 = vmatprep.subr.bf16.mxu0 %v5720
      %5841 = vmatpush1.bf16.msra.mxu0 %v5719
      %5842 = vmatprep.subr.bf16.mxu0 %v5722
      %5843 = vmatpush1.bf16.msra.mxu0 %v5721
      %5844 = vmatprep.subr.bf16.mxu0 %v5775
      %5845 = vmatpush1.bf16.msra.mxu0 %v5772
      %5846 = vmatprep.subr.bf16.mxu0 0
      %5847 = vmatpush1.bf16.msra.mxu0 0
      %5848 = vmatprep.subr.bf16.mxu0 0
      %5849 = vmatpush1.bf16.msra.mxu0 0
      %5850 = vmatprep.subr.bf16.mxu0 0
      %5851 = vmatpush1.bf16.msra.mxu0 0
      %5852 = vmatprep.subr.bf16.mxu0 0
      %5853 = vmatpush1.bf16.msra.mxu0 0
      %5854 = vmatprep.subr.bf16.mxu0 0
      %5855 = vmatpush1.bf16.msra.mxu0 0
      %5856 = vmatprep.subr.bf16.mxu0 0
      %5857 = vmatpush1.bf16.msra.mxu0 0
      %5858 = vmatprep.subr.bf16.mxu0 0
      %5859 = vmatpush1.bf16.msra.mxu0 0
      %5860 = vmatprep.subr.bf16.mxu0 0
      %5861 = vmatpush1.bf16.msra.mxu0 0
      %5862 = vmatprep.mubr.bf16.mxu0 0
      %5863 = vmatmul.mubr.bf16.gmra.mrb[0].mxu0 %v2230
      %v5864 = vpop.f32.mrb[0].mxu0
      %v5865 = vadd.f32 %v5812, %v5864
      %v5866 = vpop.f32.mrb[0].mxu0
      %v5867 = vadd.f32 %v5814, %v5866
      %v5868 = vpop.f32.mrb[0].mxu0
      %v5869 = vadd.f32 %v5816, %v5868
      %v5870 = vpop.f32.mrb[0].mxu0
      %v5871 = vadd.f32 %v5818, %v5870
      %5872 = vmatprep.mubr.bf16.mxu0 0
      %5873 = vmatmul.mubr.bf16.gmra.mrb[0].mxu0 %v2233
      %v5874 = vpop.f32.mrb[0].mxu0
      %v5875 = vadd.f32 %v5822, %v5874
      %v5876 = vpop.f32.mrb[0].mxu0
      %v5877 = vadd.f32 %v5824, %v5876
      %v5878 = vpop.f32.mrb[0].mxu0
      %v5879 = vadd.f32 %v5826, %v5878
      %v5880 = vpop.f32.mrb[0].mxu0
      %v5881 = vadd.f32 %v5828, %v5880
      %5882 = vdwg.mxu0
      %vm5883 = vcmp.gt.f32.partialorder %v5865, 0.0
      %vm5884 = vcmp.gt.f32.partialorder %v5867, 0.0
      %vm5885 = vcmp.gt.f32.partialorder %v5869, 0.0
      %vm5886 = vcmp.gt.f32.partialorder %v5871, 0.0
      %vm5887 = vcmp.gt.f32.partialorder %v5875, 0.0
      %vm5888 = vcmp.gt.f32.partialorder %v5877, 0.0
      %vm5889 = vcmp.gt.f32.partialorder %v5879, 0.0
      %vm5890 = vcmp.gt.f32.partialorder %v5881, 0.0
      %v5891 = vmul.f32 %v5865, 0.01
      %v5892 = vmul.f32 %v5867, 0.01
      %v5893 = vmul.f32 %v5869, 0.01
      %v5894 = vmul.f32 %v5871, 0.01
      %v5895 = vmul.f32 %v5875, 0.01
      %v5896 = vmul.f32 %v5877, 0.01
      %v5897 = vmul.f32 %v5879, 0.01
      %v5898 = vmul.f32 %v5881, 0.01
      %v5899 = vsel %vm5883, %v5865, %v5891
      %v5900 = vsel %vm5884, %v5867, %v5892
      %v5901 = vsel %vm5885, %v5869, %v5893
      %v5902 = vsel %vm5886, %v5871, %v5894
      %v5903 = vsel %vm5887, %v5875, %v5895
      %v5904 = vsel %vm5888, %v5877, %v5896
      %v5905 = vsel %vm5889, %v5879, %v5897
      %v5906 = vsel %vm5890, %v5881, %v5898
      %v5907 = vsel %vm1131, %v5899, 0.0
      %v5908 = vsel %vm1132, %v5900, 0.0
      %v5909 = vsel %vm1131, %v5901, 0.0
      %v5910 = vsel %vm1132, %v5902, 0.0
      %v5911 = vsel %vm1131, %v5903, 0.0
      %v5912 = vsel %vm1132, %v5904, 0.0
      %v5913 = vsel %vm1131, %v5905, 0.0
      %v5914 = vsel %vm1132, %v5906, 0.0
      %v5915 = vpack.c.bf16 %v5909, %v5907
      %v5916 = vpack.c.bf16 %v5910, %v5908
      %v5917 = vpack.c.bf16 %v5913, %v5911
      %v5918 = vpack.c.bf16 %v5914, %v5912
      %v5923 = vunpack.c.l.b16 %v5915
      %v5924 = vunpack.c.l.b16 %v5916
      %v5925 = vunpack.c.h.b16 %v5915
      %v5926 = vunpack.c.h.b16 %v5916
      %v5927 = vunpack.c.l.b16 %v5917
      %v5928 = vunpack.c.l.b16 %v5918
      %v5929 = vunpack.c.h.b16 %v5917
      %v5930 = vunpack.c.h.b16 %v5918
      %v5931 = vpack.c.b16 %v5924, %v5923
      %v5932 = vpack.c.b16 %v5926, %v5925
      %v5933 = vpack.c.b16 %v5928, %v5927
      %v5934 = vpack.c.b16 %v5930, %v5929
      %5939 = vst [vmem:[%s4129 + $0x4] sm:$0xff] %v5931
      %5940 = vst [vmem:[%s4129 + $0x14] sm:$0xff] %v5932
      %5941 = vst [vmem:[%s4129 + $0x24] sm:$0xff] %v5933
      %v5942 = vld [vmem:[%s4129 + $0x34] sm:$0x11]
      %v5943 = vsel %vm408, %v5934, %v5942
      %5944 = vst [vmem:[%s4129 + $0x34] sm:$0x11] %v5943
      %v5945 = vld [vmem:[%s4129] sm:$0xff]
      %v5946 = vld [vmem:[%s4129 + $0x8] sm:$0xf]
      %v5947 = vld [vmem:[%s4129 + $0x10] sm:$0xff]
      %v5948 = vld [vmem:[%s4129 + $0x18] sm:$0xf]
      %v5949 = vld [vmem:[%s4129 + $0x20] sm:$0xff]
      %v5950 = vld [vmem:[%s4129 + $0x28] sm:$0xf]
      %v5951 = vld [vmem:[%s4129 + $0x30] sm:$0x11]
      %v5952 = vld [vmem:[%s4129 + $0x38] sm:$0x1]
      %v5953 = vld [vmem:[%s4129 + $0x4] sm:$0xff]
      %v5954 = vld [vmem:[%s4129 + $0x14] sm:$0xff]
      %v5955 = vld [vmem:[%s4129 + $0x24] sm:$0xff]
      %v5956 = vld [vmem:[%s4129 + $0x34] sm:$0x11]
      %v5957 = vld [vmem:[%s4129 + $0xc] sm:$0xf]
      %v5958 = vld [vmem:[%s4129 + $0x1c] sm:$0xf]
      %v5959 = vld [vmem:[%s4129 + $0x2c] sm:$0xf]
      %v5960 = vld [vmem:[%s4129 + $0x3c] sm:$0x1]
      %v5969 = vunpack.c.l.b16 %v5945
      %v5970 = vunpack.c.h.b16 %v5945
      %v5971 = vunpack.c.l.b16 %v5946
      %v5972 = vunpack.c.l.b16 %v5947
      %v5973 = vunpack.c.h.b16 %v5947
      %v5974 = vunpack.c.l.b16 %v5948
      %v5975 = vunpack.c.l.b16 %v5949
      %v5976 = vunpack.c.h.b16 %v5949
      %v5977 = vunpack.c.l.b16 %v5950
      %v5978 = vunpack.c.l.b16 %v5951
      %v5979 = vunpack.c.h.b16 %v5951
      %v5980 = vunpack.c.l.b16 %v5952
      %v5981 = vpack.c.b16 %v5972, %v5969
      %v5982 = vpack.c.b16 %v5973, %v5970
      %v5983 = vpack.c.b16 %v5974, %v5971
      %v5984 = vpack.c.b16 %v5978, %v5975
      %v5985 = vpack.c.b16 %v5979, %v5976
      %v5986 = vpack.c.b16 %v5980, %v5977
      %v5991 = vshrl.u32 %v5981, 16
      %v5993 = vrot.slane %v5991, 3
      %v5994 = vshll.u32 %v5981, 16
      %v5996 = vrot.slane %v5994, 4
      %v5997 = vor.u32 %v5993, %v5996
      %v5999 = vshrl.u32 %v5982, 16
      %v6001 = vrot.slane %v5999, 3
      %v6002 = vshll.u32 %v5982, 16
      %v6004 = vrot.slane %v6002, 4
      %v6005 = vor.u32 %v6001, %v6004
      %v6007 = vshrl.u32 %v5983, 16
      %v6009 = vrot.slane %v6007, 3
      %v6010 = vshll.u32 %v5983, 16
      %v6012 = vrot.slane %v6010, 4
      %v6013 = vor.u32 %v6009, %v6012
      %v6015 = vshrl.u32 %v5984, 16
      %v6017 = vrot.slane %v6015, 3
      %v6018 = vshll.u32 %v5984, 16
      %v6020 = vrot.slane %v6018, 4
      %v6021 = vor.u32 %v6017, %v6020
      %v6022 = vsel %vm406, %v5997, %v6021
      %v6024 = vshrl.u32 %v5985, 16
      %v6026 = vrot.slane %v6024, 3
      %v6027 = vshll.u32 %v5985, 16
      %v6029 = vrot.slane %v6027, 4
      %v6030 = vor.u32 %v6026, %v6029
      %v6031 = vsel %vm406, %v6005, %v6030
      %v6033 = vshrl.u32 %v5986, 16
      %v6035 = vrot.slane %v6033, 3
      %v6036 = vshll.u32 %v5986, 16
      %v6038 = vrot.slane %v6036, 4
      %v6039 = vor.u32 %v6035, %v6038
      %v6040 = vsel %vm406, %v6013, %v6039
      %6041 = vrot.lane.b32.xlu0 %v5997, 127
      %v6042 = vpop.permute.xlu0 %6041
      %6043 = vrot.lane.b32.xlu0 %v6005, 127
      %v6044 = vpop.permute.xlu0 %6043
      %6045 = vrot.lane.b32.xlu0 %v6013, 127
      %v6046 = vpop.permute.xlu0 %6045
      %6047 = vrot.lane.b32.xlu0 %v6022, 127
      %v6048 = vpop.permute.xlu0 %6047
      %6049 = vrot.lane.b32.xlu0 %v6031, 127
      %v6050 = vpop.permute.xlu0 %6049
      %6051 = vrot.lane.b32.xlu0 %v6040, 127
      %v6052 = vpop.permute.xlu0 %6051
      %6053 = vrot.lane.b32.xlu0 %v6021, 127
      %v6054 = vpop.permute.xlu0 %6053
      %6055 = vrot.lane.b32.xlu0 %v6030, 127
      %v6056 = vpop.permute.xlu0 %6055
      %6057 = vrot.lane.b32.xlu0 %v6039, 127
      %v6058 = vpop.permute.xlu0 %6057
      %v6059 = vsel %vm479, %v6042, %v6044
      %v6060 = vsel %vm479, %v6044, %v6046
      %v6061 = vsel %vm479, %v6048, %v6050
      %v6062 = vsel %vm479, %v6050, %v6052
      %v6063 = vsel %vm479, %v6054, %v6056
      %v6064 = vsel %vm479, %v6056, %v6058
      %v6068 = vrot.slane %v5981, 7
      %v6069 = vrot.slane %v5982, 7
      %v6070 = vrot.slane %v5983, 7
      %v6071 = vrot.slane %v5984, 7
      %v6072 = vsel %vm342, %v6068, %v6071
      %v6073 = vrot.slane %v5985, 7
      %v6074 = vsel %vm342, %v6069, %v6073
      %v6075 = vrot.slane %v5986, 7
      %v6076 = vsel %vm342, %v6070, %v6075
      %6077 = vrot.lane.b32.xlu0 %v6068, 126
      %v6078 = vpop.permute.xlu0 %6077
      %6079 = vrot.lane.b32.xlu0 %v6069, 126
      %v6080 = vpop.permute.xlu0 %6079
      %6081 = vrot.lane.b32.xlu0 %v6070, 126
      %v6082 = vpop.permute.xlu0 %6081
      %6083 = vrot.lane.b32.xlu0 %v6072, 126
      %v6084 = vpop.permute.xlu0 %6083
      %6085 = vrot.lane.b32.xlu0 %v6074, 126
      %v6086 = vpop.permute.xlu0 %6085
      %6087 = vrot.lane.b32.xlu0 %v6076, 126
      %v6088 = vpop.permute.xlu0 %6087
      %v6089 = vsel %vm494, %v6078, %v6080
      %v6090 = vsel %vm494, %v6080, %v6082
      %v6091 = vsel %vm494, %v6084, %v6086
      %v6092 = vsel %vm494, %v6086, %v6088
      %v6096 = vrot.slane %v5991, 2
      %v6097 = vrot.slane %v5994, 3
      %v6098 = vor.u32 %v6096, %v6097
      %v6099 = vrot.slane %v5999, 2
      %v6100 = vrot.slane %v6002, 3
      %v6101 = vor.u32 %v6099, %v6100
      %v6102 = vrot.slane %v6007, 2
      %v6103 = vrot.slane %v6010, 3
      %v6104 = vor.u32 %v6102, %v6103
      %v6105 = vrot.slane %v6015, 2
      %v6106 = vrot.slane %v6018, 3
      %v6107 = vor.u32 %v6105, %v6106
      %v6108 = vsel %vm776, %v6098, %v6107
      %v6109 = vrot.slane %v6024, 2
      %v6110 = vrot.slane %v6027, 3
      %v6111 = vor.u32 %v6109, %v6110
      %v6112 = vsel %vm776, %v6101, %v6111
      %v6113 = vrot.slane %v6033, 2
      %v6114 = vrot.slane %v6036, 3
      %v6115 = vor.u32 %v6113, %v6114
      %v6116 = vsel %vm776, %v6104, %v6115
      %6117 = vrot.lane.b32.xlu0 %v6098, 125
      %v6118 = vpop.permute.xlu0 %6117
      %6119 = vrot.lane.b32.xlu0 %v6101, 125
      %v6120 = vpop.permute.xlu0 %6119
      %6121 = vrot.lane.b32.xlu0 %v6104, 125
      %v6122 = vpop.permute.xlu0 %6121
      %6123 = vrot.lane.b32.xlu0 %v6108, 125
      %v6124 = vpop.permute.xlu0 %6123
      %6125 = vrot.lane.b32.xlu0 %v6112, 125
      %v6126 = vpop.permute.xlu0 %6125
      %6127 = vrot.lane.b32.xlu0 %v6116, 125
      %v6128 = vpop.permute.xlu0 %6127
      %6129 = vrot.lane.b32.xlu0 %v6107, 125
      %v6130 = vpop.permute.xlu0 %6129
      %6131 = vrot.lane.b32.xlu0 %v6111, 125
      %v6132 = vpop.permute.xlu0 %6131
      %6133 = vrot.lane.b32.xlu0 %v6115, 125
      %v6134 = vpop.permute.xlu0 %6133
      %v6135 = vsel %vm506, %v6118, %v6120
      %v6136 = vsel %vm506, %v6120, %v6122
      %v6137 = vsel %vm506, %v6124, %v6126
      %v6138 = vsel %vm506, %v6126, %v6128
      %v6139 = vsel %vm506, %v6130, %v6132
      %v6140 = vsel %vm506, %v6132, %v6134
      %v6144 = vrot.slane %v5981, 6
      %v6145 = vrot.slane %v5982, 6
      %v6146 = vrot.slane %v5983, 6
      %v6147 = vrot.slane %v5984, 6
      %v6148 = vsel %vm700, %v6144, %v6147
      %v6149 = vrot.slane %v5985, 6
      %v6150 = vsel %vm700, %v6145, %v6149
      %v6151 = vrot.slane %v5986, 6
      %v6152 = vsel %vm700, %v6146, %v6151
      %6153 = vrot.lane.b32.xlu0 %v6144, 124
      %v6154 = vpop.permute.xlu0 %6153
      %6155 = vrot.lane.b32.xlu0 %v6145, 124
      %v6156 = vpop.permute.xlu0 %6155
      %6157 = vrot.lane.b32.xlu0 %v6146, 124
      %v6158 = vpop.permute.xlu0 %6157
      %6159 = vrot.lane.b32.xlu0 %v6148, 124
      %v6160 = vpop.permute.xlu0 %6159
      %6161 = vrot.lane.b32.xlu0 %v6150, 124
      %v6162 = vpop.permute.xlu0 %6161
      %6163 = vrot.lane.b32.xlu0 %v6152, 124
      %v6164 = vpop.permute.xlu0 %6163
      %v6165 = vsel %vm521, %v6154, %v6156
      %v6166 = vsel %vm521, %v6156, %v6158
      %v6167 = vsel %vm521, %v6160, %v6162
      %v6168 = vsel %vm521, %v6162, %v6164
      %v6172 = vrot.slane %v5991, 1
      %v6173 = vrot.slane %v5994, 2
      %v6174 = vor.u32 %v6172, %v6173
      %v6175 = vrot.slane %v5999, 1
      %v6176 = vrot.slane %v6002, 2
      %v6177 = vor.u32 %v6175, %v6176
      %v6178 = vrot.slane %v6007, 1
      %v6179 = vrot.slane %v6010, 2
      %v6180 = vor.u32 %v6178, %v6179
      %v6181 = vrot.slane %v6015, 1
      %v6182 = vrot.slane %v6018, 2
      %v6183 = vor.u32 %v6181, %v6182
      %v6184 = vsel %vm795, %v6174, %v6183
      %v6185 = vrot.slane %v6024, 1
      %v6186 = vrot.slane %v6027, 2
      %v6187 = vor.u32 %v6185, %v6186
      %v6188 = vsel %vm795, %v6177, %v6187
      %v6189 = vrot.slane %v6033, 1
      %v6190 = vrot.slane %v6036, 2
      %v6191 = vor.u32 %v6189, %v6190
      %v6192 = vsel %vm795, %v6180, %v6191
      %6193 = vrot.lane.b32.xlu0 %v6174, 123
      %v6194 = vpop.permute.xlu0 %6193
      %6195 = vrot.lane.b32.xlu0 %v6177, 123
      %v6196 = vpop.permute.xlu0 %6195
      %6197 = vrot.lane.b32.xlu0 %v6180, 123
      %v6198 = vpop.permute.xlu0 %6197
      %6199 = vrot.lane.b32.xlu0 %v6184, 123
      %v6200 = vpop.permute.xlu0 %6199
      %6201 = vrot.lane.b32.xlu0 %v6188, 123
      %v6202 = vpop.permute.xlu0 %6201
      %6203 = vrot.lane.b32.xlu0 %v6192, 123
      %v6204 = vpop.permute.xlu0 %6203
      %6205 = vrot.lane.b32.xlu0 %v6183, 123
      %v6206 = vpop.permute.xlu0 %6205
      %6207 = vrot.lane.b32.xlu0 %v6187, 123
      %v6208 = vpop.permute.xlu0 %6207
      %6209 = vrot.lane.b32.xlu0 %v6191, 123
      %v6210 = vpop.permute.xlu0 %6209
      %v6211 = vsel %vm533, %v6194, %v6196
      %v6212 = vsel %vm533, %v6196, %v6198
      %v6213 = vsel %vm533, %v6200, %v6202
      %v6214 = vsel %vm533, %v6202, %v6204
      %v6215 = vsel %vm533, %v6206, %v6208
      %v6216 = vsel %vm533, %v6208, %v6210
      %v6220 = vrot.slane %v5981, 5
      %v6221 = vrot.slane %v5982, 5
      %v6222 = vrot.slane %v5983, 5
      %v6223 = vrot.slane %v5984, 5
      %v6224 = vsel %vm719, %v6220, %v6223
      %v6225 = vrot.slane %v5985, 5
      %v6226 = vsel %vm719, %v6221, %v6225
      %v6227 = vrot.slane %v5986, 5
      %v6228 = vsel %vm719, %v6222, %v6227
      %6229 = vrot.lane.b32.xlu0 %v6220, 122
      %v6230 = vpop.permute.xlu0 %6229
      %6231 = vrot.lane.b32.xlu0 %v6221, 122
      %v6232 = vpop.permute.xlu0 %6231
      %6233 = vrot.lane.b32.xlu0 %v6222, 122
      %v6234 = vpop.permute.xlu0 %6233
      %6235 = vrot.lane.b32.xlu0 %v6224, 122
      %v6236 = vpop.permute.xlu0 %6235
      %6237 = vrot.lane.b32.xlu0 %v6226, 122
      %v6238 = vpop.permute.xlu0 %6237
      %6239 = vrot.lane.b32.xlu0 %v6228, 122
      %v6240 = vpop.permute.xlu0 %6239
      %v6241 = vsel %vm548, %v6230, %v6232
      %v6242 = vsel %vm548, %v6232, %v6234
      %v6243 = vsel %vm548, %v6236, %v6238
      %v6244 = vsel %vm548, %v6238, %v6240
      %v6252 = vunpack.c.l.b16 %v5953
      %v6253 = vunpack.c.h.b16 %v5953
      %v6254 = vunpack.c.l.b16 %v5954
      %v6255 = vunpack.c.h.b16 %v5954
      %v6256 = vunpack.c.l.b16 %v5955
      %v6257 = vunpack.c.h.b16 %v5955
      %v6258 = vunpack.c.l.b16 %v5956
      %v6259 = vunpack.c.h.b16 %v5956
      %v6260 = vpack.c.b16 %v6254, %v6252
      %v6261 = vpack.c.b16 %v6255, %v6253
      %v6262 = vpack.c.b16 %v6258, %v6256
      %v6263 = vpack.c.b16 %v6259, %v6257
      %v6265 = vshll.u32 %v6260, 16
      %v6267 = vrot.slane %v6265, 1
      %v6269 = vshll.u32 %v6261, 16
      %v6271 = vrot.slane %v6269, 1
      %v6272 = vshrl.u32 %v6260, 16
      %v6274 = vor.u32 %v6272, %v6267
      %v6276 = vshll.u32 %v6262, 16
      %v6278 = vrot.slane %v6276, 1
      %v6279 = vsel %vm814, %v6274, %v6278
      %v6280 = vshrl.u32 %v6261, 16
      %v6282 = vor.u32 %v6280, %v6271
      %v6284 = vshll.u32 %v6263, 16
      %v6286 = vrot.slane %v6284, 1
      %v6287 = vsel %vm814, %v6282, %v6286
      %v6288 = vshrl.u32 %v6262, 16
      %v6290 = vor.u32 %v6288, %v6278
      %v6291 = vshrl.u32 %v6263, 16
      %v6293 = vor.u32 %v6291, %v6286
      %6294 = vrot.lane.b32.xlu0 %v6267, 121
      %v6295 = vpop.permute.xlu0 %6294
      %6296 = vrot.lane.b32.xlu0 %v6271, 121
      %v6297 = vpop.permute.xlu0 %6296
      %6298 = vrot.lane.b32.xlu0 %v6279, 121
      %v6299 = vpop.permute.xlu0 %6298
      %6300 = vrot.lane.b32.xlu0 %v6287, 121
      %v6301 = vpop.permute.xlu0 %6300
      %6302 = vrot.lane.b32.xlu0 %v6290, 121
      %v6303 = vpop.permute.xlu0 %6302
      %6304 = vrot.lane.b32.xlu0 %v6293, 121
      %v6305 = vpop.permute.xlu0 %6304
      %v6306 = vsel %vm560, %v6295, %v6297
      %v6307 = vsel %vm560, %v6299, %v6301
      %v6308 = vsel %vm560, %v6303, %v6305
      %v6316 = vunpack.c.l.b16 %v5957
      %v6317 = vunpack.c.l.b16 %v5958
      %v6318 = vunpack.c.l.b16 %v5959
      %v6319 = vunpack.c.l.b16 %v5960
      %v6320 = vpack.c.b16 %v6252, %v6252
      %v6321 = vpack.c.b16 %v6253, %v6253
      %v6322 = vpack.c.b16 %v6316, %v6316
      %v6323 = vpack.c.b16 %v6256, %v6254
      %v6324 = vpack.c.b16 %v6257, %v6255
      %v6325 = vpack.c.b16 %v6318, %v6317
      %v6326 = vpack.c.b16 %v6258, %v6258
      %v6327 = vpack.c.b16 %v6259, %v6259
      %v6328 = vpack.c.b16 %v6319, %v6319
      %6329 = vrot.lane.b32.xlu0 %v6320, 120
      %v6330 = vpop.permute.xlu0 %6329
      %6331 = vrot.lane.b32.xlu0 %v6321, 120
      %v6332 = vpop.permute.xlu0 %6331
      %6333 = vrot.lane.b32.xlu0 %v6322, 120
      %v6334 = vpop.permute.xlu0 %6333
      %6335 = vrot.lane.b32.xlu0 %v6323, 120
      %v6336 = vpop.permute.xlu0 %6335
      %6337 = vrot.lane.b32.xlu0 %v6324, 120
      %v6338 = vpop.permute.xlu0 %6337
      %6339 = vrot.lane.b32.xlu0 %v6325, 120
      %v6340 = vpop.permute.xlu0 %6339
      %6341 = vrot.lane.b32.xlu0 %v6326, 120
      %v6342 = vpop.permute.xlu0 %6341
      %6343 = vrot.lane.b32.xlu0 %v6327, 120
      %v6344 = vpop.permute.xlu0 %6343
      %6345 = vrot.lane.b32.xlu0 %v6328, 120
      %v6346 = vpop.permute.xlu0 %6345
      %v6347 = vsel %vm572, %v6330, %v6332
      %v6348 = vsel %vm572, %v6332, %v6334
      %v6349 = vsel %vm572, %v6336, %v6338
      %v6350 = vsel %vm572, %v6338, %v6340
      %v6351 = vsel %vm572, %v6342, %v6344
      %v6352 = vsel %vm572, %v6344, %v6346
      %v6356 = vpack.c.b16 %v6317, %v6316
      %v6357 = vpack.c.b16 %v6319, %v6318
      %v6358 = vrot.slane %v6272, 7
      %v6359 = vor.u32 %v6358, %v6265
      %v6360 = vrot.slane %v6280, 7
      %v6361 = vor.u32 %v6360, %v6269
      %v6363 = vshrl.u32 %v6356, 16
      %v6365 = vrot.slane %v6363, 7
      %v6366 = vshll.u32 %v6356, 16
      %v6368 = vor.u32 %v6365, %v6366
      %v6369 = vrot.slane %v6288, 7
      %v6370 = vor.u32 %v6369, %v6276
      %v6371 = vsel %vm343, %v6358, %v6370
      %v6372 = vrot.slane %v6291, 7
      %v6373 = vor.u32 %v6372, %v6284
      %v6374 = vsel %vm343, %v6360, %v6373
      %v6376 = vshrl.u32 %v6357, 16
      %v6378 = vrot.slane %v6376, 7
      %v6379 = vshll.u32 %v6357, 16
      %v6381 = vor.u32 %v6378, %v6379
      %v6382 = vsel %vm343, %v6365, %v6381
      %6383 = vrot.lane.b32.xlu0 %v6359, 119
      %v6384 = vpop.permute.xlu0 %6383
      %6385 = vrot.lane.b32.xlu0 %v6361, 119
      %v6386 = vpop.permute.xlu0 %6385
      %6387 = vrot.lane.b32.xlu0 %v6368, 119
      %v6388 = vpop.permute.xlu0 %6387
      %6389 = vrot.lane.b32.xlu0 %v6371, 119
      %v6390 = vpop.permute.xlu0 %6389
      %6391 = vrot.lane.b32.xlu0 %v6374, 119
      %v6392 = vpop.permute.xlu0 %6391
      %6393 = vrot.lane.b32.xlu0 %v6382, 119
      %v6394 = vpop.permute.xlu0 %6393
      %v6395 = vsel %vm584, %v6384, %v6386
      %v6396 = vsel %vm584, %v6386, %v6388
      %v6397 = vsel %vm584, %v6390, %v6392
      %v6398 = vsel %vm584, %v6392, %v6394
      %v6402 = vrot.slane %v6260, 3
      %v6403 = vrot.slane %v6261, 3
      %v6404 = vrot.slane %v6356, 3
      %v6405 = vrot.slane %v6262, 3
      %v6406 = vsel %vm757, %v6402, %v6405
      %v6407 = vrot.slane %v6263, 3
      %v6408 = vsel %vm757, %v6403, %v6407
      %v6409 = vrot.slane %v6357, 3
      %v6410 = vsel %vm757, %v6404, %v6409
      %6411 = vrot.lane.b32.xlu0 %v6402, 118
      %v6412 = vpop.permute.xlu0 %6411
      %6413 = vrot.lane.b32.xlu0 %v6403, 118
      %v6414 = vpop.permute.xlu0 %6413
      %6415 = vrot.lane.b32.xlu0 %v6404, 118
      %v6416 = vpop.permute.xlu0 %6415
      %6417 = vrot.lane.b32.xlu0 %v6406, 118
      %v6418 = vpop.permute.xlu0 %6417
      %6419 = vrot.lane.b32.xlu0 %v6408, 118
      %v6420 = vpop.permute.xlu0 %6419
      %6421 = vrot.lane.b32.xlu0 %v6410, 118
      %v6422 = vpop.permute.xlu0 %6421
      %6423 = vrot.lane.b32.xlu0 %v6405, 118
      %v6424 = vpop.permute.xlu0 %6423
      %6425 = vrot.lane.b32.xlu0 %v6407, 118
      %v6426 = vpop.permute.xlu0 %6425
      %6427 = vrot.lane.b32.xlu0 %v6409, 118
      %v6428 = vpop.permute.xlu0 %6427
      %v6429 = vsel %vm599, %v6412, %v6414
      %v6430 = vsel %vm599, %v6414, %v6416
      %v6431 = vsel %vm599, %v6418, %v6420
      %v6432 = vsel %vm599, %v6420, %v6422
      %v6433 = vsel %vm599, %v6424, %v6426
      %v6434 = vsel %vm599, %v6426, %v6428
      %v6438 = vrot.slane %v6272, 6
      %v6439 = vrot.slane %v6265, 7
      %v6440 = vor.u32 %v6438, %v6439
      %v6441 = vrot.slane %v6280, 6
      %v6442 = vrot.slane %v6269, 7
      %v6443 = vor.u32 %v6441, %v6442
      %v6444 = vrot.slane %v6363, 6
      %v6445 = vrot.slane %v6366, 7
      %v6446 = vor.u32 %v6444, %v6445
      %v6447 = vrot.slane %v6288, 6
      %v6448 = vrot.slane %v6276, 7
      %v6449 = vor.u32 %v6447, %v6448
      %v6450 = vsel %vm701, %v6440, %v6449
      %v6451 = vrot.slane %v6291, 6
      %v6452 = vrot.slane %v6284, 7
      %v6453 = vor.u32 %v6451, %v6452
      %v6454 = vsel %vm701, %v6443, %v6453
      %v6455 = vrot.slane %v6376, 6
      %v6456 = vrot.slane %v6379, 7
      %v6457 = vor.u32 %v6455, %v6456
      %v6458 = vsel %vm701, %v6446, %v6457
      %6459 = vrot.lane.b32.xlu0 %v6440, 117
      %v6460 = vpop.permute.xlu0 %6459
      %6461 = vrot.lane.b32.xlu0 %v6443, 117
      %v6462 = vpop.permute.xlu0 %6461
      %6463 = vrot.lane.b32.xlu0 %v6446, 117
      %v6464 = vpop.permute.xlu0 %6463
      %6465 = vrot.lane.b32.xlu0 %v6450, 117
      %v6466 = vpop.permute.xlu0 %6465
      %6467 = vrot.lane.b32.xlu0 %v6454, 117
      %v6468 = vpop.permute.xlu0 %6467
      %6469 = vrot.lane.b32.xlu0 %v6458, 117
      %v6470 = vpop.permute.xlu0 %6469
      %v6471 = vsel %vm611, %v6460, %v6462
      %v6472 = vsel %vm611, %v6462, %v6464
      %v6473 = vsel %vm611, %v6466, %v6468
      %v6474 = vsel %vm611, %v6468, %v6470
      %v6478 = vrot.slane %v6260, 2
      %v6479 = vrot.slane %v6261, 2
      %v6480 = vrot.slane %v6356, 2
      %v6481 = vrot.slane %v6262, 2
      %v6482 = vsel %vm775, %v6478, %v6481
      %v6483 = vrot.slane %v6263, 2
      %v6484 = vsel %vm775, %v6479, %v6483
      %v6485 = vrot.slane %v6357, 2
      %v6486 = vsel %vm775, %v6480, %v6485
      %6487 = vrot.lane.b32.xlu0 %v6478, 116
      %v6488 = vpop.permute.xlu0 %6487
      %6489 = vrot.lane.b32.xlu0 %v6479, 116
      %v6490 = vpop.permute.xlu0 %6489
      %6491 = vrot.lane.b32.xlu0 %v6480, 116
      %v6492 = vpop.permute.xlu0 %6491
      %6493 = vrot.lane.b32.xlu0 %v6482, 116
      %v6494 = vpop.permute.xlu0 %6493
      %6495 = vrot.lane.b32.xlu0 %v6484, 116
      %v6496 = vpop.permute.xlu0 %6495
      %6497 = vrot.lane.b32.xlu0 %v6486, 116
      %v6498 = vpop.permute.xlu0 %6497
      %6499 = vrot.lane.b32.xlu0 %v6481, 116
      %v6500 = vpop.permute.xlu0 %6499
      %6501 = vrot.lane.b32.xlu0 %v6483, 116
      %v6502 = vpop.permute.xlu0 %6501
      %6503 = vrot.lane.b32.xlu0 %v6485, 116
      %v6504 = vpop.permute.xlu0 %6503
      %v6505 = vsel %vm628, %v6488, %v6490
      %v6506 = vsel %vm628, %v6490, %v6492
      %v6507 = vsel %vm628, %v6494, %v6496
      %v6508 = vsel %vm628, %v6496, %v6498
      %v6509 = vsel %vm628, %v6500, %v6502
      %v6510 = vsel %vm628, %v6502, %v6504
      %v6514 = vrot.slane %v6272, 5
      %v6515 = vrot.slane %v6265, 6
      %v6516 = vor.u32 %v6514, %v6515
      %v6517 = vrot.slane %v6280, 5
      %v6518 = vrot.slane %v6269, 6
      %v6519 = vor.u32 %v6517, %v6518
      %v6520 = vrot.slane %v6363, 5
      %v6521 = vrot.slane %v6366, 6
      %v6522 = vor.u32 %v6520, %v6521
      %v6523 = vrot.slane %v6288, 5
      %v6524 = vrot.slane %v6276, 6
      %v6525 = vor.u32 %v6523, %v6524
      %v6526 = vsel %vm720, %v6516, %v6525
      %v6527 = vrot.slane %v6291, 5
      %v6528 = vrot.slane %v6284, 6
      %v6529 = vor.u32 %v6527, %v6528
      %v6530 = vsel %vm720, %v6519, %v6529
      %v6531 = vrot.slane %v6376, 5
      %v6532 = vrot.slane %v6379, 6
      %v6533 = vor.u32 %v6531, %v6532
      %v6534 = vsel %vm720, %v6522, %v6533
      %6535 = vrot.lane.b32.xlu0 %v6516, 115
      %v6536 = vpop.permute.xlu0 %6535
      %6537 = vrot.lane.b32.xlu0 %v6519, 115
      %v6538 = vpop.permute.xlu0 %6537
      %6539 = vrot.lane.b32.xlu0 %v6522, 115
      %v6540 = vpop.permute.xlu0 %6539
      %6541 = vrot.lane.b32.xlu0 %v6526, 115
      %v6542 = vpop.permute.xlu0 %6541
      %6543 = vrot.lane.b32.xlu0 %v6530, 115
      %v6544 = vpop.permute.xlu0 %6543
      %6545 = vrot.lane.b32.xlu0 %v6534, 115
      %v6546 = vpop.permute.xlu0 %6545
      %v6547 = vsel %vm651, %v6536, %v6538
      %v6548 = vsel %vm651, %v6538, %v6540
      %v6549 = vsel %vm651, %v6542, %v6544
      %v6550 = vsel %vm651, %v6544, %v6546
      %v6554 = vrot.slane %v6260, 1
      %v6555 = vrot.slane %v6261, 1
      %v6556 = vrot.slane %v6356, 1
      %v6557 = vrot.slane %v6262, 1
      %v6558 = vsel %vm794, %v6554, %v6557
      %v6559 = vrot.slane %v6263, 1
      %v6560 = vsel %vm794, %v6555, %v6559
      %v6561 = vrot.slane %v6357, 1
      %v6562 = vsel %vm794, %v6556, %v6561
      %6563 = vrot.lane.b32.xlu0 %v6554, 114
      %v6564 = vpop.permute.xlu0 %6563
      %6565 = vrot.lane.b32.xlu0 %v6555, 114
      %v6566 = vpop.permute.xlu0 %6565
      %6567 = vrot.lane.b32.xlu0 %v6556, 114
      %v6568 = vpop.permute.xlu0 %6567
      %6569 = vrot.lane.b32.xlu0 %v6558, 114
      %v6570 = vpop.permute.xlu0 %6569
      %6571 = vrot.lane.b32.xlu0 %v6560, 114
      %v6572 = vpop.permute.xlu0 %6571
      %6573 = vrot.lane.b32.xlu0 %v6562, 114
      %v6574 = vpop.permute.xlu0 %6573
      %6575 = vrot.lane.b32.xlu0 %v6557, 114
      %v6576 = vpop.permute.xlu0 %6575
      %6577 = vrot.lane.b32.xlu0 %v6559, 114
      %v6578 = vpop.permute.xlu0 %6577
      %6579 = vrot.lane.b32.xlu0 %v6561, 114
      %v6580 = vpop.permute.xlu0 %6579
      %v6581 = vsel %vm666, %v6564, %v6566
      %v6582 = vsel %vm666, %v6566, %v6568
      %v6583 = vsel %vm666, %v6570, %v6572
      %v6584 = vsel %vm666, %v6572, %v6574
      %v6585 = vsel %vm666, %v6576, %v6578
      %v6586 = vsel %vm666, %v6578, %v6580
      %v6587 = vsel %vm758, %v5984, %v6059
      %v6588 = vsel %vm758, %v5985, %v6060
      %v6589 = vsel %vm758, %v5986, %v6046
      %v6592 = vsel %vm687, %v6063, %v6089
      %v6595 = vsel %vm687, %v6064, %v6090
      %v6598 = vsel %vm687, %v6058, %v6082
      %v6599 = vsel %vm777, %v6091, %v6135
      %v6600 = vsel %vm777, %v6092, %v6136
      %v6601 = vsel %vm777, %v6088, %v6122
      %v6604 = vsel %vm706, %v6139, %v6165
      %v6607 = vsel %vm706, %v6140, %v6166
      %v6610 = vsel %vm706, %v6134, %v6158
      %v6611 = vsel %vm796, %v6167, %v6211
      %v6612 = vsel %vm796, %v6168, %v6212
      %v6613 = vsel %vm796, %v6164, %v6198
      %v6616 = vsel %vm725, %v6215, %v6241
      %v6619 = vsel %vm725, %v6216, %v6242
      %v6622 = vsel %vm725, %v6210, %v6234
      %v6623 = vsel %vm815, %v6243, %v6295
      %v6624 = vsel %vm815, %v6244, %v6306
      %v6625 = vsel %vm815, %v6240, %v6297
      %v6628 = vsel %vm744, %v6303, %v6330
      %v6631 = vsel %vm744, %v6308, %v6347
      %v6634 = vsel %vm744, %v6305, %v6348
      %v6635 = vsel %vm344, %v6342, %v6384
      %v6636 = vsel %vm344, %v6351, %v6395
      %v6637 = vsel %vm344, %v6352, %v6396
      %v6640 = vsel %vm762, %v6390, %v6412
      %v6643 = vsel %vm762, %v6397, %v6429
      %v6646 = vsel %vm762, %v6398, %v6430
      %v6647 = vsel %vm702, %v6424, %v6460
      %v6648 = vsel %vm702, %v6433, %v6471
      %v6649 = vsel %vm702, %v6434, %v6472
      %v6652 = vsel %vm781, %v6466, %v6488
      %v6655 = vsel %vm781, %v6473, %v6505
      %v6658 = vsel %vm781, %v6474, %v6506
      %v6659 = vsel %vm721, %v6500, %v6536
      %v6660 = vsel %vm721, %v6509, %v6547
      %v6661 = vsel %vm721, %v6510, %v6548
      %v6664 = vsel %vm800, %v6542, %v6564
      %v6667 = vsel %vm800, %v6549, %v6581
      %v6670 = vsel %vm800, %v6550, %v6582
      %6713 = vrot.lane.b32.xlu0 %v5981, 7
      %v6714 = vpop.permute.xlu0 %6713
      %6715 = vrot.lane.b32.xlu0 %v5982, 7
      %v6716 = vpop.permute.xlu0 %6715
      %6717 = vrot.lane.b32.xlu0 %v5983, 7
      %v6718 = vpop.permute.xlu0 %6717
      %6719 = vrot.lane.b32.xlu0 %v6587, 7
      %v6720 = vpop.permute.xlu0 %6719
      %6721 = vrot.lane.b32.xlu0 %v6588, 7
      %v6722 = vpop.permute.xlu0 %6721
      %6723 = vrot.lane.b32.xlu0 %v6589, 7
      %v6724 = vpop.permute.xlu0 %6723
      %6725 = vrot.lane.b32.xlu0 %v6061, 7
      %v6726 = vpop.permute.xlu0 %6725
      %6727 = vrot.lane.b32.xlu0 %v6062, 7
      %v6728 = vpop.permute.xlu0 %6727
      %6729 = vrot.lane.b32.xlu0 %v6052, 7
      %v6730 = vpop.permute.xlu0 %6729
      %6731 = vrot.lane.b32.xlu0 %v6592, 7
      %v6732 = vpop.permute.xlu0 %6731
      %6733 = vrot.lane.b32.xlu0 %v6595, 7
      %v6734 = vpop.permute.xlu0 %6733
      %6735 = vrot.lane.b32.xlu0 %v6598, 7
      %v6736 = vpop.permute.xlu0 %6735
      %6737 = vrot.lane.b32.xlu0 %v6599, 7
      %v6738 = vpop.permute.xlu0 %6737
      %6739 = vrot.lane.b32.xlu0 %v6600, 7
      %v6740 = vpop.permute.xlu0 %6739
      %6741 = vrot.lane.b32.xlu0 %v6601, 7
      %v6742 = vpop.permute.xlu0 %6741
      %6743 = vrot.lane.b32.xlu0 %v6137, 7
      %v6744 = vpop.permute.xlu0 %6743
      %6745 = vrot.lane.b32.xlu0 %v6138, 7
      %v6746 = vpop.permute.xlu0 %6745
      %6747 = vrot.lane.b32.xlu0 %v6128, 7
      %v6748 = vpop.permute.xlu0 %6747
      %6749 = vrot.lane.b32.xlu0 %v6604, 7
      %v6750 = vpop.permute.xlu0 %6749
      %6751 = vrot.lane.b32.xlu0 %v6607, 7
      %v6752 = vpop.permute.xlu0 %6751
      %6753 = vrot.lane.b32.xlu0 %v6610, 7
      %v6754 = vpop.permute.xlu0 %6753
      %6755 = vrot.lane.b32.xlu0 %v6611, 7
      %v6756 = vpop.permute.xlu0 %6755
      %6757 = vrot.lane.b32.xlu0 %v6612, 7
      %v6758 = vpop.permute.xlu0 %6757
      %6759 = vrot.lane.b32.xlu0 %v6613, 7
      %v6760 = vpop.permute.xlu0 %6759
      %6761 = vrot.lane.b32.xlu0 %v6213, 7
      %v6762 = vpop.permute.xlu0 %6761
      %6763 = vrot.lane.b32.xlu0 %v6214, 7
      %v6764 = vpop.permute.xlu0 %6763
      %6765 = vrot.lane.b32.xlu0 %v6204, 7
      %v6766 = vpop.permute.xlu0 %6765
      %6767 = vrot.lane.b32.xlu0 %v6616, 7
      %v6768 = vpop.permute.xlu0 %6767
      %6769 = vrot.lane.b32.xlu0 %v6619, 7
      %v6770 = vpop.permute.xlu0 %6769
      %6771 = vrot.lane.b32.xlu0 %v6622, 7
      %v6772 = vpop.permute.xlu0 %6771
      %6773 = vrot.lane.b32.xlu0 %v6623, 7
      %v6774 = vpop.permute.xlu0 %6773
      %6775 = vrot.lane.b32.xlu0 %v6624, 7
      %v6776 = vpop.permute.xlu0 %6775
      %6777 = vrot.lane.b32.xlu0 %v6625, 7
      %v6778 = vpop.permute.xlu0 %6777
      %6779 = vrot.lane.b32.xlu0 %v6299, 7
      %v6780 = vpop.permute.xlu0 %6779
      %6781 = vrot.lane.b32.xlu0 %v6307, 7
      %v6782 = vpop.permute.xlu0 %6781
      %6783 = vrot.lane.b32.xlu0 %v6301, 7
      %v6784 = vpop.permute.xlu0 %6783
      %6785 = vrot.lane.b32.xlu0 %v6628, 7
      %v6786 = vpop.permute.xlu0 %6785
      %6787 = vrot.lane.b32.xlu0 %v6631, 7
      %v6788 = vpop.permute.xlu0 %6787
      %6789 = vrot.lane.b32.xlu0 %v6634, 7
      %v6790 = vpop.permute.xlu0 %6789
      %6791 = vrot.lane.b32.xlu0 %v6336, 7
      %v6792 = vpop.permute.xlu0 %6791
      %6793 = vrot.lane.b32.xlu0 %v6349, 7
      %v6794 = vpop.permute.xlu0 %6793
      %6795 = vrot.lane.b32.xlu0 %v6350, 7
      %v6796 = vpop.permute.xlu0 %6795
      %6797 = vrot.lane.b32.xlu0 %v6635, 7
      %v6798 = vpop.permute.xlu0 %6797
      %6799 = vrot.lane.b32.xlu0 %v6636, 7
      %v6800 = vpop.permute.xlu0 %6799
      %6801 = vrot.lane.b32.xlu0 %v6637, 7
      %v6802 = vpop.permute.xlu0 %6801
      %6803 = vrot.lane.b32.xlu0 %v6640, 7
      %v6804 = vpop.permute.xlu0 %6803
      %6805 = vrot.lane.b32.xlu0 %v6643, 7
      %v6806 = vpop.permute.xlu0 %6805
      %6807 = vrot.lane.b32.xlu0 %v6646, 7
      %v6808 = vpop.permute.xlu0 %6807
      %6809 = vrot.lane.b32.xlu0 %v6418, 7
      %v6810 = vpop.permute.xlu0 %6809
      %6811 = vrot.lane.b32.xlu0 %v6431, 7
      %v6812 = vpop.permute.xlu0 %6811
      %6813 = vrot.lane.b32.xlu0 %v6432, 7
      %v6814 = vpop.permute.xlu0 %6813
      %6815 = vrot.lane.b32.xlu0 %v6647, 7
      %v6816 = vpop.permute.xlu0 %6815
      %6817 = vrot.lane.b32.xlu0 %v6648, 7
      %v6818 = vpop.permute.xlu0 %6817
      %6819 = vrot.lane.b32.xlu0 %v6649, 7
      %v6820 = vpop.permute.xlu0 %6819
      %6821 = vrot.lane.b32.xlu0 %v6652, 7
      %v6822 = vpop.permute.xlu0 %6821
      %6823 = vrot.lane.b32.xlu0 %v6655, 7
      %v6824 = vpop.permute.xlu0 %6823
      %6825 = vrot.lane.b32.xlu0 %v6658, 7
      %v6826 = vpop.permute.xlu0 %6825
      %6827 = vrot.lane.b32.xlu0 %v6494, 7
      %v6828 = vpop.permute.xlu0 %6827
      %6829 = vrot.lane.b32.xlu0 %v6507, 7
      %v6830 = vpop.permute.xlu0 %6829
      %6831 = vrot.lane.b32.xlu0 %v6508, 7
      %v6832 = vpop.permute.xlu0 %6831
      %6833 = vrot.lane.b32.xlu0 %v6659, 7
      %v6834 = vpop.permute.xlu0 %6833
      %6835 = vrot.lane.b32.xlu0 %v6660, 7
      %v6836 = vpop.permute.xlu0 %6835
      %6837 = vrot.lane.b32.xlu0 %v6661, 7
      %v6838 = vpop.permute.xlu0 %6837
      %6839 = vrot.lane.b32.xlu0 %v6664, 7
      %v6840 = vpop.permute.xlu0 %6839
      %6841 = vrot.lane.b32.xlu0 %v6667, 7
      %v6842 = vpop.permute.xlu0 %6841
      %6843 = vrot.lane.b32.xlu0 %v6670, 7
      %v6844 = vpop.permute.xlu0 %6843
      %6845 = vrot.lane.b32.xlu0 %v6570, 7
      %v6846 = vpop.permute.xlu0 %6845
      %6847 = vrot.lane.b32.xlu0 %v6583, 7
      %v6848 = vpop.permute.xlu0 %6847
      %6849 = vrot.lane.b32.xlu0 %v6584, 7
      %v6850 = vpop.permute.xlu0 %6849
      %6851 = vrot.lane.b32.xlu0 %v6576, 7
      %v6852 = vpop.permute.xlu0 %6851
      %6853 = vrot.lane.b32.xlu0 %v6585, 7
      %v6854 = vpop.permute.xlu0 %6853
      %6855 = vrot.lane.b32.xlu0 %v6586, 7
      %v6856 = vpop.permute.xlu0 %6855
      %v6857 = vsel %vm2133, %v6714, %v6716
      %v6858 = vsel %vm2133, %v6716, %v6718
      %v6859 = vsel %vm2133, %v6720, %v6722
      %v6860 = vsel %vm2133, %v6722, %v6724
      %v6861 = vsel %vm2133, %v6726, %v6728
      %v6862 = vsel %vm2133, %v6728, %v6730
      %v6863 = vsel %vm2133, %v6732, %v6734
      %v6864 = vsel %vm2133, %v6734, %v6736
      %v6865 = vsel %vm2133, %v6738, %v6740
      %v6866 = vsel %vm2133, %v6740, %v6742
      %v6867 = vsel %vm2133, %v6744, %v6746
      %v6868 = vsel %vm2133, %v6746, %v6748
      %v6869 = vsel %vm2133, %v6750, %v6752
      %v6870 = vsel %vm2133, %v6752, %v6754
      %v6871 = vsel %vm2133, %v6756, %v6758
      %v6872 = vsel %vm2133, %v6758, %v6760
      %v6873 = vsel %vm2133, %v6762, %v6764
      %v6874 = vsel %vm2133, %v6764, %v6766
      %v6875 = vsel %vm2133, %v6768, %v6770
      %v6876 = vsel %vm2133, %v6770, %v6772
      %v6877 = vsel %vm2133, %v6774, %v6776
      %v6878 = vsel %vm2133, %v6776, %v6778
      %v6879 = vsel %vm2133, %v6780, %v6782
      %v6880 = vsel %vm2133, %v6782, %v6784
      %v6881 = vsel %vm2133, %v6786, %v6788
      %v6882 = vsel %vm2133, %v6788, %v6790
      %v6883 = vsel %vm2133, %v6792, %v6794
      %v6884 = vsel %vm2133, %v6794, %v6796
      %v6885 = vsel %vm2133, %v6798, %v6800
      %v6886 = vsel %vm2133, %v6800, %v6802
      %v6887 = vsel %vm2133, %v6804, %v6806
      %v6888 = vsel %vm2133, %v6806, %v6808
      %v6889 = vsel %vm2133, %v6810, %v6812
      %v6890 = vsel %vm2133, %v6812, %v6814
      %v6891 = vsel %vm2133, %v6816, %v6818
      %v6892 = vsel %vm2133, %v6818, %v6820
      %v6893 = vsel %vm2133, %v6822, %v6824
      %v6894 = vsel %vm2133, %v6824, %v6826
      %v6895 = vsel %vm2133, %v6828, %v6830
      %v6896 = vsel %vm2133, %v6830, %v6832
      %v6897 = vsel %vm2133, %v6834, %v6836
      %v6898 = vsel %vm2133, %v6836, %v6838
      %v6899 = vsel %vm2133, %v6840, %v6842
      %v6900 = vsel %vm2133, %v6842, %v6844
      %v6901 = vsel %vm2133, %v6846, %v6848
      %v6902 = vsel %vm2133, %v6848, %v6850
      %v6903 = vsel %vm2133, %v6852, %v6854
      %v6904 = vsel %vm2133, %v6854, %v6856
      %v6952 = vand.u32 %v6903, %v2236
      %v6955 = vand.u32 %v6904, %v2236
      %6957 = vmatprep.subr.bf16.mxu0 %v6858
      %6958 = vmatpush1.bf16.msra.mxu0 %v6857
      %6959 = vmatprep.subr.bf16.mxu0 %v6860
      %6960 = vmatpush1.bf16.msra.mxu0 %v6859
      %6961 = vmatprep.subr.bf16.mxu0 %v6862
      %6962 = vmatpush1.bf16.msra.mxu0 %v6861
      %6963 = vmatprep.subr.bf16.mxu0 %v6864
      %6964 = vmatpush1.bf16.msra.mxu0 %v6863
      %6965 = vmatprep.subr.bf16.mxu0 %v6866
      %6966 = vmatpush1.bf16.msra.mxu0 %v6865
      %6967 = vmatprep.subr.bf16.mxu0 %v6868
      %6968 = vmatpush1.bf16.msra.mxu0 %v6867
      %6969 = vmatprep.subr.bf16.mxu0 %v6870
      %6970 = vmatpush1.bf16.msra.mxu0 %v6869
      %6971 = vmatprep.subr.bf16.mxu0 %v6872
      %6972 = vmatpush1.bf16.msra.mxu0 %v6871
      %6973 = vmatprep.subr.bf16.mxu0 %v6874
      %6974 = vmatpush1.bf16.msra.mxu0 %v6873
      %6975 = vmatprep.subr.bf16.mxu0 %v6876
      %6976 = vmatpush1.bf16.msra.mxu0 %v6875
      %6977 = vmatprep.subr.bf16.mxu0 %v6878
      %6978 = vmatpush1.bf16.msra.mxu0 %v6877
      %6979 = vmatprep.subr.bf16.mxu0 %v6880
      %6980 = vmatpush1.bf16.msra.mxu0 %v6879
      %6981 = vmatprep.subr.bf16.mxu0 %v6882
      %6982 = vmatpush1.bf16.msra.mxu0 %v6881
      %6983 = vmatprep.subr.bf16.mxu0 %v6884
      %6984 = vmatpush1.bf16.msra.mxu0 %v6883
      %6985 = vmatprep.subr.bf16.mxu0 %v6886
      %6986 = vmatpush1.bf16.msra.mxu0 %v6885
      %6987 = vmatprep.subr.bf16.mxu0 %v6888
      %6988 = vmatpush1.bf16.msra.mxu0 %v6887
      %6989 = vmatprep.mubr.bf16.mxu0 %v3178
      %6990 = vmatmul.mubr.bf16.gmra.mrb[0].mxu0 %v3177
      %v6991 = vpop.f32.mrb[0].mxu0
      %v6992 = vadd.f32 %v3140, %v6991
      %v6993 = vpop.f32.mrb[0].mxu0
      %v6994 = vadd.f32 %v3140, %v6993
      %v6995 = vpop.f32.mrb[0].mxu0
      %v6996 = vadd.f32 %v3145, %v6995
      %v6997 = vpop.f32.mrb[0].mxu0
      %v6998 = vadd.f32 %v3145, %v6997
      %6999 = vmatprep.mubr.bf16.mxu0 %v3181
      %7000 = vmatmul.mubr.bf16.gmra.mrb[0].mxu0 %v3180
      %v7001 = vpop.f32.mrb[0].mxu0
      %v7002 = vadd.f32 %v3150, %v7001
      %v7003 = vpop.f32.mrb[0].mxu0
      %v7004 = vadd.f32 %v3150, %v7003
      %v7005 = vpop.f32.mrb[0].mxu0
      %v7006 = vadd.f32 %v3155, %v7005
      %v7007 = vpop.f32.mrb[0].mxu0
      %v7008 = vadd.f32 %v3155, %v7007
      %7009 = vdwg.mxu0
      %7010 = vmatprep.subr.bf16.mxu0 %v6890
      %7011 = vmatpush1.bf16.msra.mxu0 %v6889
      %7012 = vmatprep.subr.bf16.mxu0 %v6892
      %7013 = vmatpush1.bf16.msra.mxu0 %v6891
      %7014 = vmatprep.subr.bf16.mxu0 %v6894
      %7015 = vmatpush1.bf16.msra.mxu0 %v6893
      %7016 = vmatprep.subr.bf16.mxu0 %v6896
      %7017 = vmatpush1.bf16.msra.mxu0 %v6895
      %7018 = vmatprep.subr.bf16.mxu0 %v6898
      %7019 = vmatpush1.bf16.msra.mxu0 %v6897
      %7020 = vmatprep.subr.bf16.mxu0 %v6900
      %7021 = vmatpush1.bf16.msra.mxu0 %v6899
      %7022 = vmatprep.subr.bf16.mxu0 %v6902
      %7023 = vmatpush1.bf16.msra.mxu0 %v6901
      %7024 = vmatprep.subr.bf16.mxu0 %v6955
      %7025 = vmatpush1.bf16.msra.mxu0 %v6952
      %7026 = vmatprep.subr.bf16.mxu0 0
      %7027 = vmatpush1.bf16.msra.mxu0 0
      %7028 = vmatprep.subr.bf16.mxu0 0
      %7029 = vmatpush1.bf16.msra.mxu0 0
      %7030 = vmatprep.subr.bf16.mxu0 0
      %7031 = vmatpush1.bf16.msra.mxu0 0
      %7032 = vmatprep.subr.bf16.mxu0 0
      %7033 = vmatpush1.bf16.msra.mxu0 0
      %7034 = vmatprep.subr.bf16.mxu0 0
      %7035 = vmatpush1.bf16.msra.mxu0 0
      %7036 = vmatprep.subr.bf16.mxu0 0
      %7037 = vmatpush1.bf16.msra.mxu0 0
      %7038 = vmatprep.subr.bf16.mxu0 0
      %7039 = vmatpush1.bf16.msra.mxu0 0
      %7040 = vmatprep.subr.bf16.mxu0 0
      %7041 = vmatpush1.bf16.msra.mxu0 0
      %7042 = vmatprep.mubr.bf16.mxu0 0
      %7043 = vmatmul.mubr.bf16.gmra.mrb[0].mxu0 %v3468
      %v7044 = vpop.f32.mrb[0].mxu0
      %v7045 = vadd.f32 %v6992, %v7044
      %v7046 = vpop.f32.mrb[0].mxu0
      %v7047 = vadd.f32 %v6994, %v7046
      %v7048 = vpop.f32.mrb[0].mxu0
      %v7049 = vadd.f32 %v6996, %v7048
      %v7050 = vpop.f32.mrb[0].mxu0
      %v7051 = vadd.f32 %v6998, %v7050
      %7052 = vmatprep.mubr.bf16.mxu0 0
      %7053 = vmatmul.mubr.bf16.gmra.mrb[0].mxu0 %v3471
      %v7054 = vpop.f32.mrb[0].mxu0
      %v7055 = vadd.f32 %v7002, %v7054
      %v7056 = vpop.f32.mrb[0].mxu0
      %v7057 = vadd.f32 %v7004, %v7056
      %v7058 = vpop.f32.mrb[0].mxu0
      %v7059 = vadd.f32 %v7006, %v7058
      %v7060 = vpop.f32.mrb[0].mxu0
      %v7061 = vadd.f32 %v7008, %v7060
      %7062 = vdwg.mxu0
      %vm7063 = vcmp.gt.f32.partialorder %v7045, 0.0
      %vm7064 = vcmp.gt.f32.partialorder %v7047, 0.0
      %vm7065 = vcmp.gt.f32.partialorder %v7049, 0.0
      %vm7066 = vcmp.gt.f32.partialorder %v7051, 0.0
      %vm7067 = vcmp.gt.f32.partialorder %v7055, 0.0
      %vm7068 = vcmp.gt.f32.partialorder %v7057, 0.0
      %vm7069 = vcmp.gt.f32.partialorder %v7059, 0.0
      %vm7070 = vcmp.gt.f32.partialorder %v7061, 0.0
      %v7071 = vmul.f32 %v7045, 0.01
      %v7072 = vmul.f32 %v7047, 0.01
      %v7073 = vmul.f32 %v7049, 0.01
      %v7074 = vmul.f32 %v7051, 0.01
      %v7075 = vmul.f32 %v7055, 0.01
      %v7076 = vmul.f32 %v7057, 0.01
      %v7077 = vmul.f32 %v7059, 0.01
      %v7078 = vmul.f32 %v7061, 0.01
      %v7079 = vsel %vm7063, %v7045, %v7071
      %v7080 = vsel %vm7064, %v7047, %v7072
      %v7081 = vsel %vm7065, %v7049, %v7073
      %v7082 = vsel %vm7066, %v7051, %v7074
      %v7083 = vsel %vm7067, %v7055, %v7075
      %v7084 = vsel %vm7068, %v7057, %v7076
      %v7085 = vsel %vm7069, %v7059, %v7077
      %v7086 = vsel %vm7070, %v7061, %v7078
      %v7087 = vsel %vm1131, %v7079, 0.0
      %v7088 = vsel %vm1132, %v7080, 0.0
      %v7089 = vsel %vm1131, %v7081, 0.0
      %v7090 = vsel %vm1132, %v7082, 0.0
      %v7091 = vsel %vm1131, %v7083, 0.0
      %v7092 = vsel %vm1132, %v7084, 0.0
      %v7093 = vsel %vm1131, %v7085, 0.0
      %v7094 = vsel %vm1132, %v7086, 0.0
      %v7095 = vpack.c.bf16 %v7089, %v7087
      %v7096 = vpack.c.bf16 %v7090, %v7088
      %v7097 = vpack.c.bf16 %v7093, %v7091
      %v7098 = vpack.c.bf16 %v7094, %v7092
      %v7103 = vunpack.c.l.b16 %v7095
      %v7104 = vunpack.c.l.b16 %v7096
      %v7105 = vunpack.c.h.b16 %v7095
      %v7106 = vunpack.c.h.b16 %v7096
      %v7107 = vunpack.c.l.b16 %v7097
      %v7108 = vunpack.c.l.b16 %v7098
      %v7109 = vunpack.c.h.b16 %v7097
      %v7110 = vunpack.c.h.b16 %v7098
      %v7111 = vpack.c.b16 %v7104, %v7103
      %v7112 = vpack.c.b16 %v7106, %v7105
      %v7113 = vpack.c.b16 %v7108, %v7107
      %v7114 = vpack.c.b16 %v7110, %v7109
      %7119 = vst [vmem:[%s4129 + $0x4] sm:$0xff] %v7111
      %7120 = vst [vmem:[%s4129 + $0x14] sm:$0xff] %v7112
      %7121 = vst [vmem:[%s4129 + $0x24] sm:$0xff] %v7113
      %v7122 = vld [vmem:[%s4129 + $0x34] sm:$0x11]
      %v7123 = vsel %vm408, %v7114, %v7122
      %7124 = vst [vmem:[%s4129 + $0x34] sm:$0x11] %v7123
      %v7125 = vld [vmem:[%s4129] sm:$0xff]
      %v7126 = vld [vmem:[%s4129 + $0x8] sm:$0xf]
      %v7127 = vld [vmem:[%s4129 + $0x10] sm:$0xff]
      %v7128 = vld [vmem:[%s4129 + $0x18] sm:$0xf]
      %v7129 = vld [vmem:[%s4129 + $0x20] sm:$0xff]
      %v7130 = vld [vmem:[%s4129 + $0x28] sm:$0xf]
      %v7131 = vld [vmem:[%s4129 + $0x30] sm:$0x11]
      %v7132 = vld [vmem:[%s4129 + $0x38] sm:$0x1]
      %v7133 = vld [vmem:[%s4129 + $0x4] sm:$0xff]
      %v7134 = vld [vmem:[%s4129 + $0x14] sm:$0xff]
      %v7135 = vld [vmem:[%s4129 + $0x24] sm:$0xff]
      %v7136 = vld [vmem:[%s4129 + $0x34] sm:$0x11]
      %v7137 = vld [vmem:[%s4129 + $0xc] sm:$0xf]
      %v7138 = vld [vmem:[%s4129 + $0x1c] sm:$0xf]
      %v7139 = vld [vmem:[%s4129 + $0x2c] sm:$0xf]
      %v7140 = vld [vmem:[%s4129 + $0x3c] sm:$0x1]
      %v7149 = vunpack.c.l.b16 %v7125
      %v7150 = vunpack.c.h.b16 %v7125
      %v7151 = vunpack.c.l.b16 %v7126
      %v7152 = vunpack.c.l.b16 %v7127
      %v7153 = vunpack.c.h.b16 %v7127
      %v7154 = vunpack.c.l.b16 %v7128
      %v7155 = vunpack.c.l.b16 %v7129
      %v7156 = vunpack.c.h.b16 %v7129
      %v7157 = vunpack.c.l.b16 %v7130
      %v7158 = vunpack.c.l.b16 %v7131
      %v7159 = vunpack.c.h.b16 %v7131
      %v7160 = vunpack.c.l.b16 %v7132
      %v7161 = vpack.c.b16 %v7152, %v7149
      %v7162 = vpack.c.b16 %v7153, %v7150
      %v7163 = vpack.c.b16 %v7154, %v7151
      %v7164 = vpack.c.b16 %v7158, %v7155
      %v7165 = vpack.c.b16 %v7159, %v7156
      %v7166 = vpack.c.b16 %v7160, %v7157
      %v7171 = vshrl.u32 %v7161, 16
      %v7173 = vrot.slane %v7171, 3
      %v7174 = vshll.u32 %v7161, 16
      %v7176 = vrot.slane %v7174, 4
      %v7177 = vor.u32 %v7173, %v7176
      %v7179 = vshrl.u32 %v7162, 16
      %v7181 = vrot.slane %v7179, 3
      %v7182 = vshll.u32 %v7162, 16
      %v7184 = vrot.slane %v7182, 4
      %v7185 = vor.u32 %v7181, %v7184
      %v7187 = vshrl.u32 %v7163, 16
      %v7189 = vrot.slane %v7187, 3
      %v7190 = vshll.u32 %v7163, 16
      %v7192 = vrot.slane %v7190, 4
      %v7193 = vor.u32 %v7189, %v7192
      %v7195 = vshrl.u32 %v7164, 16
      %v7197 = vrot.slane %v7195, 3
      %v7198 = vshll.u32 %v7164, 16
      %v7200 = vrot.slane %v7198, 4
      %v7201 = vor.u32 %v7197, %v7200
      %v7202 = vsel %vm406, %v7177, %v7201
      %v7204 = vshrl.u32 %v7165, 16
      %v7206 = vrot.slane %v7204, 3
      %v7207 = vshll.u32 %v7165, 16
      %v7209 = vrot.slane %v7207, 4
      %v7210 = vor.u32 %v7206, %v7209
      %v7211 = vsel %vm406, %v7185, %v7210
      %v7213 = vshrl.u32 %v7166, 16
      %v7215 = vrot.slane %v7213, 3
      %v7216 = vshll.u32 %v7166, 16
      %v7218 = vrot.slane %v7216, 4
      %v7219 = vor.u32 %v7215, %v7218
      %v7220 = vsel %vm406, %v7193, %v7219
      %7221 = vrot.lane.b32.xlu0 %v7177, 127
      %v7222 = vpop.permute.xlu0 %7221
      %7223 = vrot.lane.b32.xlu0 %v7185, 127
      %v7224 = vpop.permute.xlu0 %7223
      %7225 = vrot.lane.b32.xlu0 %v7193, 127
      %v7226 = vpop.permute.xlu0 %7225
      %7227 = vrot.lane.b32.xlu0 %v7202, 127
      %v7228 = vpop.permute.xlu0 %7227
      %7229 = vrot.lane.b32.xlu0 %v7211, 127
      %v7230 = vpop.permute.xlu0 %7229
      %7231 = vrot.lane.b32.xlu0 %v7220, 127
      %v7232 = vpop.permute.xlu0 %7231
      %7233 = vrot.lane.b32.xlu0 %v7201, 127
      %v7234 = vpop.permute.xlu0 %7233
      %7235 = vrot.lane.b32.xlu0 %v7210, 127
      %v7236 = vpop.permute.xlu0 %7235
      %7237 = vrot.lane.b32.xlu0 %v7219, 127
      %v7238 = vpop.permute.xlu0 %7237
      %v7239 = vsel %vm479, %v7222, %v7224
      %v7240 = vsel %vm479, %v7224, %v7226
      %v7241 = vsel %vm479, %v7228, %v7230
      %v7242 = vsel %vm479, %v7230, %v7232
      %v7243 = vsel %vm479, %v7234, %v7236
      %v7244 = vsel %vm479, %v7236, %v7238
      %v7252 = vunpack.c.l.b16 %v7133
      %v7253 = vunpack.c.h.b16 %v7133
      %v7254 = vunpack.c.l.b16 %v7134
      %v7255 = vunpack.c.h.b16 %v7134
      %v7256 = vunpack.c.l.b16 %v7135
      %v7257 = vunpack.c.h.b16 %v7135
      %v7258 = vunpack.c.l.b16 %v7136
      %v7259 = vunpack.c.h.b16 %v7136
      %v7260 = vpack.c.b16 %v7254, %v7252
      %v7261 = vpack.c.b16 %v7255, %v7253
      %v7262 = vpack.c.b16 %v7258, %v7256
      %v7263 = vpack.c.b16 %v7259, %v7257
      %v7264 = vrot.slane %v7260, 7
      %v7265 = vrot.slane %v7261, 7
      %v7266 = vrot.slane %v7262, 7
      %v7267 = vsel %vm342, %v7264, %v7266
      %v7268 = vrot.slane %v7263, 7
      %v7269 = vsel %vm342, %v7265, %v7268
      %7270 = vrot.lane.b32.xlu0 %v7264, 126
      %v7271 = vpop.permute.xlu0 %7270
      %7272 = vrot.lane.b32.xlu0 %v7265, 126
      %v7273 = vpop.permute.xlu0 %7272
      %7274 = vrot.lane.b32.xlu0 %v7267, 126
      %v7275 = vpop.permute.xlu0 %7274
      %7276 = vrot.lane.b32.xlu0 %v7269, 126
      %v7277 = vpop.permute.xlu0 %7276
      %v7278 = vsel %vm494, %v7271, %v7273
      %v7279 = vsel %vm494, %v7275, %v7277
      %v7287 = vunpack.c.l.b16 %v7137
      %v7288 = vunpack.c.l.b16 %v7138
      %v7289 = vunpack.c.l.b16 %v7139
      %v7290 = vunpack.c.l.b16 %v7140
      %v7291 = vpack.c.b16 %v7288, %v7287
      %v7292 = vpack.c.b16 %v7290, %v7289
      %v7294 = vshrl.u32 %v7260, 16
      %v7296 = vrot.slane %v7294, 2
      %v7297 = vshll.u32 %v7260, 16
      %v7299 = vrot.slane %v7297, 3
      %v7300 = vor.u32 %v7296, %v7299
      %v7302 = vshrl.u32 %v7261, 16
      %v7304 = vrot.slane %v7302, 2
      %v7305 = vshll.u32 %v7261, 16
      %v7307 = vrot.slane %v7305, 3
      %v7308 = vor.u32 %v7304, %v7307
      %v7310 = vshrl.u32 %v7291, 16
      %v7312 = vrot.slane %v7310, 2
      %v7313 = vshll.u32 %v7291, 16
      %v7315 = vrot.slane %v7313, 3
      %v7316 = vor.u32 %v7312, %v7315
      %v7318 = vshrl.u32 %v7262, 16
      %v7320 = vrot.slane %v7318, 2
      %v7321 = vshll.u32 %v7262, 16
      %v7323 = vrot.slane %v7321, 3
      %v7324 = vor.u32 %v7320, %v7323
      %v7325 = vsel %vm776, %v7300, %v7324
      %v7327 = vshrl.u32 %v7263, 16
      %v7329 = vrot.slane %v7327, 2
      %v7330 = vshll.u32 %v7263, 16
      %v7332 = vrot.slane %v7330, 3
      %v7333 = vor.u32 %v7329, %v7332
      %v7334 = vsel %vm776, %v7308, %v7333
      %v7336 = vshrl.u32 %v7292, 16
      %v7338 = vrot.slane %v7336, 2
      %v7339 = vshll.u32 %v7292, 16
      %v7341 = vrot.slane %v7339, 3
      %v7342 = vor.u32 %v7338, %v7341
      %v7343 = vsel %vm776, %v7316, %v7342
      %7344 = vrot.lane.b32.xlu0 %v7300, 125
      %v7345 = vpop.permute.xlu0 %7344
      %7346 = vrot.lane.b32.xlu0 %v7308, 125
      %v7347 = vpop.permute.xlu0 %7346
      %7348 = vrot.lane.b32.xlu0 %v7316, 125
      %v7349 = vpop.permute.xlu0 %7348
      %7350 = vrot.lane.b32.xlu0 %v7325, 125
      %v7351 = vpop.permute.xlu0 %7350
      %7352 = vrot.lane.b32.xlu0 %v7334, 125
      %v7353 = vpop.permute.xlu0 %7352
      %7354 = vrot.lane.b32.xlu0 %v7343, 125
      %v7355 = vpop.permute.xlu0 %7354
      %7356 = vrot.lane.b32.xlu0 %v7324, 125
      %v7357 = vpop.permute.xlu0 %7356
      %7358 = vrot.lane.b32.xlu0 %v7333, 125
      %v7359 = vpop.permute.xlu0 %7358
      %7360 = vrot.lane.b32.xlu0 %v7342, 125
      %v7361 = vpop.permute.xlu0 %7360
      %v7362 = vsel %vm506, %v7345, %v7347
      %v7363 = vsel %vm506, %v7347, %v7349
      %v7364 = vsel %vm506, %v7351, %v7353
      %v7365 = vsel %vm506, %v7353, %v7355
      %v7366 = vsel %vm506, %v7357, %v7359
      %v7367 = vsel %vm506, %v7359, %v7361
      %v7371 = vrot.slane %v7260, 6
      %v7372 = vrot.slane %v7261, 6
      %v7373 = vrot.slane %v7291, 6
      %v7374 = vrot.slane %v7262, 6
      %v7375 = vsel %vm700, %v7371, %v7374
      %v7376 = vrot.slane %v7263, 6
      %v7377 = vsel %vm700, %v7372, %v7376
      %v7378 = vrot.slane %v7292, 6
      %v7379 = vsel %vm700, %v7373, %v7378
      %7380 = vrot.lane.b32.xlu0 %v7371, 124
      %v7381 = vpop.permute.xlu0 %7380
      %7382 = vrot.lane.b32.xlu0 %v7372, 124
      %v7383 = vpop.permute.xlu0 %7382
      %7384 = vrot.lane.b32.xlu0 %v7373, 124
      %v7385 = vpop.permute.xlu0 %7384
      %7386 = vrot.lane.b32.xlu0 %v7375, 124
      %v7387 = vpop.permute.xlu0 %7386
      %7388 = vrot.lane.b32.xlu0 %v7377, 124
      %v7389 = vpop.permute.xlu0 %7388
      %7390 = vrot.lane.b32.xlu0 %v7379, 124
      %v7391 = vpop.permute.xlu0 %7390
      %v7392 = vsel %vm521, %v7381, %v7383
      %v7393 = vsel %vm521, %v7383, %v7385
      %v7394 = vsel %vm521, %v7387, %v7389
      %v7395 = vsel %vm521, %v7389, %v7391
      %v7396 = vsel %vm758, %v7164, %v7239
      %v7397 = vsel %vm758, %v7165, %v7240
      %v7398 = vsel %vm758, %v7166, %v7226
      %v7401 = vsel %vm687, %v7243, %v7271
      %v7404 = vsel %vm687, %v7244, %v7278
      %v7407 = vsel %vm687, %v7238, %v7273
      %v7408 = vsel %vm777, %v7275, %v7345
      %v7409 = vsel %vm777, %v7279, %v7362
      %v7410 = vsel %vm777, %v7277, %v7363
      %v7413 = vsel %vm706, %v7357, %v7381
      %v7416 = vsel %vm706, %v7366, %v7392
      %v7419 = vsel %vm706, %v7367, %v7393
      %7432 = vrot.lane.b32.xlu0 %v7161, 2
      %v7433 = vpop.permute.xlu0 %7432
      %7434 = vrot.lane.b32.xlu0 %v7162, 2
      %v7435 = vpop.permute.xlu0 %7434
      %7436 = vrot.lane.b32.xlu0 %v7163, 2
      %v7437 = vpop.permute.xlu0 %7436
      %7438 = vrot.lane.b32.xlu0 %v7396, 2
      %v7439 = vpop.permute.xlu0 %7438
      %7440 = vrot.lane.b32.xlu0 %v7397, 2
      %v7441 = vpop.permute.xlu0 %7440
      %7442 = vrot.lane.b32.xlu0 %v7398, 2
      %v7443 = vpop.permute.xlu0 %7442
      %7444 = vrot.lane.b32.xlu0 %v7241, 2
      %v7445 = vpop.permute.xlu0 %7444
      %7446 = vrot.lane.b32.xlu0 %v7242, 2
      %v7447 = vpop.permute.xlu0 %7446
      %7448 = vrot.lane.b32.xlu0 %v7232, 2
      %v7449 = vpop.permute.xlu0 %7448
      %7450 = vrot.lane.b32.xlu0 %v7401, 2
      %v7451 = vpop.permute.xlu0 %7450
      %7452 = vrot.lane.b32.xlu0 %v7404, 2
      %v7453 = vpop.permute.xlu0 %7452
      %7454 = vrot.lane.b32.xlu0 %v7407, 2
      %v7455 = vpop.permute.xlu0 %7454
      %7456 = vrot.lane.b32.xlu0 %v7408, 2
      %v7457 = vpop.permute.xlu0 %7456
      %7458 = vrot.lane.b32.xlu0 %v7409, 2
      %v7459 = vpop.permute.xlu0 %7458
      %7460 = vrot.lane.b32.xlu0 %v7410, 2
      %v7461 = vpop.permute.xlu0 %7460
      %7462 = vrot.lane.b32.xlu0 %v7351, 2
      %v7463 = vpop.permute.xlu0 %7462
      %7464 = vrot.lane.b32.xlu0 %v7364, 2
      %v7465 = vpop.permute.xlu0 %7464
      %7466 = vrot.lane.b32.xlu0 %v7365, 2
      %v7467 = vpop.permute.xlu0 %7466
      %7468 = vrot.lane.b32.xlu0 %v7413, 2
      %v7469 = vpop.permute.xlu0 %7468
      %7470 = vrot.lane.b32.xlu0 %v7416, 2
      %v7471 = vpop.permute.xlu0 %7470
      %7472 = vrot.lane.b32.xlu0 %v7419, 2
      %v7473 = vpop.permute.xlu0 %7472
      %7474 = vrot.lane.b32.xlu0 %v7387, 2
      %v7475 = vpop.permute.xlu0 %7474
      %7476 = vrot.lane.b32.xlu0 %v7394, 2
      %v7477 = vpop.permute.xlu0 %7476
      %7478 = vrot.lane.b32.xlu0 %v7395, 2
      %v7479 = vpop.permute.xlu0 %7478
      %v7480 = vsel %vm4011, %v7433, %v7435
      %v7481 = vsel %vm4011, %v7435, %v7437
      %v7482 = vsel %vm4011, %v7439, %v7441
      %v7483 = vsel %vm4011, %v7441, %v7443
      %v7484 = vsel %vm4011, %v7445, %v7447
      %v7485 = vsel %vm4011, %v7447, %v7449
      %v7486 = vsel %vm4011, %v7451, %v7453
      %v7487 = vsel %vm4011, %v7453, %v7455
      %v7488 = vsel %vm4011, %v7457, %v7459
      %v7489 = vsel %vm4011, %v7459, %v7461
      %v7490 = vsel %vm4011, %v7463, %v7465
      %v7491 = vsel %vm4011, %v7465, %v7467
      %v7492 = vsel %vm4011, %v7469, %v7471
      %v7493 = vsel %vm4011, %v7471, %v7473
      %v7494 = vsel %vm4011, %v7475, %v7477
      %v7495 = vsel %vm4011, %v7477, %v7479
      %v7511 = vand.u32 %v7494, %v4047
      %v7514 = vand.u32 %v7495, %v4047
      %7516 = vmatprep.subr.bf16.mxu0 %v7481
      %7517 = vmatpush1.bf16.msra.mxu0 %v7480
      %7518 = vmatprep.subr.bf16.mxu0 %v7483
      %7519 = vmatpush1.bf16.msra.mxu0 %v7482
      %7520 = vmatprep.subr.bf16.mxu0 %v7485
      %7521 = vmatpush1.bf16.msra.mxu0 %v7484
      %7522 = vmatprep.subr.bf16.mxu0 %v7487
      %7523 = vmatpush1.bf16.msra.mxu0 %v7486
      %7524 = vmatprep.subr.bf16.mxu0 %v7489
      %7525 = vmatpush1.bf16.msra.mxu0 %v7488
      %7526 = vmatprep.subr.bf16.mxu0 %v7491
      %7527 = vmatpush1.bf16.msra.mxu0 %v7490
      %7528 = vmatprep.subr.bf16.mxu0 %v7493
      %7529 = vmatpush1.bf16.msra.mxu0 %v7492
      %7530 = vmatprep.subr.bf16.mxu0 %v7514
      %7531 = vmatpush1.bf16.msra.mxu0 %v7511
      %7532 = vmatprep.subr.bf16.mxu0 0
      %7533 = vmatpush1.bf16.msra.mxu0 0
      %7534 = vmatprep.subr.bf16.mxu0 0
      %7535 = vmatpush1.bf16.msra.mxu0 0
      %7536 = vmatprep.subr.bf16.mxu0 0
      %7537 = vmatpush1.bf16.msra.mxu0 0
      %7538 = vmatprep.subr.bf16.mxu0 0
      %7539 = vmatpush1.bf16.msra.mxu0 0
      %7540 = vmatprep.subr.bf16.mxu0 0
      %7541 = vmatpush1.bf16.msra.mxu0 0
      %7542 = vmatprep.subr.bf16.mxu0 0
      %7543 = vmatpush1.bf16.msra.mxu0 0
      %7544 = vmatprep.subr.bf16.mxu0 0
      %7545 = vmatpush1.bf16.msra.mxu0 0
      %7546 = vmatprep.subr.bf16.mxu0 0
      %7547 = vmatpush1.bf16.msra.mxu0 0
      %7548 = vmatprep.mubr.bf16.mxu0 0
      %7549 = vmatmul.mubr.bf16.gmra.mrb[0].mxu0 %v4044
      %v7550 = vpop.f32.mrb[0].mxu0
      %v7551 = vadd.f32 %v3950, %v7550
      %v7552 = vpop.f32.mrb[0].mxu0
      %v7553 = vadd.f32 %v3950, %v7552
      %v7554 = vpop.f32.mrb[0].mxu0
      %v7555 = vpop.f32.mrb[0].mxu0
      %7556 = vdwg.mxu0
      %vm7557 = vcmp.gt.f32.partialorder %v7551, 0.0
      %vm7558 = vcmp.gt.f32.partialorder %v7553, 0.0
      %v7559 = vmul.f32 %v7551, 0.01
      %v7560 = vmul.f32 %v7553, 0.01
      %v7561 = vsel %vm7557, %v7551, %v7559
      %v7562 = vsel %vm7558, %v7553, %v7560
      %v7563 = vsel %vm369, %v7561, 0.0
      %v7564 = vsel %vm370, %v7562, 0.0
      %v7565 = vpack.c.bf16 %v7563, %v7563
      %v7566 = vpack.c.bf16 %v7564, %v7564
      %v7569 = vcombine.low %v7565, %v7566
      %v7571 = vunpack.c.l.s4 1966171168
      %v7572 = vunpack.c.0.s8 %v7571
      %v7573 = vlaneseq
      %v7574 = vshrl.u32 %v7573, 7
      %v7575 = vsub.s32 %v7572, %v7574
      %v7576 = vrot.slane %v7569, %v7575
      %v7578 = vunpack.c.l.s4 1966171168
      %v7579 = vunpack.c.0.s8 %v7578
      %v7580 = vlaneseq
      %v7581 = vshrl.u32 %v7580, 7
      %v7582 = vsub.s32 %v7579, %v7581
      %v7583 = vrot.slane %v7576, %v7582
      %s7585 = scalar_lea.vmem %s336, 2
      %v7586 = vld [vmem:[%s7585] sm:$0x3]
      %v7587 = vsel %vm4125, %v7583, %v7586
      %7588 = vst [vmem:[%s7585] sm:$0x3] %v7587
      %s7589 = smul.u32 2, %s22
      %p7590 = scmp.lt.s32.totalorder %s7589, 3
      %s7591 = scalar_select %p7590, %s7589, 3
      %s7592 = smul.addr %s7591, 2
      %s7593 = scalar_lea.vmem %s9, %s7592
      // Predicated region
      $region57: #{simple_cnn4_forward.2} parent=55 // pred_check
        %p7594 = pneg %p234
      $region58: #{simple_cnn4_forward.2} parent=55 // pred_check_branch
        %7596 = sbr.rel (%p7594) target = $region60
      $region59: #{simple_cnn4_forward.2} parent=55 // pred_region
        %s7597 = smul.u32 2, %s22
      $region60: #{simple_cnn4_forward.2} parent=55 // pred_fallthru
        _
    $region56: #{simple_cnn4_forward.2} parent=5 // pred_fallthru
      _
    %p7598 = scmp.le.s32.totalorder 2, %s17
    // Predicated region
    $region61: #{simple_cnn4_forward.2} parent=5 // pred_check
      %p7599 = pneg %p7598
    $region62: #{simple_cnn4_forward.2} parent=5 // pred_check_branch
      %7601 = sbr.rel (%p7599) target = $region64
    $region63: #{simple_cnn4_forward.2} parent=5 // pred_region
      %s7602 = ssub.s32 %s17, 2
      // Predicated region
      $region65: #{simple_cnn4_forward.2} parent=63 // pred_check
        %p7603 = pneg %p240
      $region66: #{simple_cnn4_forward.2} parent=63 // pred_check_branch
        %7605 = sbr.rel (%p7603) target = $region68
      $region67: #{simple_cnn4_forward.2} parent=63 // pred_region
        %s7606 = smul.u32 2, %s23
        %p7607 = scmp.lt.s32.totalorder %s7606, 3
        %s7608 = scalar_select %p7607, %s7606, 3
        %s7609 = smul.addr %s7608, 2
        %s7610 = scalar_lea.vmem %s9, %s7609
      $region68: #{simple_cnn4_forward.2} parent=63 // pred_fallthru
        _
    $region64: #{simple_cnn4_forward.2} parent=5 // pred_fallthru
      _
  $region6: #{simple_cnn4_forward.2} parent=0 // loop_footer
    %s21 = sadd.s32 1, %s17
  $region7: #{simple_cnn4_forward.2} parent=0 // loop_footer_branch
    %16 = sbr.rel target = $region3
  $region8: #{simple_cnn4_forward.2} parent=0 // loop_exit
    _

</llo_original>
